<compile_context>
chip_gen: v6e
topology: v6e:2x2x1
jax: 0.10.0
libtpu: 0.0.40
codegen_flags: <defaults>
</compile_context>

<pallas_src>
import jax
import jax.numpy as jnp
from jax.experimental import pallas as pl
from jax.experimental.pallas import tpu as pltpu

# ----------------------------- model constants -----------------------------
_C_IN, _H_IN, _W_IN = 3, 32, 32          # input image (NCHW)
_K = 5                                   # conv kernel size
_C1, _C2 = 6, 16                         # conv output channels
_H1 = _H_IN - _K + 1                     # 28 (conv1 spatial)
_P1 = _H1 // 2                           # 14 (pool1 spatial)
_H2 = _P1 - _K + 1                       # 10 (conv2 spatial)
_P2 = _H2 // 2                           # 5  (pool2 spatial)
_FLAT = _C2 * _P2 * _P2                  # 400
_HID = 200

# in-kernel "sparse" activation layout extents
_R1 = _C1 * _H1                          # 168 conv1 rows (co*28 + i)
_RP1 = _R1 - 1                           # 167 pool1 rows (valid at co*28 + 2p)
_R2 = _C2 * _H2                          # 160 conv2 rows (co*10 + i)
_RP2 = _R2 - 1                           # 159 pool2 rows (valid at co*10 + 2r)
_W_A1 = _H1                              # 28 lane blocks in conv1 output
_W_P1 = _W_A1 - 1                        # 27 lane blocks in pool1 (valid even)
_W_A2 = 19                               # conv2 lane blocks (valid even 0..18)
_W_P2 = _W_A2 - 2                        # 17 pool2 lane blocks (valid 0,4,..,16)


# ------------------------------- fused kernel ------------------------------
def _single_head_kernel(x_ref,                 # (C_IN*H_IN, W_IN*TB) f32
                        b1_ref, c1b_ref,       # (K, R1, 96) bf16 ; (R1, 1) f32
                        b2_ref, c2b_ref,       # (K, R2, RP1) bf16 ; (R2, 1) f32
                        wd1_ref, bd1_ref,      # (P2, HID, RP2) bf16 ; (HID,1) f32
                        wd2_ref, bd2_ref,      # (HID, HID) bf16 ; (HID, 1) f32
                        wo_ref, bo_ref,        # (OUT, HID) bf16 ; (OUT, 1) f32
                        out_ref,               # (OUT, TB) f32
                        a1_ref,                # scratch (R1, 28*TB) f32
                        p1_ref,                # scratch (RP1, 27*TB) f32
                        a2_ref,                # scratch (R2, 19*TB) f32
                        p2_ref):               # scratch (RP2, 17*TB) f32
    f32, bf16 = jnp.float32, jnp.bfloat16
    TB = out_ref.shape[-1]

    # ---- conv1 (3->6, k5) as 5 block-banded MXU matmuls (one per dj) --------
    for dj in range(_K):
        rhs = x_ref[:, dj * TB:(dj + _W_A1) * TB].astype(bf16)      # (96, 28TB)
        part = jnp.dot(b1_ref[dj], rhs, preferred_element_type=f32)  # (168,28TB)
        a1_ref[...] = part if dj == 0 else a1_ref[...] + part
    a1_ref[...] = jnp.maximum(a1_ref[...] + c1b_ref[...], 0.0)       # bias+ReLU

    # ---- pool1: 2x2 max via shifted maxes, kept sparse ----------------------
    # valid pooled value at row co*28 + 2p, lane block 2q.
    p1_ref[...] = jnp.maximum(
        jnp.maximum(a1_ref[:_RP1, :_W_P1 * TB], a1_ref[1:, :_W_P1 * TB]),
        jnp.maximum(a1_ref[:_RP1, TB:], a1_ref[1:, TB:]))

    # ---- conv2 (6->16, k5) on the sparse pool1 map (lane stride 2 blocks) ---
    for dj in range(_K):
        rhs = p1_ref[:, 2 * dj * TB:(2 * dj + _W_A2) * TB].astype(bf16)
        part = jnp.dot(b2_ref[dj], rhs, preferred_element_type=f32)  # (160,19TB)
        a2_ref[...] = part if dj == 0 else a2_ref[...] + part
    a2_ref[...] = jnp.maximum(a2_ref[...] + c2b_ref[...], 0.0)

    # ---- pool2 (valid at row co*10 + 2r, lane block 4c) ---------------------
    p2_ref[...] = jnp.maximum(
        jnp.maximum(a2_ref[:_RP2, :_W_P2 * TB], a2_ref[1:, :_W_P2 * TB]),
        jnp.maximum(a2_ref[:_RP2, 2 * TB:], a2_ref[1:, 2 * TB:]))

    # ---- dense stack (torch NCHW flatten folded into wd1's packing) ---------
    h = None
    for c in range(_P2):
        rhs = p2_ref[:, 4 * c * TB:(4 * c + 1) * TB].astype(bf16)    # (159, TB)
        d = jnp.dot(wd1_ref[c], rhs, preferred_element_type=f32)     # (200, TB)
        h = d if h is None else h + d
    h = jnp.maximum(h + bd1_ref[...], 0.0)                           # clamp(0)
    h = jnp.maximum(jnp.dot(wd2_ref[...], h.astype(bf16),
                            preferred_element_type=f32) + bd2_ref[...], 0.0)
    out_ref[...] = jnp.dot(wo_ref[...], h.astype(bf16),
                           preferred_element_type=f32) + bo_ref[...]


# ------------------------------ weight packing ------------------------------
def _build_banded(w, rows_in, h_out, stride):
    """Block-banded conv matrix, one per kernel column dj.

    B[dj, co*h_out + i, ci*rows_in + s] = w[co, ci, s//stride - i, dj]
    whenever s % stride == 0 and 0 <= s//stride - i < K, else 0.
    (stride=2 absorbs the sparse 'valid rows are even' pool layout.)
    """
    c_out, c_in, k, _ = w.shape
    i = jnp.arange(h_out)[:, None]
    s = jnp.arange(rows_in)[None, :]
    di = s // stride - i
    valid = ((s % stride) == 0) & (di >= 0) & (di < k)
    wg = w[:, :, jnp.clip(di, 0, k - 1), :]            # (co, ci, h_out, rows, K)
    wg = jnp.where(valid[None, None, :, :, None], wg, 0.0)
    return jnp.transpose(wg, (4, 0, 2, 1, 3)).reshape(k, c_out * h_out,
                                                      c_in * rows_in)


def pack_params(params, task_idx):
    """One-time packing into the kernel's weight layout (off the hot path)."""
    w1, b1 = params["conv1"]
    w2, b2 = params["conv2"]
    col = params["columns"][task_idx]
    (wd1, bd1), (wd2, bd2) = col["dense"]
    wo, bo = col["out"]

    band1 = _build_banded(w1, _H_IN, _H1, 1)                     # (5, 168, 96)
    band2 = _build_banded(w2, _H1, _H2, 2)[:, :, :_RP1]          # (5, 160, 167)

    # dense1: torch flat index k = co*25 + r*5 + c; pool2 value lives at
    # row co*10 + 2r, lane-block 4c  ->  pack as (c, j, row).
    wd1_r = wd1.reshape(_HID, _C2, _P2, _P2)                     # (j, co, r, c)
    wd1_sp = jnp.zeros((_P2, _HID, _C2, _H2), wd1.dtype)
    wd1_sp = wd1_sp.at[:, :, :, 0::2].set(jnp.transpose(wd1_r, (3, 0, 1, 2)))
    wd1_sp = wd1_sp.reshape(_P2, _HID, _R2)[:, :, :_RP2]         # (5, 200, 159)

    return dict(
        band1=band1.astype(jnp.bfloat16),
        cbias1=jnp.repeat(b1, _H1).reshape(_R1, 1).astype(jnp.float32),
        band2=band2.astype(jnp.bfloat16),
        cbias2=jnp.repeat(b2, _H2).reshape(_R2, 1).astype(jnp.float32),
        wd1=wd1_sp.astype(jnp.bfloat16),
        bd1=bd1.reshape(_HID, 1).astype(jnp.float32),
        wd2=wd2.astype(jnp.bfloat16),
        bd2=bd2.reshape(_HID, 1).astype(jnp.float32),
        wo=wo.astype(jnp.bfloat16),
        bo=bo.reshape(-1, 1).astype(jnp.float32),
    )


# ------------------------------ parameter init ------------------------------
def _linear_init(key, fan_in, fan_out):
    kw, kb = jax.random.split(key)
    bound = 1.0 / (fan_in ** 0.5)
    w = jax.random.uniform(kw, (fan_out, fan_in), jnp.float32, -bound, bound)
    b = jax.random.uniform(kb, (fan_out,), jnp.float32, -bound, bound)
    return w, b


def _conv_init(key, cout, cin, k):
    kw, kb = jax.random.split(key)
    fan_in = cin * k * k
    bound = 1.0 / (fan_in ** 0.5)
    w = jax.random.uniform(kw, (cout, cin, k, k), jnp.float32, -bound, bound)
    b = jax.random.uniform(kb, (cout,), jnp.float32, -bound, bound)
    return w, b


def init_params(key, task_labels, hiddens=(_FLAT, _HID, _HID)):
    n_cols = len(task_labels)
    ki = iter(jax.random.split(key, 2 + n_cols * len(hiddens)))
    params = {"conv1": _conv_init(next(ki), _C1, _C_IN, _K),
              "conv2": _conv_init(next(ki), _C2, _C1, _K),
              "columns": []}
    for label in task_labels:
        dense = [_linear_init(next(ki), hiddens[i], hiddens[i + 1])
                 for i in range(len(hiddens) - 1)]
        out = _linear_init(next(ki), hiddens[-1], len(label))
        params["columns"].append({"dense": dense, "out": out})
    return params


# --------------------------------- forward ----------------------------------
def _round_up(a, b):
    return (a + b - 1) // b * b


@jax.jit
def single_head_forward(packed, x_nchw):
    n = x_nchw.shape[0]
    out_dim = packed["wo"].shape[0]
    tb = 128 if n >= 128 else max(8, _round_up(n, 8))     # batch tile (lanes)
    steps = _round_up(n, tb) // tb
    n_pad = steps * tb

    xp = jnp.pad(x_nchw.astype(jnp.float32),
                 ((0, n_pad - n), (0, 0), (0, 0), (0, 0)))
    # (n_pad, C, H, W) -> (steps, C*H, W*TB) with lane index j*TB + b.
    xt = xp.reshape(steps, tb, _C_IN, _H_IN, _W_IN)
    xt = jnp.transpose(xt, (0, 2, 3, 4, 1)).reshape(steps, _C_IN * _H_IN,
                                                    _W_IN * tb)

    def full(arr):
        shp = arr.shape
        return pl.BlockSpec(shp, lambda s: (0,) * len(shp))

    out = pl.pallas_call(
        _single_head_kernel,
        out_shape=jax.ShapeDtypeStruct((steps, out_dim, tb), jnp.float32),
        grid=(steps,),
        in_specs=[
            pl.BlockSpec((None, _C_IN * _H_IN, _W_IN * tb), lambda s: (s, 0, 0)),
            full(packed["band1"]), full(packed["cbias1"]),
            full(packed["band2"]), full(packed["cbias2"]),
            full(packed["wd1"]), full(packed["bd1"]),
            full(packed["wd2"]), full(packed["bd2"]),
            full(packed["wo"]), full(packed["bo"]),
        ],
        out_specs=pl.BlockSpec((None, out_dim, tb), lambda s: (s, 0, 0)),
        scratch_shapes=[
            pltpu.VMEM((_R1, _W_A1 * tb), jnp.float32),    # conv1 output
            pltpu.VMEM((_RP1, _W_P1 * tb), jnp.float32),   # pool1 (sparse)
            pltpu.VMEM((_R2, _W_A2 * tb), jnp.float32),    # conv2 output
            pltpu.VMEM((_RP2, _W_P2 * tb), jnp.float32),   # pool2 (sparse)
        ],
        compiler_params=pltpu.CompilerParams(
            dimension_semantics=("parallel",),             # batch tiles独立
            vmem_limit_bytes=32 * 1024 * 1024),
    )(xt, packed["band1"], packed["cbias1"], packed["band2"], packed["cbias2"],
      packed["wd1"], packed["bd1"], packed["wd2"], packed["bd2"],
      packed["wo"], packed["bo"])
    # (steps, out_dim, TB) -> (n, out_dim)
    return jnp.transpose(out, (0, 2, 1)).reshape(n_pad, out_dim)[:n]


# ---------------------------- pure-JAX reference -----------------------------
def _reference_forward(params, x, task_idx=0):
    w1, b1 = params["conv1"]
    w2, b2 = params["conv2"]
    col = params["columns"][task_idx]
    (wd1, bd1), (wd2, bd2) = col["dense"]
    wo, bo = col["out"]

    def conv(a, w, b):
        dn = jax.lax.conv_dimension_numbers(a.shape, w.shape,
                                            ('NCHW', 'OIHW', 'NCHW'))
        y = jax.lax.conv_general_dilated(a, w, (1, 1), 'VALID',
                                         dimension_numbers=dn)
        return y + b[None, :, None, None]

    def pool(a):
        return jax.lax.reduce_window(a, -jnp.inf, jax.lax.max,
                                     (1, 1, 2, 2), (1, 1, 2, 2), 'VALID')

    z = pool(jnp.maximum(conv(x, w1, b1), 0.0))
    z = pool(jnp.maximum(conv(z, w2, b2), 0.0))
    z = z.reshape(x.shape[0], -1)
    z = jnp.maximum(z @ wd1.T + bd1, 0.0)
    z = jnp.maximum(z @ wd2.T + bd2, 0.0)
    return z @ wo.T + bo


if __name__ == "__main__":
    key = jax.random.PRNGKey(0)
    kp, kx = jax.random.split(key)

    task_labels = [list(range(5)), list(range(5, 10))]     # two tasks, 5 classes
    params = init_params(kp, task_labels)
    packed = pack_params(params, task_idx=0)               # pack once, off hot path

    x = jax.random.normal(kx, (6, _C_IN, _H_IN, _W_IN), dtype=jnp.float32)
    out = single_head_forward(packed, x)
    jax.block_until_ready(out)

    assert out.shape == (6, len(task_labels[0])), out.shape
    assert bool(jnp.all(jnp.isfinite(out)))

    ref = _reference_forward(params, x, task_idx=0)
    err = float(jnp.max(jnp.abs(out - ref)) / (jnp.max(jnp.abs(ref)) + 1e-6))
    assert err < 0.1, f"normalized max error too large: {err}"

    print("KERNEL_OK")
</pallas_src>

<mosaic_0001>
module attributes {stable_mosaic.version = 11 : i64} {
  func.func @_single_head_kernel(%arg0: i32, %arg1: memref<1x96x256xf32, #tpu.memory_space<vmem>>, %arg2: memref<5x168x96xbf16, #tpu.memory_space<vmem>>, %arg3: memref<168x1xf32, #tpu.memory_space<vmem>>, %arg4: memref<5x160x167xbf16, #tpu.memory_space<vmem>>, %arg5: memref<160x1xf32, #tpu.memory_space<vmem>>, %arg6: memref<5x200x159xbf16, #tpu.memory_space<vmem>>, %arg7: memref<200x1xf32, #tpu.memory_space<vmem>>, %arg8: memref<200x200xbf16, #tpu.memory_space<vmem>>, %arg9: memref<200x1xf32, #tpu.memory_space<vmem>>, %arg10: memref<5x200xbf16, #tpu.memory_space<vmem>>, %arg11: memref<5x1xf32, #tpu.memory_space<vmem>>, %arg12: memref<1x5x8xf32, #tpu.memory_space<vmem>>, %arg13: memref<168x224xf32, #tpu.memory_space<vmem>>, %arg14: memref<167x216xf32, #tpu.memory_space<vmem>>, %arg15: memref<160x152xf32, #tpu.memory_space<vmem>>, %arg16: memref<159x136xf32, #tpu.memory_space<vmem>>) attributes {dimension_semantics = [#tpu.dimension_semantics<parallel>], iteration_bounds = array<i64: 1>, scalar_prefetch = 0 : i64, scratch_operands = 4 : i64, tpu.core_type = #tpu.core_type<tc>, window_params = [{transform_indices = @transform_0, window_bounds = array<i64: 1, 96, 256>}, {pipeline_mode = #tpu.pipeline_mode<synchronous>, transform_indices = @transform_1, window_bounds = array<i64: 5, 168, 96>}, {pipeline_mode = #tpu.pipeline_mode<synchronous>, transform_indices = @transform_2, window_bounds = array<i64: 168, 1>}, {pipeline_mode = #tpu.pipeline_mode<synchronous>, transform_indices = @transform_3, window_bounds = array<i64: 5, 160, 167>}, {pipeline_mode = #tpu.pipeline_mode<synchronous>, transform_indices = @transform_4, window_bounds = array<i64: 160, 1>}, {pipeline_mode = #tpu.pipeline_mode<synchronous>, transform_indices = @transform_5, window_bounds = array<i64: 5, 200, 159>}, {pipeline_mode = #tpu.pipeline_mode<synchronous>, transform_indices = @transform_6, window_bounds = array<i64: 200, 1>}, {pipeline_mode = #tpu.pipeline_mode<synchronous>, transform_indices = @transform_7, window_bounds = array<i64: 200, 200>}, {pipeline_mode = #tpu.pipeline_mode<synchronous>, transform_indices = @transform_8, window_bounds = array<i64: 200, 1>}, {pipeline_mode = #tpu.pipeline_mode<synchronous>, transform_indices = @transform_9, window_bounds = array<i64: 5, 200>}, {pipeline_mode = #tpu.pipeline_mode<synchronous>, transform_indices = @transform_10, window_bounds = array<i64: 5, 1>}, {transform_indices = @transform_11, window_bounds = array<i64: 1, 5, 8>}]} {
    %c0 = arith.constant 0 : index
    %c0_0 = arith.constant 0 : index
    %c0_1 = arith.constant 0 : index
    %0 = vector.load %arg1[%c0, %c0_0, %c0_1] : memref<1x96x256xf32, #tpu.memory_space<vmem>>, vector<1x96x224xf32>
    %1 = vector.shape_cast %0 : vector<1x96x224xf32> to vector<96x224xf32>
    %2 = arith.truncf %1 : vector<96x224xf32> to vector<96x224xbf16>
    %c0_2 = arith.constant 0 : index
    %c0_3 = arith.constant 0 : index
    %c0_4 = arith.constant 0 : index
    %3 = vector.load %arg2[%c0_2, %c0_3, %c0_4] : memref<5x168x96xbf16, #tpu.memory_space<vmem>>, vector<1x168x96xbf16>
    %4 = vector.shape_cast %3 : vector<1x168x96xbf16> to vector<168x96xbf16>
    %cst = arith.constant dense<0.000000e+00> : vector<168x224xf32>
    %5 = tpu.matmul %4, %2, %cst {dimension_numbers = #tpu.dot_dimension_numbers<[1], [0], [0], [1], [0, 0, 1, 1], [], []>} : vector<168x96xbf16>, vector<96x224xbf16>, vector<168x224xf32> -> vector<168x224xf32>
    %c0_5 = arith.constant 0 : index
    %c0_6 = arith.constant 0 : index
    %6 = vector.load %arg13[%c0_5, %c0_6] : memref<168x224xf32, #tpu.memory_space<vmem>>, vector<168x224xf32>
    tpu.vector_store %arg13[%c0_5, %c0_6], %5 {strides = array<i32>} : memref<168x224xf32, #tpu.memory_space<vmem>>, vector<168x224xf32>,
    %c0_7 = arith.constant 0 : index
    %c0_8 = arith.constant 0 : index
    %c8 = arith.constant 8 : index
    %7 = vector.load %arg1[%c0_7, %c0_8, %c8] : memref<1x96x256xf32, #tpu.memory_space<vmem>>, vector<1x96x224xf32>
    %8 = vector.shape_cast %7 : vector<1x96x224xf32> to vector<96x224xf32>
    %9 = arith.truncf %8 : vector<96x224xf32> to vector<96x224xbf16>
    %c1 = arith.constant 1 : index
    %c0_9 = arith.constant 0 : index
    %c0_10 = arith.constant 0 : index
    %10 = vector.load %arg2[%c1, %c0_9, %c0_10] : memref<5x168x96xbf16, #tpu.memory_space<vmem>>, vector<1x168x96xbf16>
    %11 = vector.shape_cast %10 : vector<1x168x96xbf16> to vector<168x96xbf16>
    %cst_11 = arith.constant dense<0.000000e+00> : vector<168x224xf32>
    %12 = tpu.matmul %11, %9, %cst_11 {dimension_numbers = #tpu.dot_dimension_numbers<[1], [0], [0], [1], [0, 0, 1, 1], [], []>} : vector<168x96xbf16>, vector<96x224xbf16>, vector<168x224xf32> -> vector<168x224xf32>
    %c0_12 = arith.constant 0 : index
    %c0_13 = arith.constant 0 : index
    %13 = vector.load %arg13[%c0_12, %c0_13] : memref<168x224xf32, #tpu.memory_space<vmem>>, vector<168x224xf32>
    %14 = arith.addf %13, %12 : vector<168x224xf32>
    %c0_14 = arith.constant 0 : index
    %c0_15 = arith.constant 0 : index
    %15 = vector.load %arg13[%c0_14, %c0_15] : memref<168x224xf32, #tpu.memory_space<vmem>>, vector<168x224xf32>
    tpu.vector_store %arg13[%c0_14, %c0_15], %14 {strides = array<i32>} : memref<168x224xf32, #tpu.memory_space<vmem>>, vector<168x224xf32>,
    %c0_16 = arith.constant 0 : index
    %c0_17 = arith.constant 0 : index
    %c16 = arith.constant 16 : index
    %16 = vector.load %arg1[%c0_16, %c0_17, %c16] : memref<1x96x256xf32, #tpu.memory_space<vmem>>, vector<1x96x224xf32>
    %17 = vector.shape_cast %16 : vector<1x96x224xf32> to vector<96x224xf32>
    %18 = arith.truncf %17 : vector<96x224xf32> to vector<96x224xbf16>
    %c2 = arith.constant 2 : index
    %c0_18 = arith.constant 0 : index
    %c0_19 = arith.constant 0 : index
    %19 = vector.load %arg2[%c2, %c0_18, %c0_19] : memref<5x168x96xbf16, #tpu.memory_space<vmem>>, vector<1x168x96xbf16>
    %20 = vector.shape_cast %19 : vector<1x168x96xbf16> to vector<168x96xbf16>
    %cst_20 = arith.constant dense<0.000000e+00> : vector<168x224xf32>
    %21 = tpu.matmul %20, %18, %cst_20 {dimension_numbers = #tpu.dot_dimension_numbers<[1], [0], [0], [1], [0, 0, 1, 1], [], []>} : vector<168x96xbf16>, vector<96x224xbf16>, vector<168x224xf32> -> vector<168x224xf32>
    %c0_21 = arith.constant 0 : index
    %c0_22 = arith.constant 0 : index
    %22 = vector.load %arg13[%c0_21, %c0_22] : memref<168x224xf32, #tpu.memory_space<vmem>>, vector<168x224xf32>
    %23 = arith.addf %22, %21 : vector<168x224xf32>
    %c0_23 = arith.constant 0 : index
    %c0_24 = arith.constant 0 : index
    %24 = vector.load %arg13[%c0_23, %c0_24] : memref<168x224xf32, #tpu.memory_space<vmem>>, vector<168x224xf32>
    tpu.vector_store %arg13[%c0_23, %c0_24], %23 {strides = array<i32>} : memref<168x224xf32, #tpu.memory_space<vmem>>, vector<168x224xf32>,
    %c0_25 = arith.constant 0 : index
    %c0_26 = arith.constant 0 : index
    %c24 = arith.constant 24 : index
    %25 = vector.load %arg1[%c0_25, %c0_26, %c24] : memref<1x96x256xf32, #tpu.memory_space<vmem>>, vector<1x96x224xf32>
    %26 = vector.shape_cast %25 : vector<1x96x224xf32> to vector<96x224xf32>
    %27 = arith.truncf %26 : vector<96x224xf32> to vector<96x224xbf16>
    %c3 = arith.constant 3 : index
    %c0_27 = arith.constant 0 : index
    %c0_28 = arith.constant 0 : index
    %28 = vector.load %arg2[%c3, %c0_27, %c0_28] : memref<5x168x96xbf16, #tpu.memory_space<vmem>>, vector<1x168x96xbf16>
    %29 = vector.shape_cast %28 : vector<1x168x96xbf16> to vector<168x96xbf16>
    %cst_29 = arith.constant dense<0.000000e+00> : vector<168x224xf32>
    %30 = tpu.matmul %29, %27, %cst_29 {dimension_numbers = #tpu.dot_dimension_numbers<[1], [0], [0], [1], [0, 0, 1, 1], [], []>} : vector<168x96xbf16>, vector<96x224xbf16>, vector<168x224xf32> -> vector<168x224xf32>
    %c0_30 = arith.constant 0 : index
    %c0_31 = arith.constant 0 : index
    %31 = vector.load %arg13[%c0_30, %c0_31] : memref<168x224xf32, #tpu.memory_space<vmem>>, vector<168x224xf32>
    %32 = arith.addf %31, %30 : vector<168x224xf32>
    %c0_32 = arith.constant 0 : index
    %c0_33 = arith.constant 0 : index
    %33 = vector.load %arg13[%c0_32, %c0_33] : memref<168x224xf32, #tpu.memory_space<vmem>>, vector<168x224xf32>
    tpu.vector_store %arg13[%c0_32, %c0_33], %32 {strides = array<i32>} : memref<168x224xf32, #tpu.memory_space<vmem>>, vector<168x224xf32>,
    %c0_34 = arith.constant 0 : index
    %c0_35 = arith.constant 0 : index
    %c32 = arith.constant 32 : index
    %34 = vector.load %arg1[%c0_34, %c0_35, %c32] : memref<1x96x256xf32, #tpu.memory_space<vmem>>, vector<1x96x224xf32>
    %35 = vector.shape_cast %34 : vector<1x96x224xf32> to vector<96x224xf32>
    %36 = arith.truncf %35 : vector<96x224xf32> to vector<96x224xbf16>
    %c4 = arith.constant 4 : index
    %c0_36 = arith.constant 0 : index
    %c0_37 = arith.constant 0 : index
    %37 = vector.load %arg2[%c4, %c0_36, %c0_37] : memref<5x168x96xbf16, #tpu.memory_space<vmem>>, vector<1x168x96xbf16>
    %38 = vector.shape_cast %37 : vector<1x168x96xbf16> to vector<168x96xbf16>
    %cst_38 = arith.constant dense<0.000000e+00> : vector<168x224xf32>
    %39 = tpu.matmul %38, %36, %cst_38 {dimension_numbers = #tpu.dot_dimension_numbers<[1], [0], [0], [1], [0, 0, 1, 1], [], []>} : vector<168x96xbf16>, vector<96x224xbf16>, vector<168x224xf32> -> vector<168x224xf32>
    %c0_39 = arith.constant 0 : index
    %c0_40 = arith.constant 0 : index
    %40 = vector.load %arg13[%c0_39, %c0_40] : memref<168x224xf32, #tpu.memory_space<vmem>>, vector<168x224xf32>
    %41 = arith.addf %40, %39 : vector<168x224xf32>
    %c0_41 = arith.constant 0 : index
    %c0_42 = arith.constant 0 : index
    %42 = vector.load %arg13[%c0_41, %c0_42] : memref<168x224xf32, #tpu.memory_space<vmem>>, vector<168x224xf32>
    tpu.vector_store %arg13[%c0_41, %c0_42], %41 {strides = array<i32>} : memref<168x224xf32, #tpu.memory_space<vmem>>, vector<168x224xf32>,
    %c0_43 = arith.constant 0 : index
    %c0_44 = arith.constant 0 : index
    %43 = vector.load %arg13[%c0_43, %c0_44] : memref<168x224xf32, #tpu.memory_space<vmem>>, vector<168x224xf32>
    %c0_45 = arith.constant 0 : index
    %c0_46 = arith.constant 0 : index
    %44 = vector.load %arg3[%c0_45, %c0_46] : memref<168x1xf32, #tpu.memory_space<vmem>>, vector<168x1xf32>
    %45 = vector.broadcast %44 : vector<168x1xf32> to vector<168x224xf32>
    %46 = arith.addf %43, %45 : vector<168x224xf32>
    %cst_47 = arith.constant 0.000000e+00 : f32
    %47 = vector.broadcast %cst_47 : f32 to vector<168x224xf32>
    %48 = arith.maximumf %46, %47 : vector<168x224xf32>
    %c0_48 = arith.constant 0 : index
    %c0_49 = arith.constant 0 : index
    %49 = vector.load %arg13[%c0_48, %c0_49] : memref<168x224xf32, #tpu.memory_space<vmem>>, vector<168x224xf32>
    tpu.vector_store %arg13[%c0_48, %c0_49], %48 {strides = array<i32>} : memref<168x224xf32, #tpu.memory_space<vmem>>, vector<168x224xf32>,
    %c0_50 = arith.constant 0 : index
    %c0_51 = arith.constant 0 : index
    %50 = vector.load %arg13[%c0_50, %c0_51] : memref<168x224xf32, #tpu.memory_space<vmem>>, vector<167x216xf32>
    %c1_52 = arith.constant 1 : index
    %c0_53 = arith.constant 0 : index
    %51 = vector.load %arg13[%c1_52, %c0_53] : memref<168x224xf32, #tpu.memory_space<vmem>>, vector<167x216xf32>
    %52 = arith.maximumf %50, %51 : vector<167x216xf32>
    %c0_54 = arith.constant 0 : index
    %c8_55 = arith.constant 8 : index
    %53 = vector.load %arg13[%c0_54, %c8_55] : memref<168x224xf32, #tpu.memory_space<vmem>>, vector<167x216xf32>
    %c1_56 = arith.constant 1 : index
    %c8_57 = arith.constant 8 : index
    %54 = vector.load %arg13[%c1_56, %c8_57] : memref<168x224xf32, #tpu.memory_space<vmem>>, vector<167x216xf32>
    %55 = arith.maximumf %53, %54 : vector<167x216xf32>
    %56 = arith.maximumf %52, %55 : vector<167x216xf32>
    %c0_58 = arith.constant 0 : index
    %c0_59 = arith.constant 0 : index
    %57 = vector.load %arg14[%c0_58, %c0_59] : memref<167x216xf32, #tpu.memory_space<vmem>>, vector<167x216xf32>
    tpu.vector_store %arg14[%c0_58, %c0_59], %56 {strides = array<i32>} : memref<167x216xf32, #tpu.memory_space<vmem>>, vector<167x216xf32>,
    %c0_60 = arith.constant 0 : index
    %c0_61 = arith.constant 0 : index
    %58 = vector.load %arg14[%c0_60, %c0_61] : memref<167x216xf32, #tpu.memory_space<vmem>>, vector<167x152xf32>
    %59 = arith.truncf %58 : vector<167x152xf32> to vector<167x152xbf16>
    %c0_62 = arith.constant 0 : index
    %c0_63 = arith.constant 0 : index
    %c0_64 = arith.constant 0 : index
    %60 = vector.load %arg4[%c0_62, %c0_63, %c0_64] : memref<5x160x167xbf16, #tpu.memory_space<vmem>>, vector<1x160x167xbf16>
    %61 = vector.shape_cast %60 : vector<1x160x167xbf16> to vector<160x167xbf16>
    %cst_65 = arith.constant dense<0.000000e+00> : vector<160x152xf32>
    %62 = tpu.matmul %61, %59, %cst_65 {dimension_numbers = #tpu.dot_dimension_numbers<[1], [0], [0], [1], [0, 0, 1, 1], [], []>} : vector<160x167xbf16>, vector<167x152xbf16>, vector<160x152xf32> -> vector<160x152xf32>
    %c0_66 = arith.constant 0 : index
    %c0_67 = arith.constant 0 : index
    %63 = vector.load %arg15[%c0_66, %c0_67] : memref<160x152xf32, #tpu.memory_space<vmem>>, vector<160x152xf32>
    tpu.vector_store %arg15[%c0_66, %c0_67], %62 {strides = array<i32>} : memref<160x152xf32, #tpu.memory_space<vmem>>, vector<160x152xf32>,
    %c0_68 = arith.constant 0 : index
    %c16_69 = arith.constant 16 : index
    %64 = vector.load %arg14[%c0_68, %c16_69] : memref<167x216xf32, #tpu.memory_space<vmem>>, vector<167x152xf32>
    %65 = arith.truncf %64 : vector<167x152xf32> to vector<167x152xbf16>
    %c1_70 = arith.constant 1 : index
    %c0_71 = arith.constant 0 : index
    %c0_72 = arith.constant 0 : index
    %66 = vector.load %arg4[%c1_70, %c0_71, %c0_72] : memref<5x160x167xbf16, #tpu.memory_space<vmem>>, vector<1x160x167xbf16>
    %67 = vector.shape_cast %66 : vector<1x160x167xbf16> to vector<160x167xbf16>
    %cst_73 = arith.constant dense<0.000000e+00> : vector<160x152xf32>
    %68 = tpu.matmul %67, %65, %cst_73 {dimension_numbers = #tpu.dot_dimension_numbers<[1], [0], [0], [1], [0, 0, 1, 1], [], []>} : vector<160x167xbf16>, vector<167x152xbf16>, vector<160x152xf32> -> vector<160x152xf32>
    %c0_74 = arith.constant 0 : index
    %c0_75 = arith.constant 0 : index
    %69 = vector.load %arg15[%c0_74, %c0_75] : memref<160x152xf32, #tpu.memory_space<vmem>>, vector<160x152xf32>
    %70 = arith.addf %69, %68 : vector<160x152xf32>
    %c0_76 = arith.constant 0 : index
    %c0_77 = arith.constant 0 : index
    %71 = vector.load %arg15[%c0_76, %c0_77] : memref<160x152xf32, #tpu.memory_space<vmem>>, vector<160x152xf32>
    tpu.vector_store %arg15[%c0_76, %c0_77], %70 {strides = array<i32>} : memref<160x152xf32, #tpu.memory_space<vmem>>, vector<160x152xf32>,
    %c0_78 = arith.constant 0 : index
    %c32_79 = arith.constant 32 : index
    %72 = vector.load %arg14[%c0_78, %c32_79] : memref<167x216xf32, #tpu.memory_space<vmem>>, vector<167x152xf32>
    %73 = arith.truncf %72 : vector<167x152xf32> to vector<167x152xbf16>
    %c2_80 = arith.constant 2 : index
    %c0_81 = arith.constant 0 : index
    %c0_82 = arith.constant 0 : index
    %74 = vector.load %arg4[%c2_80, %c0_81, %c0_82] : memref<5x160x167xbf16, #tpu.memory_space<vmem>>, vector<1x160x167xbf16>
    %75 = vector.shape_cast %74 : vector<1x160x167xbf16> to vector<160x167xbf16>
    %cst_83 = arith.constant dense<0.000000e+00> : vector<160x152xf32>
    %76 = tpu.matmul %75, %73, %cst_83 {dimension_numbers = #tpu.dot_dimension_numbers<[1], [0], [0], [1], [0, 0, 1, 1], [], []>} : vector<160x167xbf16>, vector<167x152xbf16>, vector<160x152xf32> -> vector<160x152xf32>
    %c0_84 = arith.constant 0 : index
    %c0_85 = arith.constant 0 : index
    %77 = vector.load %arg15[%c0_84, %c0_85] : memref<160x152xf32, #tpu.memory_space<vmem>>, vector<160x152xf32>
    %78 = arith.addf %77, %76 : vector<160x152xf32>
    %c0_86 = arith.constant 0 : index
    %c0_87 = arith.constant 0 : index
    %79 = vector.load %arg15[%c0_86, %c0_87] : memref<160x152xf32, #tpu.memory_space<vmem>>, vector<160x152xf32>
    tpu.vector_store %arg15[%c0_86, %c0_87], %78 {strides = array<i32>} : memref<160x152xf32, #tpu.memory_space<vmem>>, vector<160x152xf32>,
    %c0_88 = arith.constant 0 : index
    %c48 = arith.constant 48 : index
    %80 = vector.load %arg14[%c0_88, %c48] : memref<167x216xf32, #tpu.memory_space<vmem>>, vector<167x152xf32>
    %81 = arith.truncf %80 : vector<167x152xf32> to vector<167x152xbf16>
    %c3_89 = arith.constant 3 : index
    %c0_90 = arith.constant 0 : index
    %c0_91 = arith.constant 0 : index
    %82 = vector.load %arg4[%c3_89, %c0_90, %c0_91] : memref<5x160x167xbf16, #tpu.memory_space<vmem>>, vector<1x160x167xbf16>
    %83 = vector.shape_cast %82 : vector<1x160x167xbf16> to vector<160x167xbf16>
    %cst_92 = arith.constant dense<0.000000e+00> : vector<160x152xf32>
    %84 = tpu.matmul %83, %81, %cst_92 {dimension_numbers = #tpu.dot_dimension_numbers<[1], [0], [0], [1], [0, 0, 1, 1], [], []>} : vector<160x167xbf16>, vector<167x152xbf16>, vector<160x152xf32> -> vector<160x152xf32>
    %c0_93 = arith.constant 0 : index
    %c0_94 = arith.constant 0 : index
    %85 = vector.load %arg15[%c0_93, %c0_94] : memref<160x152xf32, #tpu.memory_space<vmem>>, vector<160x152xf32>
    %86 = arith.addf %85, %84 : vector<160x152xf32>
    %c0_95 = arith.constant 0 : index
    %c0_96 = arith.constant 0 : index
    %87 = vector.load %arg15[%c0_95, %c0_96] : memref<160x152xf32, #tpu.memory_space<vmem>>, vector<160x152xf32>
    tpu.vector_store %arg15[%c0_95, %c0_96], %86 {strides = array<i32>} : memref<160x152xf32, #tpu.memory_space<vmem>>, vector<160x152xf32>,
    %c0_97 = arith.constant 0 : index
    %c64 = arith.constant 64 : index
    %88 = vector.load %arg14[%c0_97, %c64] : memref<167x216xf32, #tpu.memory_space<vmem>>, vector<167x152xf32>
    %89 = arith.truncf %88 : vector<167x152xf32> to vector<167x152xbf16>
    %c4_98 = arith.constant 4 : index
    %c0_99 = arith.constant 0 : index
    %c0_100 = arith.constant 0 : index
    %90 = vector.load %arg4[%c4_98, %c0_99, %c0_100] : memref<5x160x167xbf16, #tpu.memory_space<vmem>>, vector<1x160x167xbf16>
    %91 = vector.shape_cast %90 : vector<1x160x167xbf16> to vector<160x167xbf16>
    %cst_101 = arith.constant dense<0.000000e+00> : vector<160x152xf32>
    %92 = tpu.matmul %91, %89, %cst_101 {dimension_numbers = #tpu.dot_dimension_numbers<[1], [0], [0], [1], [0, 0, 1, 1], [], []>} : vector<160x167xbf16>, vector<167x152xbf16>, vector<160x152xf32> -> vector<160x152xf32>
    %c0_102 = arith.constant 0 : index
    %c0_103 = arith.constant 0 : index
    %93 = vector.load %arg15[%c0_102, %c0_103] : memref<160x152xf32, #tpu.memory_space<vmem>>, vector<160x152xf32>
    %94 = arith.addf %93, %92 : vector<160x152xf32>
    %c0_104 = arith.constant 0 : index
    %c0_105 = arith.constant 0 : index
    %95 = vector.load %arg15[%c0_104, %c0_105] : memref<160x152xf32, #tpu.memory_space<vmem>>, vector<160x152xf32>
    tpu.vector_store %arg15[%c0_104, %c0_105], %94 {strides = array<i32>} : memref<160x152xf32, #tpu.memory_space<vmem>>, vector<160x152xf32>,
    %c0_106 = arith.constant 0 : index
    %c0_107 = arith.constant 0 : index
    %96 = vector.load %arg15[%c0_106, %c0_107] : memref<160x152xf32, #tpu.memory_space<vmem>>, vector<160x152xf32>
    %c0_108 = arith.constant 0 : index
    %c0_109 = arith.constant 0 : index
    %97 = vector.load %arg5[%c0_108, %c0_109] : memref<160x1xf32, #tpu.memory_space<vmem>>, vector<160x1xf32>
    %98 = vector.broadcast %97 : vector<160x1xf32> to vector<160x152xf32>
    %99 = arith.addf %96, %98 : vector<160x152xf32>
    %cst_110 = arith.constant 0.000000e+00 : f32
    %100 = vector.broadcast %cst_110 : f32 to vector<160x152xf32>
    %101 = arith.maximumf %99, %100 : vector<160x152xf32>
    %c0_111 = arith.constant 0 : index
    %c0_112 = arith.constant 0 : index
    %102 = vector.load %arg15[%c0_111, %c0_112] : memref<160x152xf32, #tpu.memory_space<vmem>>, vector<160x152xf32>
    tpu.vector_store %arg15[%c0_111, %c0_112], %101 {strides = array<i32>} : memref<160x152xf32, #tpu.memory_space<vmem>>, vector<160x152xf32>,
    %c0_113 = arith.constant 0 : index
    %c0_114 = arith.constant 0 : index
    %103 = vector.load %arg15[%c0_113, %c0_114] : memref<160x152xf32, #tpu.memory_space<vmem>>, vector<159x136xf32>
    %c1_115 = arith.constant 1 : index
    %c0_116 = arith.constant 0 : index
    %104 = vector.load %arg15[%c1_115, %c0_116] : memref<160x152xf32, #tpu.memory_space<vmem>>, vector<159x136xf32>
    %105 = arith.maximumf %103, %104 : vector<159x136xf32>
    %c0_117 = arith.constant 0 : index
    %c16_118 = arith.constant 16 : index
    %106 = vector.load %arg15[%c0_117, %c16_118] : memref<160x152xf32, #tpu.memory_space<vmem>>, vector<159x136xf32>
    %c1_119 = arith.constant 1 : index
    %c16_120 = arith.constant 16 : index
    %107 = vector.load %arg15[%c1_119, %c16_120] : memref<160x152xf32, #tpu.memory_space<vmem>>, vector<159x136xf32>
    %108 = arith.maximumf %106, %107 : vector<159x136xf32>
    %109 = arith.maximumf %105, %108 : vector<159x136xf32>
    %c0_121 = arith.constant 0 : index
    %c0_122 = arith.constant 0 : index
    %110 = vector.load %arg16[%c0_121, %c0_122] : memref<159x136xf32, #tpu.memory_space<vmem>>, vector<159x136xf32>
    tpu.vector_store %arg16[%c0_121, %c0_122], %109 {strides = array<i32>} : memref<159x136xf32, #tpu.memory_space<vmem>>, vector<159x136xf32>,
    %c0_123 = arith.constant 0 : index
    %c0_124 = arith.constant 0 : index
    %111 = vector.load %arg16[%c0_123, %c0_124] : memref<159x136xf32, #tpu.memory_space<vmem>>, vector<159x8xf32>
    %112 = arith.truncf %111 : vector<159x8xf32> to vector<159x8xbf16>
    %c0_125 = arith.constant 0 : index
    %c0_126 = arith.constant 0 : index
    %c0_127 = arith.constant 0 : index
    %113 = vector.load %arg6[%c0_125, %c0_126, %c0_127] : memref<5x200x159xbf16, #tpu.memory_space<vmem>>, vector<1x200x159xbf16>
    %114 = vector.shape_cast %113 : vector<1x200x159xbf16> to vector<200x159xbf16>
    %cst_128 = arith.constant dense<0.000000e+00> : vector<200x8xf32>
    %115 = tpu.matmul %114, %112, %cst_128 {dimension_numbers = #tpu.dot_dimension_numbers<[1], [0], [0], [1], [0, 0, 1, 1], [], []>} : vector<200x159xbf16>, vector<159x8xbf16>, vector<200x8xf32> -> vector<200x8xf32>
    %c0_129 = arith.constant 0 : index
    %c32_130 = arith.constant 32 : index
    %116 = vector.load %arg16[%c0_129, %c32_130] : memref<159x136xf32, #tpu.memory_space<vmem>>, vector<159x8xf32>
    %117 = arith.truncf %116 : vector<159x8xf32> to vector<159x8xbf16>
    %c1_131 = arith.constant 1 : index
    %c0_132 = arith.constant 0 : index
    %c0_133 = arith.constant 0 : index
    %118 = vector.load %arg6[%c1_131, %c0_132, %c0_133] : memref<5x200x159xbf16, #tpu.memory_space<vmem>>, vector<1x200x159xbf16>
    %119 = vector.shape_cast %118 : vector<1x200x159xbf16> to vector<200x159xbf16>
    %cst_134 = arith.constant dense<0.000000e+00> : vector<200x8xf32>
    %120 = tpu.matmul %119, %117, %cst_134 {dimension_numbers = #tpu.dot_dimension_numbers<[1], [0], [0], [1], [0, 0, 1, 1], [], []>} : vector<200x159xbf16>, vector<159x8xbf16>, vector<200x8xf32> -> vector<200x8xf32>
    %121 = arith.addf %115, %120 : vector<200x8xf32>
    %c0_135 = arith.constant 0 : index
    %c64_136 = arith.constant 64 : index
    %122 = vector.load %arg16[%c0_135, %c64_136] : memref<159x136xf32, #tpu.memory_space<vmem>>, vector<159x8xf32>
    %123 = arith.truncf %122 : vector<159x8xf32> to vector<159x8xbf16>
    %c2_137 = arith.constant 2 : index
    %c0_138 = arith.constant 0 : index
    %c0_139 = arith.constant 0 : index
    %124 = vector.load %arg6[%c2_137, %c0_138, %c0_139] : memref<5x200x159xbf16, #tpu.memory_space<vmem>>, vector<1x200x159xbf16>
    %125 = vector.shape_cast %124 : vector<1x200x159xbf16> to vector<200x159xbf16>
    %cst_140 = arith.constant dense<0.000000e+00> : vector<200x8xf32>
    %126 = tpu.matmul %125, %123, %cst_140 {dimension_numbers = #tpu.dot_dimension_numbers<[1], [0], [0], [1], [0, 0, 1, 1], [], []>} : vector<200x159xbf16>, vector<159x8xbf16>, vector<200x8xf32> -> vector<200x8xf32>
    %127 = arith.addf %121, %126 : vector<200x8xf32>
    %c0_141 = arith.constant 0 : index
    %c96 = arith.constant 96 : index
    %128 = vector.load %arg16[%c0_141, %c96] : memref<159x136xf32, #tpu.memory_space<vmem>>, vector<159x8xf32>
    %129 = arith.truncf %128 : vector<159x8xf32> to vector<159x8xbf16>
    %c3_142 = arith.constant 3 : index
    %c0_143 = arith.constant 0 : index
    %c0_144 = arith.constant 0 : index
    %130 = vector.load %arg6[%c3_142, %c0_143, %c0_144] : memref<5x200x159xbf16, #tpu.memory_space<vmem>>, vector<1x200x159xbf16>
    %131 = vector.shape_cast %130 : vector<1x200x159xbf16> to vector<200x159xbf16>
    %cst_145 = arith.constant dense<0.000000e+00> : vector<200x8xf32>
    %132 = tpu.matmul %131, %129, %cst_145 {dimension_numbers = #tpu.dot_dimension_numbers<[1], [0], [0], [1], [0, 0, 1, 1], [], []>} : vector<200x159xbf16>, vector<159x8xbf16>, vector<200x8xf32> -> vector<200x8xf32>
    %133 = arith.addf %127, %132 : vector<200x8xf32>
    %c0_146 = arith.constant 0 : index
    %c128 = arith.constant 128 : index
    %134 = vector.load %arg16[%c0_146, %c128] : memref<159x136xf32, #tpu.memory_space<vmem>>, vector<159x8xf32>
    %135 = arith.truncf %134 : vector<159x8xf32> to vector<159x8xbf16>
    %c4_147 = arith.constant 4 : index
    %c0_148 = arith.constant 0 : index
    %c0_149 = arith.constant 0 : index
    %136 = vector.load %arg6[%c4_147, %c0_148, %c0_149] : memref<5x200x159xbf16, #tpu.memory_space<vmem>>, vector<1x200x159xbf16>
    %137 = vector.shape_cast %136 : vector<1x200x159xbf16> to vector<200x159xbf16>
    %cst_150 = arith.constant dense<0.000000e+00> : vector<200x8xf32>
    %138 = tpu.matmul %137, %135, %cst_150 {dimension_numbers = #tpu.dot_dimension_numbers<[1], [0], [0], [1], [0, 0, 1, 1], [], []>} : vector<200x159xbf16>, vector<159x8xbf16>, vector<200x8xf32> -> vector<200x8xf32>
    %139 = arith.addf %133, %138 : vector<200x8xf32>
    %c0_151 = arith.constant 0 : index
    %c0_152 = arith.constant 0 : index
    %140 = vector.load %arg7[%c0_151, %c0_152] : memref<200x1xf32, #tpu.memory_space<vmem>>, vector<200x1xf32>
    %141 = vector.broadcast %140 : vector<200x1xf32> to vector<200x8xf32>
    %142 = arith.addf %139, %141 : vector<200x8xf32>
    %cst_153 = arith.constant 0.000000e+00 : f32
    %143 = vector.broadcast %cst_153 : f32 to vector<200x8xf32>
    %144 = arith.maximumf %142, %143 : vector<200x8xf32>
    %c0_154 = arith.constant 0 : index
    %c0_155 = arith.constant 0 : index
    %145 = vector.load %arg8[%c0_154, %c0_155] : memref<200x200xbf16, #tpu.memory_space<vmem>>, vector<200x200xbf16>
    %146 = arith.truncf %144 : vector<200x8xf32> to vector<200x8xbf16>
    %cst_156 = arith.constant dense<0.000000e+00> : vector<200x8xf32>
    %147 = tpu.matmul %145, %146, %cst_156 {dimension_numbers = #tpu.dot_dimension_numbers<[1], [0], [0], [1], [0, 0, 1, 1], [], []>} : vector<200x200xbf16>, vector<200x8xbf16>, vector<200x8xf32> -> vector<200x8xf32>
    %c0_157 = arith.constant 0 : index
    %c0_158 = arith.constant 0 : index
    %148 = vector.load %arg9[%c0_157, %c0_158] : memref<200x1xf32, #tpu.memory_space<vmem>>, vector<200x1xf32>
    %149 = vector.broadcast %148 : vector<200x1xf32> to vector<200x8xf32>
    %150 = arith.addf %147, %149 : vector<200x8xf32>
    %cst_159 = arith.constant 0.000000e+00 : f32
    %151 = vector.broadcast %cst_159 : f32 to vector<200x8xf32>
    %152 = arith.maximumf %150, %151 : vector<200x8xf32>
    %c0_160 = arith.constant 0 : index
    %c0_161 = arith.constant 0 : index
    %153 = vector.load %arg10[%c0_160, %c0_161] : memref<5x200xbf16, #tpu.memory_space<vmem>>, vector<5x200xbf16>
    %154 = arith.truncf %152 : vector<200x8xf32> to vector<200x8xbf16>
    %cst_162 = arith.constant dense<0.000000e+00> : vector<5x8xf32>
    %155 = tpu.matmul %153, %154, %cst_162 {dimension_numbers = #tpu.dot_dimension_numbers<[1], [0], [0], [1], [0, 0, 1, 1], [], []>} : vector<5x200xbf16>, vector<200x8xbf16>, vector<5x8xf32> -> vector<5x8xf32>
    %c0_163 = arith.constant 0 : index
    %c0_164 = arith.constant 0 : index
    %156 = vector.load %arg11[%c0_163, %c0_164] : memref<5x1xf32, #tpu.memory_space<vmem>>, vector<5x1xf32>
    %157 = vector.broadcast %156 : vector<5x1xf32> to vector<5x8xf32>
    %158 = arith.addf %155, %157 : vector<5x8xf32>
    %c0_165 = arith.constant 0 : index
    %c0_166 = arith.constant 0 : index
    %c0_167 = arith.constant 0 : index
    %159 = vector.load %arg12[%c0_165, %c0_166, %c0_167] : memref<1x5x8xf32, #tpu.memory_space<vmem>>, vector<1x5x8xf32>
    %160 = vector.shape_cast %159 : vector<1x5x8xf32> to vector<5x8xf32>
    %161 = vector.shape_cast %158 : vector<5x8xf32> to vector<1x5x8xf32>
    tpu.vector_store %arg12[%c0_165, %c0_166, %c0_167], %161 {strides = array<i32>} : memref<1x5x8xf32, #tpu.memory_space<vmem>>, vector<1x5x8xf32>,
    return
  }
  func.func @transform_0(%arg0: i32) -> (i32, i32, i32) {
    %c0_i32 = arith.constant 0 : i32
    %c0_i32_0 = arith.constant 0 : i32
    %c0_i32_1 = arith.constant 0 : i32
    return %arg0, %c0_i32, %c0_i32_0 : i32, i32, i32
  }
  func.func @transform_1(%arg0: i32) -> (i32, i32, i32) {
    %c0_i32 = arith.constant 0 : i32
    %c0_i32_0 = arith.constant 0 : i32
    %c0_i32_1 = arith.constant 0 : i32
    %c0_i32_2 = arith.constant 0 : i32
    return %c0_i32, %c0_i32_0, %c0_i32_1 : i32, i32, i32
  }
  func.func @transform_2(%arg0: i32) -> (i32, i32) {
    %c0_i32 = arith.constant 0 : i32
    %c0_i32_0 = arith.constant 0 : i32
    %c0_i32_1 = arith.constant 0 : i32
    return %c0_i32, %c0_i32_0 : i32, i32
  }
  func.func @transform_3(%arg0: i32) -> (i32, i32, i32) {
    %c0_i32 = arith.constant 0 : i32
    %c0_i32_0 = arith.constant 0 : i32
    %c0_i32_1 = arith.constant 0 : i32
    %c0_i32_2 = arith.constant 0 : i32
    return %c0_i32, %c0_i32_0, %c0_i32_1 : i32, i32, i32
  }
  func.func @transform_4(%arg0: i32) -> (i32, i32) {
    %c0_i32 = arith.constant 0 : i32
    %c0_i32_0 = arith.constant 0 : i32
    %c0_i32_1 = arith.constant 0 : i32
    return %c0_i32, %c0_i32_0 : i32, i32
  }
  func.func @transform_5(%arg0: i32) -> (i32, i32, i32) {
    %c0_i32 = arith.constant 0 : i32
    %c0_i32_0 = arith.constant 0 : i32
    %c0_i32_1 = arith.constant 0 : i32
    %c0_i32_2 = arith.constant 0 : i32
    return %c0_i32, %c0_i32_0, %c0_i32_1 : i32, i32, i32
  }
  func.func @transform_6(%arg0: i32) -> (i32, i32) {
    %c0_i32 = arith.constant 0 : i32
    %c0_i32_0 = arith.constant 0 : i32
    %c0_i32_1 = arith.constant 0 : i32
    return %c0_i32, %c0_i32_0 : i32, i32
  }
  func.func @transform_7(%arg0: i32) -> (i32, i32) {
    %c0_i32 = arith.constant 0 : i32
    %c0_i32_0 = arith.constant 0 : i32
    %c0_i32_1 = arith.constant 0 : i32
    return %c0_i32, %c0_i32_0 : i32, i32
  }
  func.func @transform_8(%arg0: i32) -> (i32, i32) {
    %c0_i32 = arith.constant 0 : i32
    %c0_i32_0 = arith.constant 0 : i32
    %c0_i32_1 = arith.constant 0 : i32
    return %c0_i32, %c0_i32_0 : i32, i32
  }
  func.func @transform_9(%arg0: i32) -> (i32, i32) {
    %c0_i32 = arith.constant 0 : i32
    %c0_i32_0 = arith.constant 0 : i32
    %c0_i32_1 = arith.constant 0 : i32
    return %c0_i32, %c0_i32_0 : i32, i32
  }
  func.func @transform_10(%arg0: i32) -> (i32, i32) {
    %c0_i32 = arith.constant 0 : i32
    %c0_i32_0 = arith.constant 0 : i32
    %c0_i32_1 = arith.constant 0 : i32
    return %c0_i32, %c0_i32_0 : i32, i32
  }
  func.func @transform_11(%arg0: i32) -> (i32, i32, i32) {
    %c0_i32 = arith.constant 0 : i32
    %c0_i32_0 = arith.constant 0 : i32
    %c0_i32_1 = arith.constant 0 : i32
    return %arg0, %c0_i32, %c0_i32_0 : i32, i32, i32
  }
}

</mosaic_0001>

<llo_original>
// kernel: single_head_forward.1
$region0: #{single_head_forward.1}
  #allocation0 [shape = 'u32[]', space=smem, size = 0x4, offset = 0x4, fixed_abs, tag = 'smem constant byte address 0x4 - core index']
  #allocation1 [shape = 'u32[144,128]{1,0:T(1,128)}', space=vmem, size = 0x12000, scoped, tag = 'internal scratch']
  #allocation2 [shape = 'f32[168,224]{1,0:T(8,128)}', space=vmem, size = 0x2a000, scoped, tag = 'scratch operand']
  #allocation3 [shape = 'f32[167,216]{1,0:T(8,128)}', space=vmem, size = 0x2a000, scoped, tag = 'scratch operand']
  #allocation4 [shape = 'f32[160,152]{1,0:T(8,128)}', space=vmem, size = 0x28000, scoped, tag = 'scratch operand']
  #allocation5 [shape = 'f32[159,136]{1,0:T(8,128)}', space=vmem, size = 0x28000, scoped, tag = 'scratch operand']
  %s0 = inlined_call_operand.vmem [shape: f32[1,96,256], index: 0, kind: input, shape index: {}]
  %s1 = inlined_call_operand.vmem [shape: bf16[5,168,96], index: 1, kind: input, shape index: {}]
  %s2 = inlined_call_operand.vmem [shape: f32[168,1], index: 2, kind: input, shape index: {}]
  %s3 = inlined_call_operand.vmem [shape: bf16[5,160,167], index: 3, kind: input, shape index: {}]
  %s4 = inlined_call_operand.vmem [shape: f32[160,1], index: 4, kind: input, shape index: {}]
  %s5 = inlined_call_operand.vmem [shape: bf16[5,200,159], index: 5, kind: input, shape index: {}]
  %s6 = inlined_call_operand.vmem [shape: f32[200,1], index: 6, kind: input, shape index: {}]
  %s7 = inlined_call_operand.vmem [shape: bf16[200,200], index: 7, kind: input, shape index: {}]
  %s8 = inlined_call_operand.vmem [shape: f32[200,1], index: 8, kind: input, shape index: {}]
  %s9 = inlined_call_operand.vmem [shape: bf16[5,200], index: 9, kind: input, shape index: {}]
  %s10 = inlined_call_operand.vmem [shape: f32[5,1], index: 10, kind: input, shape index: {}]
  %s11 = inlined_call_operand.vmem [shape: f32[1,5,8], index: 11, kind: output, shape index: {}]
  %s12 = sld [smem:[#allocation0]]
  $region54: #{single_head_forward.1} parent=0
    _
  %s14 = ssub.s32 1, %s12
  %s15 = scalar_select 0, %s14, %s12
  // Predicated region
  $region2: #{single_head_forward.1} parent=0 // pred_check
    _
  $region3: #{single_head_forward.1} parent=0 // pred_check_branch
    %17 = sbr.rel (0) target = $region5
  $region4: #{single_head_forward.1} parent=0 // pred_region
    _
  $region5: #{single_head_forward.1} parent=0 // pred_fallthru
    _
  // Predicated region
  $region6: #{single_head_forward.1} parent=0 // pred_check
    _
  $region7: #{single_head_forward.1} parent=0 // pred_check_branch
    %19 = sbr.rel (0) target = $region9
  $region8: #{single_head_forward.1} parent=0 // pred_region
    _
  $region9: #{single_head_forward.1} parent=0 // pred_fallthru
    _
  // Predicated region
  $region10: #{single_head_forward.1} parent=0 // pred_check
    _
  $region11: #{single_head_forward.1} parent=0 // pred_check_branch
    %21 = sbr.rel (0) target = $region13
  $region12: #{single_head_forward.1} parent=0 // pred_region
    _
  $region13: #{single_head_forward.1} parent=0 // pred_fallthru
    _
  // Predicated region
  $region14: #{single_head_forward.1} parent=0 // pred_check
    _
  $region15: #{single_head_forward.1} parent=0 // pred_check_branch
    %23 = sbr.rel (0) target = $region17
  $region16: #{single_head_forward.1} parent=0 // pred_region
    _
  $region17: #{single_head_forward.1} parent=0 // pred_fallthru
    _
  // Predicated region
  $region18: #{single_head_forward.1} parent=0 // pred_check
    _
  $region19: #{single_head_forward.1} parent=0 // pred_check_branch
    %25 = sbr.rel (0) target = $region21
  $region20: #{single_head_forward.1} parent=0 // pred_region
    _
  $region21: #{single_head_forward.1} parent=0 // pred_fallthru
    _
  // Predicated region
  $region22: #{single_head_forward.1} parent=0 // pred_check
    _
  $region23: #{single_head_forward.1} parent=0 // pred_check_branch
    %27 = sbr.rel (0) target = $region25
  $region24: #{single_head_forward.1} parent=0 // pred_region
    _
  $region25: #{single_head_forward.1} parent=0 // pred_fallthru
    _
  // Predicated region
  $region26: #{single_head_forward.1} parent=0 // pred_check
    _
  $region27: #{single_head_forward.1} parent=0 // pred_check_branch
    %29 = sbr.rel (0) target = $region29
  $region28: #{single_head_forward.1} parent=0 // pred_region
    _
  $region29: #{single_head_forward.1} parent=0 // pred_fallthru
    _
  // Predicated region
  $region30: #{single_head_forward.1} parent=0 // pred_check
    _
  $region31: #{single_head_forward.1} parent=0 // pred_check_branch
    %31 = sbr.rel (0) target = $region33
  $region32: #{single_head_forward.1} parent=0 // pred_region
    _
  $region33: #{single_head_forward.1} parent=0 // pred_fallthru
    _
  // Predicated region
  $region34: #{single_head_forward.1} parent=0 // pred_check
    _
  $region35: #{single_head_forward.1} parent=0 // pred_check_branch
    %33 = sbr.rel (0) target = $region37
  $region36: #{single_head_forward.1} parent=0 // pred_region
    _
  $region37: #{single_head_forward.1} parent=0 // pred_fallthru
    _
  // Predicated region
  $region38: #{single_head_forward.1} parent=0 // pred_check
    _
  $region39: #{single_head_forward.1} parent=0 // pred_check_branch
    %35 = sbr.rel (0) target = $region41
  $region40: #{single_head_forward.1} parent=0 // pred_region
    _
  $region41: #{single_head_forward.1} parent=0 // pred_fallthru
    _
  // Predicated region
  $region42: #{single_head_forward.1} parent=0 // pred_check
    _
  $region43: #{single_head_forward.1} parent=0 // pred_check_branch
    %37 = sbr.rel (0) target = $region45
  $region44: #{single_head_forward.1} parent=0 // pred_region
    _
  $region45: #{single_head_forward.1} parent=0 // pred_fallthru
    _
  %v39 = vld [vmem:[%s0] sm:$0xff]
  %v40 = vld [vmem:[%s0 + $0x8] sm:$0xff]
  %v41 = vld [vmem:[%s0 + $0x10] sm:$0xff]
  %v42 = vld [vmem:[%s0 + $0x18] sm:$0xff]
  %v43 = vld [vmem:[%s0 + $0x20] sm:$0xff]
  %v44 = vld [vmem:[%s0 + $0x28] sm:$0xff]
  %v45 = vld [vmem:[%s0 + $0x30] sm:$0xff]
  %v46 = vld [vmem:[%s0 + $0x38] sm:$0xff]
  %v47 = vld [vmem:[%s0 + $0x40] sm:$0xff]
  %v48 = vld [vmem:[%s0 + $0x48] sm:$0xff]
  %v49 = vld [vmem:[%s0 + $0x50] sm:$0xff]
  %v50 = vld [vmem:[%s0 + $0x58] sm:$0xff]
  %v51 = vld [vmem:[%s0 + $0x60] sm:$0xff]
  %v52 = vld [vmem:[%s0 + $0x68] sm:$0xff]
  %v53 = vld [vmem:[%s0 + $0x70] sm:$0xff]
  %v54 = vld [vmem:[%s0 + $0x78] sm:$0xff]
  %v55 = vld [vmem:[%s0 + $0x80] sm:$0xff]
  %v56 = vld [vmem:[%s0 + $0x88] sm:$0xff]
  %v57 = vld [vmem:[%s0 + $0x90] sm:$0xff]
  %v58 = vld [vmem:[%s0 + $0x98] sm:$0xff]
  %v59 = vld [vmem:[%s0 + $0xa0] sm:$0xff]
  %v60 = vld [vmem:[%s0 + $0xa8] sm:$0xff]
  %v61 = vld [vmem:[%s0 + $0xb0] sm:$0xff]
  %v62 = vld [vmem:[%s0 + $0xb8] sm:$0xff]
  %v63 = vpack.c.bf16 %v41, %v39
  %v64 = vpack.c.bf16 %v42, %v40
  %v65 = vpack.c.bf16 %v45, %v43
  %v66 = vpack.c.bf16 %v46, %v44
  %v67 = vpack.c.bf16 %v49, %v47
  %v68 = vpack.c.bf16 %v50, %v48
  %v69 = vpack.c.bf16 %v53, %v51
  %v70 = vpack.c.bf16 %v54, %v52
  %v71 = vpack.c.bf16 %v57, %v55
  %v72 = vpack.c.bf16 %v58, %v56
  %v73 = vpack.c.bf16 %v61, %v59
  %v74 = vpack.c.bf16 %v62, %v60
  %v75 = vld [vmem:[%s1] sm:$0xf]
  %v76 = vld [vmem:[%s1 + $0x4] sm:$0xf]
  %v77 = vld [vmem:[%s1 + $0x8] sm:$0xf]
  %v78 = vld [vmem:[%s1 + $0xc] sm:$0xf]
  %v79 = vld [vmem:[%s1 + $0x10] sm:$0xf]
  %v80 = vld [vmem:[%s1 + $0x14] sm:$0xf]
  %v81 = vld [vmem:[%s1 + $0x18] sm:$0xf]
  %v82 = vld [vmem:[%s1 + $0x1c] sm:$0xf]
  %v83 = vld [vmem:[%s1 + $0x20] sm:$0xf]
  %v84 = vld [vmem:[%s1 + $0x24] sm:$0xf]
  %v85 = vld [vmem:[%s1 + $0x28] sm:$0xf]
  %v86 = vld [vmem:[%s1 + $0x2c] sm:$0xf]
  %v87 = vld [vmem:[%s1 + $0x30] sm:$0xf]
  %v88 = vld [vmem:[%s1 + $0x34] sm:$0xf]
  %v89 = vld [vmem:[%s1 + $0x38] sm:$0xf]
  %v90 = vld [vmem:[%s1 + $0x3c] sm:$0xf]
  %v91 = vld [vmem:[%s1 + $0x40] sm:$0xf]
  %v92 = vld [vmem:[%s1 + $0x44] sm:$0xf]
  %v93 = vld [vmem:[%s1 + $0x48] sm:$0xf]
  %v94 = vld [vmem:[%s1 + $0x4c] sm:$0xf]
  %v95 = vld [vmem:[%s1 + $0x50] sm:$0xf]
  %v117 = vunpack.c.l.b16 %v75
  %v118 = vunpack.c.l.b16 %v76
  %v119 = vunpack.c.l.b16 %v77
  %v120 = vunpack.c.l.b16 %v78
  %v121 = vunpack.c.l.b16 %v79
  %v122 = vunpack.c.l.b16 %v80
  %v123 = vunpack.c.l.b16 %v81
  %v124 = vunpack.c.l.b16 %v82
  %v125 = vunpack.c.l.b16 %v83
  %v126 = vunpack.c.l.b16 %v84
  %v127 = vunpack.c.l.b16 %v85
  %v128 = vunpack.c.l.b16 %v86
  %v129 = vunpack.c.l.b16 %v87
  %v130 = vunpack.c.l.b16 %v88
  %v131 = vunpack.c.l.b16 %v89
  %v132 = vunpack.c.l.b16 %v90
  %v133 = vunpack.c.l.b16 %v91
  %v134 = vunpack.c.l.b16 %v92
  %v135 = vunpack.c.l.b16 %v93
  %v136 = vunpack.c.l.b16 %v94
  %v137 = vunpack.c.l.b16 %v95
  %v138 = vpack.c.b16 %v118, %v117
  %v139 = vpack.c.b16 %v120, %v119
  %v140 = vpack.c.b16 %v122, %v121
  %v141 = vpack.c.b16 %v124, %v123
  %v142 = vpack.c.b16 %v126, %v125
  %v143 = vpack.c.b16 %v128, %v127
  %v144 = vpack.c.b16 %v130, %v129
  %v145 = vpack.c.b16 %v132, %v131
  %v146 = vpack.c.b16 %v134, %v133
  %v147 = vpack.c.b16 %v136, %v135
  %v148 = vpack.c.b16 %v137, %v137
  %vm149 = vcmask 785408
  %v151 = vsel %vm149, %v138, 0
  %v154 = vsel %vm149, %v139, 0
  %v157 = vsel %vm149, %v140, 0
  %v160 = vsel %vm149, %v141, 0
  %v163 = vsel %vm149, %v142, 0
  %v166 = vsel %vm149, %v143, 0
  %v169 = vsel %vm149, %v144, 0
  %v172 = vsel %vm149, %v145, 0
  %v175 = vsel %vm149, %v146, 0
  %v178 = vsel %vm149, %v147, 0
  %v181 = vsel %vm149, %v148, 0
  %183 = vmatprep.subr.bf16.mxu0 0
  %184 = vmatpush1.bf16.msra.mxu0 0
  %185 = vmatprep.subr.bf16.mxu0 0
  %186 = vmatpush1.bf16.msra.mxu0 0
  %187 = vmatprep.subr.bf16.mxu0 %v74
  %188 = vmatpush1.bf16.msra.mxu0 %v73
  %189 = vmatprep.subr.bf16.mxu0 %v72
  %190 = vmatpush1.bf16.msra.mxu0 %v71
  %191 = vmatprep.subr.bf16.mxu0 %v70
  %192 = vmatpush1.bf16.msra.mxu0 %v69
  %193 = vmatprep.subr.bf16.mxu0 %v68
  %194 = vmatpush1.bf16.msra.mxu0 %v67
  %195 = vmatprep.subr.bf16.mxu0 %v66
  %196 = vmatpush1.bf16.msra.mxu0 %v65
  %197 = vmatprep.subr.bf16.mxu0 %v64
  %198 = vmatpush1.bf16.msra.mxu0 %v63
  %199 = vmatprep.subr.bf16.mxu0 0
  %200 = vmatpush2.bf16.msra.mxu0 0
  %201 = vmatprep.subr.bf16.mxu0 0
  %202 = vmatpush2.bf16.msra.mxu0 0
  %203 = vmatprep.subr.bf16.mxu0 0
  %204 = vmatpush2.bf16.msra.mxu0 0
  %205 = vmatprep.subr.bf16.mxu0 0
  %206 = vmatpush2.bf16.msra.mxu0 0
  %207 = vmatprep.subr.bf16.mxu0 0
  %208 = vmatpush2.bf16.msra.mxu0 0
  %209 = vmatprep.subr.bf16.mxu0 0
  %210 = vmatpush2.bf16.msra.mxu0 0
  %211 = vmatprep.subr.bf16.mxu0 0
  %212 = vmatpush2.bf16.msra.mxu0 0
  %213 = vmatprep.subr.bf16.mxu0 0
  %214 = vmatpush2.bf16.msra.mxu0 0
  %215 = vmatprep.mubr.bf16.mxu0 0
  %216 = vmatmul.mubr.bf16.gmra.mxu0 %v151
  %v217 = vpop.f32.mrf.mxu0
  %v218 = vadd.f32 0.0, %v217
  %v219 = vpop.f32.mrf.mxu0
  %v220 = vadd.f32 0.0, %v219
  %v221 = vpop.f32.mrf.mxu0
  %v222 = vadd.f32 0.0, %v221
  %v223 = vpop.f32.mrf.mxu0
  %v224 = vadd.f32 0.0, %v223
  %225 = vmatprep.mubr.bf16.mxu0 0
  %226 = vmatmul.mubr.bf16.gmra.mxu0 %v154
  %v227 = vpop.f32.mrf.mxu0
  %v228 = vadd.f32 0.0, %v227
  %v229 = vpop.f32.mrf.mxu0
  %v230 = vadd.f32 0.0, %v229
  %v231 = vpop.f32.mrf.mxu0
  %v232 = vadd.f32 0.0, %v231
  %v233 = vpop.f32.mrf.mxu0
  %v234 = vadd.f32 0.0, %v233
  %235 = vmatprep.mubr.bf16.mxu0 0
  %236 = vmatmul.mubr.bf16.gmra.mxu0 %v157
  %v237 = vpop.f32.mrf.mxu0
  %v238 = vadd.f32 0.0, %v237
  %v239 = vpop.f32.mrf.mxu0
  %v240 = vadd.f32 0.0, %v239
  %v241 = vpop.f32.mrf.mxu0
  %v242 = vadd.f32 0.0, %v241
  %v243 = vpop.f32.mrf.mxu0
  %v244 = vadd.f32 0.0, %v243
  %245 = vmatprep.mubr.bf16.mxu0 0
  %246 = vmatmul.mubr.bf16.gmra.mxu0 %v160
  %v247 = vpop.f32.mrf.mxu0
  %v248 = vadd.f32 0.0, %v247
  %v249 = vpop.f32.mrf.mxu0
  %v250 = vadd.f32 0.0, %v249
  %v251 = vpop.f32.mrf.mxu0
  %v252 = vadd.f32 0.0, %v251
  %v253 = vpop.f32.mrf.mxu0
  %v254 = vadd.f32 0.0, %v253
  %255 = vmatprep.mubr.bf16.mxu0 0
  %256 = vmatmul.mubr.bf16.gmra.mxu0 %v163
  %v257 = vpop.f32.mrf.mxu0
  %v258 = vadd.f32 0.0, %v257
  %v259 = vpop.f32.mrf.mxu0
  %v260 = vadd.f32 0.0, %v259
  %v261 = vpop.f32.mrf.mxu0
  %v262 = vadd.f32 0.0, %v261
  %v263 = vpop.f32.mrf.mxu0
  %v264 = vadd.f32 0.0, %v263
  %265 = vmatprep.mubr.bf16.mxu0 0
  %266 = vmatmul.mubr.bf16.gmra.mxu0 %v166
  %v267 = vpop.f32.mrf.mxu0
  %v268 = vadd.f32 0.0, %v267
  %v269 = vpop.f32.mrf.mxu0
  %v270 = vadd.f32 0.0, %v269
  %v271 = vpop.f32.mrf.mxu0
  %v272 = vadd.f32 0.0, %v271
  %v273 = vpop.f32.mrf.mxu0
  %v274 = vadd.f32 0.0, %v273
  %275 = vmatprep.mubr.bf16.mxu0 0
  %276 = vmatmul.mubr.bf16.gmra.mxu0 %v169
  %v277 = vpop.f32.mrf.mxu0
  %v278 = vadd.f32 0.0, %v277
  %v279 = vpop.f32.mrf.mxu0
  %v280 = vadd.f32 0.0, %v279
  %v281 = vpop.f32.mrf.mxu0
  %v282 = vadd.f32 0.0, %v281
  %v283 = vpop.f32.mrf.mxu0
  %v284 = vadd.f32 0.0, %v283
  %285 = vmatprep.mubr.bf16.mxu0 0
  %286 = vmatmul.mubr.bf16.gmra.mxu0 %v172
  %v287 = vpop.f32.mrf.mxu0
  %v288 = vadd.f32 0.0, %v287
  %v289 = vpop.f32.mrf.mxu0
  %v290 = vadd.f32 0.0, %v289
  %v291 = vpop.f32.mrf.mxu0
  %v292 = vadd.f32 0.0, %v291
  %v293 = vpop.f32.mrf.mxu0
  %v294 = vadd.f32 0.0, %v293
  %295 = vmatprep.mubr.bf16.mxu0 0
  %296 = vmatmul.mubr.bf16.gmra.mxu0 %v175
  %v297 = vpop.f32.mrf.mxu0
  %v298 = vadd.f32 0.0, %v297
  %v299 = vpop.f32.mrf.mxu0
  %v300 = vadd.f32 0.0, %v299
  %v301 = vpop.f32.mrf.mxu0
  %v302 = vadd.f32 0.0, %v301
  %v303 = vpop.f32.mrf.mxu0
  %v304 = vadd.f32 0.0, %v303
  %305 = vmatprep.mubr.bf16.mxu0 0
  %306 = vmatmul.mubr.bf16.gmra.mxu0 %v178
  %v307 = vpop.f32.mrf.mxu0
  %v308 = vadd.f32 0.0, %v307
  %v309 = vpop.f32.mrf.mxu0
  %v310 = vadd.f32 0.0, %v309
  %v311 = vpop.f32.mrf.mxu0
  %v312 = vadd.f32 0.0, %v311
  %v313 = vpop.f32.mrf.mxu0
  %v314 = vadd.f32 0.0, %v313
  %315 = vmatprep.mubr.bf16.mxu0 0
  %316 = vmatmul.mubr.bf16.gmra.mxu0 %v181
  %v317 = vpop.f32.mrf.mxu0
  %v318 = vadd.f32 0.0, %v317
  %v319 = vpop.f32.mrf.mxu0
  %v320 = vadd.f32 0.0, %v319
  %v321 = vpop.f32.mrf.mxu0
  %v322 = vpop.f32.mrf.mxu0
  %323 = vdwg.mxu0
  %324 = vst [vmem:[#allocation2] sm:$0xff] %v218
  %325 = vst.msk [vmem:[#allocation2 + $0x8] sm:$0xff] %vm149, %v220
  %326 = vst [vmem:[#allocation2 + $0x10] sm:$0xff] %v222
  %327 = vst.msk [vmem:[#allocation2 + $0x18] sm:$0xff] %vm149, %v224
  %328 = vst [vmem:[#allocation2 + $0x20] sm:$0xff] %v228
  %329 = vst.msk [vmem:[#allocation2 + $0x28] sm:$0xff] %vm149, %v230
  %330 = vst [vmem:[#allocation2 + $0x30] sm:$0xff] %v232
  %331 = vst.msk [vmem:[#allocation2 + $0x38] sm:$0xff] %vm149, %v234
  %332 = vst [vmem:[#allocation2 + $0x40] sm:$0xff] %v238
  %333 = vst.msk [vmem:[#allocation2 + $0x48] sm:$0xff] %vm149, %v240
  %334 = vst [vmem:[#allocation2 + $0x50] sm:$0xff] %v242
  %335 = vst.msk [vmem:[#allocation2 + $0x58] sm:$0xff] %vm149, %v244
  %336 = vst [vmem:[#allocation2 + $0x60] sm:$0xff] %v248
  %337 = vst.msk [vmem:[#allocation2 + $0x68] sm:$0xff] %vm149, %v250
  %338 = vst [vmem:[#allocation2 + $0x70] sm:$0xff] %v252
  %339 = vst.msk [vmem:[#allocation2 + $0x78] sm:$0xff] %vm149, %v254
  %340 = vst [vmem:[#allocation2 + $0x80] sm:$0xff] %v258
  %341 = vst.msk [vmem:[#allocation2 + $0x88] sm:$0xff] %vm149, %v260
  %342 = vst [vmem:[#allocation2 + $0x90] sm:$0xff] %v262
  %343 = vst.msk [vmem:[#allocation2 + $0x98] sm:$0xff] %vm149, %v264
  %344 = vst [vmem:[#allocation2 + $0xa0] sm:$0xff] %v268
  %345 = vst.msk [vmem:[#allocation2 + $0xa8] sm:$0xff] %vm149, %v270
  %346 = vst [vmem:[#allocation2 + $0xb0] sm:$0xff] %v272
  %347 = vst.msk [vmem:[#allocation2 + $0xb8] sm:$0xff] %vm149, %v274
  %348 = vst [vmem:[#allocation2 + $0xc0] sm:$0xff] %v278
  %349 = vst.msk [vmem:[#allocation2 + $0xc8] sm:$0xff] %vm149, %v280
  %350 = vst [vmem:[#allocation2 + $0xd0] sm:$0xff] %v282
  %351 = vst.msk [vmem:[#allocation2 + $0xd8] sm:$0xff] %vm149, %v284
  %352 = vst [vmem:[#allocation2 + $0xe0] sm:$0xff] %v288
  %353 = vst.msk [vmem:[#allocation2 + $0xe8] sm:$0xff] %vm149, %v290
  %354 = vst [vmem:[#allocation2 + $0xf0] sm:$0xff] %v292
  %355 = vst.msk [vmem:[#allocation2 + $0xf8] sm:$0xff] %vm149, %v294
  %356 = vst [vmem:[#allocation2 + $0x100] sm:$0xff] %v298
  %357 = vst.msk [vmem:[#allocation2 + $0x108] sm:$0xff] %vm149, %v300
  %358 = vst [vmem:[#allocation2 + $0x110] sm:$0xff] %v302
  %359 = vst.msk [vmem:[#allocation2 + $0x118] sm:$0xff] %vm149, %v304
  %360 = vst [vmem:[#allocation2 + $0x120] sm:$0xff] %v308
  %361 = vst.msk [vmem:[#allocation2 + $0x128] sm:$0xff] %vm149, %v310
  %362 = vst [vmem:[#allocation2 + $0x130] sm:$0xff] %v312
  %363 = vst.msk [vmem:[#allocation2 + $0x138] sm:$0xff] %vm149, %v314
  %364 = vst [vmem:[#allocation2 + $0x140] sm:$0xff] %v318
  %365 = vst.msk [vmem:[#allocation2 + $0x148] sm:$0xff] %vm149, %v320
  %v366 = vld [vmem:[%s0] sm:$0xff]
  %v367 = vld [vmem:[%s0 + $0x8] sm:$0xff]
  %v368 = vld [vmem:[%s0 + $0x10] sm:$0xff]
  %v369 = vld [vmem:[%s0 + $0x18] sm:$0xff]
  %v370 = vld [vmem:[%s0 + $0x20] sm:$0xff]
  %v371 = vld [vmem:[%s0 + $0x28] sm:$0xff]
  %v372 = vld [vmem:[%s0 + $0x30] sm:$0xff]
  %v373 = vld [vmem:[%s0 + $0x38] sm:$0xff]
  %v374 = vld [vmem:[%s0 + $0x40] sm:$0xff]
  %v375 = vld [vmem:[%s0 + $0x48] sm:$0xff]
  %v376 = vld [vmem:[%s0 + $0x50] sm:$0xff]
  %v377 = vld [vmem:[%s0 + $0x58] sm:$0xff]
  %v378 = vld [vmem:[%s0 + $0x60] sm:$0xff]
  %v379 = vld [vmem:[%s0 + $0x68] sm:$0xff]
  %v380 = vld [vmem:[%s0 + $0x70] sm:$0xff]
  %v381 = vld [vmem:[%s0 + $0x78] sm:$0xff]
  %v382 = vld [vmem:[%s0 + $0x80] sm:$0xff]
  %v383 = vld [vmem:[%s0 + $0x88] sm:$0xff]
  %v384 = vld [vmem:[%s0 + $0x90] sm:$0xff]
  %v385 = vld [vmem:[%s0 + $0x98] sm:$0xff]
  %v386 = vld [vmem:[%s0 + $0xa0] sm:$0xff]
  %v387 = vld [vmem:[%s0 + $0xa8] sm:$0xff]
  %v388 = vld [vmem:[%s0 + $0xb0] sm:$0xff]
  %v389 = vld [vmem:[%s0 + $0xb8] sm:$0xff]
  %v390 = vpack.c.bf16 %v368, %v366
  %v391 = vpack.c.bf16 %v369, %v367
  %v392 = vpack.c.bf16 %v372, %v370
  %v393 = vpack.c.bf16 %v373, %v371
  %v394 = vpack.c.bf16 %v376, %v374
  %v395 = vpack.c.bf16 %v377, %v375
  %v396 = vpack.c.bf16 %v380, %v378
  %v397 = vpack.c.bf16 %v381, %v379
  %v398 = vpack.c.bf16 %v384, %v382
  %v399 = vpack.c.bf16 %v385, %v383
  %v400 = vpack.c.bf16 %v388, %v386
  %v401 = vpack.c.bf16 %v389, %v387
  %s402 = scalar_lea.vmem %s1, 84
  %v403 = vld [vmem:[%s402] sm:$0xf]
  %v404 = vld [vmem:[%s402 + $0x4] sm:$0xf]
  %v405 = vld [vmem:[%s402 + $0x8] sm:$0xf]
  %v406 = vld [vmem:[%s402 + $0xc] sm:$0xf]
  %v407 = vld [vmem:[%s402 + $0x10] sm:$0xf]
  %v408 = vld [vmem:[%s402 + $0x14] sm:$0xf]
  %v409 = vld [vmem:[%s402 + $0x18] sm:$0xf]
  %v410 = vld [vmem:[%s402 + $0x1c] sm:$0xf]
  %v411 = vld [vmem:[%s402 + $0x20] sm:$0xf]
  %v412 = vld [vmem:[%s402 + $0x24] sm:$0xf]
  %v413 = vld [vmem:[%s402 + $0x28] sm:$0xf]
  %v414 = vld [vmem:[%s402 + $0x2c] sm:$0xf]
  %v415 = vld [vmem:[%s402 + $0x30] sm:$0xf]
  %v416 = vld [vmem:[%s402 + $0x34] sm:$0xf]
  %v417 = vld [vmem:[%s402 + $0x38] sm:$0xf]
  %v418 = vld [vmem:[%s402 + $0x3c] sm:$0xf]
  %v419 = vld [vmem:[%s402 + $0x40] sm:$0xf]
  %v420 = vld [vmem:[%s402 + $0x44] sm:$0xf]
  %v421 = vld [vmem:[%s402 + $0x48] sm:$0xf]
  %v422 = vld [vmem:[%s402 + $0x4c] sm:$0xf]
  %v423 = vld [vmem:[%s402 + $0x50] sm:$0xf]
  %v445 = vunpack.c.l.b16 %v403
  %v446 = vunpack.c.l.b16 %v404
  %v447 = vunpack.c.l.b16 %v405
  %v448 = vunpack.c.l.b16 %v406
  %v449 = vunpack.c.l.b16 %v407
  %v450 = vunpack.c.l.b16 %v408
  %v451 = vunpack.c.l.b16 %v409
  %v452 = vunpack.c.l.b16 %v410
  %v453 = vunpack.c.l.b16 %v411
  %v454 = vunpack.c.l.b16 %v412
  %v455 = vunpack.c.l.b16 %v413
  %v456 = vunpack.c.l.b16 %v414
  %v457 = vunpack.c.l.b16 %v415
  %v458 = vunpack.c.l.b16 %v416
  %v459 = vunpack.c.l.b16 %v417
  %v460 = vunpack.c.l.b16 %v418
  %v461 = vunpack.c.l.b16 %v419
  %v462 = vunpack.c.l.b16 %v420
  %v463 = vunpack.c.l.b16 %v421
  %v464 = vunpack.c.l.b16 %v422
  %v465 = vunpack.c.l.b16 %v423
  %v466 = vpack.c.b16 %v446, %v445
  %v467 = vpack.c.b16 %v448, %v447
  %v468 = vpack.c.b16 %v450, %v449
  %v469 = vpack.c.b16 %v452, %v451
  %v470 = vpack.c.b16 %v454, %v453
  %v471 = vpack.c.b16 %v456, %v455
  %v472 = vpack.c.b16 %v458, %v457
  %v473 = vpack.c.b16 %v460, %v459
  %v474 = vpack.c.b16 %v462, %v461
  %v475 = vpack.c.b16 %v464, %v463
  %v476 = vpack.c.b16 %v465, %v465
  %489 = vrot.lane.b32.xlu0 %v390, 120
  %v490 = vpop.permute.xlu0 %489
  %491 = vrot.lane.b32.xlu0 %v391, 120
  %v492 = vpop.permute.xlu0 %491
  %493 = vrot.lane.b32.xlu0 %v392, 120
  %v494 = vpop.permute.xlu0 %493
  %495 = vrot.lane.b32.xlu0 %v393, 120
  %v496 = vpop.permute.xlu0 %495
  %497 = vrot.lane.b32.xlu0 %v394, 120
  %v498 = vpop.permute.xlu0 %497
  %499 = vrot.lane.b32.xlu0 %v395, 120
  %v500 = vpop.permute.xlu0 %499
  %501 = vrot.lane.b32.xlu0 %v396, 120
  %v502 = vpop.permute.xlu0 %501
  %503 = vrot.lane.b32.xlu0 %v397, 120
  %v504 = vpop.permute.xlu0 %503
  %505 = vrot.lane.b32.xlu0 %v398, 120
  %v506 = vpop.permute.xlu0 %505
  %507 = vrot.lane.b32.xlu0 %v399, 120
  %v508 = vpop.permute.xlu0 %507
  %509 = vrot.lane.b32.xlu0 %v400, 120
  %v510 = vpop.permute.xlu0 %509
  %511 = vrot.lane.b32.xlu0 %v401, 120
  %v512 = vpop.permute.xlu0 %511
  %vm513 = vcmask 982016
  %v514 = vsel %vm513, %v490, %v492
  %v515 = vsel %vm513, %v494, %v496
  %v516 = vsel %vm513, %v498, %v500
  %v517 = vsel %vm513, %v502, %v504
  %v518 = vsel %vm513, %v506, %v508
  %v519 = vsel %vm513, %v510, %v512
  %v533 = vsel %vm149, %v466, 0
  %v536 = vsel %vm149, %v467, 0
  %v539 = vsel %vm149, %v468, 0
  %v542 = vsel %vm149, %v469, 0
  %v545 = vsel %vm149, %v470, 0
  %v548 = vsel %vm149, %v471, 0
  %v551 = vsel %vm149, %v472, 0
  %v554 = vsel %vm149, %v473, 0
  %v557 = vsel %vm149, %v474, 0
  %v560 = vsel %vm149, %v475, 0
  %v563 = vsel %vm149, %v476, 0
  %565 = vmatprep.subr.bf16.mxu0 0
  %566 = vmatpush1.bf16.msra.mxu0 0
  %567 = vmatprep.subr.bf16.mxu0 0
  %568 = vmatpush1.bf16.msra.mxu0 0
  %569 = vmatprep.subr.bf16.mxu0 %v512
  %570 = vmatpush1.bf16.msra.mxu0 %v519
  %571 = vmatprep.subr.bf16.mxu0 %v508
  %572 = vmatpush1.bf16.msra.mxu0 %v518
  %573 = vmatprep.subr.bf16.mxu0 %v504
  %574 = vmatpush1.bf16.msra.mxu0 %v517
  %575 = vmatprep.subr.bf16.mxu0 %v500
  %576 = vmatpush1.bf16.msra.mxu0 %v516
  %577 = vmatprep.subr.bf16.mxu0 %v496
  %578 = vmatpush1.bf16.msra.mxu0 %v515
  %579 = vmatprep.subr.bf16.mxu0 %v492
  %580 = vmatpush1.bf16.msra.mxu0 %v514
  %581 = vmatprep.subr.bf16.mxu0 0
  %582 = vmatpush2.bf16.msra.mxu0 0
  %583 = vmatprep.subr.bf16.mxu0 0
  %584 = vmatpush2.bf16.msra.mxu0 0
  %585 = vmatprep.subr.bf16.mxu0 0
  %586 = vmatpush2.bf16.msra.mxu0 0
  %587 = vmatprep.subr.bf16.mxu0 0
  %588 = vmatpush2.bf16.msra.mxu0 0
  %589 = vmatprep.subr.bf16.mxu0 0
  %590 = vmatpush2.bf16.msra.mxu0 0
  %591 = vmatprep.subr.bf16.mxu0 0
  %592 = vmatpush2.bf16.msra.mxu0 0
  %593 = vmatprep.subr.bf16.mxu0 0
  %594 = vmatpush2.bf16.msra.mxu0 0
  %595 = vmatprep.subr.bf16.mxu0 0
  %596 = vmatpush2.bf16.msra.mxu0 0
  %597 = vmatprep.mubr.bf16.mxu0 0
  %598 = vmatmul.mubr.bf16.gmra.mxu0 %v533
  %v599 = vpop.f32.mrf.mxu0
  %v600 = vadd.f32 0.0, %v599
  %v601 = vpop.f32.mrf.mxu0
  %v602 = vadd.f32 0.0, %v601
  %v603 = vpop.f32.mrf.mxu0
  %v604 = vadd.f32 0.0, %v603
  %v605 = vpop.f32.mrf.mxu0
  %v606 = vadd.f32 0.0, %v605
  %607 = vmatprep.mubr.bf16.mxu0 0
  %608 = vmatmul.mubr.bf16.gmra.mxu0 %v536
  %v609 = vpop.f32.mrf.mxu0
  %v610 = vadd.f32 0.0, %v609
  %v611 = vpop.f32.mrf.mxu0
  %v612 = vadd.f32 0.0, %v611
  %v613 = vpop.f32.mrf.mxu0
  %v614 = vadd.f32 0.0, %v613
  %v615 = vpop.f32.mrf.mxu0
  %v616 = vadd.f32 0.0, %v615
  %617 = vmatprep.mubr.bf16.mxu0 0
  %618 = vmatmul.mubr.bf16.gmra.mxu0 %v539
  %v619 = vpop.f32.mrf.mxu0
  %v620 = vadd.f32 0.0, %v619
  %v621 = vpop.f32.mrf.mxu0
  %v622 = vadd.f32 0.0, %v621
  %v623 = vpop.f32.mrf.mxu0
  %v624 = vadd.f32 0.0, %v623
  %v625 = vpop.f32.mrf.mxu0
  %v626 = vadd.f32 0.0, %v625
  %627 = vmatprep.mubr.bf16.mxu0 0
  %628 = vmatmul.mubr.bf16.gmra.mxu0 %v542
  %v629 = vpop.f32.mrf.mxu0
  %v630 = vadd.f32 0.0, %v629
  %v631 = vpop.f32.mrf.mxu0
  %v632 = vadd.f32 0.0, %v631
  %v633 = vpop.f32.mrf.mxu0
  %v634 = vadd.f32 0.0, %v633
  %v635 = vpop.f32.mrf.mxu0
  %v636 = vadd.f32 0.0, %v635
  %637 = vmatprep.mubr.bf16.mxu0 0
  %638 = vmatmul.mubr.bf16.gmra.mxu0 %v545
  %v639 = vpop.f32.mrf.mxu0
  %v640 = vadd.f32 0.0, %v639
  %v641 = vpop.f32.mrf.mxu0
  %v642 = vadd.f32 0.0, %v641
  %v643 = vpop.f32.mrf.mxu0
  %v644 = vadd.f32 0.0, %v643
  %v645 = vpop.f32.mrf.mxu0
  %v646 = vadd.f32 0.0, %v645
  %647 = vmatprep.mubr.bf16.mxu0 0
  %648 = vmatmul.mubr.bf16.gmra.mxu0 %v548
  %v649 = vpop.f32.mrf.mxu0
  %v650 = vadd.f32 0.0, %v649
  %v651 = vpop.f32.mrf.mxu0
  %v652 = vadd.f32 0.0, %v651
  %v653 = vpop.f32.mrf.mxu0
  %v654 = vadd.f32 0.0, %v653
  %v655 = vpop.f32.mrf.mxu0
  %v656 = vadd.f32 0.0, %v655
  %657 = vmatprep.mubr.bf16.mxu0 0
  %658 = vmatmul.mubr.bf16.gmra.mxu0 %v551
  %v659 = vpop.f32.mrf.mxu0
  %v660 = vadd.f32 0.0, %v659
  %v661 = vpop.f32.mrf.mxu0
  %v662 = vadd.f32 0.0, %v661
  %v663 = vpop.f32.mrf.mxu0
  %v664 = vadd.f32 0.0, %v663
  %v665 = vpop.f32.mrf.mxu0
  %v666 = vadd.f32 0.0, %v665
  %667 = vmatprep.mubr.bf16.mxu0 0
  %668 = vmatmul.mubr.bf16.gmra.mxu0 %v554
  %v669 = vpop.f32.mrf.mxu0
  %v670 = vadd.f32 0.0, %v669
  %v671 = vpop.f32.mrf.mxu0
  %v672 = vadd.f32 0.0, %v671
  %v673 = vpop.f32.mrf.mxu0
  %v674 = vadd.f32 0.0, %v673
  %v675 = vpop.f32.mrf.mxu0
  %v676 = vadd.f32 0.0, %v675
  %677 = vmatprep.mubr.bf16.mxu0 0
  %678 = vmatmul.mubr.bf16.gmra.mxu0 %v557
  %v679 = vpop.f32.mrf.mxu0
  %v680 = vadd.f32 0.0, %v679
  %v681 = vpop.f32.mrf.mxu0
  %v682 = vadd.f32 0.0, %v681
  %v683 = vpop.f32.mrf.mxu0
  %v684 = vadd.f32 0.0, %v683
  %v685 = vpop.f32.mrf.mxu0
  %v686 = vadd.f32 0.0, %v685
  %687 = vmatprep.mubr.bf16.mxu0 0
  %688 = vmatmul.mubr.bf16.gmra.mxu0 %v560
  %v689 = vpop.f32.mrf.mxu0
  %v690 = vadd.f32 0.0, %v689
  %v691 = vpop.f32.mrf.mxu0
  %v692 = vadd.f32 0.0, %v691
  %v693 = vpop.f32.mrf.mxu0
  %v694 = vadd.f32 0.0, %v693
  %v695 = vpop.f32.mrf.mxu0
  %v696 = vadd.f32 0.0, %v695
  %697 = vmatprep.mubr.bf16.mxu0 0
  %698 = vmatmul.mubr.bf16.gmra.mxu0 %v563
  %v699 = vpop.f32.mrf.mxu0
  %v700 = vadd.f32 0.0, %v699
  %v701 = vpop.f32.mrf.mxu0
  %v702 = vadd.f32 0.0, %v701
  %v703 = vpop.f32.mrf.mxu0
  %v704 = vpop.f32.mrf.mxu0
  %705 = vdwg.mxu0
  %v706 = vld [vmem:[#allocation2] sm:$0xff]
  %v707 = vld [vmem:[#allocation2 + $0x8] sm:$0xff]
  %v708 = vld [vmem:[#allocation2 + $0x10] sm:$0xff]
  %v709 = vld [vmem:[#allocation2 + $0x18] sm:$0xff]
  %v710 = vld [vmem:[#allocation2 + $0x20] sm:$0xff]
  %v711 = vld [vmem:[#allocation2 + $0x28] sm:$0xff]
  %v712 = vld [vmem:[#allocation2 + $0x30] sm:$0xff]
  %v713 = vld [vmem:[#allocation2 + $0x38] sm:$0xff]
  %v714 = vld [vmem:[#allocation2 + $0x40] sm:$0xff]
  %v715 = vld [vmem:[#allocation2 + $0x48] sm:$0xff]
  %v716 = vld [vmem:[#allocation2 + $0x50] sm:$0xff]
  %v717 = vld [vmem:[#allocation2 + $0x58] sm:$0xff]
  %v718 = vld [vmem:[#allocation2 + $0x60] sm:$0xff]
  %v719 = vld [vmem:[#allocation2 + $0x68] sm:$0xff]
  %v720 = vld [vmem:[#allocation2 + $0x70] sm:$0xff]
  %v721 = vld [vmem:[#allocation2 + $0x78] sm:$0xff]
  %v722 = vld [vmem:[#allocation2 + $0x80] sm:$0xff]
  %v723 = vld [vmem:[#allocation2 + $0x88] sm:$0xff]
  %v724 = vld [vmem:[#allocation2 + $0x90] sm:$0xff]
  %v725 = vld [vmem:[#allocation2 + $0x98] sm:$0xff]
  %v726 = vld [vmem:[#allocation2 + $0xa0] sm:$0xff]
  %v727 = vld [vmem:[#allocation2 + $0xa8] sm:$0xff]
  %v728 = vld [vmem:[#allocation2 + $0xb0] sm:$0xff]
  %v729 = vld [vmem:[#allocation2 + $0xb8] sm:$0xff]
  %v730 = vld [vmem:[#allocation2 + $0xc0] sm:$0xff]
  %v731 = vld [vmem:[#allocation2 + $0xc8] sm:$0xff]
  %v732 = vld [vmem:[#allocation2 + $0xd0] sm:$0xff]
  %v733 = vld [vmem:[#allocation2 + $0xd8] sm:$0xff]
  %v734 = vld [vmem:[#allocation2 + $0xe0] sm:$0xff]
  %v735 = vld [vmem:[#allocation2 + $0xe8] sm:$0xff]
  %v736 = vld [vmem:[#allocation2 + $0xf0] sm:$0xff]
  %v737 = vld [vmem:[#allocation2 + $0xf8] sm:$0xff]
  %v738 = vld [vmem:[#allocation2 + $0x100] sm:$0xff]
  %v739 = vld [vmem:[#allocation2 + $0x108] sm:$0xff]
  %v740 = vld [vmem:[#allocation2 + $0x110] sm:$0xff]
  %v741 = vld [vmem:[#allocation2 + $0x118] sm:$0xff]
  %v742 = vld [vmem:[#allocation2 + $0x120] sm:$0xff]
  %v743 = vld [vmem:[#allocation2 + $0x128] sm:$0xff]
  %v744 = vld [vmem:[#allocation2 + $0x130] sm:$0xff]
  %v745 = vld [vmem:[#allocation2 + $0x138] sm:$0xff]
  %v746 = vld [vmem:[#allocation2 + $0x140] sm:$0xff]
  %v747 = vld [vmem:[#allocation2 + $0x148] sm:$0xff]
  %v748 = vadd.f32 %v706, %v600
  %v749 = vadd.f32 %v707, %v602
  %v750 = vadd.f32 %v708, %v604
  %v751 = vadd.f32 %v709, %v606
  %v752 = vadd.f32 %v710, %v610
  %v753 = vadd.f32 %v711, %v612
  %v754 = vadd.f32 %v712, %v614
  %v755 = vadd.f32 %v713, %v616
  %v756 = vadd.f32 %v714, %v620
  %v757 = vadd.f32 %v715, %v622
  %v758 = vadd.f32 %v716, %v624
  %v759 = vadd.f32 %v717, %v626
  %v760 = vadd.f32 %v718, %v630
  %v761 = vadd.f32 %v719, %v632
  %v762 = vadd.f32 %v720, %v634
  %v763 = vadd.f32 %v721, %v636
  %v764 = vadd.f32 %v722, %v640
  %v765 = vadd.f32 %v723, %v642
  %v766 = vadd.f32 %v724, %v644
  %v767 = vadd.f32 %v725, %v646
  %v768 = vadd.f32 %v726, %v650
  %v769 = vadd.f32 %v727, %v652
  %v770 = vadd.f32 %v728, %v654
  %v771 = vadd.f32 %v729, %v656
  %v772 = vadd.f32 %v730, %v660
  %v773 = vadd.f32 %v731, %v662
  %v774 = vadd.f32 %v732, %v664
  %v775 = vadd.f32 %v733, %v666
  %v776 = vadd.f32 %v734, %v670
  %v777 = vadd.f32 %v735, %v672
  %v778 = vadd.f32 %v736, %v674
  %v779 = vadd.f32 %v737, %v676
  %v780 = vadd.f32 %v738, %v680
  %v781 = vadd.f32 %v739, %v682
  %v782 = vadd.f32 %v740, %v684
  %v783 = vadd.f32 %v741, %v686
  %v784 = vadd.f32 %v742, %v690
  %v785 = vadd.f32 %v743, %v692
  %v786 = vadd.f32 %v744, %v694
  %v787 = vadd.f32 %v745, %v696
  %v788 = vadd.f32 %v746, %v700
  %v789 = vadd.f32 %v747, %v702
  %790 = vst [vmem:[#allocation2] sm:$0xff] %v748
  %791 = vst.msk [vmem:[#allocation2 + $0x8] sm:$0xff] %vm149, %v749
  %792 = vst [vmem:[#allocation2 + $0x10] sm:$0xff] %v750
  %793 = vst.msk [vmem:[#allocation2 + $0x18] sm:$0xff] %vm149, %v751
  %794 = vst [vmem:[#allocation2 + $0x20] sm:$0xff] %v752
  %795 = vst.msk [vmem:[#allocation2 + $0x28] sm:$0xff] %vm149, %v753
  %796 = vst [vmem:[#allocation2 + $0x30] sm:$0xff] %v754
  %797 = vst.msk [vmem:[#allocation2 + $0x38] sm:$0xff] %vm149, %v755
  %798 = vst [vmem:[#allocation2 + $0x40] sm:$0xff] %v756
  %799 = vst.msk [vmem:[#allocation2 + $0x48] sm:$0xff] %vm149, %v757
  %800 = vst [vmem:[#allocation2 + $0x50] sm:$0xff] %v758
  %801 = vst.msk [vmem:[#allocation2 + $0x58] sm:$0xff] %vm149, %v759
  %802 = vst [vmem:[#allocation2 + $0x60] sm:$0xff] %v760
  %803 = vst.msk [vmem:[#allocation2 + $0x68] sm:$0xff] %vm149, %v761
  %804 = vst [vmem:[#allocation2 + $0x70] sm:$0xff] %v762
  %805 = vst.msk [vmem:[#allocation2 + $0x78] sm:$0xff] %vm149, %v763
  %806 = vst [vmem:[#allocation2 + $0x80] sm:$0xff] %v764
  %807 = vst.msk [vmem:[#allocation2 + $0x88] sm:$0xff] %vm149, %v765
  %808 = vst [vmem:[#allocation2 + $0x90] sm:$0xff] %v766
  %809 = vst.msk [vmem:[#allocation2 + $0x98] sm:$0xff] %vm149, %v767
  %810 = vst [vmem:[#allocation2 + $0xa0] sm:$0xff] %v768
  %811 = vst.msk [vmem:[#allocation2 + $0xa8] sm:$0xff] %vm149, %v769
  %812 = vst [vmem:[#allocation2 + $0xb0] sm:$0xff] %v770
  %813 = vst.msk [vmem:[#allocation2 + $0xb8] sm:$0xff] %vm149, %v771
  %814 = vst [vmem:[#allocation2 + $0xc0] sm:$0xff] %v772
  %815 = vst.msk [vmem:[#allocation2 + $0xc8] sm:$0xff] %vm149, %v773
  %816 = vst [vmem:[#allocation2 + $0xd0] sm:$0xff] %v774
  %817 = vst.msk [vmem:[#allocation2 + $0xd8] sm:$0xff] %vm149, %v775
  %818 = vst [vmem:[#allocation2 + $0xe0] sm:$0xff] %v776
  %819 = vst.msk [vmem:[#allocation2 + $0xe8] sm:$0xff] %vm149, %v777
  %820 = vst [vmem:[#allocation2 + $0xf0] sm:$0xff] %v778
  %821 = vst.msk [vmem:[#allocation2 + $0xf8] sm:$0xff] %vm149, %v779
  %822 = vst [vmem:[#allocation2 + $0x100] sm:$0xff] %v780
  %823 = vst.msk [vmem:[#allocation2 + $0x108] sm:$0xff] %vm149, %v781
  %824 = vst [vmem:[#allocation2 + $0x110] sm:$0xff] %v782
  %825 = vst.msk [vmem:[#allocation2 + $0x118] sm:$0xff] %vm149, %v783
  %826 = vst [vmem:[#allocation2 + $0x120] sm:$0xff] %v784
  %827 = vst.msk [vmem:[#allocation2 + $0x128] sm:$0xff] %vm149, %v785
  %828 = vst [vmem:[#allocation2 + $0x130] sm:$0xff] %v786
  %829 = vst.msk [vmem:[#allocation2 + $0x138] sm:$0xff] %vm149, %v787
  %830 = vst [vmem:[#allocation2 + $0x140] sm:$0xff] %v788
  %831 = vst.msk [vmem:[#allocation2 + $0x148] sm:$0xff] %vm149, %v789
  %v832 = vld [vmem:[%s0] sm:$0xff]
  %v833 = vld [vmem:[%s0 + $0x8] sm:$0xff]
  %v834 = vld [vmem:[%s0 + $0x10] sm:$0xff]
  %v835 = vld [vmem:[%s0 + $0x18] sm:$0xff]
  %v836 = vld [vmem:[%s0 + $0x20] sm:$0xff]
  %v837 = vld [vmem:[%s0 + $0x28] sm:$0xff]
  %v838 = vld [vmem:[%s0 + $0x30] sm:$0xff]
  %v839 = vld [vmem:[%s0 + $0x38] sm:$0xff]
  %v840 = vld [vmem:[%s0 + $0x40] sm:$0xff]
  %v841 = vld [vmem:[%s0 + $0x48] sm:$0xff]
  %v842 = vld [vmem:[%s0 + $0x50] sm:$0xff]
  %v843 = vld [vmem:[%s0 + $0x58] sm:$0xff]
  %v844 = vld [vmem:[%s0 + $0x60] sm:$0xff]
  %v845 = vld [vmem:[%s0 + $0x68] sm:$0xff]
  %v846 = vld [vmem:[%s0 + $0x70] sm:$0xff]
  %v847 = vld [vmem:[%s0 + $0x78] sm:$0xff]
  %v848 = vld [vmem:[%s0 + $0x80] sm:$0xff]
  %v849 = vld [vmem:[%s0 + $0x88] sm:$0xff]
  %v850 = vld [vmem:[%s0 + $0x90] sm:$0xff]
  %v851 = vld [vmem:[%s0 + $0x98] sm:$0xff]
  %v852 = vld [vmem:[%s0 + $0xa0] sm:$0xff]
  %v853 = vld [vmem:[%s0 + $0xa8] sm:$0xff]
  %v854 = vld [vmem:[%s0 + $0xb0] sm:$0xff]
  %v855 = vld [vmem:[%s0 + $0xb8] sm:$0xff]
  %v856 = vpack.c.bf16 %v834, %v832
  %v857 = vpack.c.bf16 %v835, %v833
  %v858 = vpack.c.bf16 %v838, %v836
  %v859 = vpack.c.bf16 %v839, %v837
  %v860 = vpack.c.bf16 %v842, %v840
  %v861 = vpack.c.bf16 %v843, %v841
  %v862 = vpack.c.bf16 %v846, %v844
  %v863 = vpack.c.bf16 %v847, %v845
  %v864 = vpack.c.bf16 %v850, %v848
  %v865 = vpack.c.bf16 %v851, %v849
  %v866 = vpack.c.bf16 %v854, %v852
  %v867 = vpack.c.bf16 %v855, %v853
  %s868 = scalar_lea.vmem %s1, 168
  %v869 = vld [vmem:[%s868] sm:$0xf]
  %v870 = vld [vmem:[%s868 + $0x4] sm:$0xf]
  %v871 = vld [vmem:[%s868 + $0x8] sm:$0xf]
  %v872 = vld [vmem:[%s868 + $0xc] sm:$0xf]
  %v873 = vld [vmem:[%s868 + $0x10] sm:$0xf]
  %v874 = vld [vmem:[%s868 + $0x14] sm:$0xf]
  %v875 = vld [vmem:[%s868 + $0x18] sm:$0xf]
  %v876 = vld [vmem:[%s868 + $0x1c] sm:$0xf]
  %v877 = vld [vmem:[%s868 + $0x20] sm:$0xf]
  %v878 = vld [vmem:[%s868 + $0x24] sm:$0xf]
  %v879 = vld [vmem:[%s868 + $0x28] sm:$0xf]
  %v880 = vld [vmem:[%s868 + $0x2c] sm:$0xf]
  %v881 = vld [vmem:[%s868 + $0x30] sm:$0xf]
  %v882 = vld [vmem:[%s868 + $0x34] sm:$0xf]
  %v883 = vld [vmem:[%s868 + $0x38] sm:$0xf]
  %v884 = vld [vmem:[%s868 + $0x3c] sm:$0xf]
  %v885 = vld [vmem:[%s868 + $0x40] sm:$0xf]
  %v886 = vld [vmem:[%s868 + $0x44] sm:$0xf]
  %v887 = vld [vmem:[%s868 + $0x48] sm:$0xf]
  %v888 = vld [vmem:[%s868 + $0x4c] sm:$0xf]
  %v889 = vld [vmem:[%s868 + $0x50] sm:$0xf]
  %v911 = vunpack.c.l.b16 %v869
  %v912 = vunpack.c.l.b16 %v870
  %v913 = vunpack.c.l.b16 %v871
  %v914 = vunpack.c.l.b16 %v872
  %v915 = vunpack.c.l.b16 %v873
  %v916 = vunpack.c.l.b16 %v874
  %v917 = vunpack.c.l.b16 %v875
  %v918 = vunpack.c.l.b16 %v876
  %v919 = vunpack.c.l.b16 %v877
  %v920 = vunpack.c.l.b16 %v878
  %v921 = vunpack.c.l.b16 %v879
  %v922 = vunpack.c.l.b16 %v880
  %v923 = vunpack.c.l.b16 %v881
  %v924 = vunpack.c.l.b16 %v882
  %v925 = vunpack.c.l.b16 %v883
  %v926 = vunpack.c.l.b16 %v884
  %v927 = vunpack.c.l.b16 %v885
  %v928 = vunpack.c.l.b16 %v886
  %v929 = vunpack.c.l.b16 %v887
  %v930 = vunpack.c.l.b16 %v888
  %v931 = vunpack.c.l.b16 %v889
  %v932 = vpack.c.b16 %v912, %v911
  %v933 = vpack.c.b16 %v914, %v913
  %v934 = vpack.c.b16 %v916, %v915
  %v935 = vpack.c.b16 %v918, %v917
  %v936 = vpack.c.b16 %v920, %v919
  %v937 = vpack.c.b16 %v922, %v921
  %v938 = vpack.c.b16 %v924, %v923
  %v939 = vpack.c.b16 %v926, %v925
  %v940 = vpack.c.b16 %v928, %v927
  %v941 = vpack.c.b16 %v930, %v929
  %v942 = vpack.c.b16 %v931, %v931
  %955 = vrot.lane.b32.xlu0 %v856, 112
  %v956 = vpop.permute.xlu0 %955
  %957 = vrot.lane.b32.xlu0 %v857, 112
  %v958 = vpop.permute.xlu0 %957
  %959 = vrot.lane.b32.xlu0 %v858, 112
  %v960 = vpop.permute.xlu0 %959
  %961 = vrot.lane.b32.xlu0 %v859, 112
  %v962 = vpop.permute.xlu0 %961
  %963 = vrot.lane.b32.xlu0 %v860, 112
  %v964 = vpop.permute.xlu0 %963
  %965 = vrot.lane.b32.xlu0 %v861, 112
  %v966 = vpop.permute.xlu0 %965
  %967 = vrot.lane.b32.xlu0 %v862, 112
  %v968 = vpop.permute.xlu0 %967
  %969 = vrot.lane.b32.xlu0 %v863, 112
  %v970 = vpop.permute.xlu0 %969
  %971 = vrot.lane.b32.xlu0 %v864, 112
  %v972 = vpop.permute.xlu0 %971
  %973 = vrot.lane.b32.xlu0 %v865, 112
  %v974 = vpop.permute.xlu0 %973
  %975 = vrot.lane.b32.xlu0 %v866, 112
  %v976 = vpop.permute.xlu0 %975
  %977 = vrot.lane.b32.xlu0 %v867, 112
  %v978 = vpop.permute.xlu0 %977
  %vm979 = vcmask 916480
  %v980 = vsel %vm979, %v956, %v958
  %v981 = vsel %vm979, %v960, %v962
  %v982 = vsel %vm979, %v964, %v966
  %v983 = vsel %vm979, %v968, %v970
  %v984 = vsel %vm979, %v972, %v974
  %v985 = vsel %vm979, %v976, %v978
  %v999 = vsel %vm149, %v932, 0
  %v1002 = vsel %vm149, %v933, 0
  %v1005 = vsel %vm149, %v934, 0
  %v1008 = vsel %vm149, %v935, 0
  %v1011 = vsel %vm149, %v936, 0
  %v1014 = vsel %vm149, %v937, 0
  %v1017 = vsel %vm149, %v938, 0
  %v1020 = vsel %vm149, %v939, 0
  %v1023 = vsel %vm149, %v940, 0
  %v1026 = vsel %vm149, %v941, 0
  %v1029 = vsel %vm149, %v942, 0
  %1031 = vmatprep.subr.bf16.mxu0 0
  %1032 = vmatpush1.bf16.msra.mxu0 0
  %1033 = vmatprep.subr.bf16.mxu0 0
  %1034 = vmatpush1.bf16.msra.mxu0 0
  %1035 = vmatprep.subr.bf16.mxu0 %v978
  %1036 = vmatpush1.bf16.msra.mxu0 %v985
  %1037 = vmatprep.subr.bf16.mxu0 %v974
  %1038 = vmatpush1.bf16.msra.mxu0 %v984
  %1039 = vmatprep.subr.bf16.mxu0 %v970
  %1040 = vmatpush1.bf16.msra.mxu0 %v983
  %1041 = vmatprep.subr.bf16.mxu0 %v966
  %1042 = vmatpush1.bf16.msra.mxu0 %v982
  %1043 = vmatprep.subr.bf16.mxu0 %v962
  %1044 = vmatpush1.bf16.msra.mxu0 %v981
  %1045 = vmatprep.subr.bf16.mxu0 %v958
  %1046 = vmatpush1.bf16.msra.mxu0 %v980
  %1047 = vmatprep.subr.bf16.mxu0 0
  %1048 = vmatpush2.bf16.msra.mxu0 0
  %1049 = vmatprep.subr.bf16.mxu0 0
  %1050 = vmatpush2.bf16.msra.mxu0 0
  %1051 = vmatprep.subr.bf16.mxu0 0
  %1052 = vmatpush2.bf16.msra.mxu0 0
  %1053 = vmatprep.subr.bf16.mxu0 0
  %1054 = vmatpush2.bf16.msra.mxu0 0
  %1055 = vmatprep.subr.bf16.mxu0 0
  %1056 = vmatpush2.bf16.msra.mxu0 0
  %1057 = vmatprep.subr.bf16.mxu0 0
  %1058 = vmatpush2.bf16.msra.mxu0 0
  %1059 = vmatprep.subr.bf16.mxu0 0
  %1060 = vmatpush2.bf16.msra.mxu0 0
  %1061 = vmatprep.subr.bf16.mxu0 0
  %1062 = vmatpush2.bf16.msra.mxu0 0
  %1063 = vmatprep.mubr.bf16.mxu0 0
  %1064 = vmatmul.mubr.bf16.gmra.mxu0 %v999
  %v1065 = vpop.f32.mrf.mxu0
  %v1066 = vadd.f32 0.0, %v1065
  %v1067 = vpop.f32.mrf.mxu0
  %v1068 = vadd.f32 0.0, %v1067
  %v1069 = vpop.f32.mrf.mxu0
  %v1070 = vadd.f32 0.0, %v1069
  %v1071 = vpop.f32.mrf.mxu0
  %v1072 = vadd.f32 0.0, %v1071
  %1073 = vmatprep.mubr.bf16.mxu0 0
  %1074 = vmatmul.mubr.bf16.gmra.mxu0 %v1002
  %v1075 = vpop.f32.mrf.mxu0
  %v1076 = vadd.f32 0.0, %v1075
  %v1077 = vpop.f32.mrf.mxu0
  %v1078 = vadd.f32 0.0, %v1077
  %v1079 = vpop.f32.mrf.mxu0
  %v1080 = vadd.f32 0.0, %v1079
  %v1081 = vpop.f32.mrf.mxu0
  %v1082 = vadd.f32 0.0, %v1081
  %1083 = vmatprep.mubr.bf16.mxu0 0
  %1084 = vmatmul.mubr.bf16.gmra.mxu0 %v1005
  %v1085 = vpop.f32.mrf.mxu0
  %v1086 = vadd.f32 0.0, %v1085
  %v1087 = vpop.f32.mrf.mxu0
  %v1088 = vadd.f32 0.0, %v1087
  %v1089 = vpop.f32.mrf.mxu0
  %v1090 = vadd.f32 0.0, %v1089
  %v1091 = vpop.f32.mrf.mxu0
  %v1092 = vadd.f32 0.0, %v1091
  %1093 = vmatprep.mubr.bf16.mxu0 0
  %1094 = vmatmul.mubr.bf16.gmra.mxu0 %v1008
  %v1095 = vpop.f32.mrf.mxu0
  %v1096 = vadd.f32 0.0, %v1095
  %v1097 = vpop.f32.mrf.mxu0
  %v1098 = vadd.f32 0.0, %v1097
  %v1099 = vpop.f32.mrf.mxu0
  %v1100 = vadd.f32 0.0, %v1099
  %v1101 = vpop.f32.mrf.mxu0
  %v1102 = vadd.f32 0.0, %v1101
  %1103 = vmatprep.mubr.bf16.mxu0 0
  %1104 = vmatmul.mubr.bf16.gmra.mxu0 %v1011
  %v1105 = vpop.f32.mrf.mxu0
  %v1106 = vadd.f32 0.0, %v1105
  %v1107 = vpop.f32.mrf.mxu0
  %v1108 = vadd.f32 0.0, %v1107
  %v1109 = vpop.f32.mrf.mxu0
  %v1110 = vadd.f32 0.0, %v1109
  %v1111 = vpop.f32.mrf.mxu0
  %v1112 = vadd.f32 0.0, %v1111
  %1113 = vmatprep.mubr.bf16.mxu0 0
  %1114 = vmatmul.mubr.bf16.gmra.mxu0 %v1014
  %v1115 = vpop.f32.mrf.mxu0
  %v1116 = vadd.f32 0.0, %v1115
  %v1117 = vpop.f32.mrf.mxu0
  %v1118 = vadd.f32 0.0, %v1117
  %v1119 = vpop.f32.mrf.mxu0
  %v1120 = vadd.f32 0.0, %v1119
  %v1121 = vpop.f32.mrf.mxu0
  %v1122 = vadd.f32 0.0, %v1121
  %1123 = vmatprep.mubr.bf16.mxu0 0
  %1124 = vmatmul.mubr.bf16.gmra.mxu0 %v1017
  %v1125 = vpop.f32.mrf.mxu0
  %v1126 = vadd.f32 0.0, %v1125
  %v1127 = vpop.f32.mrf.mxu0
  %v1128 = vadd.f32 0.0, %v1127
  %v1129 = vpop.f32.mrf.mxu0
  %v1130 = vadd.f32 0.0, %v1129
  %v1131 = vpop.f32.mrf.mxu0
  %v1132 = vadd.f32 0.0, %v1131
  %1133 = vmatprep.mubr.bf16.mxu0 0
  %1134 = vmatmul.mubr.bf16.gmra.mxu0 %v1020
  %v1135 = vpop.f32.mrf.mxu0
  %v1136 = vadd.f32 0.0, %v1135
  %v1137 = vpop.f32.mrf.mxu0
  %v1138 = vadd.f32 0.0, %v1137
  %v1139 = vpop.f32.mrf.mxu0
  %v1140 = vadd.f32 0.0, %v1139
  %v1141 = vpop.f32.mrf.mxu0
  %v1142 = vadd.f32 0.0, %v1141
  %1143 = vmatprep.mubr.bf16.mxu0 0
  %1144 = vmatmul.mubr.bf16.gmra.mxu0 %v1023
  %v1145 = vpop.f32.mrf.mxu0
  %v1146 = vadd.f32 0.0, %v1145
  %v1147 = vpop.f32.mrf.mxu0
  %v1148 = vadd.f32 0.0, %v1147
  %v1149 = vpop.f32.mrf.mxu0
  %v1150 = vadd.f32 0.0, %v1149
  %v1151 = vpop.f32.mrf.mxu0
  %v1152 = vadd.f32 0.0, %v1151
  %1153 = vmatprep.mubr.bf16.mxu0 0
  %1154 = vmatmul.mubr.bf16.gmra.mxu0 %v1026
  %v1155 = vpop.f32.mrf.mxu0
  %v1156 = vadd.f32 0.0, %v1155
  %v1157 = vpop.f32.mrf.mxu0
  %v1158 = vadd.f32 0.0, %v1157
  %v1159 = vpop.f32.mrf.mxu0
  %v1160 = vadd.f32 0.0, %v1159
  %v1161 = vpop.f32.mrf.mxu0
  %v1162 = vadd.f32 0.0, %v1161
  %1163 = vmatprep.mubr.bf16.mxu0 0
  %1164 = vmatmul.mubr.bf16.gmra.mxu0 %v1029
  %v1165 = vpop.f32.mrf.mxu0
  %v1166 = vadd.f32 0.0, %v1165
  %v1167 = vpop.f32.mrf.mxu0
  %v1168 = vadd.f32 0.0, %v1167
  %v1169 = vpop.f32.mrf.mxu0
  %v1170 = vpop.f32.mrf.mxu0
  %1171 = vdwg.mxu0
  %v1172 = vld [vmem:[#allocation2] sm:$0xff]
  %v1173 = vld [vmem:[#allocation2 + $0x8] sm:$0xff]
  %v1174 = vld [vmem:[#allocation2 + $0x10] sm:$0xff]
  %v1175 = vld [vmem:[#allocation2 + $0x18] sm:$0xff]
  %v1176 = vld [vmem:[#allocation2 + $0x20] sm:$0xff]
  %v1177 = vld [vmem:[#allocation2 + $0x28] sm:$0xff]
  %v1178 = vld [vmem:[#allocation2 + $0x30] sm:$0xff]
  %v1179 = vld [vmem:[#allocation2 + $0x38] sm:$0xff]
  %v1180 = vld [vmem:[#allocation2 + $0x40] sm:$0xff]
  %v1181 = vld [vmem:[#allocation2 + $0x48] sm:$0xff]
  %v1182 = vld [vmem:[#allocation2 + $0x50] sm:$0xff]
  %v1183 = vld [vmem:[#allocation2 + $0x58] sm:$0xff]
  %v1184 = vld [vmem:[#allocation2 + $0x60] sm:$0xff]
  %v1185 = vld [vmem:[#allocation2 + $0x68] sm:$0xff]
  %v1186 = vld [vmem:[#allocation2 + $0x70] sm:$0xff]
  %v1187 = vld [vmem:[#allocation2 + $0x78] sm:$0xff]
  %v1188 = vld [vmem:[#allocation2 + $0x80] sm:$0xff]
  %v1189 = vld [vmem:[#allocation2 + $0x88] sm:$0xff]
  %v1190 = vld [vmem:[#allocation2 + $0x90] sm:$0xff]
  %v1191 = vld [vmem:[#allocation2 + $0x98] sm:$0xff]
  %v1192 = vld [vmem:[#allocation2 + $0xa0] sm:$0xff]
  %v1193 = vld [vmem:[#allocation2 + $0xa8] sm:$0xff]
  %v1194 = vld [vmem:[#allocation2 + $0xb0] sm:$0xff]
  %v1195 = vld [vmem:[#allocation2 + $0xb8] sm:$0xff]
  %v1196 = vld [vmem:[#allocation2 + $0xc0] sm:$0xff]
  %v1197 = vld [vmem:[#allocation2 + $0xc8] sm:$0xff]
  %v1198 = vld [vmem:[#allocation2 + $0xd0] sm:$0xff]
  %v1199 = vld [vmem:[#allocation2 + $0xd8] sm:$0xff]
  %v1200 = vld [vmem:[#allocation2 + $0xe0] sm:$0xff]
  %v1201 = vld [vmem:[#allocation2 + $0xe8] sm:$0xff]
  %v1202 = vld [vmem:[#allocation2 + $0xf0] sm:$0xff]
  %v1203 = vld [vmem:[#allocation2 + $0xf8] sm:$0xff]
  %v1204 = vld [vmem:[#allocation2 + $0x100] sm:$0xff]
  %v1205 = vld [vmem:[#allocation2 + $0x108] sm:$0xff]
  %v1206 = vld [vmem:[#allocation2 + $0x110] sm:$0xff]
  %v1207 = vld [vmem:[#allocation2 + $0x118] sm:$0xff]
  %v1208 = vld [vmem:[#allocation2 + $0x120] sm:$0xff]
  %v1209 = vld [vmem:[#allocation2 + $0x128] sm:$0xff]
  %v1210 = vld [vmem:[#allocation2 + $0x130] sm:$0xff]
  %v1211 = vld [vmem:[#allocation2 + $0x138] sm:$0xff]
  %v1212 = vld [vmem:[#allocation2 + $0x140] sm:$0xff]
  %v1213 = vld [vmem:[#allocation2 + $0x148] sm:$0xff]
  %v1214 = vadd.f32 %v1172, %v1066
  %v1215 = vadd.f32 %v1173, %v1068
  %v1216 = vadd.f32 %v1174, %v1070
  %v1217 = vadd.f32 %v1175, %v1072
  %v1218 = vadd.f32 %v1176, %v1076
  %v1219 = vadd.f32 %v1177, %v1078
  %v1220 = vadd.f32 %v1178, %v1080
  %v1221 = vadd.f32 %v1179, %v1082
  %v1222 = vadd.f32 %v1180, %v1086
  %v1223 = vadd.f32 %v1181, %v1088
  %v1224 = vadd.f32 %v1182, %v1090
  %v1225 = vadd.f32 %v1183, %v1092
  %v1226 = vadd.f32 %v1184, %v1096
  %v1227 = vadd.f32 %v1185, %v1098
  %v1228 = vadd.f32 %v1186, %v1100
  %v1229 = vadd.f32 %v1187, %v1102
  %v1230 = vadd.f32 %v1188, %v1106
  %v1231 = vadd.f32 %v1189, %v1108
  %v1232 = vadd.f32 %v1190, %v1110
  %v1233 = vadd.f32 %v1191, %v1112
  %v1234 = vadd.f32 %v1192, %v1116
  %v1235 = vadd.f32 %v1193, %v1118
  %v1236 = vadd.f32 %v1194, %v1120
  %v1237 = vadd.f32 %v1195, %v1122
  %v1238 = vadd.f32 %v1196, %v1126
  %v1239 = vadd.f32 %v1197, %v1128
  %v1240 = vadd.f32 %v1198, %v1130
  %v1241 = vadd.f32 %v1199, %v1132
  %v1242 = vadd.f32 %v1200, %v1136
  %v1243 = vadd.f32 %v1201, %v1138
  %v1244 = vadd.f32 %v1202, %v1140
  %v1245 = vadd.f32 %v1203, %v1142
  %v1246 = vadd.f32 %v1204, %v1146
  %v1247 = vadd.f32 %v1205, %v1148
  %v1248 = vadd.f32 %v1206, %v1150
  %v1249 = vadd.f32 %v1207, %v1152
  %v1250 = vadd.f32 %v1208, %v1156
  %v1251 = vadd.f32 %v1209, %v1158
  %v1252 = vadd.f32 %v1210, %v1160
  %v1253 = vadd.f32 %v1211, %v1162
  %v1254 = vadd.f32 %v1212, %v1166
  %v1255 = vadd.f32 %v1213, %v1168
  %1256 = vst [vmem:[#allocation2] sm:$0xff] %v1214
  %1257 = vst.msk [vmem:[#allocation2 + $0x8] sm:$0xff] %vm149, %v1215
  %1258 = vst [vmem:[#allocation2 + $0x10] sm:$0xff] %v1216
  %1259 = vst.msk [vmem:[#allocation2 + $0x18] sm:$0xff] %vm149, %v1217
  %1260 = vst [vmem:[#allocation2 + $0x20] sm:$0xff] %v1218
  %1261 = vst.msk [vmem:[#allocation2 + $0x28] sm:$0xff] %vm149, %v1219
  %1262 = vst [vmem:[#allocation2 + $0x30] sm:$0xff] %v1220
  %1263 = vst.msk [vmem:[#allocation2 + $0x38] sm:$0xff] %vm149, %v1221
  %1264 = vst [vmem:[#allocation2 + $0x40] sm:$0xff] %v1222
  %1265 = vst.msk [vmem:[#allocation2 + $0x48] sm:$0xff] %vm149, %v1223
  %1266 = vst [vmem:[#allocation2 + $0x50] sm:$0xff] %v1224
  %1267 = vst.msk [vmem:[#allocation2 + $0x58] sm:$0xff] %vm149, %v1225
  %1268 = vst [vmem:[#allocation2 + $0x60] sm:$0xff] %v1226
  %1269 = vst.msk [vmem:[#allocation2 + $0x68] sm:$0xff] %vm149, %v1227
  %1270 = vst [vmem:[#allocation2 + $0x70] sm:$0xff] %v1228
  %1271 = vst.msk [vmem:[#allocation2 + $0x78] sm:$0xff] %vm149, %v1229
  %1272 = vst [vmem:[#allocation2 + $0x80] sm:$0xff] %v1230
  %1273 = vst.msk [vmem:[#allocation2 + $0x88] sm:$0xff] %vm149, %v1231
  %1274 = vst [vmem:[#allocation2 + $0x90] sm:$0xff] %v1232
  %1275 = vst.msk [vmem:[#allocation2 + $0x98] sm:$0xff] %vm149, %v1233
  %1276 = vst [vmem:[#allocation2 + $0xa0] sm:$0xff] %v1234
  %1277 = vst.msk [vmem:[#allocation2 + $0xa8] sm:$0xff] %vm149, %v1235
  %1278 = vst [vmem:[#allocation2 + $0xb0] sm:$0xff] %v1236
  %1279 = vst.msk [vmem:[#allocation2 + $0xb8] sm:$0xff] %vm149, %v1237
  %1280 = vst [vmem:[#allocation2 + $0xc0] sm:$0xff] %v1238
  %1281 = vst.msk [vmem:[#allocation2 + $0xc8] sm:$0xff] %vm149, %v1239
  %1282 = vst [vmem:[#allocation2 + $0xd0] sm:$0xff] %v1240
  %1283 = vst.msk [vmem:[#allocation2 + $0xd8] sm:$0xff] %vm149, %v1241
  %1284 = vst [vmem:[#allocation2 + $0xe0] sm:$0xff] %v1242
  %1285 = vst.msk [vmem:[#allocation2 + $0xe8] sm:$0xff] %vm149, %v1243
  %1286 = vst [vmem:[#allocation2 + $0xf0] sm:$0xff] %v1244
  %1287 = vst.msk [vmem:[#allocation2 + $0xf8] sm:$0xff] %vm149, %v1245
  %1288 = vst [vmem:[#allocation2 + $0x100] sm:$0xff] %v1246
  %1289 = vst.msk [vmem:[#allocation2 + $0x108] sm:$0xff] %vm149, %v1247
  %1290 = vst [vmem:[#allocation2 + $0x110] sm:$0xff] %v1248
  %1291 = vst.msk [vmem:[#allocation2 + $0x118] sm:$0xff] %vm149, %v1249
  %1292 = vst [vmem:[#allocation2 + $0x120] sm:$0xff] %v1250
  %1293 = vst.msk [vmem:[#allocation2 + $0x128] sm:$0xff] %vm149, %v1251
  %1294 = vst [vmem:[#allocation2 + $0x130] sm:$0xff] %v1252
  %1295 = vst.msk [vmem:[#allocation2 + $0x138] sm:$0xff] %vm149, %v1253
  %1296 = vst [vmem:[#allocation2 + $0x140] sm:$0xff] %v1254
  %1297 = vst.msk [vmem:[#allocation2 + $0x148] sm:$0xff] %vm149, %v1255
  %v1298 = vld [vmem:[%s0] sm:$0xff]
  %v1299 = vld [vmem:[%s0 + $0x8] sm:$0xff]
  %v1300 = vld [vmem:[%s0 + $0x10] sm:$0xff]
  %v1301 = vld [vmem:[%s0 + $0x18] sm:$0xff]
  %v1302 = vld [vmem:[%s0 + $0x20] sm:$0xff]
  %v1303 = vld [vmem:[%s0 + $0x28] sm:$0xff]
  %v1304 = vld [vmem:[%s0 + $0x30] sm:$0xff]
  %v1305 = vld [vmem:[%s0 + $0x38] sm:$0xff]
  %v1306 = vld [vmem:[%s0 + $0x40] sm:$0xff]
  %v1307 = vld [vmem:[%s0 + $0x48] sm:$0xff]
  %v1308 = vld [vmem:[%s0 + $0x50] sm:$0xff]
  %v1309 = vld [vmem:[%s0 + $0x58] sm:$0xff]
  %v1310 = vld [vmem:[%s0 + $0x60] sm:$0xff]
  %v1311 = vld [vmem:[%s0 + $0x68] sm:$0xff]
  %v1312 = vld [vmem:[%s0 + $0x70] sm:$0xff]
  %v1313 = vld [vmem:[%s0 + $0x78] sm:$0xff]
  %v1314 = vld [vmem:[%s0 + $0x80] sm:$0xff]
  %v1315 = vld [vmem:[%s0 + $0x88] sm:$0xff]
  %v1316 = vld [vmem:[%s0 + $0x90] sm:$0xff]
  %v1317 = vld [vmem:[%s0 + $0x98] sm:$0xff]
  %v1318 = vld [vmem:[%s0 + $0xa0] sm:$0xff]
  %v1319 = vld [vmem:[%s0 + $0xa8] sm:$0xff]
  %v1320 = vld [vmem:[%s0 + $0xb0] sm:$0xff]
  %v1321 = vld [vmem:[%s0 + $0xb8] sm:$0xff]
  %v1322 = vpack.c.bf16 %v1300, %v1298
  %v1323 = vpack.c.bf16 %v1301, %v1299
  %v1324 = vpack.c.bf16 %v1304, %v1302
  %v1325 = vpack.c.bf16 %v1305, %v1303
  %v1326 = vpack.c.bf16 %v1308, %v1306
  %v1327 = vpack.c.bf16 %v1309, %v1307
  %v1328 = vpack.c.bf16 %v1312, %v1310
  %v1329 = vpack.c.bf16 %v1313, %v1311
  %v1330 = vpack.c.bf16 %v1316, %v1314
  %v1331 = vpack.c.bf16 %v1317, %v1315
  %v1332 = vpack.c.bf16 %v1320, %v1318
  %v1333 = vpack.c.bf16 %v1321, %v1319
  %s1334 = scalar_lea.vmem %s1, 252
  %v1335 = vld [vmem:[%s1334] sm:$0xf]
  %v1336 = vld [vmem:[%s1334 + $0x4] sm:$0xf]
  %v1337 = vld [vmem:[%s1334 + $0x8] sm:$0xf]
  %v1338 = vld [vmem:[%s1334 + $0xc] sm:$0xf]
  %v1339 = vld [vmem:[%s1334 + $0x10] sm:$0xf]
  %v1340 = vld [vmem:[%s1334 + $0x14] sm:$0xf]
  %v1341 = vld [vmem:[%s1334 + $0x18] sm:$0xf]
  %v1342 = vld [vmem:[%s1334 + $0x1c] sm:$0xf]
  %v1343 = vld [vmem:[%s1334 + $0x20] sm:$0xf]
  %v1344 = vld [vmem:[%s1334 + $0x24] sm:$0xf]
  %v1345 = vld [vmem:[%s1334 + $0x28] sm:$0xf]
  %v1346 = vld [vmem:[%s1334 + $0x2c] sm:$0xf]
  %v1347 = vld [vmem:[%s1334 + $0x30] sm:$0xf]
  %v1348 = vld [vmem:[%s1334 + $0x34] sm:$0xf]
  %v1349 = vld [vmem:[%s1334 + $0x38] sm:$0xf]
  %v1350 = vld [vmem:[%s1334 + $0x3c] sm:$0xf]
  %v1351 = vld [vmem:[%s1334 + $0x40] sm:$0xf]
  %v1352 = vld [vmem:[%s1334 + $0x44] sm:$0xf]
  %v1353 = vld [vmem:[%s1334 + $0x48] sm:$0xf]
  %v1354 = vld [vmem:[%s1334 + $0x4c] sm:$0xf]
  %v1355 = vld [vmem:[%s1334 + $0x50] sm:$0xf]
  %v1377 = vunpack.c.l.b16 %v1335
  %v1378 = vunpack.c.l.b16 %v1336
  %v1379 = vunpack.c.l.b16 %v1337
  %v1380 = vunpack.c.l.b16 %v1338
  %v1381 = vunpack.c.l.b16 %v1339
  %v1382 = vunpack.c.l.b16 %v1340
  %v1383 = vunpack.c.l.b16 %v1341
  %v1384 = vunpack.c.l.b16 %v1342
  %v1385 = vunpack.c.l.b16 %v1343
  %v1386 = vunpack.c.l.b16 %v1344
  %v1387 = vunpack.c.l.b16 %v1345
  %v1388 = vunpack.c.l.b16 %v1346
  %v1389 = vunpack.c.l.b16 %v1347
  %v1390 = vunpack.c.l.b16 %v1348
  %v1391 = vunpack.c.l.b16 %v1349
  %v1392 = vunpack.c.l.b16 %v1350
  %v1393 = vunpack.c.l.b16 %v1351
  %v1394 = vunpack.c.l.b16 %v1352
  %v1395 = vunpack.c.l.b16 %v1353
  %v1396 = vunpack.c.l.b16 %v1354
  %v1397 = vunpack.c.l.b16 %v1355
  %v1398 = vpack.c.b16 %v1378, %v1377
  %v1399 = vpack.c.b16 %v1380, %v1379
  %v1400 = vpack.c.b16 %v1382, %v1381
  %v1401 = vpack.c.b16 %v1384, %v1383
  %v1402 = vpack.c.b16 %v1386, %v1385
  %v1403 = vpack.c.b16 %v1388, %v1387
  %v1404 = vpack.c.b16 %v1390, %v1389
  %v1405 = vpack.c.b16 %v1392, %v1391
  %v1406 = vpack.c.b16 %v1394, %v1393
  %v1407 = vpack.c.b16 %v1396, %v1395
  %v1408 = vpack.c.b16 %v1397, %v1397
  %1421 = vrot.lane.b32.xlu0 %v1322, 104
  %v1422 = vpop.permute.xlu0 %1421
  %1423 = vrot.lane.b32.xlu0 %v1323, 104
  %v1424 = vpop.permute.xlu0 %1423
  %1425 = vrot.lane.b32.xlu0 %v1324, 104
  %v1426 = vpop.permute.xlu0 %1425
  %1427 = vrot.lane.b32.xlu0 %v1325, 104
  %v1428 = vpop.permute.xlu0 %1427
  %1429 = vrot.lane.b32.xlu0 %v1326, 104
  %v1430 = vpop.permute.xlu0 %1429
  %1431 = vrot.lane.b32.xlu0 %v1327, 104
  %v1432 = vpop.permute.xlu0 %1431
  %1433 = vrot.lane.b32.xlu0 %v1328, 104
  %v1434 = vpop.permute.xlu0 %1433
  %1435 = vrot.lane.b32.xlu0 %v1329, 104
  %v1436 = vpop.permute.xlu0 %1435
  %1437 = vrot.lane.b32.xlu0 %v1330, 104
  %v1438 = vpop.permute.xlu0 %1437
  %1439 = vrot.lane.b32.xlu0 %v1331, 104
  %v1440 = vpop.permute.xlu0 %1439
  %1441 = vrot.lane.b32.xlu0 %v1332, 104
  %v1442 = vpop.permute.xlu0 %1441
  %1443 = vrot.lane.b32.xlu0 %v1333, 104
  %v1444 = vpop.permute.xlu0 %1443
  %vm1445 = vcmask 850944
  %v1446 = vsel %vm1445, %v1422, %v1424
  %v1447 = vsel %vm1445, %v1426, %v1428
  %v1448 = vsel %vm1445, %v1430, %v1432
  %v1449 = vsel %vm1445, %v1434, %v1436
  %v1450 = vsel %vm1445, %v1438, %v1440
  %v1451 = vsel %vm1445, %v1442, %v1444
  %v1465 = vsel %vm149, %v1398, 0
  %v1468 = vsel %vm149, %v1399, 0
  %v1471 = vsel %vm149, %v1400, 0
  %v1474 = vsel %vm149, %v1401, 0
  %v1477 = vsel %vm149, %v1402, 0
  %v1480 = vsel %vm149, %v1403, 0
  %v1483 = vsel %vm149, %v1404, 0
  %v1486 = vsel %vm149, %v1405, 0
  %v1489 = vsel %vm149, %v1406, 0
  %v1492 = vsel %vm149, %v1407, 0
  %v1495 = vsel %vm149, %v1408, 0
  %1497 = vmatprep.subr.bf16.mxu0 0
  %1498 = vmatpush1.bf16.msra.mxu0 0
  %1499 = vmatprep.subr.bf16.mxu0 0
  %1500 = vmatpush1.bf16.msra.mxu0 0
  %1501 = vmatprep.subr.bf16.mxu0 %v1444
  %1502 = vmatpush1.bf16.msra.mxu0 %v1451
  %1503 = vmatprep.subr.bf16.mxu0 %v1440
  %1504 = vmatpush1.bf16.msra.mxu0 %v1450
  %1505 = vmatprep.subr.bf16.mxu0 %v1436
  %1506 = vmatpush1.bf16.msra.mxu0 %v1449
  %1507 = vmatprep.subr.bf16.mxu0 %v1432
  %1508 = vmatpush1.bf16.msra.mxu0 %v1448
  %1509 = vmatprep.subr.bf16.mxu0 %v1428
  %1510 = vmatpush1.bf16.msra.mxu0 %v1447
  %1511 = vmatprep.subr.bf16.mxu0 %v1424
  %1512 = vmatpush1.bf16.msra.mxu0 %v1446
  %1513 = vmatprep.subr.bf16.mxu0 0
  %1514 = vmatpush2.bf16.msra.mxu0 0
  %1515 = vmatprep.subr.bf16.mxu0 0
  %1516 = vmatpush2.bf16.msra.mxu0 0
  %1517 = vmatprep.subr.bf16.mxu0 0
  %1518 = vmatpush2.bf16.msra.mxu0 0
  %1519 = vmatprep.subr.bf16.mxu0 0
  %1520 = vmatpush2.bf16.msra.mxu0 0
  %1521 = vmatprep.subr.bf16.mxu0 0
  %1522 = vmatpush2.bf16.msra.mxu0 0
  %1523 = vmatprep.subr.bf16.mxu0 0
  %1524 = vmatpush2.bf16.msra.mxu0 0
  %1525 = vmatprep.subr.bf16.mxu0 0
  %1526 = vmatpush2.bf16.msra.mxu0 0
  %1527 = vmatprep.subr.bf16.mxu0 0
  %1528 = vmatpush2.bf16.msra.mxu0 0
  %1529 = vmatprep.mubr.bf16.mxu0 0
  %1530 = vmatmul.mubr.bf16.gmra.mxu0 %v1465
  %v1531 = vpop.f32.mrf.mxu0
  %v1532 = vadd.f32 0.0, %v1531
  %v1533 = vpop.f32.mrf.mxu0
  %v1534 = vadd.f32 0.0, %v1533
  %v1535 = vpop.f32.mrf.mxu0
  %v1536 = vadd.f32 0.0, %v1535
  %v1537 = vpop.f32.mrf.mxu0
  %v1538 = vadd.f32 0.0, %v1537
  %1539 = vmatprep.mubr.bf16.mxu0 0
  %1540 = vmatmul.mubr.bf16.gmra.mxu0 %v1468
  %v1541 = vpop.f32.mrf.mxu0
  %v1542 = vadd.f32 0.0, %v1541
  %v1543 = vpop.f32.mrf.mxu0
  %v1544 = vadd.f32 0.0, %v1543
  %v1545 = vpop.f32.mrf.mxu0
  %v1546 = vadd.f32 0.0, %v1545
  %v1547 = vpop.f32.mrf.mxu0
  %v1548 = vadd.f32 0.0, %v1547
  %1549 = vmatprep.mubr.bf16.mxu0 0
  %1550 = vmatmul.mubr.bf16.gmra.mxu0 %v1471
  %v1551 = vpop.f32.mrf.mxu0
  %v1552 = vadd.f32 0.0, %v1551
  %v1553 = vpop.f32.mrf.mxu0
  %v1554 = vadd.f32 0.0, %v1553
  %v1555 = vpop.f32.mrf.mxu0
  %v1556 = vadd.f32 0.0, %v1555
  %v1557 = vpop.f32.mrf.mxu0
  %v1558 = vadd.f32 0.0, %v1557
  %1559 = vmatprep.mubr.bf16.mxu0 0
  %1560 = vmatmul.mubr.bf16.gmra.mxu0 %v1474
  %v1561 = vpop.f32.mrf.mxu0
  %v1562 = vadd.f32 0.0, %v1561
  %v1563 = vpop.f32.mrf.mxu0
  %v1564 = vadd.f32 0.0, %v1563
  %v1565 = vpop.f32.mrf.mxu0
  %v1566 = vadd.f32 0.0, %v1565
  %v1567 = vpop.f32.mrf.mxu0
  %v1568 = vadd.f32 0.0, %v1567
  %1569 = vmatprep.mubr.bf16.mxu0 0
  %1570 = vmatmul.mubr.bf16.gmra.mxu0 %v1477
  %v1571 = vpop.f32.mrf.mxu0
  %v1572 = vadd.f32 0.0, %v1571
  %v1573 = vpop.f32.mrf.mxu0
  %v1574 = vadd.f32 0.0, %v1573
  %v1575 = vpop.f32.mrf.mxu0
  %v1576 = vadd.f32 0.0, %v1575
  %v1577 = vpop.f32.mrf.mxu0
  %v1578 = vadd.f32 0.0, %v1577
  %1579 = vmatprep.mubr.bf16.mxu0 0
  %1580 = vmatmul.mubr.bf16.gmra.mxu0 %v1480
  %v1581 = vpop.f32.mrf.mxu0
  %v1582 = vadd.f32 0.0, %v1581
  %v1583 = vpop.f32.mrf.mxu0
  %v1584 = vadd.f32 0.0, %v1583
  %v1585 = vpop.f32.mrf.mxu0
  %v1586 = vadd.f32 0.0, %v1585
  %v1587 = vpop.f32.mrf.mxu0
  %v1588 = vadd.f32 0.0, %v1587
  %1589 = vmatprep.mubr.bf16.mxu0 0
  %1590 = vmatmul.mubr.bf16.gmra.mxu0 %v1483
  %v1591 = vpop.f32.mrf.mxu0
  %v1592 = vadd.f32 0.0, %v1591
  %v1593 = vpop.f32.mrf.mxu0
  %v1594 = vadd.f32 0.0, %v1593
  %v1595 = vpop.f32.mrf.mxu0
  %v1596 = vadd.f32 0.0, %v1595
  %v1597 = vpop.f32.mrf.mxu0
  %v1598 = vadd.f32 0.0, %v1597
  %1599 = vmatprep.mubr.bf16.mxu0 0
  %1600 = vmatmul.mubr.bf16.gmra.mxu0 %v1486
  %v1601 = vpop.f32.mrf.mxu0
  %v1602 = vadd.f32 0.0, %v1601
  %v1603 = vpop.f32.mrf.mxu0
  %v1604 = vadd.f32 0.0, %v1603
  %v1605 = vpop.f32.mrf.mxu0
  %v1606 = vadd.f32 0.0, %v1605
  %v1607 = vpop.f32.mrf.mxu0
  %v1608 = vadd.f32 0.0, %v1607
  %1609 = vmatprep.mubr.bf16.mxu0 0
  %1610 = vmatmul.mubr.bf16.gmra.mxu0 %v1489
  %v1611 = vpop.f32.mrf.mxu0
  %v1612 = vadd.f32 0.0, %v1611
  %v1613 = vpop.f32.mrf.mxu0
  %v1614 = vadd.f32 0.0, %v1613
  %v1615 = vpop.f32.mrf.mxu0
  %v1616 = vadd.f32 0.0, %v1615
  %v1617 = vpop.f32.mrf.mxu0
  %v1618 = vadd.f32 0.0, %v1617
  %1619 = vmatprep.mubr.bf16.mxu0 0
  %1620 = vmatmul.mubr.bf16.gmra.mxu0 %v1492
  %v1621 = vpop.f32.mrf.mxu0
  %v1622 = vadd.f32 0.0, %v1621
  %v1623 = vpop.f32.mrf.mxu0
  %v1624 = vadd.f32 0.0, %v1623
  %v1625 = vpop.f32.mrf.mxu0
  %v1626 = vadd.f32 0.0, %v1625
  %v1627 = vpop.f32.mrf.mxu0
  %v1628 = vadd.f32 0.0, %v1627
  %1629 = vmatprep.mubr.bf16.mxu0 0
  %1630 = vmatmul.mubr.bf16.gmra.mxu0 %v1495
  %v1631 = vpop.f32.mrf.mxu0
  %v1632 = vadd.f32 0.0, %v1631
  %v1633 = vpop.f32.mrf.mxu0
  %v1634 = vadd.f32 0.0, %v1633
  %v1635 = vpop.f32.mrf.mxu0
  %v1636 = vpop.f32.mrf.mxu0
  %1637 = vdwg.mxu0
  %v1638 = vld [vmem:[#allocation2] sm:$0xff]
  %v1639 = vld [vmem:[#allocation2 + $0x8] sm:$0xff]
  %v1640 = vld [vmem:[#allocation2 + $0x10] sm:$0xff]
  %v1641 = vld [vmem:[#allocation2 + $0x18] sm:$0xff]
  %v1642 = vld [vmem:[#allocation2 + $0x20] sm:$0xff]
  %v1643 = vld [vmem:[#allocation2 + $0x28] sm:$0xff]
  %v1644 = vld [vmem:[#allocation2 + $0x30] sm:$0xff]
  %v1645 = vld [vmem:[#allocation2 + $0x38] sm:$0xff]
  %v1646 = vld [vmem:[#allocation2 + $0x40] sm:$0xff]
  %v1647 = vld [vmem:[#allocation2 + $0x48] sm:$0xff]
  %v1648 = vld [vmem:[#allocation2 + $0x50] sm:$0xff]
  %v1649 = vld [vmem:[#allocation2 + $0x58] sm:$0xff]
  %v1650 = vld [vmem:[#allocation2 + $0x60] sm:$0xff]
  %v1651 = vld [vmem:[#allocation2 + $0x68] sm:$0xff]
  %v1652 = vld [vmem:[#allocation2 + $0x70] sm:$0xff]
  %v1653 = vld [vmem:[#allocation2 + $0x78] sm:$0xff]
  %v1654 = vld [vmem:[#allocation2 + $0x80] sm:$0xff]
  %v1655 = vld [vmem:[#allocation2 + $0x88] sm:$0xff]
  %v1656 = vld [vmem:[#allocation2 + $0x90] sm:$0xff]
  %v1657 = vld [vmem:[#allocation2 + $0x98] sm:$0xff]
  %v1658 = vld [vmem:[#allocation2 + $0xa0] sm:$0xff]
  %v1659 = vld [vmem:[#allocation2 + $0xa8] sm:$0xff]
  %v1660 = vld [vmem:[#allocation2 + $0xb0] sm:$0xff]
  %v1661 = vld [vmem:[#allocation2 + $0xb8] sm:$0xff]
  %v1662 = vld [vmem:[#allocation2 + $0xc0] sm:$0xff]
  %v1663 = vld [vmem:[#allocation2 + $0xc8] sm:$0xff]
  %v1664 = vld [vmem:[#allocation2 + $0xd0] sm:$0xff]
  %v1665 = vld [vmem:[#allocation2 + $0xd8] sm:$0xff]
  %v1666 = vld [vmem:[#allocation2 + $0xe0] sm:$0xff]
  %v1667 = vld [vmem:[#allocation2 + $0xe8] sm:$0xff]
  %v1668 = vld [vmem:[#allocation2 + $0xf0] sm:$0xff]
  %v1669 = vld [vmem:[#allocation2 + $0xf8] sm:$0xff]
  %v1670 = vld [vmem:[#allocation2 + $0x100] sm:$0xff]
  %v1671 = vld [vmem:[#allocation2 + $0x108] sm:$0xff]
  %v1672 = vld [vmem:[#allocation2 + $0x110] sm:$0xff]
  %v1673 = vld [vmem:[#allocation2 + $0x118] sm:$0xff]
  %v1674 = vld [vmem:[#allocation2 + $0x120] sm:$0xff]
  %v1675 = vld [vmem:[#allocation2 + $0x128] sm:$0xff]
  %v1676 = vld [vmem:[#allocation2 + $0x130] sm:$0xff]
  %v1677 = vld [vmem:[#allocation2 + $0x138] sm:$0xff]
  %v1678 = vld [vmem:[#allocation2 + $0x140] sm:$0xff]
  %v1679 = vld [vmem:[#allocation2 + $0x148] sm:$0xff]
  %v1680 = vadd.f32 %v1638, %v1532
  %v1681 = vadd.f32 %v1639, %v1534
  %v1682 = vadd.f32 %v1640, %v1536
  %v1683 = vadd.f32 %v1641, %v1538
  %v1684 = vadd.f32 %v1642, %v1542
  %v1685 = vadd.f32 %v1643, %v1544
  %v1686 = vadd.f32 %v1644, %v1546
  %v1687 = vadd.f32 %v1645, %v1548
  %v1688 = vadd.f32 %v1646, %v1552
  %v1689 = vadd.f32 %v1647, %v1554
  %v1690 = vadd.f32 %v1648, %v1556
  %v1691 = vadd.f32 %v1649, %v1558
  %v1692 = vadd.f32 %v1650, %v1562
  %v1693 = vadd.f32 %v1651, %v1564
  %v1694 = vadd.f32 %v1652, %v1566
  %v1695 = vadd.f32 %v1653, %v1568
  %v1696 = vadd.f32 %v1654, %v1572
  %v1697 = vadd.f32 %v1655, %v1574
  %v1698 = vadd.f32 %v1656, %v1576
  %v1699 = vadd.f32 %v1657, %v1578
  %v1700 = vadd.f32 %v1658, %v1582
  %v1701 = vadd.f32 %v1659, %v1584
  %v1702 = vadd.f32 %v1660, %v1586
  %v1703 = vadd.f32 %v1661, %v1588
  %v1704 = vadd.f32 %v1662, %v1592
  %v1705 = vadd.f32 %v1663, %v1594
  %v1706 = vadd.f32 %v1664, %v1596
  %v1707 = vadd.f32 %v1665, %v1598
  %v1708 = vadd.f32 %v1666, %v1602
  %v1709 = vadd.f32 %v1667, %v1604
  %v1710 = vadd.f32 %v1668, %v1606
  %v1711 = vadd.f32 %v1669, %v1608
  %v1712 = vadd.f32 %v1670, %v1612
  %v1713 = vadd.f32 %v1671, %v1614
  %v1714 = vadd.f32 %v1672, %v1616
  %v1715 = vadd.f32 %v1673, %v1618
  %v1716 = vadd.f32 %v1674, %v1622
  %v1717 = vadd.f32 %v1675, %v1624
  %v1718 = vadd.f32 %v1676, %v1626
  %v1719 = vadd.f32 %v1677, %v1628
  %v1720 = vadd.f32 %v1678, %v1632
  %v1721 = vadd.f32 %v1679, %v1634
  %1722 = vst [vmem:[#allocation2] sm:$0xff] %v1680
  %1723 = vst.msk [vmem:[#allocation2 + $0x8] sm:$0xff] %vm149, %v1681
  %1724 = vst [vmem:[#allocation2 + $0x10] sm:$0xff] %v1682
  %1725 = vst.msk [vmem:[#allocation2 + $0x18] sm:$0xff] %vm149, %v1683
  %1726 = vst [vmem:[#allocation2 + $0x20] sm:$0xff] %v1684
  %1727 = vst.msk [vmem:[#allocation2 + $0x28] sm:$0xff] %vm149, %v1685
  %1728 = vst [vmem:[#allocation2 + $0x30] sm:$0xff] %v1686
  %1729 = vst.msk [vmem:[#allocation2 + $0x38] sm:$0xff] %vm149, %v1687
  %1730 = vst [vmem:[#allocation2 + $0x40] sm:$0xff] %v1688
  %1731 = vst.msk [vmem:[#allocation2 + $0x48] sm:$0xff] %vm149, %v1689
  %1732 = vst [vmem:[#allocation2 + $0x50] sm:$0xff] %v1690
  %1733 = vst.msk [vmem:[#allocation2 + $0x58] sm:$0xff] %vm149, %v1691
  %1734 = vst [vmem:[#allocation2 + $0x60] sm:$0xff] %v1692
  %1735 = vst.msk [vmem:[#allocation2 + $0x68] sm:$0xff] %vm149, %v1693
  %1736 = vst [vmem:[#allocation2 + $0x70] sm:$0xff] %v1694
  %1737 = vst.msk [vmem:[#allocation2 + $0x78] sm:$0xff] %vm149, %v1695
  %1738 = vst [vmem:[#allocation2 + $0x80] sm:$0xff] %v1696
  %1739 = vst.msk [vmem:[#allocation2 + $0x88] sm:$0xff] %vm149, %v1697
  %1740 = vst [vmem:[#allocation2 + $0x90] sm:$0xff] %v1698
  %1741 = vst.msk [vmem:[#allocation2 + $0x98] sm:$0xff] %vm149, %v1699
  %1742 = vst [vmem:[#allocation2 + $0xa0] sm:$0xff] %v1700
  %1743 = vst.msk [vmem:[#allocation2 + $0xa8] sm:$0xff] %vm149, %v1701
  %1744 = vst [vmem:[#allocation2 + $0xb0] sm:$0xff] %v1702
  %1745 = vst.msk [vmem:[#allocation2 + $0xb8] sm:$0xff] %vm149, %v1703
  %1746 = vst [vmem:[#allocation2 + $0xc0] sm:$0xff] %v1704
  %1747 = vst.msk [vmem:[#allocation2 + $0xc8] sm:$0xff] %vm149, %v1705
  %1748 = vst [vmem:[#allocation2 + $0xd0] sm:$0xff] %v1706
  %1749 = vst.msk [vmem:[#allocation2 + $0xd8] sm:$0xff] %vm149, %v1707
  %1750 = vst [vmem:[#allocation2 + $0xe0] sm:$0xff] %v1708
  %1751 = vst.msk [vmem:[#allocation2 + $0xe8] sm:$0xff] %vm149, %v1709
  %1752 = vst [vmem:[#allocation2 + $0xf0] sm:$0xff] %v1710
  %1753 = vst.msk [vmem:[#allocation2 + $0xf8] sm:$0xff] %vm149, %v1711
  %1754 = vst [vmem:[#allocation2 + $0x100] sm:$0xff] %v1712
  %1755 = vst.msk [vmem:[#allocation2 + $0x108] sm:$0xff] %vm149, %v1713
  %1756 = vst [vmem:[#allocation2 + $0x110] sm:$0xff] %v1714
  %1757 = vst.msk [vmem:[#allocation2 + $0x118] sm:$0xff] %vm149, %v1715
  %1758 = vst [vmem:[#allocation2 + $0x120] sm:$0xff] %v1716
  %1759 = vst.msk [vmem:[#allocation2 + $0x128] sm:$0xff] %vm149, %v1717
  %1760 = vst [vmem:[#allocation2 + $0x130] sm:$0xff] %v1718
  %1761 = vst.msk [vmem:[#allocation2 + $0x138] sm:$0xff] %vm149, %v1719
  %1762 = vst [vmem:[#allocation2 + $0x140] sm:$0xff] %v1720
  %1763 = vst.msk [vmem:[#allocation2 + $0x148] sm:$0xff] %vm149, %v1721
  %v1764 = vld [vmem:[%s0] sm:$0xff]
  %v1765 = vld [vmem:[%s0 + $0x8] sm:$0xff]
  %v1766 = vld [vmem:[%s0 + $0x10] sm:$0xff]
  %v1767 = vld [vmem:[%s0 + $0x18] sm:$0xff]
  %v1768 = vld [vmem:[%s0 + $0x20] sm:$0xff]
  %v1769 = vld [vmem:[%s0 + $0x28] sm:$0xff]
  %v1770 = vld [vmem:[%s0 + $0x30] sm:$0xff]
  %v1771 = vld [vmem:[%s0 + $0x38] sm:$0xff]
  %v1772 = vld [vmem:[%s0 + $0x40] sm:$0xff]
  %v1773 = vld [vmem:[%s0 + $0x48] sm:$0xff]
  %v1774 = vld [vmem:[%s0 + $0x50] sm:$0xff]
  %v1775 = vld [vmem:[%s0 + $0x58] sm:$0xff]
  %v1776 = vld [vmem:[%s0 + $0x60] sm:$0xff]
  %v1777 = vld [vmem:[%s0 + $0x68] sm:$0xff]
  %v1778 = vld [vmem:[%s0 + $0x70] sm:$0xff]
  %v1779 = vld [vmem:[%s0 + $0x78] sm:$0xff]
  %v1780 = vld [vmem:[%s0 + $0x80] sm:$0xff]
  %v1781 = vld [vmem:[%s0 + $0x88] sm:$0xff]
  %v1782 = vld [vmem:[%s0 + $0x90] sm:$0xff]
  %v1783 = vld [vmem:[%s0 + $0x98] sm:$0xff]
  %v1784 = vld [vmem:[%s0 + $0xa0] sm:$0xff]
  %v1785 = vld [vmem:[%s0 + $0xa8] sm:$0xff]
  %v1786 = vld [vmem:[%s0 + $0xb0] sm:$0xff]
  %v1787 = vld [vmem:[%s0 + $0xb8] sm:$0xff]
  %v1788 = vpack.c.bf16 %v1766, %v1764
  %v1789 = vpack.c.bf16 %v1767, %v1765
  %v1790 = vpack.c.bf16 %v1770, %v1768
  %v1791 = vpack.c.bf16 %v1771, %v1769
  %v1792 = vpack.c.bf16 %v1774, %v1772
  %v1793 = vpack.c.bf16 %v1775, %v1773
  %v1794 = vpack.c.bf16 %v1778, %v1776
  %v1795 = vpack.c.bf16 %v1779, %v1777
  %v1796 = vpack.c.bf16 %v1782, %v1780
  %v1797 = vpack.c.bf16 %v1783, %v1781
  %v1798 = vpack.c.bf16 %v1786, %v1784
  %v1799 = vpack.c.bf16 %v1787, %v1785
  %s1800 = scalar_lea.vmem %s1, 336
  %v1801 = vld [vmem:[%s1800] sm:$0xf]
  %v1802 = vld [vmem:[%s1800 + $0x4] sm:$0xf]
  %v1803 = vld [vmem:[%s1800 + $0x8] sm:$0xf]
  %v1804 = vld [vmem:[%s1800 + $0xc] sm:$0xf]
  %v1805 = vld [vmem:[%s1800 + $0x10] sm:$0xf]
  %v1806 = vld [vmem:[%s1800 + $0x14] sm:$0xf]
  %v1807 = vld [vmem:[%s1800 + $0x18] sm:$0xf]
  %v1808 = vld [vmem:[%s1800 + $0x1c] sm:$0xf]
  %v1809 = vld [vmem:[%s1800 + $0x20] sm:$0xf]
  %v1810 = vld [vmem:[%s1800 + $0x24] sm:$0xf]
  %v1811 = vld [vmem:[%s1800 + $0x28] sm:$0xf]
  %v1812 = vld [vmem:[%s1800 + $0x2c] sm:$0xf]
  %v1813 = vld [vmem:[%s1800 + $0x30] sm:$0xf]
  %v1814 = vld [vmem:[%s1800 + $0x34] sm:$0xf]
  %v1815 = vld [vmem:[%s1800 + $0x38] sm:$0xf]
  %v1816 = vld [vmem:[%s1800 + $0x3c] sm:$0xf]
  %v1817 = vld [vmem:[%s1800 + $0x40] sm:$0xf]
  %v1818 = vld [vmem:[%s1800 + $0x44] sm:$0xf]
  %v1819 = vld [vmem:[%s1800 + $0x48] sm:$0xf]
  %v1820 = vld [vmem:[%s1800 + $0x4c] sm:$0xf]
  %v1821 = vld [vmem:[%s1800 + $0x50] sm:$0xf]
  %v1843 = vunpack.c.l.b16 %v1801
  %v1844 = vunpack.c.l.b16 %v1802
  %v1845 = vunpack.c.l.b16 %v1803
  %v1846 = vunpack.c.l.b16 %v1804
  %v1847 = vunpack.c.l.b16 %v1805
  %v1848 = vunpack.c.l.b16 %v1806
  %v1849 = vunpack.c.l.b16 %v1807
  %v1850 = vunpack.c.l.b16 %v1808
  %v1851 = vunpack.c.l.b16 %v1809
  %v1852 = vunpack.c.l.b16 %v1810
  %v1853 = vunpack.c.l.b16 %v1811
  %v1854 = vunpack.c.l.b16 %v1812
  %v1855 = vunpack.c.l.b16 %v1813
  %v1856 = vunpack.c.l.b16 %v1814
  %v1857 = vunpack.c.l.b16 %v1815
  %v1858 = vunpack.c.l.b16 %v1816
  %v1859 = vunpack.c.l.b16 %v1817
  %v1860 = vunpack.c.l.b16 %v1818
  %v1861 = vunpack.c.l.b16 %v1819
  %v1862 = vunpack.c.l.b16 %v1820
  %v1863 = vunpack.c.l.b16 %v1821
  %v1864 = vpack.c.b16 %v1844, %v1843
  %v1865 = vpack.c.b16 %v1846, %v1845
  %v1866 = vpack.c.b16 %v1848, %v1847
  %v1867 = vpack.c.b16 %v1850, %v1849
  %v1868 = vpack.c.b16 %v1852, %v1851
  %v1869 = vpack.c.b16 %v1854, %v1853
  %v1870 = vpack.c.b16 %v1856, %v1855
  %v1871 = vpack.c.b16 %v1858, %v1857
  %v1872 = vpack.c.b16 %v1860, %v1859
  %v1873 = vpack.c.b16 %v1862, %v1861
  %v1874 = vpack.c.b16 %v1863, %v1863
  %1887 = vrot.lane.b32.xlu0 %v1788, 96
  %v1888 = vpop.permute.xlu0 %1887
  %1889 = vrot.lane.b32.xlu0 %v1789, 96
  %v1890 = vpop.permute.xlu0 %1889
  %1891 = vrot.lane.b32.xlu0 %v1790, 96
  %v1892 = vpop.permute.xlu0 %1891
  %1893 = vrot.lane.b32.xlu0 %v1791, 96
  %v1894 = vpop.permute.xlu0 %1893
  %1895 = vrot.lane.b32.xlu0 %v1792, 96
  %v1896 = vpop.permute.xlu0 %1895
  %1897 = vrot.lane.b32.xlu0 %v1793, 96
  %v1898 = vpop.permute.xlu0 %1897
  %1899 = vrot.lane.b32.xlu0 %v1794, 96
  %v1900 = vpop.permute.xlu0 %1899
  %1901 = vrot.lane.b32.xlu0 %v1795, 96
  %v1902 = vpop.permute.xlu0 %1901
  %1903 = vrot.lane.b32.xlu0 %v1796, 96
  %v1904 = vpop.permute.xlu0 %1903
  %1905 = vrot.lane.b32.xlu0 %v1797, 96
  %v1906 = vpop.permute.xlu0 %1905
  %1907 = vrot.lane.b32.xlu0 %v1798, 96
  %v1908 = vpop.permute.xlu0 %1907
  %1909 = vrot.lane.b32.xlu0 %v1799, 96
  %v1910 = vpop.permute.xlu0 %1909
  %vm1911 = vcmask 785408
  %v1912 = vsel %vm1911, %v1888, %v1890
  %v1913 = vsel %vm1911, %v1892, %v1894
  %v1914 = vsel %vm1911, %v1896, %v1898
  %v1915 = vsel %vm1911, %v1900, %v1902
  %v1916 = vsel %vm1911, %v1904, %v1906
  %v1917 = vsel %vm1911, %v1908, %v1910
  %v1931 = vsel %vm149, %v1864, 0
  %v1934 = vsel %vm149, %v1865, 0
  %v1937 = vsel %vm149, %v1866, 0
  %v1940 = vsel %vm149, %v1867, 0
  %v1943 = vsel %vm149, %v1868, 0
  %v1946 = vsel %vm149, %v1869, 0
  %v1949 = vsel %vm149, %v1870, 0
  %v1952 = vsel %vm149, %v1871, 0
  %v1955 = vsel %vm149, %v1872, 0
  %v1958 = vsel %vm149, %v1873, 0
  %v1961 = vsel %vm149, %v1874, 0
  %1963 = vmatprep.subr.bf16.mxu0 0
  %1964 = vmatpush1.bf16.msra.mxu0 0
  %1965 = vmatprep.subr.bf16.mxu0 0
  %1966 = vmatpush1.bf16.msra.mxu0 0
  %1967 = vmatprep.subr.bf16.mxu0 %v1910
  %1968 = vmatpush1.bf16.msra.mxu0 %v1917
  %1969 = vmatprep.subr.bf16.mxu0 %v1906
  %1970 = vmatpush1.bf16.msra.mxu0 %v1916
  %1971 = vmatprep.subr.bf16.mxu0 %v1902
  %1972 = vmatpush1.bf16.msra.mxu0 %v1915
  %1973 = vmatprep.subr.bf16.mxu0 %v1898
  %1974 = vmatpush1.bf16.msra.mxu0 %v1914
  %1975 = vmatprep.subr.bf16.mxu0 %v1894
  %1976 = vmatpush1.bf16.msra.mxu0 %v1913
  %1977 = vmatprep.subr.bf16.mxu0 %v1890
  %1978 = vmatpush1.bf16.msra.mxu0 %v1912
  %1979 = vmatprep.subr.bf16.mxu0 0
  %1980 = vmatpush2.bf16.msra.mxu0 0
  %1981 = vmatprep.subr.bf16.mxu0 0
  %1982 = vmatpush2.bf16.msra.mxu0 0
  %1983 = vmatprep.subr.bf16.mxu0 0
  %1984 = vmatpush2.bf16.msra.mxu0 0
  %1985 = vmatprep.subr.bf16.mxu0 0
  %1986 = vmatpush2.bf16.msra.mxu0 0
  %1987 = vmatprep.subr.bf16.mxu0 0
  %1988 = vmatpush2.bf16.msra.mxu0 0
  %1989 = vmatprep.subr.bf16.mxu0 0
  %1990 = vmatpush2.bf16.msra.mxu0 0
  %1991 = vmatprep.subr.bf16.mxu0 0
  %1992 = vmatpush2.bf16.msra.mxu0 0
  %1993 = vmatprep.subr.bf16.mxu0 0
  %1994 = vmatpush2.bf16.msra.mxu0 0
  %1995 = vmatprep.mubr.bf16.mxu0 0
  %1996 = vmatmul.mubr.bf16.gmra.mxu0 %v1931
  %v1997 = vpop.f32.mrf.mxu0
  %v1998 = vadd.f32 0.0, %v1997
  %v1999 = vpop.f32.mrf.mxu0
  %v2000 = vadd.f32 0.0, %v1999
  %v2001 = vpop.f32.mrf.mxu0
  %v2002 = vadd.f32 0.0, %v2001
  %v2003 = vpop.f32.mrf.mxu0
  %v2004 = vadd.f32 0.0, %v2003
  %2005 = vmatprep.mubr.bf16.mxu0 0
  %2006 = vmatmul.mubr.bf16.gmra.mxu0 %v1934
  %v2007 = vpop.f32.mrf.mxu0
  %v2008 = vadd.f32 0.0, %v2007
  %v2009 = vpop.f32.mrf.mxu0
  %v2010 = vadd.f32 0.0, %v2009
  %v2011 = vpop.f32.mrf.mxu0
  %v2012 = vadd.f32 0.0, %v2011
  %v2013 = vpop.f32.mrf.mxu0
  %v2014 = vadd.f32 0.0, %v2013
  %2015 = vmatprep.mubr.bf16.mxu0 0
  %2016 = vmatmul.mubr.bf16.gmra.mxu0 %v1937
  %v2017 = vpop.f32.mrf.mxu0
  %v2018 = vadd.f32 0.0, %v2017
  %v2019 = vpop.f32.mrf.mxu0
  %v2020 = vadd.f32 0.0, %v2019
  %v2021 = vpop.f32.mrf.mxu0
  %v2022 = vadd.f32 0.0, %v2021
  %v2023 = vpop.f32.mrf.mxu0
  %v2024 = vadd.f32 0.0, %v2023
  %2025 = vmatprep.mubr.bf16.mxu0 0
  %2026 = vmatmul.mubr.bf16.gmra.mxu0 %v1940
  %v2027 = vpop.f32.mrf.mxu0
  %v2028 = vadd.f32 0.0, %v2027
  %v2029 = vpop.f32.mrf.mxu0
  %v2030 = vadd.f32 0.0, %v2029
  %v2031 = vpop.f32.mrf.mxu0
  %v2032 = vadd.f32 0.0, %v2031
  %v2033 = vpop.f32.mrf.mxu0
  %v2034 = vadd.f32 0.0, %v2033
  %2035 = vmatprep.mubr.bf16.mxu0 0
  %2036 = vmatmul.mubr.bf16.gmra.mxu0 %v1943
  %v2037 = vpop.f32.mrf.mxu0
  %v2038 = vadd.f32 0.0, %v2037
  %v2039 = vpop.f32.mrf.mxu0
  %v2040 = vadd.f32 0.0, %v2039
  %v2041 = vpop.f32.mrf.mxu0
  %v2042 = vadd.f32 0.0, %v2041
  %v2043 = vpop.f32.mrf.mxu0
  %v2044 = vadd.f32 0.0, %v2043
  %2045 = vmatprep.mubr.bf16.mxu0 0
  %2046 = vmatmul.mubr.bf16.gmra.mxu0 %v1946
  %v2047 = vpop.f32.mrf.mxu0
  %v2048 = vadd.f32 0.0, %v2047
  %v2049 = vpop.f32.mrf.mxu0
  %v2050 = vadd.f32 0.0, %v2049
  %v2051 = vpop.f32.mrf.mxu0
  %v2052 = vadd.f32 0.0, %v2051
  %v2053 = vpop.f32.mrf.mxu0
  %v2054 = vadd.f32 0.0, %v2053
  %2055 = vmatprep.mubr.bf16.mxu0 0
  %2056 = vmatmul.mubr.bf16.gmra.mxu0 %v1949
  %v2057 = vpop.f32.mrf.mxu0
  %v2058 = vadd.f32 0.0, %v2057
  %v2059 = vpop.f32.mrf.mxu0
  %v2060 = vadd.f32 0.0, %v2059
  %v2061 = vpop.f32.mrf.mxu0
  %v2062 = vadd.f32 0.0, %v2061
  %v2063 = vpop.f32.mrf.mxu0
  %v2064 = vadd.f32 0.0, %v2063
  %2065 = vmatprep.mubr.bf16.mxu0 0
  %2066 = vmatmul.mubr.bf16.gmra.mxu0 %v1952
  %v2067 = vpop.f32.mrf.mxu0
  %v2068 = vadd.f32 0.0, %v2067
  %v2069 = vpop.f32.mrf.mxu0
  %v2070 = vadd.f32 0.0, %v2069
  %v2071 = vpop.f32.mrf.mxu0
  %v2072 = vadd.f32 0.0, %v2071
  %v2073 = vpop.f32.mrf.mxu0
  %v2074 = vadd.f32 0.0, %v2073
  %2075 = vmatprep.mubr.bf16.mxu0 0
  %2076 = vmatmul.mubr.bf16.gmra.mxu0 %v1955
  %v2077 = vpop.f32.mrf.mxu0
  %v2078 = vadd.f32 0.0, %v2077
  %v2079 = vpop.f32.mrf.mxu0
  %v2080 = vadd.f32 0.0, %v2079
  %v2081 = vpop.f32.mrf.mxu0
  %v2082 = vadd.f32 0.0, %v2081
  %v2083 = vpop.f32.mrf.mxu0
  %v2084 = vadd.f32 0.0, %v2083
  %2085 = vmatprep.mubr.bf16.mxu0 0
  %2086 = vmatmul.mubr.bf16.gmra.mxu0 %v1958
  %v2087 = vpop.f32.mrf.mxu0
  %v2088 = vadd.f32 0.0, %v2087
  %v2089 = vpop.f32.mrf.mxu0
  %v2090 = vadd.f32 0.0, %v2089
  %v2091 = vpop.f32.mrf.mxu0
  %v2092 = vadd.f32 0.0, %v2091
  %v2093 = vpop.f32.mrf.mxu0
  %v2094 = vadd.f32 0.0, %v2093
  %2095 = vmatprep.mubr.bf16.mxu0 0
  %2096 = vmatmul.mubr.bf16.gmra.mxu0 %v1961
  %v2097 = vpop.f32.mrf.mxu0
  %v2098 = vadd.f32 0.0, %v2097
  %v2099 = vpop.f32.mrf.mxu0
  %v2100 = vadd.f32 0.0, %v2099
  %v2101 = vpop.f32.mrf.mxu0
  %v2102 = vpop.f32.mrf.mxu0
  %2103 = vdwg.mxu0
  %v2104 = vld [vmem:[#allocation2] sm:$0xff]
  %v2105 = vld [vmem:[#allocation2 + $0x8] sm:$0xff]
  %v2106 = vld [vmem:[#allocation2 + $0x10] sm:$0xff]
  %v2107 = vld [vmem:[#allocation2 + $0x18] sm:$0xff]
  %v2108 = vld [vmem:[#allocation2 + $0x20] sm:$0xff]
  %v2109 = vld [vmem:[#allocation2 + $0x28] sm:$0xff]
  %v2110 = vld [vmem:[#allocation2 + $0x30] sm:$0xff]
  %v2111 = vld [vmem:[#allocation2 + $0x38] sm:$0xff]
  %v2112 = vld [vmem:[#allocation2 + $0x40] sm:$0xff]
  %v2113 = vld [vmem:[#allocation2 + $0x48] sm:$0xff]
  %v2114 = vld [vmem:[#allocation2 + $0x50] sm:$0xff]
  %v2115 = vld [vmem:[#allocation2 + $0x58] sm:$0xff]
  %v2116 = vld [vmem:[#allocation2 + $0x60] sm:$0xff]
  %v2117 = vld [vmem:[#allocation2 + $0x68] sm:$0xff]
  %v2118 = vld [vmem:[#allocation2 + $0x70] sm:$0xff]
  %v2119 = vld [vmem:[#allocation2 + $0x78] sm:$0xff]
  %v2120 = vld [vmem:[#allocation2 + $0x80] sm:$0xff]
  %v2121 = vld [vmem:[#allocation2 + $0x88] sm:$0xff]
  %v2122 = vld [vmem:[#allocation2 + $0x90] sm:$0xff]
  %v2123 = vld [vmem:[#allocation2 + $0x98] sm:$0xff]
  %v2124 = vld [vmem:[#allocation2 + $0xa0] sm:$0xff]
  %v2125 = vld [vmem:[#allocation2 + $0xa8] sm:$0xff]
  %v2126 = vld [vmem:[#allocation2 + $0xb0] sm:$0xff]
  %v2127 = vld [vmem:[#allocation2 + $0xb8] sm:$0xff]
  %v2128 = vld [vmem:[#allocation2 + $0xc0] sm:$0xff]
  %v2129 = vld [vmem:[#allocation2 + $0xc8] sm:$0xff]
  %v2130 = vld [vmem:[#allocation2 + $0xd0] sm:$0xff]
  %v2131 = vld [vmem:[#allocation2 + $0xd8] sm:$0xff]
  %v2132 = vld [vmem:[#allocation2 + $0xe0] sm:$0xff]
  %v2133 = vld [vmem:[#allocation2 + $0xe8] sm:$0xff]
  %v2134 = vld [vmem:[#allocation2 + $0xf0] sm:$0xff]
  %v2135 = vld [vmem:[#allocation2 + $0xf8] sm:$0xff]
  %v2136 = vld [vmem:[#allocation2 + $0x100] sm:$0xff]
  %v2137 = vld [vmem:[#allocation2 + $0x108] sm:$0xff]
  %v2138 = vld [vmem:[#allocation2 + $0x110] sm:$0xff]
  %v2139 = vld [vmem:[#allocation2 + $0x118] sm:$0xff]
  %v2140 = vld [vmem:[#allocation2 + $0x120] sm:$0xff]
  %v2141 = vld [vmem:[#allocation2 + $0x128] sm:$0xff]
  %v2142 = vld [vmem:[#allocation2 + $0x130] sm:$0xff]
  %v2143 = vld [vmem:[#allocation2 + $0x138] sm:$0xff]
  %v2144 = vld [vmem:[#allocation2 + $0x140] sm:$0xff]
  %v2145 = vld [vmem:[#allocation2 + $0x148] sm:$0xff]
  %v2146 = vadd.f32 %v2104, %v1998
  %v2147 = vadd.f32 %v2105, %v2000
  %v2148 = vadd.f32 %v2106, %v2002
  %v2149 = vadd.f32 %v2107, %v2004
  %v2150 = vadd.f32 %v2108, %v2008
  %v2151 = vadd.f32 %v2109, %v2010
  %v2152 = vadd.f32 %v2110, %v2012
  %v2153 = vadd.f32 %v2111, %v2014
  %v2154 = vadd.f32 %v2112, %v2018
  %v2155 = vadd.f32 %v2113, %v2020
  %v2156 = vadd.f32 %v2114, %v2022
  %v2157 = vadd.f32 %v2115, %v2024
  %v2158 = vadd.f32 %v2116, %v2028
  %v2159 = vadd.f32 %v2117, %v2030
  %v2160 = vadd.f32 %v2118, %v2032
  %v2161 = vadd.f32 %v2119, %v2034
  %v2162 = vadd.f32 %v2120, %v2038
  %v2163 = vadd.f32 %v2121, %v2040
  %v2164 = vadd.f32 %v2122, %v2042
  %v2165 = vadd.f32 %v2123, %v2044
  %v2166 = vadd.f32 %v2124, %v2048
  %v2167 = vadd.f32 %v2125, %v2050
  %v2168 = vadd.f32 %v2126, %v2052
  %v2169 = vadd.f32 %v2127, %v2054
  %v2170 = vadd.f32 %v2128, %v2058
  %v2171 = vadd.f32 %v2129, %v2060
  %v2172 = vadd.f32 %v2130, %v2062
  %v2173 = vadd.f32 %v2131, %v2064
  %v2174 = vadd.f32 %v2132, %v2068
  %v2175 = vadd.f32 %v2133, %v2070
  %v2176 = vadd.f32 %v2134, %v2072
  %v2177 = vadd.f32 %v2135, %v2074
  %v2178 = vadd.f32 %v2136, %v2078
  %v2179 = vadd.f32 %v2137, %v2080
  %v2180 = vadd.f32 %v2138, %v2082
  %v2181 = vadd.f32 %v2139, %v2084
  %v2182 = vadd.f32 %v2140, %v2088
  %v2183 = vadd.f32 %v2141, %v2090
  %v2184 = vadd.f32 %v2142, %v2092
  %v2185 = vadd.f32 %v2143, %v2094
  %v2186 = vadd.f32 %v2144, %v2098
  %v2187 = vadd.f32 %v2145, %v2100
  %2188 = vst [vmem:[#allocation2] sm:$0xff] %v2146
  %2189 = vst.msk [vmem:[#allocation2 + $0x8] sm:$0xff] %vm149, %v2147
  %2190 = vst [vmem:[#allocation2 + $0x10] sm:$0xff] %v2148
  %2191 = vst.msk [vmem:[#allocation2 + $0x18] sm:$0xff] %vm149, %v2149
  %2192 = vst [vmem:[#allocation2 + $0x20] sm:$0xff] %v2150
  %2193 = vst.msk [vmem:[#allocation2 + $0x28] sm:$0xff] %vm149, %v2151
  %2194 = vst [vmem:[#allocation2 + $0x30] sm:$0xff] %v2152
  %2195 = vst.msk [vmem:[#allocation2 + $0x38] sm:$0xff] %vm149, %v2153
  %2196 = vst [vmem:[#allocation2 + $0x40] sm:$0xff] %v2154
  %2197 = vst.msk [vmem:[#allocation2 + $0x48] sm:$0xff] %vm149, %v2155
  %2198 = vst [vmem:[#allocation2 + $0x50] sm:$0xff] %v2156
  %2199 = vst.msk [vmem:[#allocation2 + $0x58] sm:$0xff] %vm149, %v2157
  %2200 = vst [vmem:[#allocation2 + $0x60] sm:$0xff] %v2158
  %2201 = vst.msk [vmem:[#allocation2 + $0x68] sm:$0xff] %vm149, %v2159
  %2202 = vst [vmem:[#allocation2 + $0x70] sm:$0xff] %v2160
  %2203 = vst.msk [vmem:[#allocation2 + $0x78] sm:$0xff] %vm149, %v2161
  %2204 = vst [vmem:[#allocation2 + $0x80] sm:$0xff] %v2162
  %2205 = vst.msk [vmem:[#allocation2 + $0x88] sm:$0xff] %vm149, %v2163
  %2206 = vst [vmem:[#allocation2 + $0x90] sm:$0xff] %v2164
  %2207 = vst.msk [vmem:[#allocation2 + $0x98] sm:$0xff] %vm149, %v2165
  %2208 = vst [vmem:[#allocation2 + $0xa0] sm:$0xff] %v2166
  %2209 = vst.msk [vmem:[#allocation2 + $0xa8] sm:$0xff] %vm149, %v2167
  %2210 = vst [vmem:[#allocation2 + $0xb0] sm:$0xff] %v2168
  %2211 = vst.msk [vmem:[#allocation2 + $0xb8] sm:$0xff] %vm149, %v2169
  %2212 = vst [vmem:[#allocation2 + $0xc0] sm:$0xff] %v2170
  %2213 = vst.msk [vmem:[#allocation2 + $0xc8] sm:$0xff] %vm149, %v2171
  %2214 = vst [vmem:[#allocation2 + $0xd0] sm:$0xff] %v2172
  %2215 = vst.msk [vmem:[#allocation2 + $0xd8] sm:$0xff] %vm149, %v2173
  %2216 = vst [vmem:[#allocation2 + $0xe0] sm:$0xff] %v2174
  %2217 = vst.msk [vmem:[#allocation2 + $0xe8] sm:$0xff] %vm149, %v2175
  %2218 = vst [vmem:[#allocation2 + $0xf0] sm:$0xff] %v2176
  %2219 = vst.msk [vmem:[#allocation2 + $0xf8] sm:$0xff] %vm149, %v2177
  %2220 = vst [vmem:[#allocation2 + $0x100] sm:$0xff] %v2178
  %2221 = vst.msk [vmem:[#allocation2 + $0x108] sm:$0xff] %vm149, %v2179
  %2222 = vst [vmem:[#allocation2 + $0x110] sm:$0xff] %v2180
  %2223 = vst.msk [vmem:[#allocation2 + $0x118] sm:$0xff] %vm149, %v2181
  %2224 = vst [vmem:[#allocation2 + $0x120] sm:$0xff] %v2182
  %2225 = vst.msk [vmem:[#allocation2 + $0x128] sm:$0xff] %vm149, %v2183
  %2226 = vst [vmem:[#allocation2 + $0x130] sm:$0xff] %v2184
  %2227 = vst.msk [vmem:[#allocation2 + $0x138] sm:$0xff] %vm149, %v2185
  %2228 = vst [vmem:[#allocation2 + $0x140] sm:$0xff] %v2186
  %2229 = vst.msk [vmem:[#allocation2 + $0x148] sm:$0xff] %vm149, %v2187
  %v2230 = vld [vmem:[#allocation2] sm:$0xff]
  %v2231 = vld [vmem:[#allocation2 + $0x8] sm:$0xff]
  %v2232 = vld [vmem:[#allocation2 + $0x10] sm:$0xff]
  %v2233 = vld [vmem:[#allocation2 + $0x18] sm:$0xff]
  %v2234 = vld [vmem:[#allocation2 + $0x20] sm:$0xff]
  %v2235 = vld [vmem:[#allocation2 + $0x28] sm:$0xff]
  %v2236 = vld [vmem:[#allocation2 + $0x30] sm:$0xff]
  %v2237 = vld [vmem:[#allocation2 + $0x38] sm:$0xff]
  %v2238 = vld [vmem:[#allocation2 + $0x40] sm:$0xff]
  %v2239 = vld [vmem:[#allocation2 + $0x48] sm:$0xff]
  %v2240 = vld [vmem:[#allocation2 + $0x50] sm:$0xff]
  %v2241 = vld [vmem:[#allocation2 + $0x58] sm:$0xff]
  %v2242 = vld [vmem:[#allocation2 + $0x60] sm:$0xff]
  %v2243 = vld [vmem:[#allocation2 + $0x68] sm:$0xff]
  %v2244 = vld [vmem:[#allocation2 + $0x70] sm:$0xff]
  %v2245 = vld [vmem:[#allocation2 + $0x78] sm:$0xff]
  %v2246 = vld [vmem:[#allocation2 + $0x80] sm:$0xff]
  %v2247 = vld [vmem:[#allocation2 + $0x88] sm:$0xff]
  %v2248 = vld [vmem:[#allocation2 + $0x90] sm:$0xff]
  %v2249 = vld [vmem:[#allocation2 + $0x98] sm:$0xff]
  %v2250 = vld [vmem:[#allocation2 + $0xa0] sm:$0xff]
  %v2251 = vld [vmem:[#allocation2 + $0xa8] sm:$0xff]
  %v2252 = vld [vmem:[#allocation2 + $0xb0] sm:$0xff]
  %v2253 = vld [vmem:[#allocation2 + $0xb8] sm:$0xff]
  %v2254 = vld [vmem:[#allocation2 + $0xc0] sm:$0xff]
  %v2255 = vld [vmem:[#allocation2 + $0xc8] sm:$0xff]
  %v2256 = vld [vmem:[#allocation2 + $0xd0] sm:$0xff]
  %v2257 = vld [vmem:[#allocation2 + $0xd8] sm:$0xff]
  %v2258 = vld [vmem:[#allocation2 + $0xe0] sm:$0xff]
  %v2259 = vld [vmem:[#allocation2 + $0xe8] sm:$0xff]
  %v2260 = vld [vmem:[#allocation2 + $0xf0] sm:$0xff]
  %v2261 = vld [vmem:[#allocation2 + $0xf8] sm:$0xff]
  %v2262 = vld [vmem:[#allocation2 + $0x100] sm:$0xff]
  %v2263 = vld [vmem:[#allocation2 + $0x108] sm:$0xff]
  %v2264 = vld [vmem:[#allocation2 + $0x110] sm:$0xff]
  %v2265 = vld [vmem:[#allocation2 + $0x118] sm:$0xff]
  %v2266 = vld [vmem:[#allocation2 + $0x120] sm:$0xff]
  %v2267 = vld [vmem:[#allocation2 + $0x128] sm:$0xff]
  %v2268 = vld [vmem:[#allocation2 + $0x130] sm:$0xff]
  %v2269 = vld [vmem:[#allocation2 + $0x138] sm:$0xff]
  %v2270 = vld [vmem:[#allocation2 + $0x140] sm:$0xff]
  %v2271 = vld [vmem:[#allocation2 + $0x148] sm:$0xff]
  %v2272 = vld [vmem:[%s2] sm:$0xff]
  %v2273 = vld [vmem:[%s2 + $0x8] sm:$0xff]
  %v2274 = vld [vmem:[%s2 + $0x10] sm:$0xff]
  %v2275 = vld [vmem:[%s2 + $0x18] sm:$0xff]
  %v2276 = vld [vmem:[%s2 + $0x20] sm:$0xff]
  %v2277 = vld [vmem:[%s2 + $0x28] sm:$0xff]
  %v2278 = vld [vmem:[%s2 + $0x30] sm:$0xff]
  %v2279 = vld [vmem:[%s2 + $0x38] sm:$0xff]
  %v2280 = vld [vmem:[%s2 + $0x40] sm:$0xff]
  %v2281 = vld [vmem:[%s2 + $0x48] sm:$0xff]
  %v2282 = vld [vmem:[%s2 + $0x50] sm:$0xff]
  %v2283 = vld [vmem:[%s2 + $0x58] sm:$0xff]
  %v2284 = vld [vmem:[%s2 + $0x60] sm:$0xff]
  %v2285 = vld [vmem:[%s2 + $0x68] sm:$0xff]
  %v2286 = vld [vmem:[%s2 + $0x70] sm:$0xff]
  %v2287 = vld [vmem:[%s2 + $0x78] sm:$0xff]
  %v2288 = vld [vmem:[%s2 + $0x80] sm:$0xff]
  %v2289 = vld [vmem:[%s2 + $0x88] sm:$0xff]
  %v2290 = vld [vmem:[%s2 + $0x90] sm:$0xff]
  %v2291 = vld [vmem:[%s2 + $0x98] sm:$0xff]
  %v2292 = vld [vmem:[%s2 + $0xa0] sm:$0xff]
  %2294 = vset.pattern.permute.xlu0 0
  %2295 = vperm.xlu0 %2294, %v2272
  %v2296 = vpop.permute.xlu0 %2295
  %2299 = vset.pattern.permute.xlu0 0
  %2300 = vperm.xlu0 %2299, %v2273
  %v2301 = vpop.permute.xlu0 %2300
  %2304 = vset.pattern.permute.xlu0 0
  %2305 = vperm.xlu0 %2304, %v2274
  %v2306 = vpop.permute.xlu0 %2305
  %2309 = vset.pattern.permute.xlu0 0
  %2310 = vperm.xlu0 %2309, %v2275
  %v2311 = vpop.permute.xlu0 %2310
  %2314 = vset.pattern.permute.xlu0 0
  %2315 = vperm.xlu0 %2314, %v2276
  %v2316 = vpop.permute.xlu0 %2315
  %2319 = vset.pattern.permute.xlu0 0
  %2320 = vperm.xlu0 %2319, %v2277
  %v2321 = vpop.permute.xlu0 %2320
  %2324 = vset.pattern.permute.xlu0 0
  %2325 = vperm.xlu0 %2324, %v2278
  %v2326 = vpop.permute.xlu0 %2325
  %2329 = vset.pattern.permute.xlu0 0
  %2330 = vperm.xlu0 %2329, %v2279
  %v2331 = vpop.permute.xlu0 %2330
  %2334 = vset.pattern.permute.xlu0 0
  %2335 = vperm.xlu0 %2334, %v2280
  %v2336 = vpop.permute.xlu0 %2335
  %2339 = vset.pattern.permute.xlu0 0
  %2340 = vperm.xlu0 %2339, %v2281
  %v2341 = vpop.permute.xlu0 %2340
  %2344 = vset.pattern.permute.xlu0 0
  %2345 = vperm.xlu0 %2344, %v2282
  %v2346 = vpop.permute.xlu0 %2345
  %2349 = vset.pattern.permute.xlu0 0
  %2350 = vperm.xlu0 %2349, %v2283
  %v2351 = vpop.permute.xlu0 %2350
  %2354 = vset.pattern.permute.xlu0 0
  %2355 = vperm.xlu0 %2354, %v2284
  %v2356 = vpop.permute.xlu0 %2355
  %2359 = vset.pattern.permute.xlu0 0
  %2360 = vperm.xlu0 %2359, %v2285
  %v2361 = vpop.permute.xlu0 %2360
  %2364 = vset.pattern.permute.xlu0 0
  %2365 = vperm.xlu0 %2364, %v2286
  %v2366 = vpop.permute.xlu0 %2365
  %2369 = vset.pattern.permute.xlu0 0
  %2370 = vperm.xlu0 %2369, %v2287
  %v2371 = vpop.permute.xlu0 %2370
  %2374 = vset.pattern.permute.xlu0 0
  %2375 = vperm.xlu0 %2374, %v2288
  %v2376 = vpop.permute.xlu0 %2375
  %2379 = vset.pattern.permute.xlu0 0
  %2380 = vperm.xlu0 %2379, %v2289
  %v2381 = vpop.permute.xlu0 %2380
  %2384 = vset.pattern.permute.xlu0 0
  %2385 = vperm.xlu0 %2384, %v2290
  %v2386 = vpop.permute.xlu0 %2385
  %2389 = vset.pattern.permute.xlu0 0
  %2390 = vperm.xlu0 %2389, %v2291
  %v2391 = vpop.permute.xlu0 %2390
  %2394 = vset.pattern.permute.xlu0 0
  %2395 = vperm.xlu0 %2394, %v2292
  %v2396 = vpop.permute.xlu0 %2395
  %v2398 = vadd.f32 %v2230, %v2296
  %v2399 = vadd.f32 %v2231, %v2296
  %v2400 = vadd.f32 %v2232, %v2301
  %v2401 = vadd.f32 %v2233, %v2301
  %v2402 = vadd.f32 %v2234, %v2306
  %v2403 = vadd.f32 %v2235, %v2306
  %v2404 = vadd.f32 %v2236, %v2311
  %v2405 = vadd.f32 %v2237, %v2311
  %v2406 = vadd.f32 %v2238, %v2316
  %v2407 = vadd.f32 %v2239, %v2316
  %v2408 = vadd.f32 %v2240, %v2321
  %v2409 = vadd.f32 %v2241, %v2321
  %v2410 = vadd.f32 %v2242, %v2326
  %v2411 = vadd.f32 %v2243, %v2326
  %v2412 = vadd.f32 %v2244, %v2331
  %v2413 = vadd.f32 %v2245, %v2331
  %v2414 = vadd.f32 %v2246, %v2336
  %v2415 = vadd.f32 %v2247, %v2336
  %v2416 = vadd.f32 %v2248, %v2341
  %v2417 = vadd.f32 %v2249, %v2341
  %v2418 = vadd.f32 %v2250, %v2346
  %v2419 = vadd.f32 %v2251, %v2346
  %v2420 = vadd.f32 %v2252, %v2351
  %v2421 = vadd.f32 %v2253, %v2351
  %v2422 = vadd.f32 %v2254, %v2356
  %v2423 = vadd.f32 %v2255, %v2356
  %v2424 = vadd.f32 %v2256, %v2361
  %v2425 = vadd.f32 %v2257, %v2361
  %v2426 = vadd.f32 %v2258, %v2366
  %v2427 = vadd.f32 %v2259, %v2366
  %v2428 = vadd.f32 %v2260, %v2371
  %v2429 = vadd.f32 %v2261, %v2371
  %v2430 = vadd.f32 %v2262, %v2376
  %v2431 = vadd.f32 %v2263, %v2376
  %v2432 = vadd.f32 %v2264, %v2381
  %v2433 = vadd.f32 %v2265, %v2381
  %v2434 = vadd.f32 %v2266, %v2386
  %v2435 = vadd.f32 %v2267, %v2386
  %v2436 = vadd.f32 %v2268, %v2391
  %v2437 = vadd.f32 %v2269, %v2391
  %v2438 = vadd.f32 %v2270, %v2396
  %v2439 = vadd.f32 %v2271, %v2396
  %v2440 = vmax.f32 %v2398, 0.0
  %v2441 = vmax.f32 %v2399, 0.0
  %v2442 = vmax.f32 %v2400, 0.0
  %v2443 = vmax.f32 %v2401, 0.0
  %v2444 = vmax.f32 %v2402, 0.0
  %v2445 = vmax.f32 %v2403, 0.0
  %v2446 = vmax.f32 %v2404, 0.0
  %v2447 = vmax.f32 %v2405, 0.0
  %v2448 = vmax.f32 %v2406, 0.0
  %v2449 = vmax.f32 %v2407, 0.0
  %v2450 = vmax.f32 %v2408, 0.0
  %v2451 = vmax.f32 %v2409, 0.0
  %v2452 = vmax.f32 %v2410, 0.0
  %v2453 = vmax.f32 %v2411, 0.0
  %v2454 = vmax.f32 %v2412, 0.0
  %v2455 = vmax.f32 %v2413, 0.0
  %v2456 = vmax.f32 %v2414, 0.0
  %v2457 = vmax.f32 %v2415, 0.0
  %v2458 = vmax.f32 %v2416, 0.0
  %v2459 = vmax.f32 %v2417, 0.0
  %v2460 = vmax.f32 %v2418, 0.0
  %v2461 = vmax.f32 %v2419, 0.0
  %v2462 = vmax.f32 %v2420, 0.0
  %v2463 = vmax.f32 %v2421, 0.0
  %v2464 = vmax.f32 %v2422, 0.0
  %v2465 = vmax.f32 %v2423, 0.0
  %v2466 = vmax.f32 %v2424, 0.0
  %v2467 = vmax.f32 %v2425, 0.0
  %v2468 = vmax.f32 %v2426, 0.0
  %v2469 = vmax.f32 %v2427, 0.0
  %v2470 = vmax.f32 %v2428, 0.0
  %v2471 = vmax.f32 %v2429, 0.0
  %v2472 = vmax.f32 %v2430, 0.0
  %v2473 = vmax.f32 %v2431, 0.0
  %v2474 = vmax.f32 %v2432, 0.0
  %v2475 = vmax.f32 %v2433, 0.0
  %v2476 = vmax.f32 %v2434, 0.0
  %v2477 = vmax.f32 %v2435, 0.0
  %v2478 = vmax.f32 %v2436, 0.0
  %v2479 = vmax.f32 %v2437, 0.0
  %v2480 = vmax.f32 %v2438, 0.0
  %v2481 = vmax.f32 %v2439, 0.0
  %2482 = vst [vmem:[#allocation2] sm:$0xff] %v2440
  %2483 = vst.msk [vmem:[#allocation2 + $0x8] sm:$0xff] %vm149, %v2441
  %2484 = vst [vmem:[#allocation2 + $0x10] sm:$0xff] %v2442
  %2485 = vst.msk [vmem:[#allocation2 + $0x18] sm:$0xff] %vm149, %v2443
  %2486 = vst [vmem:[#allocation2 + $0x20] sm:$0xff] %v2444
  %2487 = vst.msk [vmem:[#allocation2 + $0x28] sm:$0xff] %vm149, %v2445
  %2488 = vst [vmem:[#allocation2 + $0x30] sm:$0xff] %v2446
  %2489 = vst.msk [vmem:[#allocation2 + $0x38] sm:$0xff] %vm149, %v2447
  %2490 = vst [vmem:[#allocation2 + $0x40] sm:$0xff] %v2448
  %2491 = vst.msk [vmem:[#allocation2 + $0x48] sm:$0xff] %vm149, %v2449
  %2492 = vst [vmem:[#allocation2 + $0x50] sm:$0xff] %v2450
  %2493 = vst.msk [vmem:[#allocation2 + $0x58] sm:$0xff] %vm149, %v2451
  %2494 = vst [vmem:[#allocation2 + $0x60] sm:$0xff] %v2452
  %2495 = vst.msk [vmem:[#allocation2 + $0x68] sm:$0xff] %vm149, %v2453
  %2496 = vst [vmem:[#allocation2 + $0x70] sm:$0xff] %v2454
  %2497 = vst.msk [vmem:[#allocation2 + $0x78] sm:$0xff] %vm149, %v2455
  %2498 = vst [vmem:[#allocation2 + $0x80] sm:$0xff] %v2456
  %2499 = vst.msk [vmem:[#allocation2 + $0x88] sm:$0xff] %vm149, %v2457
  %2500 = vst [vmem:[#allocation2 + $0x90] sm:$0xff] %v2458
  %2501 = vst.msk [vmem:[#allocation2 + $0x98] sm:$0xff] %vm149, %v2459
  %2502 = vst [vmem:[#allocation2 + $0xa0] sm:$0xff] %v2460
  %2503 = vst.msk [vmem:[#allocation2 + $0xa8] sm:$0xff] %vm149, %v2461
  %2504 = vst [vmem:[#allocation2 + $0xb0] sm:$0xff] %v2462
  %2505 = vst.msk [vmem:[#allocation2 + $0xb8] sm:$0xff] %vm149, %v2463
  %2506 = vst [vmem:[#allocation2 + $0xc0] sm:$0xff] %v2464
  %2507 = vst.msk [vmem:[#allocation2 + $0xc8] sm:$0xff] %vm149, %v2465
  %2508 = vst [vmem:[#allocation2 + $0xd0] sm:$0xff] %v2466
  %2509 = vst.msk [vmem:[#allocation2 + $0xd8] sm:$0xff] %vm149, %v2467
  %2510 = vst [vmem:[#allocation2 + $0xe0] sm:$0xff] %v2468
  %2511 = vst.msk [vmem:[#allocation2 + $0xe8] sm:$0xff] %vm149, %v2469
  %2512 = vst [vmem:[#allocation2 + $0xf0] sm:$0xff] %v2470
  %2513 = vst.msk [vmem:[#allocation2 + $0xf8] sm:$0xff] %vm149, %v2471
  %2514 = vst [vmem:[#allocation2 + $0x100] sm:$0xff] %v2472
  %2515 = vst.msk [vmem:[#allocation2 + $0x108] sm:$0xff] %vm149, %v2473
  %2516 = vst [vmem:[#allocation2 + $0x110] sm:$0xff] %v2474
  %2517 = vst.msk [vmem:[#allocation2 + $0x118] sm:$0xff] %vm149, %v2475
  %2518 = vst [vmem:[#allocation2 + $0x120] sm:$0xff] %v2476
  %2519 = vst.msk [vmem:[#allocation2 + $0x128] sm:$0xff] %vm149, %v2477
  %2520 = vst [vmem:[#allocation2 + $0x130] sm:$0xff] %v2478
  %2521 = vst.msk [vmem:[#allocation2 + $0x138] sm:$0xff] %vm149, %v2479
  %2522 = vst [vmem:[#allocation2 + $0x140] sm:$0xff] %v2480
  %2523 = vst.msk [vmem:[#allocation2 + $0x148] sm:$0xff] %vm149, %v2481
  %v2524 = vld [vmem:[#allocation2] sm:$0xff]
  %v2525 = vld [vmem:[#allocation2 + $0x8] sm:$0xff]
  %v2526 = vld [vmem:[#allocation2 + $0x10] sm:$0xff]
  %v2527 = vld [vmem:[#allocation2 + $0x18] sm:$0xff]
  %v2528 = vld [vmem:[#allocation2 + $0x20] sm:$0xff]
  %v2529 = vld [vmem:[#allocation2 + $0x28] sm:$0xff]
  %v2530 = vld [vmem:[#allocation2 + $0x30] sm:$0xff]
  %v2531 = vld [vmem:[#allocation2 + $0x38] sm:$0xff]
  %v2532 = vld [vmem:[#allocation2 + $0x40] sm:$0xff]
  %v2533 = vld [vmem:[#allocation2 + $0x48] sm:$0xff]
  %v2534 = vld [vmem:[#allocation2 + $0x50] sm:$0xff]
  %v2535 = vld [vmem:[#allocation2 + $0x58] sm:$0xff]
  %v2536 = vld [vmem:[#allocation2 + $0x60] sm:$0xff]
  %v2537 = vld [vmem:[#allocation2 + $0x68] sm:$0xff]
  %v2538 = vld [vmem:[#allocation2 + $0x70] sm:$0xff]
  %v2539 = vld [vmem:[#allocation2 + $0x78] sm:$0xff]
  %v2540 = vld [vmem:[#allocation2 + $0x80] sm:$0xff]
  %v2541 = vld [vmem:[#allocation2 + $0x88] sm:$0xff]
  %v2542 = vld [vmem:[#allocation2 + $0x90] sm:$0xff]
  %v2543 = vld [vmem:[#allocation2 + $0x98] sm:$0xff]
  %v2544 = vld [vmem:[#allocation2 + $0xa0] sm:$0xff]
  %v2545 = vld [vmem:[#allocation2 + $0xa8] sm:$0xff]
  %v2546 = vld [vmem:[#allocation2 + $0xb0] sm:$0xff]
  %v2547 = vld [vmem:[#allocation2 + $0xb8] sm:$0xff]
  %v2548 = vld [vmem:[#allocation2 + $0xc0] sm:$0xff]
  %v2549 = vld [vmem:[#allocation2 + $0xc8] sm:$0xff]
  %v2550 = vld [vmem:[#allocation2 + $0xd0] sm:$0xff]
  %v2551 = vld [vmem:[#allocation2 + $0xd8] sm:$0xff]
  %v2552 = vld [vmem:[#allocation2 + $0xe0] sm:$0xff]
  %v2553 = vld [vmem:[#allocation2 + $0xe8] sm:$0xff]
  %v2554 = vld [vmem:[#allocation2 + $0xf0] sm:$0xff]
  %v2555 = vld [vmem:[#allocation2 + $0xf8] sm:$0xff]
  %v2556 = vld [vmem:[#allocation2 + $0x100] sm:$0xff]
  %v2557 = vld [vmem:[#allocation2 + $0x108] sm:$0xff]
  %v2558 = vld [vmem:[#allocation2 + $0x110] sm:$0xff]
  %v2559 = vld [vmem:[#allocation2 + $0x118] sm:$0xff]
  %v2560 = vld [vmem:[#allocation2 + $0x120] sm:$0xff]
  %v2561 = vld [vmem:[#allocation2 + $0x128] sm:$0xff]
  %v2562 = vld [vmem:[#allocation2 + $0x130] sm:$0xff]
  %v2563 = vld [vmem:[#allocation2 + $0x138] sm:$0xff]
  %v2564 = vld [vmem:[#allocation2 + $0x140] sm:$0x7f]
  %v2565 = vld [vmem:[#allocation2 + $0x148] sm:$0x7f]
  %v2566 = vld [vmem:[#allocation2] sm:$0xfe]
  %v2567 = vld [vmem:[#allocation2 + $0x8] sm:$0xfe]
  %v2568 = vld [vmem:[#allocation2 + $0x140] sm:$0xff]
  %v2569 = vld [vmem:[#allocation2 + $0x148] sm:$0xff]
  %vm2612 = vcmask 1046528
  %v2613 = vrot.slane %v2566, 1
  %v2614 = vrot.slane %v2526, 1
  %v2615 = vsel %vm2612, %v2613, %v2614
  %v2616 = vrot.slane %v2567, 1
  %v2617 = vrot.slane %v2527, 1
  %v2618 = vsel %vm2612, %v2616, %v2617
  %v2619 = vrot.slane %v2528, 1
  %v2620 = vsel %vm2612, %v2614, %v2619
  %v2621 = vrot.slane %v2529, 1
  %v2622 = vsel %vm2612, %v2617, %v2621
  %v2623 = vrot.slane %v2530, 1
  %v2624 = vsel %vm2612, %v2619, %v2623
  %v2625 = vrot.slane %v2531, 1
  %v2626 = vsel %vm2612, %v2621, %v2625
  %v2627 = vrot.slane %v2532, 1
  %v2628 = vsel %vm2612, %v2623, %v2627
  %v2629 = vrot.slane %v2533, 1
  %v2630 = vsel %vm2612, %v2625, %v2629
  %v2631 = vrot.slane %v2534, 1
  %v2632 = vsel %vm2612, %v2627, %v2631
  %v2633 = vrot.slane %v2535, 1
  %v2634 = vsel %vm2612, %v2629, %v2633
  %v2635 = vrot.slane %v2536, 1
  %v2636 = vsel %vm2612, %v2631, %v2635
  %v2637 = vrot.slane %v2537, 1
  %v2638 = vsel %vm2612, %v2633, %v2637
  %v2639 = vrot.slane %v2538, 1
  %v2640 = vsel %vm2612, %v2635, %v2639
  %v2641 = vrot.slane %v2539, 1
  %v2642 = vsel %vm2612, %v2637, %v2641
  %v2643 = vrot.slane %v2540, 1
  %v2644 = vsel %vm2612, %v2639, %v2643
  %v2645 = vrot.slane %v2541, 1
  %v2646 = vsel %vm2612, %v2641, %v2645
  %v2647 = vrot.slane %v2542, 1
  %v2648 = vsel %vm2612, %v2643, %v2647
  %v2649 = vrot.slane %v2543, 1
  %v2650 = vsel %vm2612, %v2645, %v2649
  %v2651 = vrot.slane %v2544, 1
  %v2652 = vsel %vm2612, %v2647, %v2651
  %v2653 = vrot.slane %v2545, 1
  %v2654 = vsel %vm2612, %v2649, %v2653
  %v2655 = vrot.slane %v2546, 1
  %v2656 = vsel %vm2612, %v2651, %v2655
  %v2657 = vrot.slane %v2547, 1
  %v2658 = vsel %vm2612, %v2653, %v2657
  %v2659 = vrot.slane %v2548, 1
  %v2660 = vsel %vm2612, %v2655, %v2659
  %v2661 = vrot.slane %v2549, 1
  %v2662 = vsel %vm2612, %v2657, %v2661
  %v2663 = vrot.slane %v2550, 1
  %v2664 = vsel %vm2612, %v2659, %v2663
  %v2665 = vrot.slane %v2551, 1
  %v2666 = vsel %vm2612, %v2661, %v2665
  %v2667 = vrot.slane %v2552, 1
  %v2668 = vsel %vm2612, %v2663, %v2667
  %v2669 = vrot.slane %v2553, 1
  %v2670 = vsel %vm2612, %v2665, %v2669
  %v2671 = vrot.slane %v2554, 1
  %v2672 = vsel %vm2612, %v2667, %v2671
  %v2673 = vrot.slane %v2555, 1
  %v2674 = vsel %vm2612, %v2669, %v2673
  %v2675 = vrot.slane %v2556, 1
  %v2676 = vsel %vm2612, %v2671, %v2675
  %v2677 = vrot.slane %v2557, 1
  %v2678 = vsel %vm2612, %v2673, %v2677
  %v2679 = vrot.slane %v2558, 1
  %v2680 = vsel %vm2612, %v2675, %v2679
  %v2681 = vrot.slane %v2559, 1
  %v2682 = vsel %vm2612, %v2677, %v2681
  %v2683 = vrot.slane %v2560, 1
  %v2684 = vsel %vm2612, %v2679, %v2683
  %v2685 = vrot.slane %v2561, 1
  %v2686 = vsel %vm2612, %v2681, %v2685
  %v2687 = vrot.slane %v2562, 1
  %v2688 = vsel %vm2612, %v2683, %v2687
  %v2689 = vrot.slane %v2563, 1
  %v2690 = vsel %vm2612, %v2685, %v2689
  %v2691 = vrot.slane %v2568, 1
  %v2692 = vsel %vm2612, %v2687, %v2691
  %v2693 = vrot.slane %v2569, 1
  %v2694 = vsel %vm2612, %v2689, %v2693
  %v2737 = vmax.f32 %v2524, %v2615
  %v2738 = vmax.f32 %v2525, %v2618
  %v2739 = vmax.f32 %v2526, %v2620
  %v2740 = vmax.f32 %v2527, %v2622
  %v2741 = vmax.f32 %v2528, %v2624
  %v2742 = vmax.f32 %v2529, %v2626
  %v2743 = vmax.f32 %v2530, %v2628
  %v2744 = vmax.f32 %v2531, %v2630
  %v2745 = vmax.f32 %v2532, %v2632
  %v2746 = vmax.f32 %v2533, %v2634
  %v2747 = vmax.f32 %v2534, %v2636
  %v2748 = vmax.f32 %v2535, %v2638
  %v2749 = vmax.f32 %v2536, %v2640
  %v2750 = vmax.f32 %v2537, %v2642
  %v2751 = vmax.f32 %v2538, %v2644
  %v2752 = vmax.f32 %v2539, %v2646
  %v2753 = vmax.f32 %v2540, %v2648
  %v2754 = vmax.f32 %v2541, %v2650
  %v2755 = vmax.f32 %v2542, %v2652
  %v2756 = vmax.f32 %v2543, %v2654
  %v2757 = vmax.f32 %v2544, %v2656
  %v2758 = vmax.f32 %v2545, %v2658
  %v2759 = vmax.f32 %v2546, %v2660
  %v2760 = vmax.f32 %v2547, %v2662
  %v2761 = vmax.f32 %v2548, %v2664
  %v2762 = vmax.f32 %v2549, %v2666
  %v2763 = vmax.f32 %v2550, %v2668
  %v2764 = vmax.f32 %v2551, %v2670
  %v2765 = vmax.f32 %v2552, %v2672
  %v2766 = vmax.f32 %v2553, %v2674
  %v2767 = vmax.f32 %v2554, %v2676
  %v2768 = vmax.f32 %v2555, %v2678
  %v2769 = vmax.f32 %v2556, %v2680
  %v2770 = vmax.f32 %v2557, %v2682
  %v2771 = vmax.f32 %v2558, %v2684
  %v2772 = vmax.f32 %v2559, %v2686
  %v2773 = vmax.f32 %v2560, %v2688
  %v2774 = vmax.f32 %v2561, %v2690
  %v2775 = vmax.f32 %v2562, %v2692
  %v2776 = vmax.f32 %v2563, %v2694
  %v2777 = vmax.f32 %v2564, %v2691
  %v2778 = vmax.f32 %v2565, %v2693
  %2821 = vrot.lane.b32.xlu0 %v2737, 120
  %v2822 = vpop.permute.xlu0 %2821
  %2823 = vrot.lane.b32.xlu0 %v2738, 120
  %v2824 = vpop.permute.xlu0 %2823
  %2825 = vrot.lane.b32.xlu0 %v2739, 120
  %v2826 = vpop.permute.xlu0 %2825
  %2827 = vrot.lane.b32.xlu0 %v2740, 120
  %v2828 = vpop.permute.xlu0 %2827
  %2829 = vrot.lane.b32.xlu0 %v2741, 120
  %v2830 = vpop.permute.xlu0 %2829
  %2831 = vrot.lane.b32.xlu0 %v2742, 120
  %v2832 = vpop.permute.xlu0 %2831
  %2833 = vrot.lane.b32.xlu0 %v2743, 120
  %v2834 = vpop.permute.xlu0 %2833
  %2835 = vrot.lane.b32.xlu0 %v2744, 120
  %v2836 = vpop.permute.xlu0 %2835
  %2837 = vrot.lane.b32.xlu0 %v2745, 120
  %v2838 = vpop.permute.xlu0 %2837
  %2839 = vrot.lane.b32.xlu0 %v2746, 120
  %v2840 = vpop.permute.xlu0 %2839
  %2841 = vrot.lane.b32.xlu0 %v2747, 120
  %v2842 = vpop.permute.xlu0 %2841
  %2843 = vrot.lane.b32.xlu0 %v2748, 120
  %v2844 = vpop.permute.xlu0 %2843
  %2845 = vrot.lane.b32.xlu0 %v2749, 120
  %v2846 = vpop.permute.xlu0 %2845
  %2847 = vrot.lane.b32.xlu0 %v2750, 120
  %v2848 = vpop.permute.xlu0 %2847
  %2849 = vrot.lane.b32.xlu0 %v2751, 120
  %v2850 = vpop.permute.xlu0 %2849
  %2851 = vrot.lane.b32.xlu0 %v2752, 120
  %v2852 = vpop.permute.xlu0 %2851
  %2853 = vrot.lane.b32.xlu0 %v2753, 120
  %v2854 = vpop.permute.xlu0 %2853
  %2855 = vrot.lane.b32.xlu0 %v2754, 120
  %v2856 = vpop.permute.xlu0 %2855
  %2857 = vrot.lane.b32.xlu0 %v2755, 120
  %v2858 = vpop.permute.xlu0 %2857
  %2859 = vrot.lane.b32.xlu0 %v2756, 120
  %v2860 = vpop.permute.xlu0 %2859
  %2861 = vrot.lane.b32.xlu0 %v2757, 120
  %v2862 = vpop.permute.xlu0 %2861
  %2863 = vrot.lane.b32.xlu0 %v2758, 120
  %v2864 = vpop.permute.xlu0 %2863
  %2865 = vrot.lane.b32.xlu0 %v2759, 120
  %v2866 = vpop.permute.xlu0 %2865
  %2867 = vrot.lane.b32.xlu0 %v2760, 120
  %v2868 = vpop.permute.xlu0 %2867
  %2869 = vrot.lane.b32.xlu0 %v2761, 120
  %v2870 = vpop.permute.xlu0 %2869
  %2871 = vrot.lane.b32.xlu0 %v2762, 120
  %v2872 = vpop.permute.xlu0 %2871
  %2873 = vrot.lane.b32.xlu0 %v2763, 120
  %v2874 = vpop.permute.xlu0 %2873
  %2875 = vrot.lane.b32.xlu0 %v2764, 120
  %v2876 = vpop.permute.xlu0 %2875
  %2877 = vrot.lane.b32.xlu0 %v2765, 120
  %v2878 = vpop.permute.xlu0 %2877
  %2879 = vrot.lane.b32.xlu0 %v2766, 120
  %v2880 = vpop.permute.xlu0 %2879
  %2881 = vrot.lane.b32.xlu0 %v2767, 120
  %v2882 = vpop.permute.xlu0 %2881
  %2883 = vrot.lane.b32.xlu0 %v2768, 120
  %v2884 = vpop.permute.xlu0 %2883
  %2885 = vrot.lane.b32.xlu0 %v2769, 120
  %v2886 = vpop.permute.xlu0 %2885
  %2887 = vrot.lane.b32.xlu0 %v2770, 120
  %v2888 = vpop.permute.xlu0 %2887
  %2889 = vrot.lane.b32.xlu0 %v2771, 120
  %v2890 = vpop.permute.xlu0 %2889
  %2891 = vrot.lane.b32.xlu0 %v2772, 120
  %v2892 = vpop.permute.xlu0 %2891
  %2893 = vrot.lane.b32.xlu0 %v2773, 120
  %v2894 = vpop.permute.xlu0 %2893
  %2895 = vrot.lane.b32.xlu0 %v2774, 120
  %v2896 = vpop.permute.xlu0 %2895
  %2897 = vrot.lane.b32.xlu0 %v2775, 120
  %v2898 = vpop.permute.xlu0 %2897
  %2899 = vrot.lane.b32.xlu0 %v2776, 120
  %v2900 = vpop.permute.xlu0 %2899
  %2901 = vrot.lane.b32.xlu0 %v2777, 120
  %v2902 = vpop.permute.xlu0 %2901
  %2903 = vrot.lane.b32.xlu0 %v2778, 120
  %v2904 = vpop.permute.xlu0 %2903
  %vm2905 = vcmask 982016
  %v2906 = vsel %vm2905, %v2822, %v2824
  %v2907 = vsel %vm2905, %v2826, %v2828
  %v2908 = vsel %vm2905, %v2830, %v2832
  %v2909 = vsel %vm2905, %v2834, %v2836
  %v2910 = vsel %vm2905, %v2838, %v2840
  %v2911 = vsel %vm2905, %v2842, %v2844
  %v2912 = vsel %vm2905, %v2846, %v2848
  %v2913 = vsel %vm2905, %v2850, %v2852
  %v2914 = vsel %vm2905, %v2854, %v2856
  %v2915 = vsel %vm2905, %v2858, %v2860
  %v2916 = vsel %vm2905, %v2862, %v2864
  %v2917 = vsel %vm2905, %v2866, %v2868
  %v2918 = vsel %vm2905, %v2870, %v2872
  %v2919 = vsel %vm2905, %v2874, %v2876
  %v2920 = vsel %vm2905, %v2878, %v2880
  %v2921 = vsel %vm2905, %v2882, %v2884
  %v2922 = vsel %vm2905, %v2886, %v2888
  %v2923 = vsel %vm2905, %v2890, %v2892
  %v2924 = vsel %vm2905, %v2894, %v2896
  %v2925 = vsel %vm2905, %v2898, %v2900
  %v2926 = vsel %vm2905, %v2902, %v2904
  %v2969 = vmax.f32 %v2737, %v2906
  %v2970 = vmax.f32 %v2738, %v2824
  %v2971 = vmax.f32 %v2739, %v2907
  %v2972 = vmax.f32 %v2740, %v2828
  %v2973 = vmax.f32 %v2741, %v2908
  %v2974 = vmax.f32 %v2742, %v2832
  %v2975 = vmax.f32 %v2743, %v2909
  %v2976 = vmax.f32 %v2744, %v2836
  %v2977 = vmax.f32 %v2745, %v2910
  %v2978 = vmax.f32 %v2746, %v2840
  %v2979 = vmax.f32 %v2747, %v2911
  %v2980 = vmax.f32 %v2748, %v2844
  %v2981 = vmax.f32 %v2749, %v2912
  %v2982 = vmax.f32 %v2750, %v2848
  %v2983 = vmax.f32 %v2751, %v2913
  %v2984 = vmax.f32 %v2752, %v2852
  %v2985 = vmax.f32 %v2753, %v2914
  %v2986 = vmax.f32 %v2754, %v2856
  %v2987 = vmax.f32 %v2755, %v2915
  %v2988 = vmax.f32 %v2756, %v2860
  %v2989 = vmax.f32 %v2757, %v2916
  %v2990 = vmax.f32 %v2758, %v2864
  %v2991 = vmax.f32 %v2759, %v2917
  %v2992 = vmax.f32 %v2760, %v2868
  %v2993 = vmax.f32 %v2761, %v2918
  %v2994 = vmax.f32 %v2762, %v2872
  %v2995 = vmax.f32 %v2763, %v2919
  %v2996 = vmax.f32 %v2764, %v2876
  %v2997 = vmax.f32 %v2765, %v2920
  %v2998 = vmax.f32 %v2766, %v2880
  %v2999 = vmax.f32 %v2767, %v2921
  %v3000 = vmax.f32 %v2768, %v2884
  %v3001 = vmax.f32 %v2769, %v2922
  %v3002 = vmax.f32 %v2770, %v2888
  %v3003 = vmax.f32 %v2771, %v2923
  %v3004 = vmax.f32 %v2772, %v2892
  %v3005 = vmax.f32 %v2773, %v2924
  %v3006 = vmax.f32 %v2774, %v2896
  %v3007 = vmax.f32 %v2775, %v2925
  %v3008 = vmax.f32 %v2776, %v2900
  %v3009 = vmax.f32 %v2777, %v2926
  %v3010 = vmax.f32 %v2778, %v2904
  %3011 = vst [vmem:[#allocation3] sm:$0xff] %v2969
  %vm3012 = vcmask 719872
  %3013 = vst.msk [vmem:[#allocation3 + $0x8] sm:$0xff] %vm3012, %v2970
  %3014 = vst [vmem:[#allocation3 + $0x10] sm:$0xff] %v2971
  %3015 = vst.msk [vmem:[#allocation3 + $0x18] sm:$0xff] %vm3012, %v2972
  %3016 = vst [vmem:[#allocation3 + $0x20] sm:$0xff] %v2973
  %3017 = vst.msk [vmem:[#allocation3 + $0x28] sm:$0xff] %vm3012, %v2974
  %3018 = vst [vmem:[#allocation3 + $0x30] sm:$0xff] %v2975
  %3019 = vst.msk [vmem:[#allocation3 + $0x38] sm:$0xff] %vm3012, %v2976
  %3020 = vst [vmem:[#allocation3 + $0x40] sm:$0xff] %v2977
  %3021 = vst.msk [vmem:[#allocation3 + $0x48] sm:$0xff] %vm3012, %v2978
  %3022 = vst [vmem:[#allocation3 + $0x50] sm:$0xff] %v2979
  %3023 = vst.msk [vmem:[#allocation3 + $0x58] sm:$0xff] %vm3012, %v2980
  %3024 = vst [vmem:[#allocation3 + $0x60] sm:$0xff] %v2981
  %3025 = vst.msk [vmem:[#allocation3 + $0x68] sm:$0xff] %vm3012, %v2982
  %3026 = vst [vmem:[#allocation3 + $0x70] sm:$0xff] %v2983
  %3027 = vst.msk [vmem:[#allocation3 + $0x78] sm:$0xff] %vm3012, %v2984
  %3028 = vst [vmem:[#allocation3 + $0x80] sm:$0xff] %v2985
  %3029 = vst.msk [vmem:[#allocation3 + $0x88] sm:$0xff] %vm3012, %v2986
  %3030 = vst [vmem:[#allocation3 + $0x90] sm:$0xff] %v2987
  %3031 = vst.msk [vmem:[#allocation3 + $0x98] sm:$0xff] %vm3012, %v2988
  %3032 = vst [vmem:[#allocation3 + $0xa0] sm:$0xff] %v2989
  %3033 = vst.msk [vmem:[#allocation3 + $0xa8] sm:$0xff] %vm3012, %v2990
  %3034 = vst [vmem:[#allocation3 + $0xb0] sm:$0xff] %v2991
  %3035 = vst.msk [vmem:[#allocation3 + $0xb8] sm:$0xff] %vm3012, %v2992
  %3036 = vst [vmem:[#allocation3 + $0xc0] sm:$0xff] %v2993
  %3037 = vst.msk [vmem:[#allocation3 + $0xc8] sm:$0xff] %vm3012, %v2994
  %3038 = vst [vmem:[#allocation3 + $0xd0] sm:$0xff] %v2995
  %3039 = vst.msk [vmem:[#allocation3 + $0xd8] sm:$0xff] %vm3012, %v2996
  %3040 = vst [vmem:[#allocation3 + $0xe0] sm:$0xff] %v2997
  %3041 = vst.msk [vmem:[#allocation3 + $0xe8] sm:$0xff] %vm3012, %v2998
  %3042 = vst [vmem:[#allocation3 + $0xf0] sm:$0xff] %v2999
  %3043 = vst.msk [vmem:[#allocation3 + $0xf8] sm:$0xff] %vm3012, %v3000
  %3044 = vst [vmem:[#allocation3 + $0x100] sm:$0xff] %v3001
  %3045 = vst.msk [vmem:[#allocation3 + $0x108] sm:$0xff] %vm3012, %v3002
  %3046 = vst [vmem:[#allocation3 + $0x110] sm:$0xff] %v3003
  %3047 = vst.msk [vmem:[#allocation3 + $0x118] sm:$0xff] %vm3012, %v3004
  %3048 = vst [vmem:[#allocation3 + $0x120] sm:$0xff] %v3005
  %3049 = vst.msk [vmem:[#allocation3 + $0x128] sm:$0xff] %vm3012, %v3006
  %3050 = vst [vmem:[#allocation3 + $0x130] sm:$0xff] %v3007
  %3051 = vst.msk [vmem:[#allocation3 + $0x138] sm:$0xff] %vm3012, %v3008
  %3052 = vst [vmem:[#allocation3 + $0x140] sm:$0x7f] %v3009
  %vm3053 = vcmask 718848
  %3054 = vst.msk [vmem:[#allocation3 + $0x148] sm:$0x7f] %vm3053, %v3010
  %v3055 = vld [vmem:[#allocation3] sm:$0xff]
  %v3056 = vld [vmem:[#allocation3 + $0x8] sm:$0xff]
  %v3057 = vld [vmem:[#allocation3 + $0x10] sm:$0xff]
  %v3058 = vld [vmem:[#allocation3 + $0x18] sm:$0xff]
  %v3059 = vld [vmem:[#allocation3 + $0x20] sm:$0xff]
  %v3060 = vld [vmem:[#allocation3 + $0x28] sm:$0xff]
  %v3061 = vld [vmem:[#allocation3 + $0x30] sm:$0xff]
  %v3062 = vld [vmem:[#allocation3 + $0x38] sm:$0xff]
  %v3063 = vld [vmem:[#allocation3 + $0x40] sm:$0xff]
  %v3064 = vld [vmem:[#allocation3 + $0x48] sm:$0xff]
  %v3065 = vld [vmem:[#allocation3 + $0x50] sm:$0xff]
  %v3066 = vld [vmem:[#allocation3 + $0x58] sm:$0xff]
  %v3067 = vld [vmem:[#allocation3 + $0x60] sm:$0xff]
  %v3068 = vld [vmem:[#allocation3 + $0x68] sm:$0xff]
  %v3069 = vld [vmem:[#allocation3 + $0x70] sm:$0xff]
  %v3070 = vld [vmem:[#allocation3 + $0x78] sm:$0xff]
  %v3071 = vld [vmem:[#allocation3 + $0x80] sm:$0xff]
  %v3072 = vld [vmem:[#allocation3 + $0x88] sm:$0xff]
  %v3073 = vld [vmem:[#allocation3 + $0x90] sm:$0xff]
  %v3074 = vld [vmem:[#allocation3 + $0x98] sm:$0xff]
  %v3075 = vld [vmem:[#allocation3 + $0xa0] sm:$0xff]
  %v3076 = vld [vmem:[#allocation3 + $0xa8] sm:$0xff]
  %v3077 = vld [vmem:[#allocation3 + $0xb0] sm:$0xff]
  %v3078 = vld [vmem:[#allocation3 + $0xb8] sm:$0xff]
  %v3079 = vld [vmem:[#allocation3 + $0xc0] sm:$0xff]
  %v3080 = vld [vmem:[#allocation3 + $0xc8] sm:$0xff]
  %v3081 = vld [vmem:[#allocation3 + $0xd0] sm:$0xff]
  %v3082 = vld [vmem:[#allocation3 + $0xd8] sm:$0xff]
  %v3083 = vld [vmem:[#allocation3 + $0xe0] sm:$0xff]
  %v3084 = vld [vmem:[#allocation3 + $0xe8] sm:$0xff]
  %v3085 = vld [vmem:[#allocation3 + $0xf0] sm:$0xff]
  %v3086 = vld [vmem:[#allocation3 + $0xf8] sm:$0xff]
  %v3087 = vld [vmem:[#allocation3 + $0x100] sm:$0xff]
  %v3088 = vld [vmem:[#allocation3 + $0x108] sm:$0xff]
  %v3089 = vld [vmem:[#allocation3 + $0x110] sm:$0xff]
  %v3090 = vld [vmem:[#allocation3 + $0x118] sm:$0xff]
  %v3091 = vld [vmem:[#allocation3 + $0x120] sm:$0xff]
  %v3092 = vld [vmem:[#allocation3 + $0x128] sm:$0xff]
  %v3093 = vld [vmem:[#allocation3 + $0x130] sm:$0xff]
  %v3094 = vld [vmem:[#allocation3 + $0x138] sm:$0xff]
  %v3095 = vld [vmem:[#allocation3 + $0x140] sm:$0x7f]
  %v3096 = vld [vmem:[#allocation3 + $0x148] sm:$0x7f]
  %v3097 = vpack.c.bf16 %v3057, %v3055
  %v3098 = vpack.c.bf16 %v3058, %v3056
  %v3099 = vpack.c.bf16 %v3061, %v3059
  %v3100 = vpack.c.bf16 %v3062, %v3060
  %v3101 = vpack.c.bf16 %v3065, %v3063
  %v3102 = vpack.c.bf16 %v3066, %v3064
  %v3103 = vpack.c.bf16 %v3069, %v3067
  %v3104 = vpack.c.bf16 %v3070, %v3068
  %v3105 = vpack.c.bf16 %v3073, %v3071
  %v3106 = vpack.c.bf16 %v3074, %v3072
  %v3107 = vpack.c.bf16 %v3077, %v3075
  %v3108 = vpack.c.bf16 %v3078, %v3076
  %v3109 = vpack.c.bf16 %v3081, %v3079
  %v3110 = vpack.c.bf16 %v3082, %v3080
  %v3111 = vpack.c.bf16 %v3085, %v3083
  %v3112 = vpack.c.bf16 %v3086, %v3084
  %v3113 = vpack.c.bf16 %v3089, %v3087
  %v3114 = vpack.c.bf16 %v3090, %v3088
  %v3115 = vpack.c.bf16 %v3093, %v3091
  %v3116 = vpack.c.bf16 %v3094, %v3092
  %v3117 = vpack.c.bf16 %v3095, %v3095
  %v3118 = vpack.c.bf16 %v3096, %v3096
  %v3119 = vld [vmem:[%s3] sm:$0xff]
  %v3120 = vld [vmem:[%s3 + $0x8] sm:$0xff]
  %v3121 = vld [vmem:[%s3 + $0x10] sm:$0xff]
  %v3122 = vld [vmem:[%s3 + $0x18] sm:$0xff]
  %v3123 = vld [vmem:[%s3 + $0x20] sm:$0xff]
  %v3124 = vld [vmem:[%s3 + $0x28] sm:$0xff]
  %v3125 = vld [vmem:[%s3 + $0x30] sm:$0xff]
  %v3126 = vld [vmem:[%s3 + $0x38] sm:$0xff]
  %v3127 = vld [vmem:[%s3 + $0x40] sm:$0xff]
  %v3128 = vld [vmem:[%s3 + $0x48] sm:$0xff]
  %v3129 = vld [vmem:[%s3 + $0x50] sm:$0xff]
  %v3130 = vld [vmem:[%s3 + $0x58] sm:$0xff]
  %v3131 = vld [vmem:[%s3 + $0x60] sm:$0xff]
  %v3132 = vld [vmem:[%s3 + $0x68] sm:$0xff]
  %v3133 = vld [vmem:[%s3 + $0x70] sm:$0xff]
  %v3134 = vld [vmem:[%s3 + $0x78] sm:$0xff]
  %v3135 = vld [vmem:[%s3 + $0x80] sm:$0xff]
  %v3136 = vld [vmem:[%s3 + $0x88] sm:$0xff]
  %v3137 = vld [vmem:[%s3 + $0x90] sm:$0xff]
  %v3138 = vld [vmem:[%s3 + $0x98] sm:$0xff]
  %v3159 = vunpack.c.l.b16 %v3119
  %v3160 = vunpack.c.h.b16 %v3119
  %v3161 = vunpack.c.l.b16 %v3120
  %v3162 = vunpack.c.h.b16 %v3120
  %v3163 = vunpack.c.l.b16 %v3121
  %v3164 = vunpack.c.h.b16 %v3121
  %v3165 = vunpack.c.l.b16 %v3122
  %v3166 = vunpack.c.h.b16 %v3122
  %v3167 = vunpack.c.l.b16 %v3123
  %v3168 = vunpack.c.h.b16 %v3123
  %v3169 = vunpack.c.l.b16 %v3124
  %v3170 = vunpack.c.h.b16 %v3124
  %v3171 = vunpack.c.l.b16 %v3125
  %v3172 = vunpack.c.h.b16 %v3125
  %v3173 = vunpack.c.l.b16 %v3126
  %v3174 = vunpack.c.h.b16 %v3126
  %v3175 = vunpack.c.l.b16 %v3127
  %v3176 = vunpack.c.h.b16 %v3127
  %v3177 = vunpack.c.l.b16 %v3128
  %v3178 = vunpack.c.h.b16 %v3128
  %v3179 = vunpack.c.l.b16 %v3129
  %v3180 = vunpack.c.h.b16 %v3129
  %v3181 = vunpack.c.l.b16 %v3130
  %v3182 = vunpack.c.h.b16 %v3130
  %v3183 = vunpack.c.l.b16 %v3131
  %v3184 = vunpack.c.h.b16 %v3131
  %v3185 = vunpack.c.l.b16 %v3132
  %v3186 = vunpack.c.h.b16 %v3132
  %v3187 = vunpack.c.l.b16 %v3133
  %v3188 = vunpack.c.h.b16 %v3133
  %v3189 = vunpack.c.l.b16 %v3134
  %v3190 = vunpack.c.h.b16 %v3134
  %v3191 = vunpack.c.l.b16 %v3135
  %v3192 = vunpack.c.h.b16 %v3135
  %v3193 = vunpack.c.l.b16 %v3136
  %v3194 = vunpack.c.h.b16 %v3136
  %v3195 = vunpack.c.l.b16 %v3137
  %v3196 = vunpack.c.h.b16 %v3137
  %v3197 = vunpack.c.l.b16 %v3138
  %v3198 = vunpack.c.h.b16 %v3138
  %v3199 = vpack.c.b16 %v3161, %v3159
  %v3200 = vpack.c.b16 %v3162, %v3160
  %v3201 = vpack.c.b16 %v3165, %v3163
  %v3202 = vpack.c.b16 %v3166, %v3164
  %v3203 = vpack.c.b16 %v3169, %v3167
  %v3204 = vpack.c.b16 %v3170, %v3168
  %v3205 = vpack.c.b16 %v3173, %v3171
  %v3206 = vpack.c.b16 %v3174, %v3172
  %v3207 = vpack.c.b16 %v3177, %v3175
  %v3208 = vpack.c.b16 %v3178, %v3176
  %v3209 = vpack.c.b16 %v3181, %v3179
  %v3210 = vpack.c.b16 %v3182, %v3180
  %v3211 = vpack.c.b16 %v3185, %v3183
  %v3212 = vpack.c.b16 %v3186, %v3184
  %v3213 = vpack.c.b16 %v3189, %v3187
  %v3214 = vpack.c.b16 %v3190, %v3188
  %v3215 = vpack.c.b16 %v3193, %v3191
  %v3216 = vpack.c.b16 %v3194, %v3192
  %v3217 = vpack.c.b16 %v3197, %v3195
  %v3218 = vpack.c.b16 %v3198, %v3196
  %vm3229 = vcmask 318464
  %v3231 = vsel %vm3229, %v3200, 0
  %v3234 = vsel %vm3229, %v3202, 0
  %v3237 = vsel %vm3229, %v3204, 0
  %v3240 = vsel %vm3229, %v3206, 0
  %v3243 = vsel %vm3229, %v3208, 0
  %v3246 = vsel %vm3229, %v3210, 0
  %v3249 = vsel %vm3229, %v3212, 0
  %v3252 = vsel %vm3229, %v3214, 0
  %v3255 = vsel %vm3229, %v3216, 0
  %v3258 = vsel %vm3229, %v3218, 0
  %vm3260 = vcmask 1042432
  %vm3261 = vcmask 1043456
  %v3262 = vsel %vm3260, 4294967295, 65535
  %v3263 = vsel %vm3261, %v3262, 0
  %v3265 = vand.u32 %v3117, %v3263
  %v3268 = vand.u32 %v3118, %v3263
  %3270 = vmatprep.subr.bf16.mxu0 %v3112
  %3271 = vmatpush1.bf16.msra.mxu0 %v3111
  %3272 = vmatprep.subr.bf16.mxu0 %v3110
  %3273 = vmatpush1.bf16.msra.mxu0 %v3109
  %3274 = vmatprep.subr.bf16.mxu0 %v3108
  %3275 = vmatpush1.bf16.msra.mxu0 %v3107
  %3276 = vmatprep.subr.bf16.mxu0 %v3106
  %3277 = vmatpush1.bf16.msra.mxu0 %v3105
  %3278 = vmatprep.subr.bf16.mxu0 %v3104
  %3279 = vmatpush1.bf16.msra.mxu0 %v3103
  %3280 = vmatprep.subr.bf16.mxu0 %v3102
  %3281 = vmatpush1.bf16.msra.mxu0 %v3101
  %3282 = vmatprep.subr.bf16.mxu0 %v3100
  %3283 = vmatpush1.bf16.msra.mxu0 %v3099
  %3284 = vmatprep.subr.bf16.mxu0 %v3098
  %3285 = vmatpush1.bf16.msra.mxu0 %v3097
  %3286 = vmatprep.subr.bf16.mxu0 0
  %3287 = vmatpush2.bf16.msra.mxu0 0
  %3288 = vmatprep.subr.bf16.mxu0 0
  %3289 = vmatpush2.bf16.msra.mxu0 0
  %3290 = vmatprep.subr.bf16.mxu0 0
  %3291 = vmatpush2.bf16.msra.mxu0 0
  %3292 = vmatprep.subr.bf16.mxu0 0
  %3293 = vmatpush2.bf16.msra.mxu0 0
  %3294 = vmatprep.subr.bf16.mxu0 0
  %3295 = vmatpush2.bf16.msra.mxu0 0
  %3296 = vmatprep.subr.bf16.mxu0 %v3268
  %3297 = vmatpush2.bf16.msra.mxu0 %v3265
  %3298 = vmatprep.subr.bf16.mxu0 %v3116
  %3299 = vmatpush2.bf16.msra.mxu0 %v3115
  %3300 = vmatprep.subr.bf16.mxu0 %v3114
  %3301 = vmatpush2.bf16.msra.mxu0 %v3113
  %3302 = vmatprep.mubr.bf16.mxu0 %v3231
  %3303 = vmatmul.mubr.bf16.gmra.mxu0 %v3199
  %v3304 = vpop.f32.mrf.mxu0
  %v3305 = vadd.f32 0.0, %v3304
  %v3306 = vpop.f32.mrf.mxu0
  %v3307 = vadd.f32 0.0, %v3306
  %v3308 = vpop.f32.mrf.mxu0
  %v3309 = vadd.f32 0.0, %v3308
  %v3310 = vpop.f32.mrf.mxu0
  %v3311 = vadd.f32 0.0, %v3310
  %3312 = vmatprep.mubr.bf16.mxu0 %v3234
  %3313 = vmatmul.mubr.bf16.gmra.mxu0 %v3201
  %v3314 = vpop.f32.mrf.mxu0
  %v3315 = vadd.f32 0.0, %v3314
  %v3316 = vpop.f32.mrf.mxu0
  %v3317 = vadd.f32 0.0, %v3316
  %v3318 = vpop.f32.mrf.mxu0
  %v3319 = vadd.f32 0.0, %v3318
  %v3320 = vpop.f32.mrf.mxu0
  %v3321 = vadd.f32 0.0, %v3320
  %3322 = vmatprep.mubr.bf16.mxu0 %v3237
  %3323 = vmatmul.mubr.bf16.gmra.mxu0 %v3203
  %v3324 = vpop.f32.mrf.mxu0
  %v3325 = vadd.f32 0.0, %v3324
  %v3326 = vpop.f32.mrf.mxu0
  %v3327 = vadd.f32 0.0, %v3326
  %v3328 = vpop.f32.mrf.mxu0
  %v3329 = vadd.f32 0.0, %v3328
  %v3330 = vpop.f32.mrf.mxu0
  %v3331 = vadd.f32 0.0, %v3330
  %3332 = vmatprep.mubr.bf16.mxu0 %v3240
  %3333 = vmatmul.mubr.bf16.gmra.mxu0 %v3205
  %v3334 = vpop.f32.mrf.mxu0
  %v3335 = vadd.f32 0.0, %v3334
  %v3336 = vpop.f32.mrf.mxu0
  %v3337 = vadd.f32 0.0, %v3336
  %v3338 = vpop.f32.mrf.mxu0
  %v3339 = vadd.f32 0.0, %v3338
  %v3340 = vpop.f32.mrf.mxu0
  %v3341 = vadd.f32 0.0, %v3340
  %3342 = vmatprep.mubr.bf16.mxu0 %v3243
  %3343 = vmatmul.mubr.bf16.gmra.mxu0 %v3207
  %v3344 = vpop.f32.mrf.mxu0
  %v3345 = vadd.f32 0.0, %v3344
  %v3346 = vpop.f32.mrf.mxu0
  %v3347 = vadd.f32 0.0, %v3346
  %v3348 = vpop.f32.mrf.mxu0
  %v3349 = vadd.f32 0.0, %v3348
  %v3350 = vpop.f32.mrf.mxu0
  %v3351 = vadd.f32 0.0, %v3350
  %3352 = vmatprep.mubr.bf16.mxu0 %v3246
  %3353 = vmatmul.mubr.bf16.gmra.mxu0 %v3209
  %v3354 = vpop.f32.mrf.mxu0
  %v3355 = vadd.f32 0.0, %v3354
  %v3356 = vpop.f32.mrf.mxu0
  %v3357 = vadd.f32 0.0, %v3356
  %v3358 = vpop.f32.mrf.mxu0
  %v3359 = vadd.f32 0.0, %v3358
  %v3360 = vpop.f32.mrf.mxu0
  %v3361 = vadd.f32 0.0, %v3360
  %3362 = vmatprep.mubr.bf16.mxu0 %v3249
  %3363 = vmatmul.mubr.bf16.gmra.mxu0 %v3211
  %v3364 = vpop.f32.mrf.mxu0
  %v3365 = vadd.f32 0.0, %v3364
  %v3366 = vpop.f32.mrf.mxu0
  %v3367 = vadd.f32 0.0, %v3366
  %v3368 = vpop.f32.mrf.mxu0
  %v3369 = vadd.f32 0.0, %v3368
  %v3370 = vpop.f32.mrf.mxu0
  %v3371 = vadd.f32 0.0, %v3370
  %3372 = vmatprep.mubr.bf16.mxu0 %v3252
  %3373 = vmatmul.mubr.bf16.gmra.mxu0 %v3213
  %v3374 = vpop.f32.mrf.mxu0
  %v3375 = vadd.f32 0.0, %v3374
  %v3376 = vpop.f32.mrf.mxu0
  %v3377 = vadd.f32 0.0, %v3376
  %v3378 = vpop.f32.mrf.mxu0
  %v3379 = vadd.f32 0.0, %v3378
  %v3380 = vpop.f32.mrf.mxu0
  %v3381 = vadd.f32 0.0, %v3380
  %3382 = vmatprep.mubr.bf16.mxu0 %v3255
  %3383 = vmatmul.mubr.bf16.gmra.mxu0 %v3215
  %v3384 = vpop.f32.mrf.mxu0
  %v3385 = vadd.f32 0.0, %v3384
  %v3386 = vpop.f32.mrf.mxu0
  %v3387 = vadd.f32 0.0, %v3386
  %v3388 = vpop.f32.mrf.mxu0
  %v3389 = vadd.f32 0.0, %v3388
  %v3390 = vpop.f32.mrf.mxu0
  %v3391 = vadd.f32 0.0, %v3390
  %3392 = vmatprep.mubr.bf16.mxu0 %v3258
  %3393 = vmatmul.mubr.bf16.gmra.mxu0 %v3217
  %v3394 = vpop.f32.mrf.mxu0
  %v3395 = vadd.f32 0.0, %v3394
  %v3396 = vpop.f32.mrf.mxu0
  %v3397 = vadd.f32 0.0, %v3396
  %v3398 = vpop.f32.mrf.mxu0
  %v3399 = vadd.f32 0.0, %v3398
  %v3400 = vpop.f32.mrf.mxu0
  %v3401 = vadd.f32 0.0, %v3400
  %3402 = vdwg.mxu0
  %3403 = vst [vmem:[#allocation4] sm:$0xff] %v3305
  %vm3404 = vcmask 195584
  %3405 = vst.msk [vmem:[#allocation4 + $0x8] sm:$0xff] %vm3404, %v3307
  %3406 = vst [vmem:[#allocation4 + $0x10] sm:$0xff] %v3309
  %3407 = vst.msk [vmem:[#allocation4 + $0x18] sm:$0xff] %vm3404, %v3311
  %3408 = vst [vmem:[#allocation4 + $0x20] sm:$0xff] %v3315
  %3409 = vst.msk [vmem:[#allocation4 + $0x28] sm:$0xff] %vm3404, %v3317
  %3410 = vst [vmem:[#allocation4 + $0x30] sm:$0xff] %v3319
  %3411 = vst.msk [vmem:[#allocation4 + $0x38] sm:$0xff] %vm3404, %v3321
  %3412 = vst [vmem:[#allocation4 + $0x40] sm:$0xff] %v3325
  %3413 = vst.msk [vmem:[#allocation4 + $0x48] sm:$0xff] %vm3404, %v3327
  %3414 = vst [vmem:[#allocation4 + $0x50] sm:$0xff] %v3329
  %3415 = vst.msk [vmem:[#allocation4 + $0x58] sm:$0xff] %vm3404, %v3331
  %3416 = vst [vmem:[#allocation4 + $0x60] sm:$0xff] %v3335
  %3417 = vst.msk [vmem:[#allocation4 + $0x68] sm:$0xff] %vm3404, %v3337
  %3418 = vst [vmem:[#allocation4 + $0x70] sm:$0xff] %v3339
  %3419 = vst.msk [vmem:[#allocation4 + $0x78] sm:$0xff] %vm3404, %v3341
  %3420 = vst [vmem:[#allocation4 + $0x80] sm:$0xff] %v3345
  %3421 = vst.msk [vmem:[#allocation4 + $0x88] sm:$0xff] %vm3404, %v3347
  %3422 = vst [vmem:[#allocation4 + $0x90] sm:$0xff] %v3349
  %3423 = vst.msk [vmem:[#allocation4 + $0x98] sm:$0xff] %vm3404, %v3351
  %3424 = vst [vmem:[#allocation4 + $0xa0] sm:$0xff] %v3355
  %3425 = vst.msk [vmem:[#allocation4 + $0xa8] sm:$0xff] %vm3404, %v3357
  %3426 = vst [vmem:[#allocation4 + $0xb0] sm:$0xff] %v3359
  %3427 = vst.msk [vmem:[#allocation4 + $0xb8] sm:$0xff] %vm3404, %v3361
  %3428 = vst [vmem:[#allocation4 + $0xc0] sm:$0xff] %v3365
  %3429 = vst.msk [vmem:[#allocation4 + $0xc8] sm:$0xff] %vm3404, %v3367
  %3430 = vst [vmem:[#allocation4 + $0xd0] sm:$0xff] %v3369
  %3431 = vst.msk [vmem:[#allocation4 + $0xd8] sm:$0xff] %vm3404, %v3371
  %3432 = vst [vmem:[#allocation4 + $0xe0] sm:$0xff] %v3375
  %3433 = vst.msk [vmem:[#allocation4 + $0xe8] sm:$0xff] %vm3404, %v3377
  %3434 = vst [vmem:[#allocation4 + $0xf0] sm:$0xff] %v3379
  %3435 = vst.msk [vmem:[#allocation4 + $0xf8] sm:$0xff] %vm3404, %v3381
  %3436 = vst [vmem:[#allocation4 + $0x100] sm:$0xff] %v3385
  %3437 = vst.msk [vmem:[#allocation4 + $0x108] sm:$0xff] %vm3404, %v3387
  %3438 = vst [vmem:[#allocation4 + $0x110] sm:$0xff] %v3389
  %3439 = vst.msk [vmem:[#allocation4 + $0x118] sm:$0xff] %vm3404, %v3391
  %3440 = vst [vmem:[#allocation4 + $0x120] sm:$0xff] %v3395
  %3441 = vst.msk [vmem:[#allocation4 + $0x128] sm:$0xff] %vm3404, %v3397
  %3442 = vst [vmem:[#allocation4 + $0x130] sm:$0xff] %v3399
  %3443 = vst.msk [vmem:[#allocation4 + $0x138] sm:$0xff] %vm3404, %v3401
  %v3444 = vld [vmem:[#allocation3] sm:$0xff]
  %v3445 = vld [vmem:[#allocation3 + $0x8] sm:$0xff]
  %v3446 = vld [vmem:[#allocation3 + $0x10] sm:$0xff]
  %v3447 = vld [vmem:[#allocation3 + $0x18] sm:$0xff]
  %v3448 = vld [vmem:[#allocation3 + $0x20] sm:$0xff]
  %v3449 = vld [vmem:[#allocation3 + $0x28] sm:$0xff]
  %v3450 = vld [vmem:[#allocation3 + $0x30] sm:$0xff]
  %v3451 = vld [vmem:[#allocation3 + $0x38] sm:$0xff]
  %v3452 = vld [vmem:[#allocation3 + $0x40] sm:$0xff]
  %v3453 = vld [vmem:[#allocation3 + $0x48] sm:$0xff]
  %v3454 = vld [vmem:[#allocation3 + $0x50] sm:$0xff]
  %v3455 = vld [vmem:[#allocation3 + $0x58] sm:$0xff]
  %v3456 = vld [vmem:[#allocation3 + $0x60] sm:$0xff]
  %v3457 = vld [vmem:[#allocation3 + $0x68] sm:$0xff]
  %v3458 = vld [vmem:[#allocation3 + $0x70] sm:$0xff]
  %v3459 = vld [vmem:[#allocation3 + $0x78] sm:$0xff]
  %v3460 = vld [vmem:[#allocation3 + $0x80] sm:$0xff]
  %v3461 = vld [vmem:[#allocation3 + $0x88] sm:$0xff]
  %v3462 = vld [vmem:[#allocation3 + $0x90] sm:$0xff]
  %v3463 = vld [vmem:[#allocation3 + $0x98] sm:$0xff]
  %v3464 = vld [vmem:[#allocation3 + $0xa0] sm:$0xff]
  %v3465 = vld [vmem:[#allocation3 + $0xa8] sm:$0xff]
  %v3466 = vld [vmem:[#allocation3 + $0xb0] sm:$0xff]
  %v3467 = vld [vmem:[#allocation3 + $0xb8] sm:$0xff]
  %v3468 = vld [vmem:[#allocation3 + $0xc0] sm:$0xff]
  %v3469 = vld [vmem:[#allocation3 + $0xc8] sm:$0xff]
  %v3470 = vld [vmem:[#allocation3 + $0xd0] sm:$0xff]
  %v3471 = vld [vmem:[#allocation3 + $0xd8] sm:$0xff]
  %v3472 = vld [vmem:[#allocation3 + $0xe0] sm:$0xff]
  %v3473 = vld [vmem:[#allocation3 + $0xe8] sm:$0xff]
  %v3474 = vld [vmem:[#allocation3 + $0xf0] sm:$0xff]
  %v3475 = vld [vmem:[#allocation3 + $0xf8] sm:$0xff]
  %v3476 = vld [vmem:[#allocation3 + $0x100] sm:$0xff]
  %v3477 = vld [vmem:[#allocation3 + $0x108] sm:$0xff]
  %v3478 = vld [vmem:[#allocation3 + $0x110] sm:$0xff]
  %v3479 = vld [vmem:[#allocation3 + $0x118] sm:$0xff]
  %v3480 = vld [vmem:[#allocation3 + $0x120] sm:$0xff]
  %v3481 = vld [vmem:[#allocation3 + $0x128] sm:$0xff]
  %v3482 = vld [vmem:[#allocation3 + $0x130] sm:$0xff]
  %v3483 = vld [vmem:[#allocation3 + $0x138] sm:$0xff]
  %v3484 = vld [vmem:[#allocation3 + $0x140] sm:$0x7f]
  %v3485 = vld [vmem:[#allocation3 + $0x148] sm:$0x7f]
  %v3486 = vpack.c.bf16 %v3446, %v3444
  %v3487 = vpack.c.bf16 %v3447, %v3445
  %v3488 = vpack.c.bf16 %v3450, %v3448
  %v3489 = vpack.c.bf16 %v3451, %v3449
  %v3490 = vpack.c.bf16 %v3454, %v3452
  %v3491 = vpack.c.bf16 %v3455, %v3453
  %v3492 = vpack.c.bf16 %v3458, %v3456
  %v3493 = vpack.c.bf16 %v3459, %v3457
  %v3494 = vpack.c.bf16 %v3462, %v3460
  %v3495 = vpack.c.bf16 %v3463, %v3461
  %v3496 = vpack.c.bf16 %v3466, %v3464
  %v3497 = vpack.c.bf16 %v3467, %v3465
  %v3498 = vpack.c.bf16 %v3470, %v3468
  %v3499 = vpack.c.bf16 %v3471, %v3469
  %v3500 = vpack.c.bf16 %v3474, %v3472
  %v3501 = vpack.c.bf16 %v3475, %v3473
  %v3502 = vpack.c.bf16 %v3478, %v3476
  %v3503 = vpack.c.bf16 %v3479, %v3477
  %v3504 = vpack.c.bf16 %v3482, %v3480
  %v3505 = vpack.c.bf16 %v3483, %v3481
  %v3506 = vpack.c.bf16 %v3484, %v3484
  %v3507 = vpack.c.bf16 %v3485, %v3485
  %s3508 = scalar_lea.vmem %s3, 160
  %v3509 = vld [vmem:[%s3508] sm:$0xff]
  %v3510 = vld [vmem:[%s3508 + $0x8] sm:$0xff]
  %v3511 = vld [vmem:[%s3508 + $0x10] sm:$0xff]
  %v3512 = vld [vmem:[%s3508 + $0x18] sm:$0xff]
  %v3513 = vld [vmem:[%s3508 + $0x20] sm:$0xff]
  %v3514 = vld [vmem:[%s3508 + $0x28] sm:$0xff]
  %v3515 = vld [vmem:[%s3508 + $0x30] sm:$0xff]
  %v3516 = vld [vmem:[%s3508 + $0x38] sm:$0xff]
  %v3517 = vld [vmem:[%s3508 + $0x40] sm:$0xff]
  %v3518 = vld [vmem:[%s3508 + $0x48] sm:$0xff]
  %v3519 = vld [vmem:[%s3508 + $0x50] sm:$0xff]
  %v3520 = vld [vmem:[%s3508 + $0x58] sm:$0xff]
  %v3521 = vld [vmem:[%s3508 + $0x60] sm:$0xff]
  %v3522 = vld [vmem:[%s3508 + $0x68] sm:$0xff]
  %v3523 = vld [vmem:[%s3508 + $0x70] sm:$0xff]
  %v3524 = vld [vmem:[%s3508 + $0x78] sm:$0xff]
  %v3525 = vld [vmem:[%s3508 + $0x80] sm:$0xff]
  %v3526 = vld [vmem:[%s3508 + $0x88] sm:$0xff]
  %v3527 = vld [vmem:[%s3508 + $0x90] sm:$0xff]
  %v3528 = vld [vmem:[%s3508 + $0x98] sm:$0xff]
  %v3549 = vunpack.c.l.b16 %v3509
  %v3550 = vunpack.c.h.b16 %v3509
  %v3551 = vunpack.c.l.b16 %v3510
  %v3552 = vunpack.c.h.b16 %v3510
  %v3553 = vunpack.c.l.b16 %v3511
  %v3554 = vunpack.c.h.b16 %v3511
  %v3555 = vunpack.c.l.b16 %v3512
  %v3556 = vunpack.c.h.b16 %v3512
  %v3557 = vunpack.c.l.b16 %v3513
  %v3558 = vunpack.c.h.b16 %v3513
  %v3559 = vunpack.c.l.b16 %v3514
  %v3560 = vunpack.c.h.b16 %v3514
  %v3561 = vunpack.c.l.b16 %v3515
  %v3562 = vunpack.c.h.b16 %v3515
  %v3563 = vunpack.c.l.b16 %v3516
  %v3564 = vunpack.c.h.b16 %v3516
  %v3565 = vunpack.c.l.b16 %v3517
  %v3566 = vunpack.c.h.b16 %v3517
  %v3567 = vunpack.c.l.b16 %v3518
  %v3568 = vunpack.c.h.b16 %v3518
  %v3569 = vunpack.c.l.b16 %v3519
  %v3570 = vunpack.c.h.b16 %v3519
  %v3571 = vunpack.c.l.b16 %v3520
  %v3572 = vunpack.c.h.b16 %v3520
  %v3573 = vunpack.c.l.b16 %v3521
  %v3574 = vunpack.c.h.b16 %v3521
  %v3575 = vunpack.c.l.b16 %v3522
  %v3576 = vunpack.c.h.b16 %v3522
  %v3577 = vunpack.c.l.b16 %v3523
  %v3578 = vunpack.c.h.b16 %v3523
  %v3579 = vunpack.c.l.b16 %v3524
  %v3580 = vunpack.c.h.b16 %v3524
  %v3581 = vunpack.c.l.b16 %v3525
  %v3582 = vunpack.c.h.b16 %v3525
  %v3583 = vunpack.c.l.b16 %v3526
  %v3584 = vunpack.c.h.b16 %v3526
  %v3585 = vunpack.c.l.b16 %v3527
  %v3586 = vunpack.c.h.b16 %v3527
  %v3587 = vunpack.c.l.b16 %v3528
  %v3588 = vunpack.c.h.b16 %v3528
  %v3589 = vpack.c.b16 %v3551, %v3549
  %v3590 = vpack.c.b16 %v3552, %v3550
  %v3591 = vpack.c.b16 %v3555, %v3553
  %v3592 = vpack.c.b16 %v3556, %v3554
  %v3593 = vpack.c.b16 %v3559, %v3557
  %v3594 = vpack.c.b16 %v3560, %v3558
  %v3595 = vpack.c.b16 %v3563, %v3561
  %v3596 = vpack.c.b16 %v3564, %v3562
  %v3597 = vpack.c.b16 %v3567, %v3565
  %v3598 = vpack.c.b16 %v3568, %v3566
  %v3599 = vpack.c.b16 %v3571, %v3569
  %v3600 = vpack.c.b16 %v3572, %v3570
  %v3601 = vpack.c.b16 %v3575, %v3573
  %v3602 = vpack.c.b16 %v3576, %v3574
  %v3603 = vpack.c.b16 %v3579, %v3577
  %v3604 = vpack.c.b16 %v3580, %v3578
  %v3605 = vpack.c.b16 %v3583, %v3581
  %v3606 = vpack.c.b16 %v3584, %v3582
  %v3607 = vpack.c.b16 %v3587, %v3585
  %v3608 = vpack.c.b16 %v3588, %v3586
  %3641 = vrot.lane.b32.xlu0 %v3486, 112
  %v3642 = vpop.permute.xlu0 %3641
  %3643 = vrot.lane.b32.xlu0 %v3487, 112
  %v3644 = vpop.permute.xlu0 %3643
  %3645 = vrot.lane.b32.xlu0 %v3488, 112
  %v3646 = vpop.permute.xlu0 %3645
  %3647 = vrot.lane.b32.xlu0 %v3489, 112
  %v3648 = vpop.permute.xlu0 %3647
  %3649 = vrot.lane.b32.xlu0 %v3490, 112
  %v3650 = vpop.permute.xlu0 %3649
  %3651 = vrot.lane.b32.xlu0 %v3491, 112
  %v3652 = vpop.permute.xlu0 %3651
  %3653 = vrot.lane.b32.xlu0 %v3492, 112
  %v3654 = vpop.permute.xlu0 %3653
  %3655 = vrot.lane.b32.xlu0 %v3493, 112
  %v3656 = vpop.permute.xlu0 %3655
  %3657 = vrot.lane.b32.xlu0 %v3494, 112
  %v3658 = vpop.permute.xlu0 %3657
  %3659 = vrot.lane.b32.xlu0 %v3495, 112
  %v3660 = vpop.permute.xlu0 %3659
  %3661 = vrot.lane.b32.xlu0 %v3496, 112
  %v3662 = vpop.permute.xlu0 %3661
  %3663 = vrot.lane.b32.xlu0 %v3497, 112
  %v3664 = vpop.permute.xlu0 %3663
  %3665 = vrot.lane.b32.xlu0 %v3498, 112
  %v3666 = vpop.permute.xlu0 %3665
  %3667 = vrot.lane.b32.xlu0 %v3499, 112
  %v3668 = vpop.permute.xlu0 %3667
  %3669 = vrot.lane.b32.xlu0 %v3500, 112
  %v3670 = vpop.permute.xlu0 %3669
  %3671 = vrot.lane.b32.xlu0 %v3501, 112
  %v3672 = vpop.permute.xlu0 %3671
  %3673 = vrot.lane.b32.xlu0 %v3502, 112
  %v3674 = vpop.permute.xlu0 %3673
  %3675 = vrot.lane.b32.xlu0 %v3503, 112
  %v3676 = vpop.permute.xlu0 %3675
  %3677 = vrot.lane.b32.xlu0 %v3504, 112
  %v3678 = vpop.permute.xlu0 %3677
  %3679 = vrot.lane.b32.xlu0 %v3505, 112
  %v3680 = vpop.permute.xlu0 %3679
  %3681 = vrot.lane.b32.xlu0 %v3506, 112
  %v3682 = vpop.permute.xlu0 %3681
  %3683 = vrot.lane.b32.xlu0 %v3507, 112
  %v3684 = vpop.permute.xlu0 %3683
  %v3685 = vsel %vm979, %v3642, %v3644
  %v3686 = vsel %vm979, %v3646, %v3648
  %v3687 = vsel %vm979, %v3650, %v3652
  %v3688 = vsel %vm979, %v3654, %v3656
  %v3689 = vsel %vm979, %v3658, %v3660
  %v3690 = vsel %vm979, %v3662, %v3664
  %v3691 = vsel %vm979, %v3666, %v3668
  %v3692 = vsel %vm979, %v3670, %v3672
  %v3693 = vsel %vm979, %v3674, %v3676
  %v3694 = vsel %vm979, %v3678, %v3680
  %v3695 = vsel %vm979, %v3682, %v3684
  %v3717 = vsel %vm3229, %v3590, 0
  %v3720 = vsel %vm3229, %v3592, 0
  %v3723 = vsel %vm3229, %v3594, 0
  %v3726 = vsel %vm3229, %v3596, 0
  %v3729 = vsel %vm3229, %v3598, 0
  %v3732 = vsel %vm3229, %v3600, 0
  %v3735 = vsel %vm3229, %v3602, 0
  %v3738 = vsel %vm3229, %v3604, 0
  %v3741 = vsel %vm3229, %v3606, 0
  %v3744 = vsel %vm3229, %v3608, 0
  %v3747 = vand.u32 %v3695, %v3263
  %v3750 = vand.u32 %v3684, %v3263
  %3752 = vmatprep.subr.bf16.mxu0 %v3672
  %3753 = vmatpush1.bf16.msra.mxu0 %v3692
  %3754 = vmatprep.subr.bf16.mxu0 %v3668
  %3755 = vmatpush1.bf16.msra.mxu0 %v3691
  %3756 = vmatprep.subr.bf16.mxu0 %v3664
  %3757 = vmatpush1.bf16.msra.mxu0 %v3690
  %3758 = vmatprep.subr.bf16.mxu0 %v3660
  %3759 = vmatpush1.bf16.msra.mxu0 %v3689
  %3760 = vmatprep.subr.bf16.mxu0 %v3656
  %3761 = vmatpush1.bf16.msra.mxu0 %v3688
  %3762 = vmatprep.subr.bf16.mxu0 %v3652
  %3763 = vmatpush1.bf16.msra.mxu0 %v3687
  %3764 = vmatprep.subr.bf16.mxu0 %v3648
  %3765 = vmatpush1.bf16.msra.mxu0 %v3686
  %3766 = vmatprep.subr.bf16.mxu0 %v3644
  %3767 = vmatpush1.bf16.msra.mxu0 %v3685
  %3768 = vmatprep.subr.bf16.mxu0 0
  %3769 = vmatpush2.bf16.msra.mxu0 0
  %3770 = vmatprep.subr.bf16.mxu0 0
  %3771 = vmatpush2.bf16.msra.mxu0 0
  %3772 = vmatprep.subr.bf16.mxu0 0
  %3773 = vmatpush2.bf16.msra.mxu0 0
  %3774 = vmatprep.subr.bf16.mxu0 0
  %3775 = vmatpush2.bf16.msra.mxu0 0
  %3776 = vmatprep.subr.bf16.mxu0 0
  %3777 = vmatpush2.bf16.msra.mxu0 0
  %3778 = vmatprep.subr.bf16.mxu0 %v3750
  %3779 = vmatpush2.bf16.msra.mxu0 %v3747
  %3780 = vmatprep.subr.bf16.mxu0 %v3680
  %3781 = vmatpush2.bf16.msra.mxu0 %v3694
  %3782 = vmatprep.subr.bf16.mxu0 %v3676
  %3783 = vmatpush2.bf16.msra.mxu0 %v3693
  %3784 = vmatprep.mubr.bf16.mxu0 %v3717
  %3785 = vmatmul.mubr.bf16.gmra.mxu0 %v3589
  %v3786 = vpop.f32.mrf.mxu0
  %v3787 = vadd.f32 0.0, %v3786
  %v3788 = vpop.f32.mrf.mxu0
  %v3789 = vadd.f32 0.0, %v3788
  %v3790 = vpop.f32.mrf.mxu0
  %v3791 = vadd.f32 0.0, %v3790
  %v3792 = vpop.f32.mrf.mxu0
  %v3793 = vadd.f32 0.0, %v3792
  %3794 = vmatprep.mubr.bf16.mxu0 %v3720
  %3795 = vmatmul.mubr.bf16.gmra.mxu0 %v3591
  %v3796 = vpop.f32.mrf.mxu0
  %v3797 = vadd.f32 0.0, %v3796
  %v3798 = vpop.f32.mrf.mxu0
  %v3799 = vadd.f32 0.0, %v3798
  %v3800 = vpop.f32.mrf.mxu0
  %v3801 = vadd.f32 0.0, %v3800
  %v3802 = vpop.f32.mrf.mxu0
  %v3803 = vadd.f32 0.0, %v3802
  %3804 = vmatprep.mubr.bf16.mxu0 %v3723
  %3805 = vmatmul.mubr.bf16.gmra.mxu0 %v3593
  %v3806 = vpop.f32.mrf.mxu0
  %v3807 = vadd.f32 0.0, %v3806
  %v3808 = vpop.f32.mrf.mxu0
  %v3809 = vadd.f32 0.0, %v3808
  %v3810 = vpop.f32.mrf.mxu0
  %v3811 = vadd.f32 0.0, %v3810
  %v3812 = vpop.f32.mrf.mxu0
  %v3813 = vadd.f32 0.0, %v3812
  %3814 = vmatprep.mubr.bf16.mxu0 %v3726
  %3815 = vmatmul.mubr.bf16.gmra.mxu0 %v3595
  %v3816 = vpop.f32.mrf.mxu0
  %v3817 = vadd.f32 0.0, %v3816
  %v3818 = vpop.f32.mrf.mxu0
  %v3819 = vadd.f32 0.0, %v3818
  %v3820 = vpop.f32.mrf.mxu0
  %v3821 = vadd.f32 0.0, %v3820
  %v3822 = vpop.f32.mrf.mxu0
  %v3823 = vadd.f32 0.0, %v3822
  %3824 = vmatprep.mubr.bf16.mxu0 %v3729
  %3825 = vmatmul.mubr.bf16.gmra.mxu0 %v3597
  %v3826 = vpop.f32.mrf.mxu0
  %v3827 = vadd.f32 0.0, %v3826
  %v3828 = vpop.f32.mrf.mxu0
  %v3829 = vadd.f32 0.0, %v3828
  %v3830 = vpop.f32.mrf.mxu0
  %v3831 = vadd.f32 0.0, %v3830
  %v3832 = vpop.f32.mrf.mxu0
  %v3833 = vadd.f32 0.0, %v3832
  %3834 = vmatprep.mubr.bf16.mxu0 %v3732
  %3835 = vmatmul.mubr.bf16.gmra.mxu0 %v3599
  %v3836 = vpop.f32.mrf.mxu0
  %v3837 = vadd.f32 0.0, %v3836
  %v3838 = vpop.f32.mrf.mxu0
  %v3839 = vadd.f32 0.0, %v3838
  %v3840 = vpop.f32.mrf.mxu0
  %v3841 = vadd.f32 0.0, %v3840
  %v3842 = vpop.f32.mrf.mxu0
  %v3843 = vadd.f32 0.0, %v3842
  %3844 = vmatprep.mubr.bf16.mxu0 %v3735
  %3845 = vmatmul.mubr.bf16.gmra.mxu0 %v3601
  %v3846 = vpop.f32.mrf.mxu0
  %v3847 = vadd.f32 0.0, %v3846
  %v3848 = vpop.f32.mrf.mxu0
  %v3849 = vadd.f32 0.0, %v3848
  %v3850 = vpop.f32.mrf.mxu0
  %v3851 = vadd.f32 0.0, %v3850
  %v3852 = vpop.f32.mrf.mxu0
  %v3853 = vadd.f32 0.0, %v3852
  %3854 = vmatprep.mubr.bf16.mxu0 %v3738
  %3855 = vmatmul.mubr.bf16.gmra.mxu0 %v3603
  %v3856 = vpop.f32.mrf.mxu0
  %v3857 = vadd.f32 0.0, %v3856
  %v3858 = vpop.f32.mrf.mxu0
  %v3859 = vadd.f32 0.0, %v3858
  %v3860 = vpop.f32.mrf.mxu0
  %v3861 = vadd.f32 0.0, %v3860
  %v3862 = vpop.f32.mrf.mxu0
  %v3863 = vadd.f32 0.0, %v3862
  %3864 = vmatprep.mubr.bf16.mxu0 %v3741
  %3865 = vmatmul.mubr.bf16.gmra.mxu0 %v3605
  %v3866 = vpop.f32.mrf.mxu0
  %v3867 = vadd.f32 0.0, %v3866
  %v3868 = vpop.f32.mrf.mxu0
  %v3869 = vadd.f32 0.0, %v3868
  %v3870 = vpop.f32.mrf.mxu0
  %v3871 = vadd.f32 0.0, %v3870
  %v3872 = vpop.f32.mrf.mxu0
  %v3873 = vadd.f32 0.0, %v3872
  %3874 = vmatprep.mubr.bf16.mxu0 %v3744
  %3875 = vmatmul.mubr.bf16.gmra.mxu0 %v3607
  %v3876 = vpop.f32.mrf.mxu0
  %v3877 = vadd.f32 0.0, %v3876
  %v3878 = vpop.f32.mrf.mxu0
  %v3879 = vadd.f32 0.0, %v3878
  %v3880 = vpop.f32.mrf.mxu0
  %v3881 = vadd.f32 0.0, %v3880
  %v3882 = vpop.f32.mrf.mxu0
  %v3883 = vadd.f32 0.0, %v3882
  %3884 = vdwg.mxu0
  %v3885 = vld [vmem:[#allocation4] sm:$0xff]
  %v3886 = vld [vmem:[#allocation4 + $0x8] sm:$0xff]
  %v3887 = vld [vmem:[#allocation4 + $0x10] sm:$0xff]
  %v3888 = vld [vmem:[#allocation4 + $0x18] sm:$0xff]
  %v3889 = vld [vmem:[#allocation4 + $0x20] sm:$0xff]
  %v3890 = vld [vmem:[#allocation4 + $0x28] sm:$0xff]
  %v3891 = vld [vmem:[#allocation4 + $0x30] sm:$0xff]
  %v3892 = vld [vmem:[#allocation4 + $0x38] sm:$0xff]
  %v3893 = vld [vmem:[#allocation4 + $0x40] sm:$0xff]
  %v3894 = vld [vmem:[#allocation4 + $0x48] sm:$0xff]
  %v3895 = vld [vmem:[#allocation4 + $0x50] sm:$0xff]
  %v3896 = vld [vmem:[#allocation4 + $0x58] sm:$0xff]
  %v3897 = vld [vmem:[#allocation4 + $0x60] sm:$0xff]
  %v3898 = vld [vmem:[#allocation4 + $0x68] sm:$0xff]
  %v3899 = vld [vmem:[#allocation4 + $0x70] sm:$0xff]
  %v3900 = vld [vmem:[#allocation4 + $0x78] sm:$0xff]
  %v3901 = vld [vmem:[#allocation4 + $0x80] sm:$0xff]
  %v3902 = vld [vmem:[#allocation4 + $0x88] sm:$0xff]
  %v3903 = vld [vmem:[#allocation4 + $0x90] sm:$0xff]
  %v3904 = vld [vmem:[#allocation4 + $0x98] sm:$0xff]
  %v3905 = vld [vmem:[#allocation4 + $0xa0] sm:$0xff]
  %v3906 = vld [vmem:[#allocation4 + $0xa8] sm:$0xff]
  %v3907 = vld [vmem:[#allocation4 + $0xb0] sm:$0xff]
  %v3908 = vld [vmem:[#allocation4 + $0xb8] sm:$0xff]
  %v3909 = vld [vmem:[#allocation4 + $0xc0] sm:$0xff]
  %v3910 = vld [vmem:[#allocation4 + $0xc8] sm:$0xff]
  %v3911 = vld [vmem:[#allocation4 + $0xd0] sm:$0xff]
  %v3912 = vld [vmem:[#allocation4 + $0xd8] sm:$0xff]
  %v3913 = vld [vmem:[#allocation4 + $0xe0] sm:$0xff]
  %v3914 = vld [vmem:[#allocation4 + $0xe8] sm:$0xff]
  %v3915 = vld [vmem:[#allocation4 + $0xf0] sm:$0xff]
  %v3916 = vld [vmem:[#allocation4 + $0xf8] sm:$0xff]
  %v3917 = vld [vmem:[#allocation4 + $0x100] sm:$0xff]
  %v3918 = vld [vmem:[#allocation4 + $0x108] sm:$0xff]
  %v3919 = vld [vmem:[#allocation4 + $0x110] sm:$0xff]
  %v3920 = vld [vmem:[#allocation4 + $0x118] sm:$0xff]
  %v3921 = vld [vmem:[#allocation4 + $0x120] sm:$0xff]
  %v3922 = vld [vmem:[#allocation4 + $0x128] sm:$0xff]
  %v3923 = vld [vmem:[#allocation4 + $0x130] sm:$0xff]
  %v3924 = vld [vmem:[#allocation4 + $0x138] sm:$0xff]
  %v3925 = vadd.f32 %v3885, %v3787
  %v3926 = vadd.f32 %v3886, %v3789
  %v3927 = vadd.f32 %v3887, %v3791
  %v3928 = vadd.f32 %v3888, %v3793
  %v3929 = vadd.f32 %v3889, %v3797
  %v3930 = vadd.f32 %v3890, %v3799
  %v3931 = vadd.f32 %v3891, %v3801
  %v3932 = vadd.f32 %v3892, %v3803
  %v3933 = vadd.f32 %v3893, %v3807
  %v3934 = vadd.f32 %v3894, %v3809
  %v3935 = vadd.f32 %v3895, %v3811
  %v3936 = vadd.f32 %v3896, %v3813
  %v3937 = vadd.f32 %v3897, %v3817
  %v3938 = vadd.f32 %v3898, %v3819
  %v3939 = vadd.f32 %v3899, %v3821
  %v3940 = vadd.f32 %v3900, %v3823
  %v3941 = vadd.f32 %v3901, %v3827
  %v3942 = vadd.f32 %v3902, %v3829
  %v3943 = vadd.f32 %v3903, %v3831
  %v3944 = vadd.f32 %v3904, %v3833
  %v3945 = vadd.f32 %v3905, %v3837
  %v3946 = vadd.f32 %v3906, %v3839
  %v3947 = vadd.f32 %v3907, %v3841
  %v3948 = vadd.f32 %v3908, %v3843
  %v3949 = vadd.f32 %v3909, %v3847
  %v3950 = vadd.f32 %v3910, %v3849
  %v3951 = vadd.f32 %v3911, %v3851
  %v3952 = vadd.f32 %v3912, %v3853
  %v3953 = vadd.f32 %v3913, %v3857
  %v3954 = vadd.f32 %v3914, %v3859
  %v3955 = vadd.f32 %v3915, %v3861
  %v3956 = vadd.f32 %v3916, %v3863
  %v3957 = vadd.f32 %v3917, %v3867
  %v3958 = vadd.f32 %v3918, %v3869
  %v3959 = vadd.f32 %v3919, %v3871
  %v3960 = vadd.f32 %v3920, %v3873
  %v3961 = vadd.f32 %v3921, %v3877
  %v3962 = vadd.f32 %v3922, %v3879
  %v3963 = vadd.f32 %v3923, %v3881
  %v3964 = vadd.f32 %v3924, %v3883
  %3965 = vst [vmem:[#allocation4] sm:$0xff] %v3925
  %3966 = vst.msk [vmem:[#allocation4 + $0x8] sm:$0xff] %vm3404, %v3926
  %3967 = vst [vmem:[#allocation4 + $0x10] sm:$0xff] %v3927
  %3968 = vst.msk [vmem:[#allocation4 + $0x18] sm:$0xff] %vm3404, %v3928
  %3969 = vst [vmem:[#allocation4 + $0x20] sm:$0xff] %v3929
  %3970 = vst.msk [vmem:[#allocation4 + $0x28] sm:$0xff] %vm3404, %v3930
  %3971 = vst [vmem:[#allocation4 + $0x30] sm:$0xff] %v3931
  %3972 = vst.msk [vmem:[#allocation4 + $0x38] sm:$0xff] %vm3404, %v3932
  %3973 = vst [vmem:[#allocation4 + $0x40] sm:$0xff] %v3933
  %3974 = vst.msk [vmem:[#allocation4 + $0x48] sm:$0xff] %vm3404, %v3934
  %3975 = vst [vmem:[#allocation4 + $0x50] sm:$0xff] %v3935
  %3976 = vst.msk [vmem:[#allocation4 + $0x58] sm:$0xff] %vm3404, %v3936
  %3977 = vst [vmem:[#allocation4 + $0x60] sm:$0xff] %v3937
  %3978 = vst.msk [vmem:[#allocation4 + $0x68] sm:$0xff] %vm3404, %v3938
  %3979 = vst [vmem:[#allocation4 + $0x70] sm:$0xff] %v3939
  %3980 = vst.msk [vmem:[#allocation4 + $0x78] sm:$0xff] %vm3404, %v3940
  %3981 = vst [vmem:[#allocation4 + $0x80] sm:$0xff] %v3941
  %3982 = vst.msk [vmem:[#allocation4 + $0x88] sm:$0xff] %vm3404, %v3942
  %3983 = vst [vmem:[#allocation4 + $0x90] sm:$0xff] %v3943
  %3984 = vst.msk [vmem:[#allocation4 + $0x98] sm:$0xff] %vm3404, %v3944
  %3985 = vst [vmem:[#allocation4 + $0xa0] sm:$0xff] %v3945
  %3986 = vst.msk [vmem:[#allocation4 + $0xa8] sm:$0xff] %vm3404, %v3946
  %3987 = vst [vmem:[#allocation4 + $0xb0] sm:$0xff] %v3947
  %3988 = vst.msk [vmem:[#allocation4 + $0xb8] sm:$0xff] %vm3404, %v3948
  %3989 = vst [vmem:[#allocation4 + $0xc0] sm:$0xff] %v3949
  %3990 = vst.msk [vmem:[#allocation4 + $0xc8] sm:$0xff] %vm3404, %v3950
  %3991 = vst [vmem:[#allocation4 + $0xd0] sm:$0xff] %v3951
  %3992 = vst.msk [vmem:[#allocation4 + $0xd8] sm:$0xff] %vm3404, %v3952
  %3993 = vst [vmem:[#allocation4 + $0xe0] sm:$0xff] %v3953
  %3994 = vst.msk [vmem:[#allocation4 + $0xe8] sm:$0xff] %vm3404, %v3954
  %3995 = vst [vmem:[#allocation4 + $0xf0] sm:$0xff] %v3955
  %3996 = vst.msk [vmem:[#allocation4 + $0xf8] sm:$0xff] %vm3404, %v3956
  %3997 = vst [vmem:[#allocation4 + $0x100] sm:$0xff] %v3957
  %3998 = vst.msk [vmem:[#allocation4 + $0x108] sm:$0xff] %vm3404, %v3958
  %3999 = vst [vmem:[#allocation4 + $0x110] sm:$0xff] %v3959
  %4000 = vst.msk [vmem:[#allocation4 + $0x118] sm:$0xff] %vm3404, %v3960
  %4001 = vst [vmem:[#allocation4 + $0x120] sm:$0xff] %v3961
  %4002 = vst.msk [vmem:[#allocation4 + $0x128] sm:$0xff] %vm3404, %v3962
  %4003 = vst [vmem:[#allocation4 + $0x130] sm:$0xff] %v3963
  %4004 = vst.msk [vmem:[#allocation4 + $0x138] sm:$0xff] %vm3404, %v3964
  %v4005 = vld [vmem:[#allocation3] sm:$0xff]
  %v4006 = vld [vmem:[#allocation3 + $0x8] sm:$0xff]
  %v4007 = vld [vmem:[#allocation3 + $0x10] sm:$0xff]
  %v4008 = vld [vmem:[#allocation3 + $0x18] sm:$0xff]
  %v4009 = vld [vmem:[#allocation3 + $0x20] sm:$0xff]
  %v4010 = vld [vmem:[#allocation3 + $0x28] sm:$0xff]
  %v4011 = vld [vmem:[#allocation3 + $0x30] sm:$0xff]
  %v4012 = vld [vmem:[#allocation3 + $0x38] sm:$0xff]
  %v4013 = vld [vmem:[#allocation3 + $0x40] sm:$0xff]
  %v4014 = vld [vmem:[#allocation3 + $0x48] sm:$0xff]
  %v4015 = vld [vmem:[#allocation3 + $0x50] sm:$0xff]
  %v4016 = vld [vmem:[#allocation3 + $0x58] sm:$0xff]
  %v4017 = vld [vmem:[#allocation3 + $0x60] sm:$0xff]
  %v4018 = vld [vmem:[#allocation3 + $0x68] sm:$0xff]
  %v4019 = vld [vmem:[#allocation3 + $0x70] sm:$0xff]
  %v4020 = vld [vmem:[#allocation3 + $0x78] sm:$0xff]
  %v4021 = vld [vmem:[#allocation3 + $0x80] sm:$0xff]
  %v4022 = vld [vmem:[#allocation3 + $0x88] sm:$0xff]
  %v4023 = vld [vmem:[#allocation3 + $0x90] sm:$0xff]
  %v4024 = vld [vmem:[#allocation3 + $0x98] sm:$0xff]
  %v4025 = vld [vmem:[#allocation3 + $0xa0] sm:$0xff]
  %v4026 = vld [vmem:[#allocation3 + $0xa8] sm:$0xff]
  %v4027 = vld [vmem:[#allocation3 + $0xb0] sm:$0xff]
  %v4028 = vld [vmem:[#allocation3 + $0xb8] sm:$0xff]
  %v4029 = vld [vmem:[#allocation3 + $0xc0] sm:$0xff]
  %v4030 = vld [vmem:[#allocation3 + $0xc8] sm:$0xff]
  %v4031 = vld [vmem:[#allocation3 + $0xd0] sm:$0xff]
  %v4032 = vld [vmem:[#allocation3 + $0xd8] sm:$0xff]
  %v4033 = vld [vmem:[#allocation3 + $0xe0] sm:$0xff]
  %v4034 = vld [vmem:[#allocation3 + $0xe8] sm:$0xff]
  %v4035 = vld [vmem:[#allocation3 + $0xf0] sm:$0xff]
  %v4036 = vld [vmem:[#allocation3 + $0xf8] sm:$0xff]
  %v4037 = vld [vmem:[#allocation3 + $0x100] sm:$0xff]
  %v4038 = vld [vmem:[#allocation3 + $0x108] sm:$0xff]
  %v4039 = vld [vmem:[#allocation3 + $0x110] sm:$0xff]
  %v4040 = vld [vmem:[#allocation3 + $0x118] sm:$0xff]
  %v4041 = vld [vmem:[#allocation3 + $0x120] sm:$0xff]
  %v4042 = vld [vmem:[#allocation3 + $0x128] sm:$0xff]
  %v4043 = vld [vmem:[#allocation3 + $0x130] sm:$0xff]
  %v4044 = vld [vmem:[#allocation3 + $0x138] sm:$0xff]
  %v4045 = vld [vmem:[#allocation3 + $0x140] sm:$0x7f]
  %v4046 = vld [vmem:[#allocation3 + $0x148] sm:$0x7f]
  %v4047 = vpack.c.bf16 %v4007, %v4005
  %v4048 = vpack.c.bf16 %v4008, %v4006
  %v4049 = vpack.c.bf16 %v4011, %v4009
  %v4050 = vpack.c.bf16 %v4012, %v4010
  %v4051 = vpack.c.bf16 %v4015, %v4013
  %v4052 = vpack.c.bf16 %v4016, %v4014
  %v4053 = vpack.c.bf16 %v4019, %v4017
  %v4054 = vpack.c.bf16 %v4020, %v4018
  %v4055 = vpack.c.bf16 %v4023, %v4021
  %v4056 = vpack.c.bf16 %v4024, %v4022
  %v4057 = vpack.c.bf16 %v4027, %v4025
  %v4058 = vpack.c.bf16 %v4028, %v4026
  %v4059 = vpack.c.bf16 %v4031, %v4029
  %v4060 = vpack.c.bf16 %v4032, %v4030
  %v4061 = vpack.c.bf16 %v4035, %v4033
  %v4062 = vpack.c.bf16 %v4036, %v4034
  %v4063 = vpack.c.bf16 %v4039, %v4037
  %v4064 = vpack.c.bf16 %v4040, %v4038
  %v4065 = vpack.c.bf16 %v4043, %v4041
  %v4066 = vpack.c.bf16 %v4044, %v4042
  %v4067 = vpack.c.bf16 %v4045, %v4045
  %v4068 = vpack.c.bf16 %v4046, %v4046
  %s4069 = scalar_lea.vmem %s3, 320
  %v4070 = vld [vmem:[%s4069] sm:$0xff]
  %v4071 = vld [vmem:[%s4069 + $0x8] sm:$0xff]
  %v4072 = vld [vmem:[%s4069 + $0x10] sm:$0xff]
  %v4073 = vld [vmem:[%s4069 + $0x18] sm:$0xff]
  %v4074 = vld [vmem:[%s4069 + $0x20] sm:$0xff]
  %v4075 = vld [vmem:[%s4069 + $0x28] sm:$0xff]
  %v4076 = vld [vmem:[%s4069 + $0x30] sm:$0xff]
  %v4077 = vld [vmem:[%s4069 + $0x38] sm:$0xff]
  %v4078 = vld [vmem:[%s4069 + $0x40] sm:$0xff]
  %v4079 = vld [vmem:[%s4069 + $0x48] sm:$0xff]
  %v4080 = vld [vmem:[%s4069 + $0x50] sm:$0xff]
  %v4081 = vld [vmem:[%s4069 + $0x58] sm:$0xff]
  %v4082 = vld [vmem:[%s4069 + $0x60] sm:$0xff]
  %v4083 = vld [vmem:[%s4069 + $0x68] sm:$0xff]
  %v4084 = vld [vmem:[%s4069 + $0x70] sm:$0xff]
  %v4085 = vld [vmem:[%s4069 + $0x78] sm:$0xff]
  %v4086 = vld [vmem:[%s4069 + $0x80] sm:$0xff]
  %v4087 = vld [vmem:[%s4069 + $0x88] sm:$0xff]
  %v4088 = vld [vmem:[%s4069 + $0x90] sm:$0xff]
  %v4089 = vld [vmem:[%s4069 + $0x98] sm:$0xff]
  %v4110 = vunpack.c.l.b16 %v4070
  %v4111 = vunpack.c.h.b16 %v4070
  %v4112 = vunpack.c.l.b16 %v4071
  %v4113 = vunpack.c.h.b16 %v4071
  %v4114 = vunpack.c.l.b16 %v4072
  %v4115 = vunpack.c.h.b16 %v4072
  %v4116 = vunpack.c.l.b16 %v4073
  %v4117 = vunpack.c.h.b16 %v4073
  %v4118 = vunpack.c.l.b16 %v4074
  %v4119 = vunpack.c.h.b16 %v4074
  %v4120 = vunpack.c.l.b16 %v4075
  %v4121 = vunpack.c.h.b16 %v4075
  %v4122 = vunpack.c.l.b16 %v4076
  %v4123 = vunpack.c.h.b16 %v4076
  %v4124 = vunpack.c.l.b16 %v4077
  %v4125 = vunpack.c.h.b16 %v4077
  %v4126 = vunpack.c.l.b16 %v4078
  %v4127 = vunpack.c.h.b16 %v4078
  %v4128 = vunpack.c.l.b16 %v4079
  %v4129 = vunpack.c.h.b16 %v4079
  %v4130 = vunpack.c.l.b16 %v4080
  %v4131 = vunpack.c.h.b16 %v4080
  %v4132 = vunpack.c.l.b16 %v4081
  %v4133 = vunpack.c.h.b16 %v4081
  %v4134 = vunpack.c.l.b16 %v4082
  %v4135 = vunpack.c.h.b16 %v4082
  %v4136 = vunpack.c.l.b16 %v4083
  %v4137 = vunpack.c.h.b16 %v4083
  %v4138 = vunpack.c.l.b16 %v4084
  %v4139 = vunpack.c.h.b16 %v4084
  %v4140 = vunpack.c.l.b16 %v4085
  %v4141 = vunpack.c.h.b16 %v4085
  %v4142 = vunpack.c.l.b16 %v4086
  %v4143 = vunpack.c.h.b16 %v4086
  %v4144 = vunpack.c.l.b16 %v4087
  %v4145 = vunpack.c.h.b16 %v4087
  %v4146 = vunpack.c.l.b16 %v4088
  %v4147 = vunpack.c.h.b16 %v4088
  %v4148 = vunpack.c.l.b16 %v4089
  %v4149 = vunpack.c.h.b16 %v4089
  %v4150 = vpack.c.b16 %v4112, %v4110
  %v4151 = vpack.c.b16 %v4113, %v4111
  %v4152 = vpack.c.b16 %v4116, %v4114
  %v4153 = vpack.c.b16 %v4117, %v4115
  %v4154 = vpack.c.b16 %v4120, %v4118
  %v4155 = vpack.c.b16 %v4121, %v4119
  %v4156 = vpack.c.b16 %v4124, %v4122
  %v4157 = vpack.c.b16 %v4125, %v4123
  %v4158 = vpack.c.b16 %v4128, %v4126
  %v4159 = vpack.c.b16 %v4129, %v4127
  %v4160 = vpack.c.b16 %v4132, %v4130
  %v4161 = vpack.c.b16 %v4133, %v4131
  %v4162 = vpack.c.b16 %v4136, %v4134
  %v4163 = vpack.c.b16 %v4137, %v4135
  %v4164 = vpack.c.b16 %v4140, %v4138
  %v4165 = vpack.c.b16 %v4141, %v4139
  %v4166 = vpack.c.b16 %v4144, %v4142
  %v4167 = vpack.c.b16 %v4145, %v4143
  %v4168 = vpack.c.b16 %v4148, %v4146
  %v4169 = vpack.c.b16 %v4149, %v4147
  %4202 = vrot.lane.b32.xlu0 %v4047, 96
  %v4203 = vpop.permute.xlu0 %4202
  %4204 = vrot.lane.b32.xlu0 %v4048, 96
  %v4205 = vpop.permute.xlu0 %4204
  %4206 = vrot.lane.b32.xlu0 %v4049, 96
  %v4207 = vpop.permute.xlu0 %4206
  %4208 = vrot.lane.b32.xlu0 %v4050, 96
  %v4209 = vpop.permute.xlu0 %4208
  %4210 = vrot.lane.b32.xlu0 %v4051, 96
  %v4211 = vpop.permute.xlu0 %4210
  %4212 = vrot.lane.b32.xlu0 %v4052, 96
  %v4213 = vpop.permute.xlu0 %4212
  %4214 = vrot.lane.b32.xlu0 %v4053, 96
  %v4215 = vpop.permute.xlu0 %4214
  %4216 = vrot.lane.b32.xlu0 %v4054, 96
  %v4217 = vpop.permute.xlu0 %4216
  %4218 = vrot.lane.b32.xlu0 %v4055, 96
  %v4219 = vpop.permute.xlu0 %4218
  %4220 = vrot.lane.b32.xlu0 %v4056, 96
  %v4221 = vpop.permute.xlu0 %4220
  %4222 = vrot.lane.b32.xlu0 %v4057, 96
  %v4223 = vpop.permute.xlu0 %4222
  %4224 = vrot.lane.b32.xlu0 %v4058, 96
  %v4225 = vpop.permute.xlu0 %4224
  %4226 = vrot.lane.b32.xlu0 %v4059, 96
  %v4227 = vpop.permute.xlu0 %4226
  %4228 = vrot.lane.b32.xlu0 %v4060, 96
  %v4229 = vpop.permute.xlu0 %4228
  %4230 = vrot.lane.b32.xlu0 %v4061, 96
  %v4231 = vpop.permute.xlu0 %4230
  %4232 = vrot.lane.b32.xlu0 %v4062, 96
  %v4233 = vpop.permute.xlu0 %4232
  %4234 = vrot.lane.b32.xlu0 %v4063, 96
  %v4235 = vpop.permute.xlu0 %4234
  %4236 = vrot.lane.b32.xlu0 %v4064, 96
  %v4237 = vpop.permute.xlu0 %4236
  %4238 = vrot.lane.b32.xlu0 %v4065, 96
  %v4239 = vpop.permute.xlu0 %4238
  %4240 = vrot.lane.b32.xlu0 %v4066, 96
  %v4241 = vpop.permute.xlu0 %4240
  %4242 = vrot.lane.b32.xlu0 %v4067, 96
  %v4243 = vpop.permute.xlu0 %4242
  %4244 = vrot.lane.b32.xlu0 %v4068, 96
  %v4245 = vpop.permute.xlu0 %4244
  %v4246 = vsel %vm1911, %v4203, %v4205
  %v4247 = vsel %vm1911, %v4207, %v4209
  %v4248 = vsel %vm1911, %v4211, %v4213
  %v4249 = vsel %vm1911, %v4215, %v4217
  %v4250 = vsel %vm1911, %v4219, %v4221
  %v4251 = vsel %vm1911, %v4223, %v4225
  %v4252 = vsel %vm1911, %v4227, %v4229
  %v4253 = vsel %vm1911, %v4231, %v4233
  %v4254 = vsel %vm1911, %v4235, %v4237
  %v4255 = vsel %vm1911, %v4239, %v4241
  %v4256 = vsel %vm1911, %v4243, %v4245
  %v4278 = vsel %vm3229, %v4151, 0
  %v4281 = vsel %vm3229, %v4153, 0
  %v4284 = vsel %vm3229, %v4155, 0
  %v4287 = vsel %vm3229, %v4157, 0
  %v4290 = vsel %vm3229, %v4159, 0
  %v4293 = vsel %vm3229, %v4161, 0
  %v4296 = vsel %vm3229, %v4163, 0
  %v4299 = vsel %vm3229, %v4165, 0
  %v4302 = vsel %vm3229, %v4167, 0
  %v4305 = vsel %vm3229, %v4169, 0
  %v4308 = vand.u32 %v4256, %v3263
  %v4311 = vand.u32 %v4245, %v3263
  %4313 = vmatprep.subr.bf16.mxu0 %v4233
  %4314 = vmatpush1.bf16.msra.mxu0 %v4253
  %4315 = vmatprep.subr.bf16.mxu0 %v4229
  %4316 = vmatpush1.bf16.msra.mxu0 %v4252
  %4317 = vmatprep.subr.bf16.mxu0 %v4225
  %4318 = vmatpush1.bf16.msra.mxu0 %v4251
  %4319 = vmatprep.subr.bf16.mxu0 %v4221
  %4320 = vmatpush1.bf16.msra.mxu0 %v4250
  %4321 = vmatprep.subr.bf16.mxu0 %v4217
  %4322 = vmatpush1.bf16.msra.mxu0 %v4249
  %4323 = vmatprep.subr.bf16.mxu0 %v4213
  %4324 = vmatpush1.bf16.msra.mxu0 %v4248
  %4325 = vmatprep.subr.bf16.mxu0 %v4209
  %4326 = vmatpush1.bf16.msra.mxu0 %v4247
  %4327 = vmatprep.subr.bf16.mxu0 %v4205
  %4328 = vmatpush1.bf16.msra.mxu0 %v4246
  %4329 = vmatprep.subr.bf16.mxu0 0
  %4330 = vmatpush2.bf16.msra.mxu0 0
  %4331 = vmatprep.subr.bf16.mxu0 0
  %4332 = vmatpush2.bf16.msra.mxu0 0
  %4333 = vmatprep.subr.bf16.mxu0 0
  %4334 = vmatpush2.bf16.msra.mxu0 0
  %4335 = vmatprep.subr.bf16.mxu0 0
  %4336 = vmatpush2.bf16.msra.mxu0 0
  %4337 = vmatprep.subr.bf16.mxu0 0
  %4338 = vmatpush2.bf16.msra.mxu0 0
  %4339 = vmatprep.subr.bf16.mxu0 %v4311
  %4340 = vmatpush2.bf16.msra.mxu0 %v4308
  %4341 = vmatprep.subr.bf16.mxu0 %v4241
  %4342 = vmatpush2.bf16.msra.mxu0 %v4255
  %4343 = vmatprep.subr.bf16.mxu0 %v4237
  %4344 = vmatpush2.bf16.msra.mxu0 %v4254
  %4345 = vmatprep.mubr.bf16.mxu0 %v4278
  %4346 = vmatmul.mubr.bf16.gmra.mxu0 %v4150
  %v4347 = vpop.f32.mrf.mxu0
  %v4348 = vadd.f32 0.0, %v4347
  %v4349 = vpop.f32.mrf.mxu0
  %v4350 = vadd.f32 0.0, %v4349
  %v4351 = vpop.f32.mrf.mxu0
  %v4352 = vadd.f32 0.0, %v4351
  %v4353 = vpop.f32.mrf.mxu0
  %v4354 = vadd.f32 0.0, %v4353
  %4355 = vmatprep.mubr.bf16.mxu0 %v4281
  %4356 = vmatmul.mubr.bf16.gmra.mxu0 %v4152
  %v4357 = vpop.f32.mrf.mxu0
  %v4358 = vadd.f32 0.0, %v4357
  %v4359 = vpop.f32.mrf.mxu0
  %v4360 = vadd.f32 0.0, %v4359
  %v4361 = vpop.f32.mrf.mxu0
  %v4362 = vadd.f32 0.0, %v4361
  %v4363 = vpop.f32.mrf.mxu0
  %v4364 = vadd.f32 0.0, %v4363
  %4365 = vmatprep.mubr.bf16.mxu0 %v4284
  %4366 = vmatmul.mubr.bf16.gmra.mxu0 %v4154
  %v4367 = vpop.f32.mrf.mxu0
  %v4368 = vadd.f32 0.0, %v4367
  %v4369 = vpop.f32.mrf.mxu0
  %v4370 = vadd.f32 0.0, %v4369
  %v4371 = vpop.f32.mrf.mxu0
  %v4372 = vadd.f32 0.0, %v4371
  %v4373 = vpop.f32.mrf.mxu0
  %v4374 = vadd.f32 0.0, %v4373
  %4375 = vmatprep.mubr.bf16.mxu0 %v4287
  %4376 = vmatmul.mubr.bf16.gmra.mxu0 %v4156
  %v4377 = vpop.f32.mrf.mxu0
  %v4378 = vadd.f32 0.0, %v4377
  %v4379 = vpop.f32.mrf.mxu0
  %v4380 = vadd.f32 0.0, %v4379
  %v4381 = vpop.f32.mrf.mxu0
  %v4382 = vadd.f32 0.0, %v4381
  %v4383 = vpop.f32.mrf.mxu0
  %v4384 = vadd.f32 0.0, %v4383
  %4385 = vmatprep.mubr.bf16.mxu0 %v4290
  %4386 = vmatmul.mubr.bf16.gmra.mxu0 %v4158
  %v4387 = vpop.f32.mrf.mxu0
  %v4388 = vadd.f32 0.0, %v4387
  %v4389 = vpop.f32.mrf.mxu0
  %v4390 = vadd.f32 0.0, %v4389
  %v4391 = vpop.f32.mrf.mxu0
  %v4392 = vadd.f32 0.0, %v4391
  %v4393 = vpop.f32.mrf.mxu0
  %v4394 = vadd.f32 0.0, %v4393
  %4395 = vmatprep.mubr.bf16.mxu0 %v4293
  %4396 = vmatmul.mubr.bf16.gmra.mxu0 %v4160
  %v4397 = vpop.f32.mrf.mxu0
  %v4398 = vadd.f32 0.0, %v4397
  %v4399 = vpop.f32.mrf.mxu0
  %v4400 = vadd.f32 0.0, %v4399
  %v4401 = vpop.f32.mrf.mxu0
  %v4402 = vadd.f32 0.0, %v4401
  %v4403 = vpop.f32.mrf.mxu0
  %v4404 = vadd.f32 0.0, %v4403
  %4405 = vmatprep.mubr.bf16.mxu0 %v4296
  %4406 = vmatmul.mubr.bf16.gmra.mxu0 %v4162
  %v4407 = vpop.f32.mrf.mxu0
  %v4408 = vadd.f32 0.0, %v4407
  %v4409 = vpop.f32.mrf.mxu0
  %v4410 = vadd.f32 0.0, %v4409
  %v4411 = vpop.f32.mrf.mxu0
  %v4412 = vadd.f32 0.0, %v4411
  %v4413 = vpop.f32.mrf.mxu0
  %v4414 = vadd.f32 0.0, %v4413
  %4415 = vmatprep.mubr.bf16.mxu0 %v4299
  %4416 = vmatmul.mubr.bf16.gmra.mxu0 %v4164
  %v4417 = vpop.f32.mrf.mxu0
  %v4418 = vadd.f32 0.0, %v4417
  %v4419 = vpop.f32.mrf.mxu0
  %v4420 = vadd.f32 0.0, %v4419
  %v4421 = vpop.f32.mrf.mxu0
  %v4422 = vadd.f32 0.0, %v4421
  %v4423 = vpop.f32.mrf.mxu0
  %v4424 = vadd.f32 0.0, %v4423
  %4425 = vmatprep.mubr.bf16.mxu0 %v4302
  %4426 = vmatmul.mubr.bf16.gmra.mxu0 %v4166
  %v4427 = vpop.f32.mrf.mxu0
  %v4428 = vadd.f32 0.0, %v4427
  %v4429 = vpop.f32.mrf.mxu0
  %v4430 = vadd.f32 0.0, %v4429
  %v4431 = vpop.f32.mrf.mxu0
  %v4432 = vadd.f32 0.0, %v4431
  %v4433 = vpop.f32.mrf.mxu0
  %v4434 = vadd.f32 0.0, %v4433
  %4435 = vmatprep.mubr.bf16.mxu0 %v4305
  %4436 = vmatmul.mubr.bf16.gmra.mxu0 %v4168
  %v4437 = vpop.f32.mrf.mxu0
  %v4438 = vadd.f32 0.0, %v4437
  %v4439 = vpop.f32.mrf.mxu0
  %v4440 = vadd.f32 0.0, %v4439
  %v4441 = vpop.f32.mrf.mxu0
  %v4442 = vadd.f32 0.0, %v4441
  %v4443 = vpop.f32.mrf.mxu0
  %v4444 = vadd.f32 0.0, %v4443
  %4445 = vdwg.mxu0
  %v4446 = vld [vmem:[#allocation4] sm:$0xff]
  %v4447 = vld [vmem:[#allocation4 + $0x8] sm:$0xff]
  %v4448 = vld [vmem:[#allocation4 + $0x10] sm:$0xff]
  %v4449 = vld [vmem:[#allocation4 + $0x18] sm:$0xff]
  %v4450 = vld [vmem:[#allocation4 + $0x20] sm:$0xff]
  %v4451 = vld [vmem:[#allocation4 + $0x28] sm:$0xff]
  %v4452 = vld [vmem:[#allocation4 + $0x30] sm:$0xff]
  %v4453 = vld [vmem:[#allocation4 + $0x38] sm:$0xff]
  %v4454 = vld [vmem:[#allocation4 + $0x40] sm:$0xff]
  %v4455 = vld [vmem:[#allocation4 + $0x48] sm:$0xff]
  %v4456 = vld [vmem:[#allocation4 + $0x50] sm:$0xff]
  %v4457 = vld [vmem:[#allocation4 + $0x58] sm:$0xff]
  %v4458 = vld [vmem:[#allocation4 + $0x60] sm:$0xff]
  %v4459 = vld [vmem:[#allocation4 + $0x68] sm:$0xff]
  %v4460 = vld [vmem:[#allocation4 + $0x70] sm:$0xff]
  %v4461 = vld [vmem:[#allocation4 + $0x78] sm:$0xff]
  %v4462 = vld [vmem:[#allocation4 + $0x80] sm:$0xff]
  %v4463 = vld [vmem:[#allocation4 + $0x88] sm:$0xff]
  %v4464 = vld [vmem:[#allocation4 + $0x90] sm:$0xff]
  %v4465 = vld [vmem:[#allocation4 + $0x98] sm:$0xff]
  %v4466 = vld [vmem:[#allocation4 + $0xa0] sm:$0xff]
  %v4467 = vld [vmem:[#allocation4 + $0xa8] sm:$0xff]
  %v4468 = vld [vmem:[#allocation4 + $0xb0] sm:$0xff]
  %v4469 = vld [vmem:[#allocation4 + $0xb8] sm:$0xff]
  %v4470 = vld [vmem:[#allocation4 + $0xc0] sm:$0xff]
  %v4471 = vld [vmem:[#allocation4 + $0xc8] sm:$0xff]
  %v4472 = vld [vmem:[#allocation4 + $0xd0] sm:$0xff]
  %v4473 = vld [vmem:[#allocation4 + $0xd8] sm:$0xff]
  %v4474 = vld [vmem:[#allocation4 + $0xe0] sm:$0xff]
  %v4475 = vld [vmem:[#allocation4 + $0xe8] sm:$0xff]
  %v4476 = vld [vmem:[#allocation4 + $0xf0] sm:$0xff]
  %v4477 = vld [vmem:[#allocation4 + $0xf8] sm:$0xff]
  %v4478 = vld [vmem:[#allocation4 + $0x100] sm:$0xff]
  %v4479 = vld [vmem:[#allocation4 + $0x108] sm:$0xff]
  %v4480 = vld [vmem:[#allocation4 + $0x110] sm:$0xff]
  %v4481 = vld [vmem:[#allocation4 + $0x118] sm:$0xff]
  %v4482 = vld [vmem:[#allocation4 + $0x120] sm:$0xff]
  %v4483 = vld [vmem:[#allocation4 + $0x128] sm:$0xff]
  %v4484 = vld [vmem:[#allocation4 + $0x130] sm:$0xff]
  %v4485 = vld [vmem:[#allocation4 + $0x138] sm:$0xff]
  %v4486 = vadd.f32 %v4446, %v4348
  %v4487 = vadd.f32 %v4447, %v4350
  %v4488 = vadd.f32 %v4448, %v4352
  %v4489 = vadd.f32 %v4449, %v4354
  %v4490 = vadd.f32 %v4450, %v4358
  %v4491 = vadd.f32 %v4451, %v4360
  %v4492 = vadd.f32 %v4452, %v4362
  %v4493 = vadd.f32 %v4453, %v4364
  %v4494 = vadd.f32 %v4454, %v4368
  %v4495 = vadd.f32 %v4455, %v4370
  %v4496 = vadd.f32 %v4456, %v4372
  %v4497 = vadd.f32 %v4457, %v4374
  %v4498 = vadd.f32 %v4458, %v4378
  %v4499 = vadd.f32 %v4459, %v4380
  %v4500 = vadd.f32 %v4460, %v4382
  %v4501 = vadd.f32 %v4461, %v4384
  %v4502 = vadd.f32 %v4462, %v4388
  %v4503 = vadd.f32 %v4463, %v4390
  %v4504 = vadd.f32 %v4464, %v4392
  %v4505 = vadd.f32 %v4465, %v4394
  %v4506 = vadd.f32 %v4466, %v4398
  %v4507 = vadd.f32 %v4467, %v4400
  %v4508 = vadd.f32 %v4468, %v4402
  %v4509 = vadd.f32 %v4469, %v4404
  %v4510 = vadd.f32 %v4470, %v4408
  %v4511 = vadd.f32 %v4471, %v4410
  %v4512 = vadd.f32 %v4472, %v4412
  %v4513 = vadd.f32 %v4473, %v4414
  %v4514 = vadd.f32 %v4474, %v4418
  %v4515 = vadd.f32 %v4475, %v4420
  %v4516 = vadd.f32 %v4476, %v4422
  %v4517 = vadd.f32 %v4477, %v4424
  %v4518 = vadd.f32 %v4478, %v4428
  %v4519 = vadd.f32 %v4479, %v4430
  %v4520 = vadd.f32 %v4480, %v4432
  %v4521 = vadd.f32 %v4481, %v4434
  %v4522 = vadd.f32 %v4482, %v4438
  %v4523 = vadd.f32 %v4483, %v4440
  %v4524 = vadd.f32 %v4484, %v4442
  %v4525 = vadd.f32 %v4485, %v4444
  %4526 = vst [vmem:[#allocation4] sm:$0xff] %v4486
  %4527 = vst.msk [vmem:[#allocation4 + $0x8] sm:$0xff] %vm3404, %v4487
  %4528 = vst [vmem:[#allocation4 + $0x10] sm:$0xff] %v4488
  %4529 = vst.msk [vmem:[#allocation4 + $0x18] sm:$0xff] %vm3404, %v4489
  %4530 = vst [vmem:[#allocation4 + $0x20] sm:$0xff] %v4490
  %4531 = vst.msk [vmem:[#allocation4 + $0x28] sm:$0xff] %vm3404, %v4491
  %4532 = vst [vmem:[#allocation4 + $0x30] sm:$0xff] %v4492
  %4533 = vst.msk [vmem:[#allocation4 + $0x38] sm:$0xff] %vm3404, %v4493
  %4534 = vst [vmem:[#allocation4 + $0x40] sm:$0xff] %v4494
  %4535 = vst.msk [vmem:[#allocation4 + $0x48] sm:$0xff] %vm3404, %v4495
  %4536 = vst [vmem:[#allocation4 + $0x50] sm:$0xff] %v4496
  %4537 = vst.msk [vmem:[#allocation4 + $0x58] sm:$0xff] %vm3404, %v4497
  %4538 = vst [vmem:[#allocation4 + $0x60] sm:$0xff] %v4498
  %4539 = vst.msk [vmem:[#allocation4 + $0x68] sm:$0xff] %vm3404, %v4499
  %4540 = vst [vmem:[#allocation4 + $0x70] sm:$0xff] %v4500
  %4541 = vst.msk [vmem:[#allocation4 + $0x78] sm:$0xff] %vm3404, %v4501
  %4542 = vst [vmem:[#allocation4 + $0x80] sm:$0xff] %v4502
  %4543 = vst.msk [vmem:[#allocation4 + $0x88] sm:$0xff] %vm3404, %v4503
  %4544 = vst [vmem:[#allocation4 + $0x90] sm:$0xff] %v4504
  %4545 = vst.msk [vmem:[#allocation4 + $0x98] sm:$0xff] %vm3404, %v4505
  %4546 = vst [vmem:[#allocation4 + $0xa0] sm:$0xff] %v4506
  %4547 = vst.msk [vmem:[#allocation4 + $0xa8] sm:$0xff] %vm3404, %v4507
  %4548 = vst [vmem:[#allocation4 + $0xb0] sm:$0xff] %v4508
  %4549 = vst.msk [vmem:[#allocation4 + $0xb8] sm:$0xff] %vm3404, %v4509
  %4550 = vst [vmem:[#allocation4 + $0xc0] sm:$0xff] %v4510
  %4551 = vst.msk [vmem:[#allocation4 + $0xc8] sm:$0xff] %vm3404, %v4511
  %4552 = vst [vmem:[#allocation4 + $0xd0] sm:$0xff] %v4512
  %4553 = vst.msk [vmem:[#allocation4 + $0xd8] sm:$0xff] %vm3404, %v4513
  %4554 = vst [vmem:[#allocation4 + $0xe0] sm:$0xff] %v4514
  %4555 = vst.msk [vmem:[#allocation4 + $0xe8] sm:$0xff] %vm3404, %v4515
  %4556 = vst [vmem:[#allocation4 + $0xf0] sm:$0xff] %v4516
  %4557 = vst.msk [vmem:[#allocation4 + $0xf8] sm:$0xff] %vm3404, %v4517
  %4558 = vst [vmem:[#allocation4 + $0x100] sm:$0xff] %v4518
  %4559 = vst.msk [vmem:[#allocation4 + $0x108] sm:$0xff] %vm3404, %v4519
  %4560 = vst [vmem:[#allocation4 + $0x110] sm:$0xff] %v4520
  %4561 = vst.msk [vmem:[#allocation4 + $0x118] sm:$0xff] %vm3404, %v4521
  %4562 = vst [vmem:[#allocation4 + $0x120] sm:$0xff] %v4522
  %4563 = vst.msk [vmem:[#allocation4 + $0x128] sm:$0xff] %vm3404, %v4523
  %4564 = vst [vmem:[#allocation4 + $0x130] sm:$0xff] %v4524
  %4565 = vst.msk [vmem:[#allocation4 + $0x138] sm:$0xff] %vm3404, %v4525
  %v4566 = vld [vmem:[#allocation3] sm:$0xff]
  %v4567 = vld [vmem:[#allocation3 + $0x8] sm:$0xff]
  %v4568 = vld [vmem:[#allocation3 + $0x10] sm:$0xff]
  %v4569 = vld [vmem:[#allocation3 + $0x18] sm:$0xff]
  %v4570 = vld [vmem:[#allocation3 + $0x20] sm:$0xff]
  %v4571 = vld [vmem:[#allocation3 + $0x28] sm:$0xff]
  %v4572 = vld [vmem:[#allocation3 + $0x30] sm:$0xff]
  %v4573 = vld [vmem:[#allocation3 + $0x38] sm:$0xff]
  %v4574 = vld [vmem:[#allocation3 + $0x40] sm:$0xff]
  %v4575 = vld [vmem:[#allocation3 + $0x48] sm:$0xff]
  %v4576 = vld [vmem:[#allocation3 + $0x50] sm:$0xff]
  %v4577 = vld [vmem:[#allocation3 + $0x58] sm:$0xff]
  %v4578 = vld [vmem:[#allocation3 + $0x60] sm:$0xff]
  %v4579 = vld [vmem:[#allocation3 + $0x68] sm:$0xff]
  %v4580 = vld [vmem:[#allocation3 + $0x70] sm:$0xff]
  %v4581 = vld [vmem:[#allocation3 + $0x78] sm:$0xff]
  %v4582 = vld [vmem:[#allocation3 + $0x80] sm:$0xff]
  %v4583 = vld [vmem:[#allocation3 + $0x88] sm:$0xff]
  %v4584 = vld [vmem:[#allocation3 + $0x90] sm:$0xff]
  %v4585 = vld [vmem:[#allocation3 + $0x98] sm:$0xff]
  %v4586 = vld [vmem:[#allocation3 + $0xa0] sm:$0xff]
  %v4587 = vld [vmem:[#allocation3 + $0xa8] sm:$0xff]
  %v4588 = vld [vmem:[#allocation3 + $0xb0] sm:$0xff]
  %v4589 = vld [vmem:[#allocation3 + $0xb8] sm:$0xff]
  %v4590 = vld [vmem:[#allocation3 + $0xc0] sm:$0xff]
  %v4591 = vld [vmem:[#allocation3 + $0xc8] sm:$0xff]
  %v4592 = vld [vmem:[#allocation3 + $0xd0] sm:$0xff]
  %v4593 = vld [vmem:[#allocation3 + $0xd8] sm:$0xff]
  %v4594 = vld [vmem:[#allocation3 + $0xe0] sm:$0xff]
  %v4595 = vld [vmem:[#allocation3 + $0xe8] sm:$0xff]
  %v4596 = vld [vmem:[#allocation3 + $0xf0] sm:$0xff]
  %v4597 = vld [vmem:[#allocation3 + $0xf8] sm:$0xff]
  %v4598 = vld [vmem:[#allocation3 + $0x100] sm:$0xff]
  %v4599 = vld [vmem:[#allocation3 + $0x108] sm:$0xff]
  %v4600 = vld [vmem:[#allocation3 + $0x110] sm:$0xff]
  %v4601 = vld [vmem:[#allocation3 + $0x118] sm:$0xff]
  %v4602 = vld [vmem:[#allocation3 + $0x120] sm:$0xff]
  %v4603 = vld [vmem:[#allocation3 + $0x128] sm:$0xff]
  %v4604 = vld [vmem:[#allocation3 + $0x130] sm:$0xff]
  %v4605 = vld [vmem:[#allocation3 + $0x138] sm:$0xff]
  %v4606 = vld [vmem:[#allocation3 + $0x140] sm:$0x7f]
  %v4607 = vld [vmem:[#allocation3 + $0x148] sm:$0x7f]
  %v4608 = vpack.c.bf16 %v4568, %v4566
  %v4609 = vpack.c.bf16 %v4569, %v4567
  %v4610 = vpack.c.bf16 %v4572, %v4570
  %v4611 = vpack.c.bf16 %v4573, %v4571
  %v4612 = vpack.c.bf16 %v4576, %v4574
  %v4613 = vpack.c.bf16 %v4577, %v4575
  %v4614 = vpack.c.bf16 %v4580, %v4578
  %v4615 = vpack.c.bf16 %v4581, %v4579
  %v4616 = vpack.c.bf16 %v4584, %v4582
  %v4617 = vpack.c.bf16 %v4585, %v4583
  %v4618 = vpack.c.bf16 %v4588, %v4586
  %v4619 = vpack.c.bf16 %v4589, %v4587
  %v4620 = vpack.c.bf16 %v4592, %v4590
  %v4621 = vpack.c.bf16 %v4593, %v4591
  %v4622 = vpack.c.bf16 %v4596, %v4594
  %v4623 = vpack.c.bf16 %v4597, %v4595
  %v4624 = vpack.c.bf16 %v4600, %v4598
  %v4625 = vpack.c.bf16 %v4601, %v4599
  %v4626 = vpack.c.bf16 %v4604, %v4602
  %v4627 = vpack.c.bf16 %v4605, %v4603
  %v4628 = vpack.c.bf16 %v4606, %v4606
  %v4629 = vpack.c.bf16 %v4607, %v4607
  %s4630 = scalar_lea.vmem %s3, 480
  %v4631 = vld [vmem:[%s4630] sm:$0xff]
  %v4632 = vld [vmem:[%s4630 + $0x8] sm:$0xff]
  %v4633 = vld [vmem:[%s4630 + $0x10] sm:$0xff]
  %v4634 = vld [vmem:[%s4630 + $0x18] sm:$0xff]
  %v4635 = vld [vmem:[%s4630 + $0x20] sm:$0xff]
  %v4636 = vld [vmem:[%s4630 + $0x28] sm:$0xff]
  %v4637 = vld [vmem:[%s4630 + $0x30] sm:$0xff]
  %v4638 = vld [vmem:[%s4630 + $0x38] sm:$0xff]
  %v4639 = vld [vmem:[%s4630 + $0x40] sm:$0xff]
  %v4640 = vld [vmem:[%s4630 + $0x48] sm:$0xff]
  %v4641 = vld [vmem:[%s4630 + $0x50] sm:$0xff]
  %v4642 = vld [vmem:[%s4630 + $0x58] sm:$0xff]
  %v4643 = vld [vmem:[%s4630 + $0x60] sm:$0xff]
  %v4644 = vld [vmem:[%s4630 + $0x68] sm:$0xff]
  %v4645 = vld [vmem:[%s4630 + $0x70] sm:$0xff]
  %v4646 = vld [vmem:[%s4630 + $0x78] sm:$0xff]
  %v4647 = vld [vmem:[%s4630 + $0x80] sm:$0xff]
  %v4648 = vld [vmem:[%s4630 + $0x88] sm:$0xff]
  %v4649 = vld [vmem:[%s4630 + $0x90] sm:$0xff]
  %v4650 = vld [vmem:[%s4630 + $0x98] sm:$0xff]
  %v4671 = vunpack.c.l.b16 %v4631
  %v4672 = vunpack.c.h.b16 %v4631
  %v4673 = vunpack.c.l.b16 %v4632
  %v4674 = vunpack.c.h.b16 %v4632
  %v4675 = vunpack.c.l.b16 %v4633
  %v4676 = vunpack.c.h.b16 %v4633
  %v4677 = vunpack.c.l.b16 %v4634
  %v4678 = vunpack.c.h.b16 %v4634
  %v4679 = vunpack.c.l.b16 %v4635
  %v4680 = vunpack.c.h.b16 %v4635
  %v4681 = vunpack.c.l.b16 %v4636
  %v4682 = vunpack.c.h.b16 %v4636
  %v4683 = vunpack.c.l.b16 %v4637
  %v4684 = vunpack.c.h.b16 %v4637
  %v4685 = vunpack.c.l.b16 %v4638
  %v4686 = vunpack.c.h.b16 %v4638
  %v4687 = vunpack.c.l.b16 %v4639
  %v4688 = vunpack.c.h.b16 %v4639
  %v4689 = vunpack.c.l.b16 %v4640
  %v4690 = vunpack.c.h.b16 %v4640
  %v4691 = vunpack.c.l.b16 %v4641
  %v4692 = vunpack.c.h.b16 %v4641
  %v4693 = vunpack.c.l.b16 %v4642
  %v4694 = vunpack.c.h.b16 %v4642
  %v4695 = vunpack.c.l.b16 %v4643
  %v4696 = vunpack.c.h.b16 %v4643
  %v4697 = vunpack.c.l.b16 %v4644
  %v4698 = vunpack.c.h.b16 %v4644
  %v4699 = vunpack.c.l.b16 %v4645
  %v4700 = vunpack.c.h.b16 %v4645
  %v4701 = vunpack.c.l.b16 %v4646
  %v4702 = vunpack.c.h.b16 %v4646
  %v4703 = vunpack.c.l.b16 %v4647
  %v4704 = vunpack.c.h.b16 %v4647
  %v4705 = vunpack.c.l.b16 %v4648
  %v4706 = vunpack.c.h.b16 %v4648
  %v4707 = vunpack.c.l.b16 %v4649
  %v4708 = vunpack.c.h.b16 %v4649
  %v4709 = vunpack.c.l.b16 %v4650
  %v4710 = vunpack.c.h.b16 %v4650
  %v4711 = vpack.c.b16 %v4673, %v4671
  %v4712 = vpack.c.b16 %v4674, %v4672
  %v4713 = vpack.c.b16 %v4677, %v4675
  %v4714 = vpack.c.b16 %v4678, %v4676
  %v4715 = vpack.c.b16 %v4681, %v4679
  %v4716 = vpack.c.b16 %v4682, %v4680
  %v4717 = vpack.c.b16 %v4685, %v4683
  %v4718 = vpack.c.b16 %v4686, %v4684
  %v4719 = vpack.c.b16 %v4689, %v4687
  %v4720 = vpack.c.b16 %v4690, %v4688
  %v4721 = vpack.c.b16 %v4693, %v4691
  %v4722 = vpack.c.b16 %v4694, %v4692
  %v4723 = vpack.c.b16 %v4697, %v4695
  %v4724 = vpack.c.b16 %v4698, %v4696
  %v4725 = vpack.c.b16 %v4701, %v4699
  %v4726 = vpack.c.b16 %v4702, %v4700
  %v4727 = vpack.c.b16 %v4705, %v4703
  %v4728 = vpack.c.b16 %v4706, %v4704
  %v4729 = vpack.c.b16 %v4709, %v4707
  %v4730 = vpack.c.b16 %v4710, %v4708
  %4763 = vrot.lane.b32.xlu0 %v4608, 80
  %v4764 = vpop.permute.xlu0 %4763
  %4765 = vrot.lane.b32.xlu0 %v4609, 80
  %v4766 = vpop.permute.xlu0 %4765
  %4767 = vrot.lane.b32.xlu0 %v4610, 80
  %v4768 = vpop.permute.xlu0 %4767
  %4769 = vrot.lane.b32.xlu0 %v4611, 80
  %v4770 = vpop.permute.xlu0 %4769
  %4771 = vrot.lane.b32.xlu0 %v4612, 80
  %v4772 = vpop.permute.xlu0 %4771
  %4773 = vrot.lane.b32.xlu0 %v4613, 80
  %v4774 = vpop.permute.xlu0 %4773
  %4775 = vrot.lane.b32.xlu0 %v4614, 80
  %v4776 = vpop.permute.xlu0 %4775
  %4777 = vrot.lane.b32.xlu0 %v4615, 80
  %v4778 = vpop.permute.xlu0 %4777
  %4779 = vrot.lane.b32.xlu0 %v4616, 80
  %v4780 = vpop.permute.xlu0 %4779
  %4781 = vrot.lane.b32.xlu0 %v4617, 80
  %v4782 = vpop.permute.xlu0 %4781
  %4783 = vrot.lane.b32.xlu0 %v4618, 80
  %v4784 = vpop.permute.xlu0 %4783
  %4785 = vrot.lane.b32.xlu0 %v4619, 80
  %v4786 = vpop.permute.xlu0 %4785
  %4787 = vrot.lane.b32.xlu0 %v4620, 80
  %v4788 = vpop.permute.xlu0 %4787
  %4789 = vrot.lane.b32.xlu0 %v4621, 80
  %v4790 = vpop.permute.xlu0 %4789
  %4791 = vrot.lane.b32.xlu0 %v4622, 80
  %v4792 = vpop.permute.xlu0 %4791
  %4793 = vrot.lane.b32.xlu0 %v4623, 80
  %v4794 = vpop.permute.xlu0 %4793
  %4795 = vrot.lane.b32.xlu0 %v4624, 80
  %v4796 = vpop.permute.xlu0 %4795
  %4797 = vrot.lane.b32.xlu0 %v4625, 80
  %v4798 = vpop.permute.xlu0 %4797
  %4799 = vrot.lane.b32.xlu0 %v4626, 80
  %v4800 = vpop.permute.xlu0 %4799
  %4801 = vrot.lane.b32.xlu0 %v4627, 80
  %v4802 = vpop.permute.xlu0 %4801
  %4803 = vrot.lane.b32.xlu0 %v4628, 80
  %v4804 = vpop.permute.xlu0 %4803
  %4805 = vrot.lane.b32.xlu0 %v4629, 80
  %v4806 = vpop.permute.xlu0 %4805
  %vm4807 = vcmask 654336
  %v4808 = vsel %vm4807, %v4764, %v4766
  %v4809 = vsel %vm4807, %v4768, %v4770
  %v4810 = vsel %vm4807, %v4772, %v4774
  %v4811 = vsel %vm4807, %v4776, %v4778
  %v4812 = vsel %vm4807, %v4780, %v4782
  %v4813 = vsel %vm4807, %v4784, %v4786
  %v4814 = vsel %vm4807, %v4788, %v4790
  %v4815 = vsel %vm4807, %v4792, %v4794
  %v4816 = vsel %vm4807, %v4796, %v4798
  %v4817 = vsel %vm4807, %v4800, %v4802
  %v4818 = vsel %vm4807, %v4804, %v4806
  %v4840 = vsel %vm3229, %v4712, 0
  %v4843 = vsel %vm3229, %v4714, 0
  %v4846 = vsel %vm3229, %v4716, 0
  %v4849 = vsel %vm3229, %v4718, 0
  %v4852 = vsel %vm3229, %v4720, 0
  %v4855 = vsel %vm3229, %v4722, 0
  %v4858 = vsel %vm3229, %v4724, 0
  %v4861 = vsel %vm3229, %v4726, 0
  %v4864 = vsel %vm3229, %v4728, 0
  %v4867 = vsel %vm3229, %v4730, 0
  %v4870 = vand.u32 %v4818, %v3263
  %v4873 = vand.u32 %v4806, %v3263
  %4875 = vmatprep.subr.bf16.mxu0 %v4794
  %4876 = vmatpush1.bf16.msra.mxu0 %v4815
  %4877 = vmatprep.subr.bf16.mxu0 %v4790
  %4878 = vmatpush1.bf16.msra.mxu0 %v4814
  %4879 = vmatprep.subr.bf16.mxu0 %v4786
  %4880 = vmatpush1.bf16.msra.mxu0 %v4813
  %4881 = vmatprep.subr.bf16.mxu0 %v4782
  %4882 = vmatpush1.bf16.msra.mxu0 %v4812
  %4883 = vmatprep.subr.bf16.mxu0 %v4778
  %4884 = vmatpush1.bf16.msra.mxu0 %v4811
  %4885 = vmatprep.subr.bf16.mxu0 %v4774
  %4886 = vmatpush1.bf16.msra.mxu0 %v4810
  %4887 = vmatprep.subr.bf16.mxu0 %v4770
  %4888 = vmatpush1.bf16.msra.mxu0 %v4809
  %4889 = vmatprep.subr.bf16.mxu0 %v4766
  %4890 = vmatpush1.bf16.msra.mxu0 %v4808
  %4891 = vmatprep.subr.bf16.mxu0 0
  %4892 = vmatpush2.bf16.msra.mxu0 0
  %4893 = vmatprep.subr.bf16.mxu0 0
  %4894 = vmatpush2.bf16.msra.mxu0 0
  %4895 = vmatprep.subr.bf16.mxu0 0
  %4896 = vmatpush2.bf16.msra.mxu0 0
  %4897 = vmatprep.subr.bf16.mxu0 0
  %4898 = vmatpush2.bf16.msra.mxu0 0
  %4899 = vmatprep.subr.bf16.mxu0 0
  %4900 = vmatpush2.bf16.msra.mxu0 0
  %4901 = vmatprep.subr.bf16.mxu0 %v4873
  %4902 = vmatpush2.bf16.msra.mxu0 %v4870
  %4903 = vmatprep.subr.bf16.mxu0 %v4802
  %4904 = vmatpush2.bf16.msra.mxu0 %v4817
  %4905 = vmatprep.subr.bf16.mxu0 %v4798
  %4906 = vmatpush2.bf16.msra.mxu0 %v4816
  %4907 = vmatprep.mubr.bf16.mxu0 %v4840
  %4908 = vmatmul.mubr.bf16.gmra.mxu0 %v4711
  %v4909 = vpop.f32.mrf.mxu0
  %v4910 = vadd.f32 0.0, %v4909
  %v4911 = vpop.f32.mrf.mxu0
  %v4912 = vadd.f32 0.0, %v4911
  %v4913 = vpop.f32.mrf.mxu0
  %v4914 = vadd.f32 0.0, %v4913
  %v4915 = vpop.f32.mrf.mxu0
  %v4916 = vadd.f32 0.0, %v4915
  %4917 = vmatprep.mubr.bf16.mxu0 %v4843
  %4918 = vmatmul.mubr.bf16.gmra.mxu0 %v4713
  %v4919 = vpop.f32.mrf.mxu0
  %v4920 = vadd.f32 0.0, %v4919
  %v4921 = vpop.f32.mrf.mxu0
  %v4922 = vadd.f32 0.0, %v4921
  %v4923 = vpop.f32.mrf.mxu0
  %v4924 = vadd.f32 0.0, %v4923
  %v4925 = vpop.f32.mrf.mxu0
  %v4926 = vadd.f32 0.0, %v4925
  %4927 = vmatprep.mubr.bf16.mxu0 %v4846
  %4928 = vmatmul.mubr.bf16.gmra.mxu0 %v4715
  %v4929 = vpop.f32.mrf.mxu0
  %v4930 = vadd.f32 0.0, %v4929
  %v4931 = vpop.f32.mrf.mxu0
  %v4932 = vadd.f32 0.0, %v4931
  %v4933 = vpop.f32.mrf.mxu0
  %v4934 = vadd.f32 0.0, %v4933
  %v4935 = vpop.f32.mrf.mxu0
  %v4936 = vadd.f32 0.0, %v4935
  %4937 = vmatprep.mubr.bf16.mxu0 %v4849
  %4938 = vmatmul.mubr.bf16.gmra.mxu0 %v4717
  %v4939 = vpop.f32.mrf.mxu0
  %v4940 = vadd.f32 0.0, %v4939
  %v4941 = vpop.f32.mrf.mxu0
  %v4942 = vadd.f32 0.0, %v4941
  %v4943 = vpop.f32.mrf.mxu0
  %v4944 = vadd.f32 0.0, %v4943
  %v4945 = vpop.f32.mrf.mxu0
  %v4946 = vadd.f32 0.0, %v4945
  %4947 = vmatprep.mubr.bf16.mxu0 %v4852
  %4948 = vmatmul.mubr.bf16.gmra.mxu0 %v4719
  %v4949 = vpop.f32.mrf.mxu0
  %v4950 = vadd.f32 0.0, %v4949
  %v4951 = vpop.f32.mrf.mxu0
  %v4952 = vadd.f32 0.0, %v4951
  %v4953 = vpop.f32.mrf.mxu0
  %v4954 = vadd.f32 0.0, %v4953
  %v4955 = vpop.f32.mrf.mxu0
  %v4956 = vadd.f32 0.0, %v4955
  %4957 = vmatprep.mubr.bf16.mxu0 %v4855
  %4958 = vmatmul.mubr.bf16.gmra.mxu0 %v4721
  %v4959 = vpop.f32.mrf.mxu0
  %v4960 = vadd.f32 0.0, %v4959
  %v4961 = vpop.f32.mrf.mxu0
  %v4962 = vadd.f32 0.0, %v4961
  %v4963 = vpop.f32.mrf.mxu0
  %v4964 = vadd.f32 0.0, %v4963
  %v4965 = vpop.f32.mrf.mxu0
  %v4966 = vadd.f32 0.0, %v4965
  %4967 = vmatprep.mubr.bf16.mxu0 %v4858
  %4968 = vmatmul.mubr.bf16.gmra.mxu0 %v4723
  %v4969 = vpop.f32.mrf.mxu0
  %v4970 = vadd.f32 0.0, %v4969
  %v4971 = vpop.f32.mrf.mxu0
  %v4972 = vadd.f32 0.0, %v4971
  %v4973 = vpop.f32.mrf.mxu0
  %v4974 = vadd.f32 0.0, %v4973
  %v4975 = vpop.f32.mrf.mxu0
  %v4976 = vadd.f32 0.0, %v4975
  %4977 = vmatprep.mubr.bf16.mxu0 %v4861
  %4978 = vmatmul.mubr.bf16.gmra.mxu0 %v4725
  %v4979 = vpop.f32.mrf.mxu0
  %v4980 = vadd.f32 0.0, %v4979
  %v4981 = vpop.f32.mrf.mxu0
  %v4982 = vadd.f32 0.0, %v4981
  %v4983 = vpop.f32.mrf.mxu0
  %v4984 = vadd.f32 0.0, %v4983
  %v4985 = vpop.f32.mrf.mxu0
  %v4986 = vadd.f32 0.0, %v4985
  %4987 = vmatprep.mubr.bf16.mxu0 %v4864
  %4988 = vmatmul.mubr.bf16.gmra.mxu0 %v4727
  %v4989 = vpop.f32.mrf.mxu0
  %v4990 = vadd.f32 0.0, %v4989
  %v4991 = vpop.f32.mrf.mxu0
  %v4992 = vadd.f32 0.0, %v4991
  %v4993 = vpop.f32.mrf.mxu0
  %v4994 = vadd.f32 0.0, %v4993
  %v4995 = vpop.f32.mrf.mxu0
  %v4996 = vadd.f32 0.0, %v4995
  %4997 = vmatprep.mubr.bf16.mxu0 %v4867
  %4998 = vmatmul.mubr.bf16.gmra.mxu0 %v4729
  %v4999 = vpop.f32.mrf.mxu0
  %v5000 = vadd.f32 0.0, %v4999
  %v5001 = vpop.f32.mrf.mxu0
  %v5002 = vadd.f32 0.0, %v5001
  %v5003 = vpop.f32.mrf.mxu0
  %v5004 = vadd.f32 0.0, %v5003
  %v5005 = vpop.f32.mrf.mxu0
  %v5006 = vadd.f32 0.0, %v5005
  %5007 = vdwg.mxu0
  %v5008 = vld [vmem:[#allocation4] sm:$0xff]
  %v5009 = vld [vmem:[#allocation4 + $0x8] sm:$0xff]
  %v5010 = vld [vmem:[#allocation4 + $0x10] sm:$0xff]
  %v5011 = vld [vmem:[#allocation4 + $0x18] sm:$0xff]
  %v5012 = vld [vmem:[#allocation4 + $0x20] sm:$0xff]
  %v5013 = vld [vmem:[#allocation4 + $0x28] sm:$0xff]
  %v5014 = vld [vmem:[#allocation4 + $0x30] sm:$0xff]
  %v5015 = vld [vmem:[#allocation4 + $0x38] sm:$0xff]
  %v5016 = vld [vmem:[#allocation4 + $0x40] sm:$0xff]
  %v5017 = vld [vmem:[#allocation4 + $0x48] sm:$0xff]
  %v5018 = vld [vmem:[#allocation4 + $0x50] sm:$0xff]
  %v5019 = vld [vmem:[#allocation4 + $0x58] sm:$0xff]
  %v5020 = vld [vmem:[#allocation4 + $0x60] sm:$0xff]
  %v5021 = vld [vmem:[#allocation4 + $0x68] sm:$0xff]
  %v5022 = vld [vmem:[#allocation4 + $0x70] sm:$0xff]
  %v5023 = vld [vmem:[#allocation4 + $0x78] sm:$0xff]
  %v5024 = vld [vmem:[#allocation4 + $0x80] sm:$0xff]
  %v5025 = vld [vmem:[#allocation4 + $0x88] sm:$0xff]
  %v5026 = vld [vmem:[#allocation4 + $0x90] sm:$0xff]
  %v5027 = vld [vmem:[#allocation4 + $0x98] sm:$0xff]
  %v5028 = vld [vmem:[#allocation4 + $0xa0] sm:$0xff]
  %v5029 = vld [vmem:[#allocation4 + $0xa8] sm:$0xff]
  %v5030 = vld [vmem:[#allocation4 + $0xb0] sm:$0xff]
  %v5031 = vld [vmem:[#allocation4 + $0xb8] sm:$0xff]
  %v5032 = vld [vmem:[#allocation4 + $0xc0] sm:$0xff]
  %v5033 = vld [vmem:[#allocation4 + $0xc8] sm:$0xff]
  %v5034 = vld [vmem:[#allocation4 + $0xd0] sm:$0xff]
  %v5035 = vld [vmem:[#allocation4 + $0xd8] sm:$0xff]
  %v5036 = vld [vmem:[#allocation4 + $0xe0] sm:$0xff]
  %v5037 = vld [vmem:[#allocation4 + $0xe8] sm:$0xff]
  %v5038 = vld [vmem:[#allocation4 + $0xf0] sm:$0xff]
  %v5039 = vld [vmem:[#allocation4 + $0xf8] sm:$0xff]
  %v5040 = vld [vmem:[#allocation4 + $0x100] sm:$0xff]
  %v5041 = vld [vmem:[#allocation4 + $0x108] sm:$0xff]
  %v5042 = vld [vmem:[#allocation4 + $0x110] sm:$0xff]
  %v5043 = vld [vmem:[#allocation4 + $0x118] sm:$0xff]
  %v5044 = vld [vmem:[#allocation4 + $0x120] sm:$0xff]
  %v5045 = vld [vmem:[#allocation4 + $0x128] sm:$0xff]
  %v5046 = vld [vmem:[#allocation4 + $0x130] sm:$0xff]
  %v5047 = vld [vmem:[#allocation4 + $0x138] sm:$0xff]
  %v5048 = vadd.f32 %v5008, %v4910
  %v5049 = vadd.f32 %v5009, %v4912
  %v5050 = vadd.f32 %v5010, %v4914
  %v5051 = vadd.f32 %v5011, %v4916
  %v5052 = vadd.f32 %v5012, %v4920
  %v5053 = vadd.f32 %v5013, %v4922
  %v5054 = vadd.f32 %v5014, %v4924
  %v5055 = vadd.f32 %v5015, %v4926
  %v5056 = vadd.f32 %v5016, %v4930
  %v5057 = vadd.f32 %v5017, %v4932
  %v5058 = vadd.f32 %v5018, %v4934
  %v5059 = vadd.f32 %v5019, %v4936
  %v5060 = vadd.f32 %v5020, %v4940
  %v5061 = vadd.f32 %v5021, %v4942
  %v5062 = vadd.f32 %v5022, %v4944
  %v5063 = vadd.f32 %v5023, %v4946
  %v5064 = vadd.f32 %v5024, %v4950
  %v5065 = vadd.f32 %v5025, %v4952
  %v5066 = vadd.f32 %v5026, %v4954
  %v5067 = vadd.f32 %v5027, %v4956
  %v5068 = vadd.f32 %v5028, %v4960
  %v5069 = vadd.f32 %v5029, %v4962
  %v5070 = vadd.f32 %v5030, %v4964
  %v5071 = vadd.f32 %v5031, %v4966
  %v5072 = vadd.f32 %v5032, %v4970
  %v5073 = vadd.f32 %v5033, %v4972
  %v5074 = vadd.f32 %v5034, %v4974
  %v5075 = vadd.f32 %v5035, %v4976
  %v5076 = vadd.f32 %v5036, %v4980
  %v5077 = vadd.f32 %v5037, %v4982
  %v5078 = vadd.f32 %v5038, %v4984
  %v5079 = vadd.f32 %v5039, %v4986
  %v5080 = vadd.f32 %v5040, %v4990
  %v5081 = vadd.f32 %v5041, %v4992
  %v5082 = vadd.f32 %v5042, %v4994
  %v5083 = vadd.f32 %v5043, %v4996
  %v5084 = vadd.f32 %v5044, %v5000
  %v5085 = vadd.f32 %v5045, %v5002
  %v5086 = vadd.f32 %v5046, %v5004
  %v5087 = vadd.f32 %v5047, %v5006
  %5088 = vst [vmem:[#allocation4] sm:$0xff] %v5048
  %5089 = vst.msk [vmem:[#allocation4 + $0x8] sm:$0xff] %vm3404, %v5049
  %5090 = vst [vmem:[#allocation4 + $0x10] sm:$0xff] %v5050
  %5091 = vst.msk [vmem:[#allocation4 + $0x18] sm:$0xff] %vm3404, %v5051
  %5092 = vst [vmem:[#allocation4 + $0x20] sm:$0xff] %v5052
  %5093 = vst.msk [vmem:[#allocation4 + $0x28] sm:$0xff] %vm3404, %v5053
  %5094 = vst [vmem:[#allocation4 + $0x30] sm:$0xff] %v5054
  %5095 = vst.msk [vmem:[#allocation4 + $0x38] sm:$0xff] %vm3404, %v5055
  %5096 = vst [vmem:[#allocation4 + $0x40] sm:$0xff] %v5056
  %5097 = vst.msk [vmem:[#allocation4 + $0x48] sm:$0xff] %vm3404, %v5057
  %5098 = vst [vmem:[#allocation4 + $0x50] sm:$0xff] %v5058
  %5099 = vst.msk [vmem:[#allocation4 + $0x58] sm:$0xff] %vm3404, %v5059
  %5100 = vst [vmem:[#allocation4 + $0x60] sm:$0xff] %v5060
  %5101 = vst.msk [vmem:[#allocation4 + $0x68] sm:$0xff] %vm3404, %v5061
  %5102 = vst [vmem:[#allocation4 + $0x70] sm:$0xff] %v5062
  %5103 = vst.msk [vmem:[#allocation4 + $0x78] sm:$0xff] %vm3404, %v5063
  %5104 = vst [vmem:[#allocation4 + $0x80] sm:$0xff] %v5064
  %5105 = vst.msk [vmem:[#allocation4 + $0x88] sm:$0xff] %vm3404, %v5065
  %5106 = vst [vmem:[#allocation4 + $0x90] sm:$0xff] %v5066
  %5107 = vst.msk [vmem:[#allocation4 + $0x98] sm:$0xff] %vm3404, %v5067
  %5108 = vst [vmem:[#allocation4 + $0xa0] sm:$0xff] %v5068
  %5109 = vst.msk [vmem:[#allocation4 + $0xa8] sm:$0xff] %vm3404, %v5069
  %5110 = vst [vmem:[#allocation4 + $0xb0] sm:$0xff] %v5070
  %5111 = vst.msk [vmem:[#allocation4 + $0xb8] sm:$0xff] %vm3404, %v5071
  %5112 = vst [vmem:[#allocation4 + $0xc0] sm:$0xff] %v5072
  %5113 = vst.msk [vmem:[#allocation4 + $0xc8] sm:$0xff] %vm3404, %v5073
  %5114 = vst [vmem:[#allocation4 + $0xd0] sm:$0xff] %v5074
  %5115 = vst.msk [vmem:[#allocation4 + $0xd8] sm:$0xff] %vm3404, %v5075
  %5116 = vst [vmem:[#allocation4 + $0xe0] sm:$0xff] %v5076
  %5117 = vst.msk [vmem:[#allocation4 + $0xe8] sm:$0xff] %vm3404, %v5077
  %5118 = vst [vmem:[#allocation4 + $0xf0] sm:$0xff] %v5078
  %5119 = vst.msk [vmem:[#allocation4 + $0xf8] sm:$0xff] %vm3404, %v5079
  %5120 = vst [vmem:[#allocation4 + $0x100] sm:$0xff] %v5080
  %5121 = vst.msk [vmem:[#allocation4 + $0x108] sm:$0xff] %vm3404, %v5081
  %5122 = vst [vmem:[#allocation4 + $0x110] sm:$0xff] %v5082
  %5123 = vst.msk [vmem:[#allocation4 + $0x118] sm:$0xff] %vm3404, %v5083
  %5124 = vst [vmem:[#allocation4 + $0x120] sm:$0xff] %v5084
  %5125 = vst.msk [vmem:[#allocation4 + $0x128] sm:$0xff] %vm3404, %v5085
  %5126 = vst [vmem:[#allocation4 + $0x130] sm:$0xff] %v5086
  %5127 = vst.msk [vmem:[#allocation4 + $0x138] sm:$0xff] %vm3404, %v5087
  %v5128 = vld [vmem:[#allocation3] sm:$0xff]
  %v5129 = vld [vmem:[#allocation3 + $0x8] sm:$0xff]
  %v5130 = vld [vmem:[#allocation3 + $0x10] sm:$0xff]
  %v5131 = vld [vmem:[#allocation3 + $0x18] sm:$0xff]
  %v5132 = vld [vmem:[#allocation3 + $0x20] sm:$0xff]
  %v5133 = vld [vmem:[#allocation3 + $0x28] sm:$0xff]
  %v5134 = vld [vmem:[#allocation3 + $0x30] sm:$0xff]
  %v5135 = vld [vmem:[#allocation3 + $0x38] sm:$0xff]
  %v5136 = vld [vmem:[#allocation3 + $0x40] sm:$0xff]
  %v5137 = vld [vmem:[#allocation3 + $0x48] sm:$0xff]
  %v5138 = vld [vmem:[#allocation3 + $0x50] sm:$0xff]
  %v5139 = vld [vmem:[#allocation3 + $0x58] sm:$0xff]
  %v5140 = vld [vmem:[#allocation3 + $0x60] sm:$0xff]
  %v5141 = vld [vmem:[#allocation3 + $0x68] sm:$0xff]
  %v5142 = vld [vmem:[#allocation3 + $0x70] sm:$0xff]
  %v5143 = vld [vmem:[#allocation3 + $0x78] sm:$0xff]
  %v5144 = vld [vmem:[#allocation3 + $0x80] sm:$0xff]
  %v5145 = vld [vmem:[#allocation3 + $0x88] sm:$0xff]
  %v5146 = vld [vmem:[#allocation3 + $0x90] sm:$0xff]
  %v5147 = vld [vmem:[#allocation3 + $0x98] sm:$0xff]
  %v5148 = vld [vmem:[#allocation3 + $0xa0] sm:$0xff]
  %v5149 = vld [vmem:[#allocation3 + $0xa8] sm:$0xff]
  %v5150 = vld [vmem:[#allocation3 + $0xb0] sm:$0xff]
  %v5151 = vld [vmem:[#allocation3 + $0xb8] sm:$0xff]
  %v5152 = vld [vmem:[#allocation3 + $0xc0] sm:$0xff]
  %v5153 = vld [vmem:[#allocation3 + $0xc8] sm:$0xff]
  %v5154 = vld [vmem:[#allocation3 + $0xd0] sm:$0xff]
  %v5155 = vld [vmem:[#allocation3 + $0xd8] sm:$0xff]
  %v5156 = vld [vmem:[#allocation3 + $0xe0] sm:$0xff]
  %v5157 = vld [vmem:[#allocation3 + $0xe8] sm:$0xff]
  %v5158 = vld [vmem:[#allocation3 + $0xf0] sm:$0xff]
  %v5159 = vld [vmem:[#allocation3 + $0xf8] sm:$0xff]
  %v5160 = vld [vmem:[#allocation3 + $0x100] sm:$0xff]
  %v5161 = vld [vmem:[#allocation3 + $0x108] sm:$0xff]
  %v5162 = vld [vmem:[#allocation3 + $0x110] sm:$0xff]
  %v5163 = vld [vmem:[#allocation3 + $0x118] sm:$0xff]
  %v5164 = vld [vmem:[#allocation3 + $0x120] sm:$0xff]
  %v5165 = vld [vmem:[#allocation3 + $0x128] sm:$0xff]
  %v5166 = vld [vmem:[#allocation3 + $0x130] sm:$0xff]
  %v5167 = vld [vmem:[#allocation3 + $0x138] sm:$0xff]
  %v5168 = vld [vmem:[#allocation3 + $0x140] sm:$0x7f]
  %v5169 = vld [vmem:[#allocation3 + $0x148] sm:$0x7f]
  %v5170 = vpack.c.bf16 %v5130, %v5128
  %v5171 = vpack.c.bf16 %v5131, %v5129
  %v5172 = vpack.c.bf16 %v5134, %v5132
  %v5173 = vpack.c.bf16 %v5135, %v5133
  %v5174 = vpack.c.bf16 %v5138, %v5136
  %v5175 = vpack.c.bf16 %v5139, %v5137
  %v5176 = vpack.c.bf16 %v5142, %v5140
  %v5177 = vpack.c.bf16 %v5143, %v5141
  %v5178 = vpack.c.bf16 %v5146, %v5144
  %v5179 = vpack.c.bf16 %v5147, %v5145
  %v5180 = vpack.c.bf16 %v5150, %v5148
  %v5181 = vpack.c.bf16 %v5151, %v5149
  %v5182 = vpack.c.bf16 %v5154, %v5152
  %v5183 = vpack.c.bf16 %v5155, %v5153
  %v5184 = vpack.c.bf16 %v5158, %v5156
  %v5185 = vpack.c.bf16 %v5159, %v5157
  %v5186 = vpack.c.bf16 %v5162, %v5160
  %v5187 = vpack.c.bf16 %v5163, %v5161
  %v5188 = vpack.c.bf16 %v5166, %v5164
  %v5189 = vpack.c.bf16 %v5167, %v5165
  %v5190 = vpack.c.bf16 %v5168, %v5168
  %v5191 = vpack.c.bf16 %v5169, %v5169
  %s5192 = scalar_lea.vmem %s3, 640
  %v5193 = vld [vmem:[%s5192] sm:$0xff]
  %v5194 = vld [vmem:[%s5192 + $0x8] sm:$0xff]
  %v5195 = vld [vmem:[%s5192 + $0x10] sm:$0xff]
  %v5196 = vld [vmem:[%s5192 + $0x18] sm:$0xff]
  %v5197 = vld [vmem:[%s5192 + $0x20] sm:$0xff]
  %v5198 = vld [vmem:[%s5192 + $0x28] sm:$0xff]
  %v5199 = vld [vmem:[%s5192 + $0x30] sm:$0xff]
  %v5200 = vld [vmem:[%s5192 + $0x38] sm:$0xff]
  %v5201 = vld [vmem:[%s5192 + $0x40] sm:$0xff]
  %v5202 = vld [vmem:[%s5192 + $0x48] sm:$0xff]
  %v5203 = vld [vmem:[%s5192 + $0x50] sm:$0xff]
  %v5204 = vld [vmem:[%s5192 + $0x58] sm:$0xff]
  %v5205 = vld [vmem:[%s5192 + $0x60] sm:$0xff]
  %v5206 = vld [vmem:[%s5192 + $0x68] sm:$0xff]
  %v5207 = vld [vmem:[%s5192 + $0x70] sm:$0xff]
  %v5208 = vld [vmem:[%s5192 + $0x78] sm:$0xff]
  %v5209 = vld [vmem:[%s5192 + $0x80] sm:$0xff]
  %v5210 = vld [vmem:[%s5192 + $0x88] sm:$0xff]
  %v5211 = vld [vmem:[%s5192 + $0x90] sm:$0xff]
  %v5212 = vld [vmem:[%s5192 + $0x98] sm:$0xff]
  %v5233 = vunpack.c.l.b16 %v5193
  %v5234 = vunpack.c.h.b16 %v5193
  %v5235 = vunpack.c.l.b16 %v5194
  %v5236 = vunpack.c.h.b16 %v5194
  %v5237 = vunpack.c.l.b16 %v5195
  %v5238 = vunpack.c.h.b16 %v5195
  %v5239 = vunpack.c.l.b16 %v5196
  %v5240 = vunpack.c.h.b16 %v5196
  %v5241 = vunpack.c.l.b16 %v5197
  %v5242 = vunpack.c.h.b16 %v5197
  %v5243 = vunpack.c.l.b16 %v5198
  %v5244 = vunpack.c.h.b16 %v5198
  %v5245 = vunpack.c.l.b16 %v5199
  %v5246 = vunpack.c.h.b16 %v5199
  %v5247 = vunpack.c.l.b16 %v5200
  %v5248 = vunpack.c.h.b16 %v5200
  %v5249 = vunpack.c.l.b16 %v5201
  %v5250 = vunpack.c.h.b16 %v5201
  %v5251 = vunpack.c.l.b16 %v5202
  %v5252 = vunpack.c.h.b16 %v5202
  %v5253 = vunpack.c.l.b16 %v5203
  %v5254 = vunpack.c.h.b16 %v5203
  %v5255 = vunpack.c.l.b16 %v5204
  %v5256 = vunpack.c.h.b16 %v5204
  %v5257 = vunpack.c.l.b16 %v5205
  %v5258 = vunpack.c.h.b16 %v5205
  %v5259 = vunpack.c.l.b16 %v5206
  %v5260 = vunpack.c.h.b16 %v5206
  %v5261 = vunpack.c.l.b16 %v5207
  %v5262 = vunpack.c.h.b16 %v5207
  %v5263 = vunpack.c.l.b16 %v5208
  %v5264 = vunpack.c.h.b16 %v5208
  %v5265 = vunpack.c.l.b16 %v5209
  %v5266 = vunpack.c.h.b16 %v5209
  %v5267 = vunpack.c.l.b16 %v5210
  %v5268 = vunpack.c.h.b16 %v5210
  %v5269 = vunpack.c.l.b16 %v5211
  %v5270 = vunpack.c.h.b16 %v5211
  %v5271 = vunpack.c.l.b16 %v5212
  %v5272 = vunpack.c.h.b16 %v5212
  %v5273 = vpack.c.b16 %v5235, %v5233
  %v5274 = vpack.c.b16 %v5236, %v5234
  %v5275 = vpack.c.b16 %v5239, %v5237
  %v5276 = vpack.c.b16 %v5240, %v5238
  %v5277 = vpack.c.b16 %v5243, %v5241
  %v5278 = vpack.c.b16 %v5244, %v5242
  %v5279 = vpack.c.b16 %v5247, %v5245
  %v5280 = vpack.c.b16 %v5248, %v5246
  %v5281 = vpack.c.b16 %v5251, %v5249
  %v5282 = vpack.c.b16 %v5252, %v5250
  %v5283 = vpack.c.b16 %v5255, %v5253
  %v5284 = vpack.c.b16 %v5256, %v5254
  %v5285 = vpack.c.b16 %v5259, %v5257
  %v5286 = vpack.c.b16 %v5260, %v5258
  %v5287 = vpack.c.b16 %v5263, %v5261
  %v5288 = vpack.c.b16 %v5264, %v5262
  %v5289 = vpack.c.b16 %v5267, %v5265
  %v5290 = vpack.c.b16 %v5268, %v5266
  %v5291 = vpack.c.b16 %v5271, %v5269
  %v5292 = vpack.c.b16 %v5272, %v5270
  %5325 = vrot.lane.b32.xlu0 %v5170, 64
  %v5326 = vpop.permute.xlu0 %5325
  %5327 = vrot.lane.b32.xlu0 %v5171, 64
  %v5328 = vpop.permute.xlu0 %5327
  %5329 = vrot.lane.b32.xlu0 %v5172, 64
  %v5330 = vpop.permute.xlu0 %5329
  %5331 = vrot.lane.b32.xlu0 %v5173, 64
  %v5332 = vpop.permute.xlu0 %5331
  %5333 = vrot.lane.b32.xlu0 %v5174, 64
  %v5334 = vpop.permute.xlu0 %5333
  %5335 = vrot.lane.b32.xlu0 %v5175, 64
  %v5336 = vpop.permute.xlu0 %5335
  %5337 = vrot.lane.b32.xlu0 %v5176, 64
  %v5338 = vpop.permute.xlu0 %5337
  %5339 = vrot.lane.b32.xlu0 %v5177, 64
  %v5340 = vpop.permute.xlu0 %5339
  %5341 = vrot.lane.b32.xlu0 %v5178, 64
  %v5342 = vpop.permute.xlu0 %5341
  %5343 = vrot.lane.b32.xlu0 %v5179, 64
  %v5344 = vpop.permute.xlu0 %5343
  %5345 = vrot.lane.b32.xlu0 %v5180, 64
  %v5346 = vpop.permute.xlu0 %5345
  %5347 = vrot.lane.b32.xlu0 %v5181, 64
  %v5348 = vpop.permute.xlu0 %5347
  %5349 = vrot.lane.b32.xlu0 %v5182, 64
  %v5350 = vpop.permute.xlu0 %5349
  %5351 = vrot.lane.b32.xlu0 %v5183, 64
  %v5352 = vpop.permute.xlu0 %5351
  %5353 = vrot.lane.b32.xlu0 %v5184, 64
  %v5354 = vpop.permute.xlu0 %5353
  %5355 = vrot.lane.b32.xlu0 %v5185, 64
  %v5356 = vpop.permute.xlu0 %5355
  %5357 = vrot.lane.b32.xlu0 %v5186, 64
  %v5358 = vpop.permute.xlu0 %5357
  %5359 = vrot.lane.b32.xlu0 %v5187, 64
  %v5360 = vpop.permute.xlu0 %5359
  %5361 = vrot.lane.b32.xlu0 %v5188, 64
  %v5362 = vpop.permute.xlu0 %5361
  %5363 = vrot.lane.b32.xlu0 %v5189, 64
  %v5364 = vpop.permute.xlu0 %5363
  %5365 = vrot.lane.b32.xlu0 %v5190, 64
  %v5366 = vpop.permute.xlu0 %5365
  %5367 = vrot.lane.b32.xlu0 %v5191, 64
  %v5368 = vpop.permute.xlu0 %5367
  %vm5369 = vcmask 523264
  %v5370 = vsel %vm5369, %v5326, %v5328
  %v5371 = vsel %vm5369, %v5330, %v5332
  %v5372 = vsel %vm5369, %v5334, %v5336
  %v5373 = vsel %vm5369, %v5338, %v5340
  %v5374 = vsel %vm5369, %v5342, %v5344
  %v5375 = vsel %vm5369, %v5346, %v5348
  %v5376 = vsel %vm5369, %v5350, %v5352
  %v5377 = vsel %vm5369, %v5354, %v5356
  %v5378 = vsel %vm5369, %v5358, %v5360
  %v5379 = vsel %vm5369, %v5362, %v5364
  %v5380 = vsel %vm5369, %v5366, %v5368
  %v5402 = vsel %vm3229, %v5274, 0
  %v5405 = vsel %vm3229, %v5276, 0
  %v5408 = vsel %vm3229, %v5278, 0
  %v5411 = vsel %vm3229, %v5280, 0
  %v5414 = vsel %vm3229, %v5282, 0
  %v5417 = vsel %vm3229, %v5284, 0
  %v5420 = vsel %vm3229, %v5286, 0
  %v5423 = vsel %vm3229, %v5288, 0
  %v5426 = vsel %vm3229, %v5290, 0
  %v5429 = vsel %vm3229, %v5292, 0
  %v5432 = vand.u32 %v5380, %v3263
  %v5435 = vand.u32 %v5368, %v3263
  %5437 = vmatprep.subr.bf16.mxu0 %v5356
  %5438 = vmatpush1.bf16.msra.mxu0 %v5377
  %5439 = vmatprep.subr.bf16.mxu0 %v5352
  %5440 = vmatpush1.bf16.msra.mxu0 %v5376
  %5441 = vmatprep.subr.bf16.mxu0 %v5348
  %5442 = vmatpush1.bf16.msra.mxu0 %v5375
  %5443 = vmatprep.subr.bf16.mxu0 %v5344
  %5444 = vmatpush1.bf16.msra.mxu0 %v5374
  %5445 = vmatprep.subr.bf16.mxu0 %v5340
  %5446 = vmatpush1.bf16.msra.mxu0 %v5373
  %5447 = vmatprep.subr.bf16.mxu0 %v5336
  %5448 = vmatpush1.bf16.msra.mxu0 %v5372
  %5449 = vmatprep.subr.bf16.mxu0 %v5332
  %5450 = vmatpush1.bf16.msra.mxu0 %v5371
  %5451 = vmatprep.subr.bf16.mxu0 %v5328
  %5452 = vmatpush1.bf16.msra.mxu0 %v5370
  %5453 = vmatprep.subr.bf16.mxu0 0
  %5454 = vmatpush2.bf16.msra.mxu0 0
  %5455 = vmatprep.subr.bf16.mxu0 0
  %5456 = vmatpush2.bf16.msra.mxu0 0
  %5457 = vmatprep.subr.bf16.mxu0 0
  %5458 = vmatpush2.bf16.msra.mxu0 0
  %5459 = vmatprep.subr.bf16.mxu0 0
  %5460 = vmatpush2.bf16.msra.mxu0 0
  %5461 = vmatprep.subr.bf16.mxu0 0
  %5462 = vmatpush2.bf16.msra.mxu0 0
  %5463 = vmatprep.subr.bf16.mxu0 %v5435
  %5464 = vmatpush2.bf16.msra.mxu0 %v5432
  %5465 = vmatprep.subr.bf16.mxu0 %v5364
  %5466 = vmatpush2.bf16.msra.mxu0 %v5379
  %5467 = vmatprep.subr.bf16.mxu0 %v5360
  %5468 = vmatpush2.bf16.msra.mxu0 %v5378
  %5469 = vmatprep.mubr.bf16.mxu0 %v5402
  %5470 = vmatmul.mubr.bf16.gmra.mxu0 %v5273
  %v5471 = vpop.f32.mrf.mxu0
  %v5472 = vadd.f32 0.0, %v5471
  %v5473 = vpop.f32.mrf.mxu0
  %v5474 = vadd.f32 0.0, %v5473
  %v5475 = vpop.f32.mrf.mxu0
  %v5476 = vadd.f32 0.0, %v5475
  %v5477 = vpop.f32.mrf.mxu0
  %v5478 = vadd.f32 0.0, %v5477
  %5479 = vmatprep.mubr.bf16.mxu0 %v5405
  %5480 = vmatmul.mubr.bf16.gmra.mxu0 %v5275
  %v5481 = vpop.f32.mrf.mxu0
  %v5482 = vadd.f32 0.0, %v5481
  %v5483 = vpop.f32.mrf.mxu0
  %v5484 = vadd.f32 0.0, %v5483
  %v5485 = vpop.f32.mrf.mxu0
  %v5486 = vadd.f32 0.0, %v5485
  %v5487 = vpop.f32.mrf.mxu0
  %v5488 = vadd.f32 0.0, %v5487
  %5489 = vmatprep.mubr.bf16.mxu0 %v5408
  %5490 = vmatmul.mubr.bf16.gmra.mxu0 %v5277
  %v5491 = vpop.f32.mrf.mxu0
  %v5492 = vadd.f32 0.0, %v5491
  %v5493 = vpop.f32.mrf.mxu0
  %v5494 = vadd.f32 0.0, %v5493
  %v5495 = vpop.f32.mrf.mxu0
  %v5496 = vadd.f32 0.0, %v5495
  %v5497 = vpop.f32.mrf.mxu0
  %v5498 = vadd.f32 0.0, %v5497
  %5499 = vmatprep.mubr.bf16.mxu0 %v5411
  %5500 = vmatmul.mubr.bf16.gmra.mxu0 %v5279
  %v5501 = vpop.f32.mrf.mxu0
  %v5502 = vadd.f32 0.0, %v5501
  %v5503 = vpop.f32.mrf.mxu0
  %v5504 = vadd.f32 0.0, %v5503
  %v5505 = vpop.f32.mrf.mxu0
  %v5506 = vadd.f32 0.0, %v5505
  %v5507 = vpop.f32.mrf.mxu0
  %v5508 = vadd.f32 0.0, %v5507
  %5509 = vmatprep.mubr.bf16.mxu0 %v5414
  %5510 = vmatmul.mubr.bf16.gmra.mxu0 %v5281
  %v5511 = vpop.f32.mrf.mxu0
  %v5512 = vadd.f32 0.0, %v5511
  %v5513 = vpop.f32.mrf.mxu0
  %v5514 = vadd.f32 0.0, %v5513
  %v5515 = vpop.f32.mrf.mxu0
  %v5516 = vadd.f32 0.0, %v5515
  %v5517 = vpop.f32.mrf.mxu0
  %v5518 = vadd.f32 0.0, %v5517
  %5519 = vmatprep.mubr.bf16.mxu0 %v5417
  %5520 = vmatmul.mubr.bf16.gmra.mxu0 %v5283
  %v5521 = vpop.f32.mrf.mxu0
  %v5522 = vadd.f32 0.0, %v5521
  %v5523 = vpop.f32.mrf.mxu0
  %v5524 = vadd.f32 0.0, %v5523
  %v5525 = vpop.f32.mrf.mxu0
  %v5526 = vadd.f32 0.0, %v5525
  %v5527 = vpop.f32.mrf.mxu0
  %v5528 = vadd.f32 0.0, %v5527
  %5529 = vmatprep.mubr.bf16.mxu0 %v5420
  %5530 = vmatmul.mubr.bf16.gmra.mxu0 %v5285
  %v5531 = vpop.f32.mrf.mxu0
  %v5532 = vadd.f32 0.0, %v5531
  %v5533 = vpop.f32.mrf.mxu0
  %v5534 = vadd.f32 0.0, %v5533
  %v5535 = vpop.f32.mrf.mxu0
  %v5536 = vadd.f32 0.0, %v5535
  %v5537 = vpop.f32.mrf.mxu0
  %v5538 = vadd.f32 0.0, %v5537
  %5539 = vmatprep.mubr.bf16.mxu0 %v5423
  %5540 = vmatmul.mubr.bf16.gmra.mxu0 %v5287
  %v5541 = vpop.f32.mrf.mxu0
  %v5542 = vadd.f32 0.0, %v5541
  %v5543 = vpop.f32.mrf.mxu0
  %v5544 = vadd.f32 0.0, %v5543
  %v5545 = vpop.f32.mrf.mxu0
  %v5546 = vadd.f32 0.0, %v5545
  %v5547 = vpop.f32.mrf.mxu0
  %v5548 = vadd.f32 0.0, %v5547
  %5549 = vmatprep.mubr.bf16.mxu0 %v5426
  %5550 = vmatmul.mubr.bf16.gmra.mxu0 %v5289
  %v5551 = vpop.f32.mrf.mxu0
  %v5552 = vadd.f32 0.0, %v5551
  %v5553 = vpop.f32.mrf.mxu0
  %v5554 = vadd.f32 0.0, %v5553
  %v5555 = vpop.f32.mrf.mxu0
  %v5556 = vadd.f32 0.0, %v5555
  %v5557 = vpop.f32.mrf.mxu0
  %v5558 = vadd.f32 0.0, %v5557
  %5559 = vmatprep.mubr.bf16.mxu0 %v5429
  %5560 = vmatmul.mubr.bf16.gmra.mxu0 %v5291
  %v5561 = vpop.f32.mrf.mxu0
  %v5562 = vadd.f32 0.0, %v5561
  %v5563 = vpop.f32.mrf.mxu0
  %v5564 = vadd.f32 0.0, %v5563
  %v5565 = vpop.f32.mrf.mxu0
  %v5566 = vadd.f32 0.0, %v5565
  %v5567 = vpop.f32.mrf.mxu0
  %v5568 = vadd.f32 0.0, %v5567
  %5569 = vdwg.mxu0
  %v5570 = vld [vmem:[#allocation4] sm:$0xff]
  %v5571 = vld [vmem:[#allocation4 + $0x8] sm:$0xff]
  %v5572 = vld [vmem:[#allocation4 + $0x10] sm:$0xff]
  %v5573 = vld [vmem:[#allocation4 + $0x18] sm:$0xff]
  %v5574 = vld [vmem:[#allocation4 + $0x20] sm:$0xff]
  %v5575 = vld [vmem:[#allocation4 + $0x28] sm:$0xff]
  %v5576 = vld [vmem:[#allocation4 + $0x30] sm:$0xff]
  %v5577 = vld [vmem:[#allocation4 + $0x38] sm:$0xff]
  %v5578 = vld [vmem:[#allocation4 + $0x40] sm:$0xff]
  %v5579 = vld [vmem:[#allocation4 + $0x48] sm:$0xff]
  %v5580 = vld [vmem:[#allocation4 + $0x50] sm:$0xff]
  %v5581 = vld [vmem:[#allocation4 + $0x58] sm:$0xff]
  %v5582 = vld [vmem:[#allocation4 + $0x60] sm:$0xff]
  %v5583 = vld [vmem:[#allocation4 + $0x68] sm:$0xff]
  %v5584 = vld [vmem:[#allocation4 + $0x70] sm:$0xff]
  %v5585 = vld [vmem:[#allocation4 + $0x78] sm:$0xff]
  %v5586 = vld [vmem:[#allocation4 + $0x80] sm:$0xff]
  %v5587 = vld [vmem:[#allocation4 + $0x88] sm:$0xff]
  %v5588 = vld [vmem:[#allocation4 + $0x90] sm:$0xff]
  %v5589 = vld [vmem:[#allocation4 + $0x98] sm:$0xff]
  %v5590 = vld [vmem:[#allocation4 + $0xa0] sm:$0xff]
  %v5591 = vld [vmem:[#allocation4 + $0xa8] sm:$0xff]
  %v5592 = vld [vmem:[#allocation4 + $0xb0] sm:$0xff]
  %v5593 = vld [vmem:[#allocation4 + $0xb8] sm:$0xff]
  %v5594 = vld [vmem:[#allocation4 + $0xc0] sm:$0xff]
  %v5595 = vld [vmem:[#allocation4 + $0xc8] sm:$0xff]
  %v5596 = vld [vmem:[#allocation4 + $0xd0] sm:$0xff]
  %v5597 = vld [vmem:[#allocation4 + $0xd8] sm:$0xff]
  %v5598 = vld [vmem:[#allocation4 + $0xe0] sm:$0xff]
  %v5599 = vld [vmem:[#allocation4 + $0xe8] sm:$0xff]
  %v5600 = vld [vmem:[#allocation4 + $0xf0] sm:$0xff]
  %v5601 = vld [vmem:[#allocation4 + $0xf8] sm:$0xff]
  %v5602 = vld [vmem:[#allocation4 + $0x100] sm:$0xff]
  %v5603 = vld [vmem:[#allocation4 + $0x108] sm:$0xff]
  %v5604 = vld [vmem:[#allocation4 + $0x110] sm:$0xff]
  %v5605 = vld [vmem:[#allocation4 + $0x118] sm:$0xff]
  %v5606 = vld [vmem:[#allocation4 + $0x120] sm:$0xff]
  %v5607 = vld [vmem:[#allocation4 + $0x128] sm:$0xff]
  %v5608 = vld [vmem:[#allocation4 + $0x130] sm:$0xff]
  %v5609 = vld [vmem:[#allocation4 + $0x138] sm:$0xff]
  %v5610 = vadd.f32 %v5570, %v5472
  %v5611 = vadd.f32 %v5571, %v5474
  %v5612 = vadd.f32 %v5572, %v5476
  %v5613 = vadd.f32 %v5573, %v5478
  %v5614 = vadd.f32 %v5574, %v5482
  %v5615 = vadd.f32 %v5575, %v5484
  %v5616 = vadd.f32 %v5576, %v5486
  %v5617 = vadd.f32 %v5577, %v5488
  %v5618 = vadd.f32 %v5578, %v5492
  %v5619 = vadd.f32 %v5579, %v5494
  %v5620 = vadd.f32 %v5580, %v5496
  %v5621 = vadd.f32 %v5581, %v5498
  %v5622 = vadd.f32 %v5582, %v5502
  %v5623 = vadd.f32 %v5583, %v5504
  %v5624 = vadd.f32 %v5584, %v5506
  %v5625 = vadd.f32 %v5585, %v5508
  %v5626 = vadd.f32 %v5586, %v5512
  %v5627 = vadd.f32 %v5587, %v5514
  %v5628 = vadd.f32 %v5588, %v5516
  %v5629 = vadd.f32 %v5589, %v5518
  %v5630 = vadd.f32 %v5590, %v5522
  %v5631 = vadd.f32 %v5591, %v5524
  %v5632 = vadd.f32 %v5592, %v5526
  %v5633 = vadd.f32 %v5593, %v5528
  %v5634 = vadd.f32 %v5594, %v5532
  %v5635 = vadd.f32 %v5595, %v5534
  %v5636 = vadd.f32 %v5596, %v5536
  %v5637 = vadd.f32 %v5597, %v5538
  %v5638 = vadd.f32 %v5598, %v5542
  %v5639 = vadd.f32 %v5599, %v5544
  %v5640 = vadd.f32 %v5600, %v5546
  %v5641 = vadd.f32 %v5601, %v5548
  %v5642 = vadd.f32 %v5602, %v5552
  %v5643 = vadd.f32 %v5603, %v5554
  %v5644 = vadd.f32 %v5604, %v5556
  %v5645 = vadd.f32 %v5605, %v5558
  %v5646 = vadd.f32 %v5606, %v5562
  %v5647 = vadd.f32 %v5607, %v5564
  %v5648 = vadd.f32 %v5608, %v5566
  %v5649 = vadd.f32 %v5609, %v5568
  %5650 = vst [vmem:[#allocation4] sm:$0xff] %v5610
  %5651 = vst.msk [vmem:[#allocation4 + $0x8] sm:$0xff] %vm3404, %v5611
  %5652 = vst [vmem:[#allocation4 + $0x10] sm:$0xff] %v5612
  %5653 = vst.msk [vmem:[#allocation4 + $0x18] sm:$0xff] %vm3404, %v5613
  %5654 = vst [vmem:[#allocation4 + $0x20] sm:$0xff] %v5614
  %5655 = vst.msk [vmem:[#allocation4 + $0x28] sm:$0xff] %vm3404, %v5615
  %5656 = vst [vmem:[#allocation4 + $0x30] sm:$0xff] %v5616
  %5657 = vst.msk [vmem:[#allocation4 + $0x38] sm:$0xff] %vm3404, %v5617
  %5658 = vst [vmem:[#allocation4 + $0x40] sm:$0xff] %v5618
  %5659 = vst.msk [vmem:[#allocation4 + $0x48] sm:$0xff] %vm3404, %v5619
  %5660 = vst [vmem:[#allocation4 + $0x50] sm:$0xff] %v5620
  %5661 = vst.msk [vmem:[#allocation4 + $0x58] sm:$0xff] %vm3404, %v5621
  %5662 = vst [vmem:[#allocation4 + $0x60] sm:$0xff] %v5622
  %5663 = vst.msk [vmem:[#allocation4 + $0x68] sm:$0xff] %vm3404, %v5623
  %5664 = vst [vmem:[#allocation4 + $0x70] sm:$0xff] %v5624
  %5665 = vst.msk [vmem:[#allocation4 + $0x78] sm:$0xff] %vm3404, %v5625
  %5666 = vst [vmem:[#allocation4 + $0x80] sm:$0xff] %v5626
  %5667 = vst.msk [vmem:[#allocation4 + $0x88] sm:$0xff] %vm3404, %v5627
  %5668 = vst [vmem:[#allocation4 + $0x90] sm:$0xff] %v5628
  %5669 = vst.msk [vmem:[#allocation4 + $0x98] sm:$0xff] %vm3404, %v5629
  %5670 = vst [vmem:[#allocation4 + $0xa0] sm:$0xff] %v5630
  %5671 = vst.msk [vmem:[#allocation4 + $0xa8] sm:$0xff] %vm3404, %v5631
  %5672 = vst [vmem:[#allocation4 + $0xb0] sm:$0xff] %v5632
  %5673 = vst.msk [vmem:[#allocation4 + $0xb8] sm:$0xff] %vm3404, %v5633
  %5674 = vst [vmem:[#allocation4 + $0xc0] sm:$0xff] %v5634
  %5675 = vst.msk [vmem:[#allocation4 + $0xc8] sm:$0xff] %vm3404, %v5635
  %5676 = vst [vmem:[#allocation4 + $0xd0] sm:$0xff] %v5636
  %5677 = vst.msk [vmem:[#allocation4 + $0xd8] sm:$0xff] %vm3404, %v5637
  %5678 = vst [vmem:[#allocation4 + $0xe0] sm:$0xff] %v5638
  %5679 = vst.msk [vmem:[#allocation4 + $0xe8] sm:$0xff] %vm3404, %v5639
  %5680 = vst [vmem:[#allocation4 + $0xf0] sm:$0xff] %v5640
  %5681 = vst.msk [vmem:[#allocation4 + $0xf8] sm:$0xff] %vm3404, %v5641
  %5682 = vst [vmem:[#allocation4 + $0x100] sm:$0xff] %v5642
  %5683 = vst.msk [vmem:[#allocation4 + $0x108] sm:$0xff] %vm3404, %v5643
  %5684 = vst [vmem:[#allocation4 + $0x110] sm:$0xff] %v5644
  %5685 = vst.msk [vmem:[#allocation4 + $0x118] sm:$0xff] %vm3404, %v5645
  %5686 = vst [vmem:[#allocation4 + $0x120] sm:$0xff] %v5646
  %5687 = vst.msk [vmem:[#allocation4 + $0x128] sm:$0xff] %vm3404, %v5647
  %5688 = vst [vmem:[#allocation4 + $0x130] sm:$0xff] %v5648
  %5689 = vst.msk [vmem:[#allocation4 + $0x138] sm:$0xff] %vm3404, %v5649
  %v5690 = vld [vmem:[#allocation4] sm:$0xff]
  %v5691 = vld [vmem:[#allocation4 + $0x8] sm:$0xff]
  %v5692 = vld [vmem:[#allocation4 + $0x10] sm:$0xff]
  %v5693 = vld [vmem:[#allocation4 + $0x18] sm:$0xff]
  %v5694 = vld [vmem:[#allocation4 + $0x20] sm:$0xff]
  %v5695 = vld [vmem:[#allocation4 + $0x28] sm:$0xff]
  %v5696 = vld [vmem:[#allocation4 + $0x30] sm:$0xff]
  %v5697 = vld [vmem:[#allocation4 + $0x38] sm:$0xff]
  %v5698 = vld [vmem:[#allocation4 + $0x40] sm:$0xff]
  %v5699 = vld [vmem:[#allocation4 + $0x48] sm:$0xff]
  %v5700 = vld [vmem:[#allocation4 + $0x50] sm:$0xff]
  %v5701 = vld [vmem:[#allocation4 + $0x58] sm:$0xff]
  %v5702 = vld [vmem:[#allocation4 + $0x60] sm:$0xff]
  %v5703 = vld [vmem:[#allocation4 + $0x68] sm:$0xff]
  %v5704 = vld [vmem:[#allocation4 + $0x70] sm:$0xff]
  %v5705 = vld [vmem:[#allocation4 + $0x78] sm:$0xff]
  %v5706 = vld [vmem:[#allocation4 + $0x80] sm:$0xff]
  %v5707 = vld [vmem:[#allocation4 + $0x88] sm:$0xff]
  %v5708 = vld [vmem:[#allocation4 + $0x90] sm:$0xff]
  %v5709 = vld [vmem:[#allocation4 + $0x98] sm:$0xff]
  %v5710 = vld [vmem:[#allocation4 + $0xa0] sm:$0xff]
  %v5711 = vld [vmem:[#allocation4 + $0xa8] sm:$0xff]
  %v5712 = vld [vmem:[#allocation4 + $0xb0] sm:$0xff]
  %v5713 = vld [vmem:[#allocation4 + $0xb8] sm:$0xff]
  %v5714 = vld [vmem:[#allocation4 + $0xc0] sm:$0xff]
  %v5715 = vld [vmem:[#allocation4 + $0xc8] sm:$0xff]
  %v5716 = vld [vmem:[#allocation4 + $0xd0] sm:$0xff]
  %v5717 = vld [vmem:[#allocation4 + $0xd8] sm:$0xff]
  %v5718 = vld [vmem:[#allocation4 + $0xe0] sm:$0xff]
  %v5719 = vld [vmem:[#allocation4 + $0xe8] sm:$0xff]
  %v5720 = vld [vmem:[#allocation4 + $0xf0] sm:$0xff]
  %v5721 = vld [vmem:[#allocation4 + $0xf8] sm:$0xff]
  %v5722 = vld [vmem:[#allocation4 + $0x100] sm:$0xff]
  %v5723 = vld [vmem:[#allocation4 + $0x108] sm:$0xff]
  %v5724 = vld [vmem:[#allocation4 + $0x110] sm:$0xff]
  %v5725 = vld [vmem:[#allocation4 + $0x118] sm:$0xff]
  %v5726 = vld [vmem:[#allocation4 + $0x120] sm:$0xff]
  %v5727 = vld [vmem:[#allocation4 + $0x128] sm:$0xff]
  %v5728 = vld [vmem:[#allocation4 + $0x130] sm:$0xff]
  %v5729 = vld [vmem:[#allocation4 + $0x138] sm:$0xff]
  %v5730 = vld [vmem:[%s4] sm:$0xff]
  %v5731 = vld [vmem:[%s4 + $0x8] sm:$0xff]
  %v5732 = vld [vmem:[%s4 + $0x10] sm:$0xff]
  %v5733 = vld [vmem:[%s4 + $0x18] sm:$0xff]
  %v5734 = vld [vmem:[%s4 + $0x20] sm:$0xff]
  %v5735 = vld [vmem:[%s4 + $0x28] sm:$0xff]
  %v5736 = vld [vmem:[%s4 + $0x30] sm:$0xff]
  %v5737 = vld [vmem:[%s4 + $0x38] sm:$0xff]
  %v5738 = vld [vmem:[%s4 + $0x40] sm:$0xff]
  %v5739 = vld [vmem:[%s4 + $0x48] sm:$0xff]
  %v5740 = vld [vmem:[%s4 + $0x50] sm:$0xff]
  %v5741 = vld [vmem:[%s4 + $0x58] sm:$0xff]
  %v5742 = vld [vmem:[%s4 + $0x60] sm:$0xff]
  %v5743 = vld [vmem:[%s4 + $0x68] sm:$0xff]
  %v5744 = vld [vmem:[%s4 + $0x70] sm:$0xff]
  %v5745 = vld [vmem:[%s4 + $0x78] sm:$0xff]
  %v5746 = vld [vmem:[%s4 + $0x80] sm:$0xff]
  %v5747 = vld [vmem:[%s4 + $0x88] sm:$0xff]
  %v5748 = vld [vmem:[%s4 + $0x90] sm:$0xff]
  %v5749 = vld [vmem:[%s4 + $0x98] sm:$0xff]
  %5751 = vset.pattern.permute.xlu0 0
  %5752 = vperm.xlu0 %5751, %v5730
  %v5753 = vpop.permute.xlu0 %5752
  %5756 = vset.pattern.permute.xlu0 0
  %5757 = vperm.xlu0 %5756, %v5731
  %v5758 = vpop.permute.xlu0 %5757
  %5761 = vset.pattern.permute.xlu0 0
  %5762 = vperm.xlu0 %5761, %v5732
  %v5763 = vpop.permute.xlu0 %5762
  %5766 = vset.pattern.permute.xlu0 0
  %5767 = vperm.xlu0 %5766, %v5733
  %v5768 = vpop.permute.xlu0 %5767
  %5771 = vset.pattern.permute.xlu0 0
  %5772 = vperm.xlu0 %5771, %v5734
  %v5773 = vpop.permute.xlu0 %5772
  %5776 = vset.pattern.permute.xlu0 0
  %5777 = vperm.xlu0 %5776, %v5735
  %v5778 = vpop.permute.xlu0 %5777
  %5781 = vset.pattern.permute.xlu0 0
  %5782 = vperm.xlu0 %5781, %v5736
  %v5783 = vpop.permute.xlu0 %5782
  %5786 = vset.pattern.permute.xlu0 0
  %5787 = vperm.xlu0 %5786, %v5737
  %v5788 = vpop.permute.xlu0 %5787
  %5791 = vset.pattern.permute.xlu0 0
  %5792 = vperm.xlu0 %5791, %v5738
  %v5793 = vpop.permute.xlu0 %5792
  %5796 = vset.pattern.permute.xlu0 0
  %5797 = vperm.xlu0 %5796, %v5739
  %v5798 = vpop.permute.xlu0 %5797
  %5801 = vset.pattern.permute.xlu0 0
  %5802 = vperm.xlu0 %5801, %v5740
  %v5803 = vpop.permute.xlu0 %5802
  %5806 = vset.pattern.permute.xlu0 0
  %5807 = vperm.xlu0 %5806, %v5741
  %v5808 = vpop.permute.xlu0 %5807
  %5811 = vset.pattern.permute.xlu0 0
  %5812 = vperm.xlu0 %5811, %v5742
  %v5813 = vpop.permute.xlu0 %5812
  %5816 = vset.pattern.permute.xlu0 0
  %5817 = vperm.xlu0 %5816, %v5743
  %v5818 = vpop.permute.xlu0 %5817
  %5821 = vset.pattern.permute.xlu0 0
  %5822 = vperm.xlu0 %5821, %v5744
  %v5823 = vpop.permute.xlu0 %5822
  %5826 = vset.pattern.permute.xlu0 0
  %5827 = vperm.xlu0 %5826, %v5745
  %v5828 = vpop.permute.xlu0 %5827
  %5831 = vset.pattern.permute.xlu0 0
  %5832 = vperm.xlu0 %5831, %v5746
  %v5833 = vpop.permute.xlu0 %5832
  %5836 = vset.pattern.permute.xlu0 0
  %5837 = vperm.xlu0 %5836, %v5747
  %v5838 = vpop.permute.xlu0 %5837
  %5841 = vset.pattern.permute.xlu0 0
  %5842 = vperm.xlu0 %5841, %v5748
  %v5843 = vpop.permute.xlu0 %5842
  %5846 = vset.pattern.permute.xlu0 0
  %5847 = vperm.xlu0 %5846, %v5749
  %v5848 = vpop.permute.xlu0 %5847
  %v5850 = vadd.f32 %v5690, %v5753
  %v5851 = vadd.f32 %v5691, %v5753
  %v5852 = vadd.f32 %v5692, %v5758
  %v5853 = vadd.f32 %v5693, %v5758
  %v5854 = vadd.f32 %v5694, %v5763
  %v5855 = vadd.f32 %v5695, %v5763
  %v5856 = vadd.f32 %v5696, %v5768
  %v5857 = vadd.f32 %v5697, %v5768
  %v5858 = vadd.f32 %v5698, %v5773
  %v5859 = vadd.f32 %v5699, %v5773
  %v5860 = vadd.f32 %v5700, %v5778
  %v5861 = vadd.f32 %v5701, %v5778
  %v5862 = vadd.f32 %v5702, %v5783
  %v5863 = vadd.f32 %v5703, %v5783
  %v5864 = vadd.f32 %v5704, %v5788
  %v5865 = vadd.f32 %v5705, %v5788
  %v5866 = vadd.f32 %v5706, %v5793
  %v5867 = vadd.f32 %v5707, %v5793
  %v5868 = vadd.f32 %v5708, %v5798
  %v5869 = vadd.f32 %v5709, %v5798
  %v5870 = vadd.f32 %v5710, %v5803
  %v5871 = vadd.f32 %v5711, %v5803
  %v5872 = vadd.f32 %v5712, %v5808
  %v5873 = vadd.f32 %v5713, %v5808
  %v5874 = vadd.f32 %v5714, %v5813
  %v5875 = vadd.f32 %v5715, %v5813
  %v5876 = vadd.f32 %v5716, %v5818
  %v5877 = vadd.f32 %v5717, %v5818
  %v5878 = vadd.f32 %v5718, %v5823
  %v5879 = vadd.f32 %v5719, %v5823
  %v5880 = vadd.f32 %v5720, %v5828
  %v5881 = vadd.f32 %v5721, %v5828
  %v5882 = vadd.f32 %v5722, %v5833
  %v5883 = vadd.f32 %v5723, %v5833
  %v5884 = vadd.f32 %v5724, %v5838
  %v5885 = vadd.f32 %v5725, %v5838
  %v5886 = vadd.f32 %v5726, %v5843
  %v5887 = vadd.f32 %v5727, %v5843
  %v5888 = vadd.f32 %v5728, %v5848
  %v5889 = vadd.f32 %v5729, %v5848
  %v5890 = vmax.f32 %v5850, 0.0
  %v5891 = vmax.f32 %v5851, 0.0
  %v5892 = vmax.f32 %v5852, 0.0
  %v5893 = vmax.f32 %v5853, 0.0
  %v5894 = vmax.f32 %v5854, 0.0
  %v5895 = vmax.f32 %v5855, 0.0
  %v5896 = vmax.f32 %v5856, 0.0
  %v5897 = vmax.f32 %v5857, 0.0
  %v5898 = vmax.f32 %v5858, 0.0
  %v5899 = vmax.f32 %v5859, 0.0
  %v5900 = vmax.f32 %v5860, 0.0
  %v5901 = vmax.f32 %v5861, 0.0
  %v5902 = vmax.f32 %v5862, 0.0
  %v5903 = vmax.f32 %v5863, 0.0
  %v5904 = vmax.f32 %v5864, 0.0
  %v5905 = vmax.f32 %v5865, 0.0
  %v5906 = vmax.f32 %v5866, 0.0
  %v5907 = vmax.f32 %v5867, 0.0
  %v5908 = vmax.f32 %v5868, 0.0
  %v5909 = vmax.f32 %v5869, 0.0
  %v5910 = vmax.f32 %v5870, 0.0
  %v5911 = vmax.f32 %v5871, 0.0
  %v5912 = vmax.f32 %v5872, 0.0
  %v5913 = vmax.f32 %v5873, 0.0
  %v5914 = vmax.f32 %v5874, 0.0
  %v5915 = vmax.f32 %v5875, 0.0
  %v5916 = vmax.f32 %v5876, 0.0
  %v5917 = vmax.f32 %v5877, 0.0
  %v5918 = vmax.f32 %v5878, 0.0
  %v5919 = vmax.f32 %v5879, 0.0
  %v5920 = vmax.f32 %v5880, 0.0
  %v5921 = vmax.f32 %v5881, 0.0
  %v5922 = vmax.f32 %v5882, 0.0
  %v5923 = vmax.f32 %v5883, 0.0
  %v5924 = vmax.f32 %v5884, 0.0
  %v5925 = vmax.f32 %v5885, 0.0
  %v5926 = vmax.f32 %v5886, 0.0
  %v5927 = vmax.f32 %v5887, 0.0
  %v5928 = vmax.f32 %v5888, 0.0
  %v5929 = vmax.f32 %v5889, 0.0
  %5930 = vst [vmem:[#allocation4] sm:$0xff] %v5890
  %5931 = vst.msk [vmem:[#allocation4 + $0x8] sm:$0xff] %vm3404, %v5891
  %5932 = vst [vmem:[#allocation4 + $0x10] sm:$0xff] %v5892
  %5933 = vst.msk [vmem:[#allocation4 + $0x18] sm:$0xff] %vm3404, %v5893
  %5934 = vst [vmem:[#allocation4 + $0x20] sm:$0xff] %v5894
  %5935 = vst.msk [vmem:[#allocation4 + $0x28] sm:$0xff] %vm3404, %v5895
  %5936 = vst [vmem:[#allocation4 + $0x30] sm:$0xff] %v5896
  %5937 = vst.msk [vmem:[#allocation4 + $0x38] sm:$0xff] %vm3404, %v5897
  %5938 = vst [vmem:[#allocation4 + $0x40] sm:$0xff] %v5898
  %5939 = vst.msk [vmem:[#allocation4 + $0x48] sm:$0xff] %vm3404, %v5899
  %5940 = vst [vmem:[#allocation4 + $0x50] sm:$0xff] %v5900
  %5941 = vst.msk [vmem:[#allocation4 + $0x58] sm:$0xff] %vm3404, %v5901
  %5942 = vst [vmem:[#allocation4 + $0x60] sm:$0xff] %v5902
  %5943 = vst.msk [vmem:[#allocation4 + $0x68] sm:$0xff] %vm3404, %v5903
  %5944 = vst [vmem:[#allocation4 + $0x70] sm:$0xff] %v5904
  %5945 = vst.msk [vmem:[#allocation4 + $0x78] sm:$0xff] %vm3404, %v5905
  %5946 = vst [vmem:[#allocation4 + $0x80] sm:$0xff] %v5906
  %5947 = vst.msk [vmem:[#allocation4 + $0x88] sm:$0xff] %vm3404, %v5907
  %5948 = vst [vmem:[#allocation4 + $0x90] sm:$0xff] %v5908
  %5949 = vst.msk [vmem:[#allocation4 + $0x98] sm:$0xff] %vm3404, %v5909
  %5950 = vst [vmem:[#allocation4 + $0xa0] sm:$0xff] %v5910
  %5951 = vst.msk [vmem:[#allocation4 + $0xa8] sm:$0xff] %vm3404, %v5911
  %5952 = vst [vmem:[#allocation4 + $0xb0] sm:$0xff] %v5912
  %5953 = vst.msk [vmem:[#allocation4 + $0xb8] sm:$0xff] %vm3404, %v5913
  %5954 = vst [vmem:[#allocation4 + $0xc0] sm:$0xff] %v5914
  %5955 = vst.msk [vmem:[#allocation4 + $0xc8] sm:$0xff] %vm3404, %v5915
  %5956 = vst [vmem:[#allocation4 + $0xd0] sm:$0xff] %v5916
  %5957 = vst.msk [vmem:[#allocation4 + $0xd8] sm:$0xff] %vm3404, %v5917
  %5958 = vst [vmem:[#allocation4 + $0xe0] sm:$0xff] %v5918
  %5959 = vst.msk [vmem:[#allocation4 + $0xe8] sm:$0xff] %vm3404, %v5919
  %5960 = vst [vmem:[#allocation4 + $0xf0] sm:$0xff] %v5920
  %5961 = vst.msk [vmem:[#allocation4 + $0xf8] sm:$0xff] %vm3404, %v5921
  %5962 = vst [vmem:[#allocation4 + $0x100] sm:$0xff] %v5922
  %5963 = vst.msk [vmem:[#allocation4 + $0x108] sm:$0xff] %vm3404, %v5923
  %5964 = vst [vmem:[#allocation4 + $0x110] sm:$0xff] %v5924
  %5965 = vst.msk [vmem:[#allocation4 + $0x118] sm:$0xff] %vm3404, %v5925
  %5966 = vst [vmem:[#allocation4 + $0x120] sm:$0xff] %v5926
  %5967 = vst.msk [vmem:[#allocation4 + $0x128] sm:$0xff] %vm3404, %v5927
  %5968 = vst [vmem:[#allocation4 + $0x130] sm:$0xff] %v5928
  %5969 = vst.msk [vmem:[#allocation4 + $0x138] sm:$0xff] %vm3404, %v5929
  %v5970 = vld [vmem:[#allocation4] sm:$0xff]
  %v5971 = vld [vmem:[#allocation4 + $0x8] sm:$0xff]
  %v5972 = vld [vmem:[#allocation4 + $0x10] sm:$0xff]
  %v5973 = vld [vmem:[#allocation4 + $0x18] sm:$0xff]
  %v5974 = vld [vmem:[#allocation4 + $0x20] sm:$0xff]
  %v5975 = vld [vmem:[#allocation4 + $0x28] sm:$0xff]
  %v5976 = vld [vmem:[#allocation4 + $0x30] sm:$0xff]
  %v5977 = vld [vmem:[#allocation4 + $0x38] sm:$0xff]
  %v5978 = vld [vmem:[#allocation4 + $0x40] sm:$0xff]
  %v5979 = vld [vmem:[#allocation4 + $0x48] sm:$0xff]
  %v5980 = vld [vmem:[#allocation4 + $0x50] sm:$0xff]
  %v5981 = vld [vmem:[#allocation4 + $0x58] sm:$0xff]
  %v5982 = vld [vmem:[#allocation4 + $0x60] sm:$0xff]
  %v5983 = vld [vmem:[#allocation4 + $0x68] sm:$0xff]
  %v5984 = vld [vmem:[#allocation4 + $0x70] sm:$0xff]
  %v5985 = vld [vmem:[#allocation4 + $0x78] sm:$0xff]
  %v5986 = vld [vmem:[#allocation4 + $0x80] sm:$0xff]
  %v5987 = vld [vmem:[#allocation4 + $0x88] sm:$0xff]
  %v5988 = vld [vmem:[#allocation4 + $0x90] sm:$0xff]
  %v5989 = vld [vmem:[#allocation4 + $0x98] sm:$0xff]
  %v5990 = vld [vmem:[#allocation4 + $0xa0] sm:$0xff]
  %v5991 = vld [vmem:[#allocation4 + $0xa8] sm:$0xff]
  %v5992 = vld [vmem:[#allocation4 + $0xb0] sm:$0xff]
  %v5993 = vld [vmem:[#allocation4 + $0xb8] sm:$0xff]
  %v5994 = vld [vmem:[#allocation4 + $0xc0] sm:$0xff]
  %v5995 = vld [vmem:[#allocation4 + $0xc8] sm:$0xff]
  %v5996 = vld [vmem:[#allocation4 + $0xd0] sm:$0xff]
  %v5997 = vld [vmem:[#allocation4 + $0xd8] sm:$0xff]
  %v5998 = vld [vmem:[#allocation4 + $0xe0] sm:$0xff]
  %v5999 = vld [vmem:[#allocation4 + $0xe8] sm:$0xff]
  %v6000 = vld [vmem:[#allocation4 + $0xf0] sm:$0xff]
  %v6001 = vld [vmem:[#allocation4 + $0xf8] sm:$0xff]
  %v6002 = vld [vmem:[#allocation4 + $0x100] sm:$0xff]
  %v6003 = vld [vmem:[#allocation4 + $0x108] sm:$0xff]
  %v6004 = vld [vmem:[#allocation4 + $0x110] sm:$0xff]
  %v6005 = vld [vmem:[#allocation4 + $0x118] sm:$0xff]
  %v6006 = vld [vmem:[#allocation4 + $0x120] sm:$0xff]
  %v6007 = vld [vmem:[#allocation4 + $0x128] sm:$0xff]
  %v6008 = vld [vmem:[#allocation4 + $0x130] sm:$0x7f]
  %v6009 = vld [vmem:[#allocation4 + $0x138] sm:$0x7f]
  %v6010 = vld [vmem:[#allocation4] sm:$0xfe]
  %v6011 = vld [vmem:[#allocation4 + $0x8] sm:$0xfe]
  %v6012 = vld [vmem:[#allocation4 + $0x130] sm:$0xff]
  %v6013 = vld [vmem:[#allocation4 + $0x138] sm:$0xff]
  %v6054 = vrot.slane %v6010, 1
  %v6055 = vrot.slane %v5972, 1
  %v6056 = vsel %vm2612, %v6054, %v6055
  %v6057 = vrot.slane %v6011, 1
  %v6058 = vrot.slane %v5973, 1
  %v6059 = vsel %vm2612, %v6057, %v6058
  %v6060 = vrot.slane %v5974, 1
  %v6061 = vsel %vm2612, %v6055, %v6060
  %v6062 = vrot.slane %v5975, 1
  %v6063 = vsel %vm2612, %v6058, %v6062
  %v6064 = vrot.slane %v5976, 1
  %v6065 = vsel %vm2612, %v6060, %v6064
  %v6066 = vrot.slane %v5977, 1
  %v6067 = vsel %vm2612, %v6062, %v6066
  %v6068 = vrot.slane %v5978, 1
  %v6069 = vsel %vm2612, %v6064, %v6068
  %v6070 = vrot.slane %v5979, 1
  %v6071 = vsel %vm2612, %v6066, %v6070
  %v6072 = vrot.slane %v5980, 1
  %v6073 = vsel %vm2612, %v6068, %v6072
  %v6074 = vrot.slane %v5981, 1
  %v6075 = vsel %vm2612, %v6070, %v6074
  %v6076 = vrot.slane %v5982, 1
  %v6077 = vsel %vm2612, %v6072, %v6076
  %v6078 = vrot.slane %v5983, 1
  %v6079 = vsel %vm2612, %v6074, %v6078
  %v6080 = vrot.slane %v5984, 1
  %v6081 = vsel %vm2612, %v6076, %v6080
  %v6082 = vrot.slane %v5985, 1
  %v6083 = vsel %vm2612, %v6078, %v6082
  %v6084 = vrot.slane %v5986, 1
  %v6085 = vsel %vm2612, %v6080, %v6084
  %v6086 = vrot.slane %v5987, 1
  %v6087 = vsel %vm2612, %v6082, %v6086
  %v6088 = vrot.slane %v5988, 1
  %v6089 = vsel %vm2612, %v6084, %v6088
  %v6090 = vrot.slane %v5989, 1
  %v6091 = vsel %vm2612, %v6086, %v6090
  %v6092 = vrot.slane %v5990, 1
  %v6093 = vsel %vm2612, %v6088, %v6092
  %v6094 = vrot.slane %v5991, 1
  %v6095 = vsel %vm2612, %v6090, %v6094
  %v6096 = vrot.slane %v5992, 1
  %v6097 = vsel %vm2612, %v6092, %v6096
  %v6098 = vrot.slane %v5993, 1
  %v6099 = vsel %vm2612, %v6094, %v6098
  %v6100 = vrot.slane %v5994, 1
  %v6101 = vsel %vm2612, %v6096, %v6100
  %v6102 = vrot.slane %v5995, 1
  %v6103 = vsel %vm2612, %v6098, %v6102
  %v6104 = vrot.slane %v5996, 1
  %v6105 = vsel %vm2612, %v6100, %v6104
  %v6106 = vrot.slane %v5997, 1
  %v6107 = vsel %vm2612, %v6102, %v6106
  %v6108 = vrot.slane %v5998, 1
  %v6109 = vsel %vm2612, %v6104, %v6108
  %v6110 = vrot.slane %v5999, 1
  %v6111 = vsel %vm2612, %v6106, %v6110
  %v6112 = vrot.slane %v6000, 1
  %v6113 = vsel %vm2612, %v6108, %v6112
  %v6114 = vrot.slane %v6001, 1
  %v6115 = vsel %vm2612, %v6110, %v6114
  %v6116 = vrot.slane %v6002, 1
  %v6117 = vsel %vm2612, %v6112, %v6116
  %v6118 = vrot.slane %v6003, 1
  %v6119 = vsel %vm2612, %v6114, %v6118
  %v6120 = vrot.slane %v6004, 1
  %v6121 = vsel %vm2612, %v6116, %v6120
  %v6122 = vrot.slane %v6005, 1
  %v6123 = vsel %vm2612, %v6118, %v6122
  %v6124 = vrot.slane %v6006, 1
  %v6125 = vsel %vm2612, %v6120, %v6124
  %v6126 = vrot.slane %v6007, 1
  %v6127 = vsel %vm2612, %v6122, %v6126
  %v6128 = vrot.slane %v6012, 1
  %v6129 = vsel %vm2612, %v6124, %v6128
  %v6130 = vrot.slane %v6013, 1
  %v6131 = vsel %vm2612, %v6126, %v6130
  %v6172 = vmax.f32 %v5970, %v6056
  %v6173 = vmax.f32 %v5971, %v6059
  %v6174 = vmax.f32 %v5972, %v6061
  %v6175 = vmax.f32 %v5973, %v6063
  %v6176 = vmax.f32 %v5974, %v6065
  %v6177 = vmax.f32 %v5975, %v6067
  %v6178 = vmax.f32 %v5976, %v6069
  %v6179 = vmax.f32 %v5977, %v6071
  %v6180 = vmax.f32 %v5978, %v6073
  %v6181 = vmax.f32 %v5979, %v6075
  %v6182 = vmax.f32 %v5980, %v6077
  %v6183 = vmax.f32 %v5981, %v6079
  %v6184 = vmax.f32 %v5982, %v6081
  %v6185 = vmax.f32 %v5983, %v6083
  %v6186 = vmax.f32 %v5984, %v6085
  %v6187 = vmax.f32 %v5985, %v6087
  %v6188 = vmax.f32 %v5986, %v6089
  %v6189 = vmax.f32 %v5987, %v6091
  %v6190 = vmax.f32 %v5988, %v6093
  %v6191 = vmax.f32 %v5989, %v6095
  %v6192 = vmax.f32 %v5990, %v6097
  %v6193 = vmax.f32 %v5991, %v6099
  %v6194 = vmax.f32 %v5992, %v6101
  %v6195 = vmax.f32 %v5993, %v6103
  %v6196 = vmax.f32 %v5994, %v6105
  %v6197 = vmax.f32 %v5995, %v6107
  %v6198 = vmax.f32 %v5996, %v6109
  %v6199 = vmax.f32 %v5997, %v6111
  %v6200 = vmax.f32 %v5998, %v6113
  %v6201 = vmax.f32 %v5999, %v6115
  %v6202 = vmax.f32 %v6000, %v6117
  %v6203 = vmax.f32 %v6001, %v6119
  %v6204 = vmax.f32 %v6002, %v6121
  %v6205 = vmax.f32 %v6003, %v6123
  %v6206 = vmax.f32 %v6004, %v6125
  %v6207 = vmax.f32 %v6005, %v6127
  %v6208 = vmax.f32 %v6006, %v6129
  %v6209 = vmax.f32 %v6007, %v6131
  %v6210 = vmax.f32 %v6008, %v6128
  %v6211 = vmax.f32 %v6009, %v6130
  %6252 = vrot.lane.b32.xlu0 %v6172, 112
  %v6253 = vpop.permute.xlu0 %6252
  %6254 = vrot.lane.b32.xlu0 %v6173, 112
  %v6255 = vpop.permute.xlu0 %6254
  %6256 = vrot.lane.b32.xlu0 %v6174, 112
  %v6257 = vpop.permute.xlu0 %6256
  %6258 = vrot.lane.b32.xlu0 %v6175, 112
  %v6259 = vpop.permute.xlu0 %6258
  %6260 = vrot.lane.b32.xlu0 %v6176, 112
  %v6261 = vpop.permute.xlu0 %6260
  %6262 = vrot.lane.b32.xlu0 %v6177, 112
  %v6263 = vpop.permute.xlu0 %6262
  %6264 = vrot.lane.b32.xlu0 %v6178, 112
  %v6265 = vpop.permute.xlu0 %6264
  %6266 = vrot.lane.b32.xlu0 %v6179, 112
  %v6267 = vpop.permute.xlu0 %6266
  %6268 = vrot.lane.b32.xlu0 %v6180, 112
  %v6269 = vpop.permute.xlu0 %6268
  %6270 = vrot.lane.b32.xlu0 %v6181, 112
  %v6271 = vpop.permute.xlu0 %6270
  %6272 = vrot.lane.b32.xlu0 %v6182, 112
  %v6273 = vpop.permute.xlu0 %6272
  %6274 = vrot.lane.b32.xlu0 %v6183, 112
  %v6275 = vpop.permute.xlu0 %6274
  %6276 = vrot.lane.b32.xlu0 %v6184, 112
  %v6277 = vpop.permute.xlu0 %6276
  %6278 = vrot.lane.b32.xlu0 %v6185, 112
  %v6279 = vpop.permute.xlu0 %6278
  %6280 = vrot.lane.b32.xlu0 %v6186, 112
  %v6281 = vpop.permute.xlu0 %6280
  %6282 = vrot.lane.b32.xlu0 %v6187, 112
  %v6283 = vpop.permute.xlu0 %6282
  %6284 = vrot.lane.b32.xlu0 %v6188, 112
  %v6285 = vpop.permute.xlu0 %6284
  %6286 = vrot.lane.b32.xlu0 %v6189, 112
  %v6287 = vpop.permute.xlu0 %6286
  %6288 = vrot.lane.b32.xlu0 %v6190, 112
  %v6289 = vpop.permute.xlu0 %6288
  %6290 = vrot.lane.b32.xlu0 %v6191, 112
  %v6291 = vpop.permute.xlu0 %6290
  %6292 = vrot.lane.b32.xlu0 %v6192, 112
  %v6293 = vpop.permute.xlu0 %6292
  %6294 = vrot.lane.b32.xlu0 %v6193, 112
  %v6295 = vpop.permute.xlu0 %6294
  %6296 = vrot.lane.b32.xlu0 %v6194, 112
  %v6297 = vpop.permute.xlu0 %6296
  %6298 = vrot.lane.b32.xlu0 %v6195, 112
  %v6299 = vpop.permute.xlu0 %6298
  %6300 = vrot.lane.b32.xlu0 %v6196, 112
  %v6301 = vpop.permute.xlu0 %6300
  %6302 = vrot.lane.b32.xlu0 %v6197, 112
  %v6303 = vpop.permute.xlu0 %6302
  %6304 = vrot.lane.b32.xlu0 %v6198, 112
  %v6305 = vpop.permute.xlu0 %6304
  %6306 = vrot.lane.b32.xlu0 %v6199, 112
  %v6307 = vpop.permute.xlu0 %6306
  %6308 = vrot.lane.b32.xlu0 %v6200, 112
  %v6309 = vpop.permute.xlu0 %6308
  %6310 = vrot.lane.b32.xlu0 %v6201, 112
  %v6311 = vpop.permute.xlu0 %6310
  %6312 = vrot.lane.b32.xlu0 %v6202, 112
  %v6313 = vpop.permute.xlu0 %6312
  %6314 = vrot.lane.b32.xlu0 %v6203, 112
  %v6315 = vpop.permute.xlu0 %6314
  %6316 = vrot.lane.b32.xlu0 %v6204, 112
  %v6317 = vpop.permute.xlu0 %6316
  %6318 = vrot.lane.b32.xlu0 %v6205, 112
  %v6319 = vpop.permute.xlu0 %6318
  %6320 = vrot.lane.b32.xlu0 %v6206, 112
  %v6321 = vpop.permute.xlu0 %6320
  %6322 = vrot.lane.b32.xlu0 %v6207, 112
  %v6323 = vpop.permute.xlu0 %6322
  %6324 = vrot.lane.b32.xlu0 %v6208, 112
  %v6325 = vpop.permute.xlu0 %6324
  %6326 = vrot.lane.b32.xlu0 %v6209, 112
  %v6327 = vpop.permute.xlu0 %6326
  %6328 = vrot.lane.b32.xlu0 %v6210, 112
  %v6329 = vpop.permute.xlu0 %6328
  %6330 = vrot.lane.b32.xlu0 %v6211, 112
  %v6331 = vpop.permute.xlu0 %6330
  %vm6332 = vcmask 916480
  %v6333 = vsel %vm6332, %v6253, %v6255
  %v6334 = vsel %vm6332, %v6257, %v6259
  %v6335 = vsel %vm6332, %v6261, %v6263
  %v6336 = vsel %vm6332, %v6265, %v6267
  %v6337 = vsel %vm6332, %v6269, %v6271
  %v6338 = vsel %vm6332, %v6273, %v6275
  %v6339 = vsel %vm6332, %v6277, %v6279
  %v6340 = vsel %vm6332, %v6281, %v6283
  %v6341 = vsel %vm6332, %v6285, %v6287
  %v6342 = vsel %vm6332, %v6289, %v6291
  %v6343 = vsel %vm6332, %v6293, %v6295
  %v6344 = vsel %vm6332, %v6297, %v6299
  %v6345 = vsel %vm6332, %v6301, %v6303
  %v6346 = vsel %vm6332, %v6305, %v6307
  %v6347 = vsel %vm6332, %v6309, %v6311
  %v6348 = vsel %vm6332, %v6313, %v6315
  %v6349 = vsel %vm6332, %v6317, %v6319
  %v6350 = vsel %vm6332, %v6321, %v6323
  %v6351 = vsel %vm6332, %v6325, %v6327
  %v6352 = vsel %vm6332, %v6329, %v6331
  %v6393 = vmax.f32 %v6172, %v6333
  %v6394 = vmax.f32 %v6173, %v6255
  %v6395 = vmax.f32 %v6174, %v6334
  %v6396 = vmax.f32 %v6175, %v6259
  %v6397 = vmax.f32 %v6176, %v6335
  %v6398 = vmax.f32 %v6177, %v6263
  %v6399 = vmax.f32 %v6178, %v6336
  %v6400 = vmax.f32 %v6179, %v6267
  %v6401 = vmax.f32 %v6180, %v6337
  %v6402 = vmax.f32 %v6181, %v6271
  %v6403 = vmax.f32 %v6182, %v6338
  %v6404 = vmax.f32 %v6183, %v6275
  %v6405 = vmax.f32 %v6184, %v6339
  %v6406 = vmax.f32 %v6185, %v6279
  %v6407 = vmax.f32 %v6186, %v6340
  %v6408 = vmax.f32 %v6187, %v6283
  %v6409 = vmax.f32 %v6188, %v6341
  %v6410 = vmax.f32 %v6189, %v6287
  %v6411 = vmax.f32 %v6190, %v6342
  %v6412 = vmax.f32 %v6191, %v6291
  %v6413 = vmax.f32 %v6192, %v6343
  %v6414 = vmax.f32 %v6193, %v6295
  %v6415 = vmax.f32 %v6194, %v6344
  %v6416 = vmax.f32 %v6195, %v6299
  %v6417 = vmax.f32 %v6196, %v6345
  %v6418 = vmax.f32 %v6197, %v6303
  %v6419 = vmax.f32 %v6198, %v6346
  %v6420 = vmax.f32 %v6199, %v6307
  %v6421 = vmax.f32 %v6200, %v6347
  %v6422 = vmax.f32 %v6201, %v6311
  %v6423 = vmax.f32 %v6202, %v6348
  %v6424 = vmax.f32 %v6203, %v6315
  %v6425 = vmax.f32 %v6204, %v6349
  %v6426 = vmax.f32 %v6205, %v6319
  %v6427 = vmax.f32 %v6206, %v6350
  %v6428 = vmax.f32 %v6207, %v6323
  %v6429 = vmax.f32 %v6208, %v6351
  %v6430 = vmax.f32 %v6209, %v6327
  %v6431 = vmax.f32 %v6210, %v6352
  %v6432 = vmax.f32 %v6211, %v6331
  %6433 = vst [vmem:[#allocation5] sm:$0xff] %v6393
  %vm6434 = vcmask 64512
  %6435 = vst.msk [vmem:[#allocation5 + $0x8] sm:$0xff] %vm6434, %v6394
  %6436 = vst [vmem:[#allocation5 + $0x10] sm:$0xff] %v6395
  %6437 = vst.msk [vmem:[#allocation5 + $0x18] sm:$0xff] %vm6434, %v6396
  %6438 = vst [vmem:[#allocation5 + $0x20] sm:$0xff] %v6397
  %6439 = vst.msk [vmem:[#allocation5 + $0x28] sm:$0xff] %vm6434, %v6398
  %6440 = vst [vmem:[#allocation5 + $0x30] sm:$0xff] %v6399
  %6441 = vst.msk [vmem:[#allocation5 + $0x38] sm:$0xff] %vm6434, %v6400
  %6442 = vst [vmem:[#allocation5 + $0x40] sm:$0xff] %v6401
  %6443 = vst.msk [vmem:[#allocation5 + $0x48] sm:$0xff] %vm6434, %v6402
  %6444 = vst [vmem:[#allocation5 + $0x50] sm:$0xff] %v6403
  %6445 = vst.msk [vmem:[#allocation5 + $0x58] sm:$0xff] %vm6434, %v6404
  %6446 = vst [vmem:[#allocation5 + $0x60] sm:$0xff] %v6405
  %6447 = vst.msk [vmem:[#allocation5 + $0x68] sm:$0xff] %vm6434, %v6406
  %6448 = vst [vmem:[#allocation5 + $0x70] sm:$0xff] %v6407
  %6449 = vst.msk [vmem:[#allocation5 + $0x78] sm:$0xff] %vm6434, %v6408
  %6450 = vst [vmem:[#allocation5 + $0x80] sm:$0xff] %v6409
  %6451 = vst.msk [vmem:[#allocation5 + $0x88] sm:$0xff] %vm6434, %v6410
  %6452 = vst [vmem:[#allocation5 + $0x90] sm:$0xff] %v6411
  %6453 = vst.msk [vmem:[#allocation5 + $0x98] sm:$0xff] %vm6434, %v6412
  %6454 = vst [vmem:[#allocation5 + $0xa0] sm:$0xff] %v6413
  %6455 = vst.msk [vmem:[#allocation5 + $0xa8] sm:$0xff] %vm6434, %v6414
  %6456 = vst [vmem:[#allocation5 + $0xb0] sm:$0xff] %v6415
  %6457 = vst.msk [vmem:[#allocation5 + $0xb8] sm:$0xff] %vm6434, %v6416
  %6458 = vst [vmem:[#allocation5 + $0xc0] sm:$0xff] %v6417
  %6459 = vst.msk [vmem:[#allocation5 + $0xc8] sm:$0xff] %vm6434, %v6418
  %6460 = vst [vmem:[#allocation5 + $0xd0] sm:$0xff] %v6419
  %6461 = vst.msk [vmem:[#allocation5 + $0xd8] sm:$0xff] %vm6434, %v6420
  %6462 = vst [vmem:[#allocation5 + $0xe0] sm:$0xff] %v6421
  %6463 = vst.msk [vmem:[#allocation5 + $0xe8] sm:$0xff] %vm6434, %v6422
  %6464 = vst [vmem:[#allocation5 + $0xf0] sm:$0xff] %v6423
  %6465 = vst.msk [vmem:[#allocation5 + $0xf8] sm:$0xff] %vm6434, %v6424
  %6466 = vst [vmem:[#allocation5 + $0x100] sm:$0xff] %v6425
  %6467 = vst.msk [vmem:[#allocation5 + $0x108] sm:$0xff] %vm6434, %v6426
  %6468 = vst [vmem:[#allocation5 + $0x110] sm:$0xff] %v6427
  %6469 = vst.msk [vmem:[#allocation5 + $0x118] sm:$0xff] %vm6434, %v6428
  %6470 = vst [vmem:[#allocation5 + $0x120] sm:$0xff] %v6429
  %6471 = vst.msk [vmem:[#allocation5 + $0x128] sm:$0xff] %vm6434, %v6430
  %6472 = vst [vmem:[#allocation5 + $0x130] sm:$0x7f] %v6431
  %vm6473 = vcmask 63488
  %6474 = vst.msk [vmem:[#allocation5 + $0x138] sm:$0x7f] %vm6473, %v6432
  %v6475 = vld [vmem:[#allocation5] sm:$0xff]
  %v6476 = vld [vmem:[#allocation5 + $0x10] sm:$0xff]
  %v6477 = vld [vmem:[#allocation5 + $0x20] sm:$0xff]
  %v6478 = vld [vmem:[#allocation5 + $0x30] sm:$0xff]
  %v6479 = vld [vmem:[#allocation5 + $0x40] sm:$0xff]
  %v6480 = vld [vmem:[#allocation5 + $0x50] sm:$0xff]
  %v6481 = vld [vmem:[#allocation5 + $0x60] sm:$0xff]
  %v6482 = vld [vmem:[#allocation5 + $0x70] sm:$0xff]
  %v6483 = vld [vmem:[#allocation5 + $0x80] sm:$0xff]
  %v6484 = vld [vmem:[#allocation5 + $0x90] sm:$0xff]
  %v6485 = vld [vmem:[#allocation5 + $0xa0] sm:$0xff]
  %v6486 = vld [vmem:[#allocation5 + $0xb0] sm:$0xff]
  %v6487 = vld [vmem:[#allocation5 + $0xc0] sm:$0xff]
  %v6488 = vld [vmem:[#allocation5 + $0xd0] sm:$0xff]
  %v6489 = vld [vmem:[#allocation5 + $0xe0] sm:$0xff]
  %v6490 = vld [vmem:[#allocation5 + $0xf0] sm:$0xff]
  %v6491 = vld [vmem:[#allocation5 + $0x100] sm:$0xff]
  %v6492 = vld [vmem:[#allocation5 + $0x110] sm:$0xff]
  %v6493 = vld [vmem:[#allocation5 + $0x120] sm:$0xff]
  %v6494 = vld [vmem:[#allocation5 + $0x130] sm:$0x7f]
  %v6495 = vpack.c.bf16 %v6476, %v6475
  %v6496 = vpack.c.bf16 %v6478, %v6477
  %v6497 = vpack.c.bf16 %v6480, %v6479
  %v6498 = vpack.c.bf16 %v6482, %v6481
  %v6499 = vpack.c.bf16 %v6484, %v6483
  %v6500 = vpack.c.bf16 %v6486, %v6485
  %v6501 = vpack.c.bf16 %v6488, %v6487
  %v6502 = vpack.c.bf16 %v6490, %v6489
  %v6503 = vpack.c.bf16 %v6492, %v6491
  %v6504 = vpack.c.bf16 %v6494, %v6493
  %v6505 = vld [vmem:[%s5] sm:$0xff]
  %v6506 = vld [vmem:[%s5 + $0x8] sm:$0xff]
  %v6507 = vld [vmem:[%s5 + $0x10] sm:$0xff]
  %v6508 = vld [vmem:[%s5 + $0x18] sm:$0xff]
  %v6509 = vld [vmem:[%s5 + $0x20] sm:$0xff]
  %v6510 = vld [vmem:[%s5 + $0x28] sm:$0xff]
  %v6511 = vld [vmem:[%s5 + $0x30] sm:$0xff]
  %v6512 = vld [vmem:[%s5 + $0x38] sm:$0xff]
  %v6513 = vld [vmem:[%s5 + $0x40] sm:$0xff]
  %v6514 = vld [vmem:[%s5 + $0x48] sm:$0xff]
  %v6515 = vld [vmem:[%s5 + $0x50] sm:$0xff]
  %v6516 = vld [vmem:[%s5 + $0x58] sm:$0xff]
  %v6517 = vld [vmem:[%s5 + $0x60] sm:$0xff]
  %v6518 = vld [vmem:[%s5 + $0x68] sm:$0xff]
  %v6519 = vld [vmem:[%s5 + $0x70] sm:$0xff]
  %v6520 = vld [vmem:[%s5 + $0x78] sm:$0xff]
  %v6521 = vld [vmem:[%s5 + $0x80] sm:$0xff]
  %v6522 = vld [vmem:[%s5 + $0x88] sm:$0xff]
  %v6523 = vld [vmem:[%s5 + $0x90] sm:$0xff]
  %v6524 = vld [vmem:[%s5 + $0x98] sm:$0xff]
  %v6525 = vld [vmem:[%s5 + $0xa0] sm:$0xff]
  %v6526 = vld [vmem:[%s5 + $0xa8] sm:$0xff]
  %v6527 = vld [vmem:[%s5 + $0xb0] sm:$0xff]
  %v6528 = vld [vmem:[%s5 + $0xb8] sm:$0xff]
  %v6529 = vld [vmem:[%s5 + $0xc0] sm:$0xff]
  %s6530 = scalar_lea.vmem %s5, 200
  %v6531 = vld [vmem:[%s6530] sm:$0xff]
  %v6532 = vld [vmem:[%s6530 + $0x8] sm:$0xff]
  %v6533 = vld [vmem:[%s6530 + $0x10] sm:$0xff]
  %v6534 = vld [vmem:[%s6530 + $0x18] sm:$0xff]
  %v6535 = vld [vmem:[%s6530 + $0x20] sm:$0xff]
  %v6536 = vld [vmem:[%s6530 + $0x28] sm:$0xff]
  %v6537 = vld [vmem:[%s6530 + $0x30] sm:$0xff]
  %v6538 = vld [vmem:[%s6530 + $0x38] sm:$0xff]
  %v6539 = vld [vmem:[%s6530 + $0x40] sm:$0xff]
  %v6540 = vld [vmem:[%s6530 + $0x48] sm:$0xff]
  %v6541 = vld [vmem:[%s6530 + $0x50] sm:$0xff]
  %v6542 = vld [vmem:[%s6530 + $0x58] sm:$0xff]
  %v6543 = vld [vmem:[%s6530 + $0x60] sm:$0xff]
  %v6544 = vld [vmem:[%s6530 + $0x68] sm:$0xff]
  %v6545 = vld [vmem:[%s6530 + $0x70] sm:$0xff]
  %v6546 = vld [vmem:[%s6530 + $0x78] sm:$0xff]
  %v6547 = vld [vmem:[%s6530 + $0x80] sm:$0xff]
  %v6548 = vld [vmem:[%s6530 + $0x88] sm:$0xff]
  %v6549 = vld [vmem:[%s6530 + $0x90] sm:$0xff]
  %v6550 = vld [vmem:[%s6530 + $0x98] sm:$0xff]
  %v6551 = vld [vmem:[%s6530 + $0xa0] sm:$0xff]
  %v6552 = vld [vmem:[%s6530 + $0xa8] sm:$0xff]
  %v6553 = vld [vmem:[%s6530 + $0xb0] sm:$0xff]
  %v6554 = vld [vmem:[%s6530 + $0xb8] sm:$0xff]
  %v6555 = vld [vmem:[%s6530 + $0xc0] sm:$0xff]
  %v6581 = vunpack.c.l.b16 %v6531
  %v6582 = vunpack.c.h.b16 %v6531
  %v6583 = vunpack.c.l.b16 %v6532
  %v6584 = vunpack.c.h.b16 %v6532
  %v6585 = vunpack.c.l.b16 %v6533
  %v6586 = vunpack.c.h.b16 %v6533
  %v6587 = vunpack.c.l.b16 %v6534
  %v6588 = vunpack.c.h.b16 %v6534
  %v6589 = vunpack.c.l.b16 %v6535
  %v6590 = vunpack.c.h.b16 %v6535
  %v6591 = vunpack.c.l.b16 %v6536
  %v6592 = vunpack.c.h.b16 %v6536
  %v6593 = vunpack.c.l.b16 %v6537
  %v6594 = vunpack.c.h.b16 %v6537
  %v6595 = vunpack.c.l.b16 %v6538
  %v6596 = vunpack.c.h.b16 %v6538
  %v6597 = vunpack.c.l.b16 %v6539
  %v6598 = vunpack.c.h.b16 %v6539
  %v6599 = vunpack.c.l.b16 %v6540
  %v6600 = vunpack.c.h.b16 %v6540
  %v6601 = vunpack.c.l.b16 %v6541
  %v6602 = vunpack.c.h.b16 %v6541
  %v6603 = vunpack.c.l.b16 %v6542
  %v6604 = vunpack.c.h.b16 %v6542
  %v6605 = vunpack.c.l.b16 %v6543
  %v6606 = vunpack.c.h.b16 %v6543
  %v6607 = vunpack.c.l.b16 %v6544
  %v6608 = vunpack.c.h.b16 %v6544
  %v6609 = vunpack.c.l.b16 %v6545
  %v6610 = vunpack.c.h.b16 %v6545
  %v6611 = vunpack.c.l.b16 %v6546
  %v6612 = vunpack.c.h.b16 %v6546
  %v6613 = vunpack.c.l.b16 %v6547
  %v6614 = vunpack.c.h.b16 %v6547
  %v6615 = vunpack.c.l.b16 %v6548
  %v6616 = vunpack.c.h.b16 %v6548
  %v6617 = vunpack.c.l.b16 %v6549
  %v6618 = vunpack.c.h.b16 %v6549
  %v6619 = vunpack.c.l.b16 %v6550
  %v6620 = vunpack.c.h.b16 %v6550
  %v6621 = vunpack.c.l.b16 %v6551
  %v6622 = vunpack.c.h.b16 %v6551
  %v6623 = vunpack.c.l.b16 %v6552
  %v6624 = vunpack.c.h.b16 %v6552
  %v6625 = vunpack.c.l.b16 %v6553
  %v6626 = vunpack.c.h.b16 %v6553
  %v6627 = vunpack.c.l.b16 %v6554
  %v6628 = vunpack.c.h.b16 %v6554
  %v6629 = vunpack.c.l.b16 %v6555
  %v6630 = vunpack.c.h.b16 %v6555
  %v6631 = vpack.c.b16 %v6583, %v6581
  %v6632 = vpack.c.b16 %v6584, %v6582
  %v6633 = vpack.c.b16 %v6587, %v6585
  %v6634 = vpack.c.b16 %v6588, %v6586
  %v6635 = vpack.c.b16 %v6591, %v6589
  %v6636 = vpack.c.b16 %v6592, %v6590
  %v6637 = vpack.c.b16 %v6595, %v6593
  %v6638 = vpack.c.b16 %v6596, %v6594
  %v6639 = vpack.c.b16 %v6599, %v6597
  %v6640 = vpack.c.b16 %v6600, %v6598
  %v6641 = vpack.c.b16 %v6603, %v6601
  %v6642 = vpack.c.b16 %v6604, %v6602
  %v6643 = vpack.c.b16 %v6607, %v6605
  %v6644 = vpack.c.b16 %v6608, %v6606
  %v6645 = vpack.c.b16 %v6611, %v6609
  %v6646 = vpack.c.b16 %v6612, %v6610
  %v6647 = vpack.c.b16 %v6615, %v6613
  %v6648 = vpack.c.b16 %v6616, %v6614
  %v6649 = vpack.c.b16 %v6619, %v6617
  %v6650 = vpack.c.b16 %v6620, %v6618
  %v6651 = vpack.c.b16 %v6623, %v6621
  %v6652 = vpack.c.b16 %v6624, %v6622
  %v6653 = vpack.c.b16 %v6627, %v6625
  %v6654 = vpack.c.b16 %v6628, %v6626
  %v6655 = vpack.c.b16 %v6629, %v6629
  %v6656 = vpack.c.b16 %v6630, %v6630
  %6680 = vrot.lane.b32.xlu0 %v6495, 96
  %v6681 = vpop.permute.xlu0 %6680
  %6682 = vrot.lane.b32.xlu0 %v6496, 96
  %v6683 = vpop.permute.xlu0 %6682
  %6684 = vrot.lane.b32.xlu0 %v6497, 96
  %v6685 = vpop.permute.xlu0 %6684
  %6686 = vrot.lane.b32.xlu0 %v6498, 96
  %v6687 = vpop.permute.xlu0 %6686
  %6688 = vrot.lane.b32.xlu0 %v6499, 96
  %v6689 = vpop.permute.xlu0 %6688
  %6690 = vrot.lane.b32.xlu0 %v6500, 96
  %v6691 = vpop.permute.xlu0 %6690
  %6692 = vrot.lane.b32.xlu0 %v6501, 96
  %v6693 = vpop.permute.xlu0 %6692
  %6694 = vrot.lane.b32.xlu0 %v6502, 96
  %v6695 = vpop.permute.xlu0 %6694
  %6696 = vrot.lane.b32.xlu0 %v6503, 96
  %v6697 = vpop.permute.xlu0 %6696
  %6698 = vrot.lane.b32.xlu0 %v6504, 96
  %v6699 = vpop.permute.xlu0 %6698
  %vm6709 = vcmask 252928
  %v6711 = vsel %vm6709, %v6632, 0
  %v6714 = vsel %vm6709, %v6634, 0
  %v6717 = vsel %vm6709, %v6636, 0
  %v6720 = vsel %vm6709, %v6638, 0
  %v6723 = vsel %vm6709, %v6640, 0
  %v6726 = vsel %vm6709, %v6642, 0
  %v6729 = vsel %vm6709, %v6644, 0
  %v6732 = vsel %vm6709, %v6646, 0
  %v6735 = vsel %vm6709, %v6648, 0
  %v6738 = vsel %vm6709, %v6650, 0
  %v6741 = vsel %vm6709, %v6652, 0
  %v6744 = vsel %vm6709, %v6654, 0
  %v6747 = vsel %vm6709, %v6656, 0
  %vm6749 = vcmask 1047552
  %v6750 = vsel %vm2612, 4294967295, 65535
  %v6751 = vsel %vm6749, %v6750, 0
  %v6753 = vand.u32 %v6699, %v6751
  %6755 = vmatprep.subr.bf16.mxu0 0
  %6756 = vmatpush1.bf16.msra.mxu0 %v6695
  %6757 = vmatprep.subr.bf16.mxu0 0
  %6758 = vmatpush1.bf16.msra.mxu0 %v6693
  %6759 = vmatprep.subr.bf16.mxu0 0
  %6760 = vmatpush1.bf16.msra.mxu0 %v6691
  %6761 = vmatprep.subr.bf16.mxu0 0
  %6762 = vmatpush1.bf16.msra.mxu0 %v6689
  %6763 = vmatprep.subr.bf16.mxu0 0
  %6764 = vmatpush1.bf16.msra.mxu0 %v6687
  %6765 = vmatprep.subr.bf16.mxu0 0
  %6766 = vmatpush1.bf16.msra.mxu0 %v6685
  %6767 = vmatprep.subr.bf16.mxu0 0
  %6768 = vmatpush1.bf16.msra.mxu0 %v6683
  %6769 = vmatprep.subr.bf16.mxu0 0
  %6770 = vmatpush1.bf16.msra.mxu0 %v6681
  %6771 = vmatprep.subr.bf16.mxu0 0
  %6772 = vmatpush2.bf16.msra.mxu0 0
  %6773 = vmatprep.subr.bf16.mxu0 0
  %6774 = vmatpush2.bf16.msra.mxu0 0
  %6775 = vmatprep.subr.bf16.mxu0 0
  %6776 = vmatpush2.bf16.msra.mxu0 0
  %6777 = vmatprep.subr.bf16.mxu0 0
  %6778 = vmatpush2.bf16.msra.mxu0 0
  %6779 = vmatprep.subr.bf16.mxu0 0
  %6780 = vmatpush2.bf16.msra.mxu0 0
  %6781 = vmatprep.subr.bf16.mxu0 0
  %6782 = vmatpush2.bf16.msra.mxu0 0
  %6783 = vmatprep.subr.bf16.mxu0 0
  %6784 = vmatpush2.bf16.msra.mxu0 %v6753
  %6785 = vmatprep.subr.bf16.mxu0 0
  %6786 = vmatpush2.bf16.msra.mxu0 %v6697
  %6787 = vmatprep.mubr.bf16.mxu0 %v6711
  %6788 = vmatmul.mubr.bf16.gmra.mxu0 %v6631
  %v6789 = vpop.f32.mrf.mxu0
  %v6790 = vadd.f32 0.0, %v6789
  %v6791 = vpop.f32.mrf.mxu0
  %v6792 = vpop.f32.mrf.mxu0
  %v6793 = vadd.f32 0.0, %v6792
  %v6794 = vpop.f32.mrf.mxu0
  %6795 = vmatprep.mubr.bf16.mxu0 %v6714
  %6796 = vmatmul.mubr.bf16.gmra.mxu0 %v6633
  %v6797 = vpop.f32.mrf.mxu0
  %v6798 = vadd.f32 0.0, %v6797
  %v6799 = vpop.f32.mrf.mxu0
  %v6800 = vpop.f32.mrf.mxu0
  %v6801 = vadd.f32 0.0, %v6800
  %v6802 = vpop.f32.mrf.mxu0
  %6803 = vmatprep.mubr.bf16.mxu0 %v6717
  %6804 = vmatmul.mubr.bf16.gmra.mxu0 %v6635
  %v6805 = vpop.f32.mrf.mxu0
  %v6806 = vadd.f32 0.0, %v6805
  %v6807 = vpop.f32.mrf.mxu0
  %v6808 = vpop.f32.mrf.mxu0
  %v6809 = vadd.f32 0.0, %v6808
  %v6810 = vpop.f32.mrf.mxu0
  %6811 = vmatprep.mubr.bf16.mxu0 %v6720
  %6812 = vmatmul.mubr.bf16.gmra.mxu0 %v6637
  %v6813 = vpop.f32.mrf.mxu0
  %v6814 = vadd.f32 0.0, %v6813
  %v6815 = vpop.f32.mrf.mxu0
  %v6816 = vpop.f32.mrf.mxu0
  %v6817 = vadd.f32 0.0, %v6816
  %v6818 = vpop.f32.mrf.mxu0
  %6819 = vmatprep.mubr.bf16.mxu0 %v6723
  %6820 = vmatmul.mubr.bf16.gmra.mxu0 %v6639
  %v6821 = vpop.f32.mrf.mxu0
  %v6822 = vadd.f32 0.0, %v6821
  %v6823 = vpop.f32.mrf.mxu0
  %v6824 = vpop.f32.mrf.mxu0
  %v6825 = vadd.f32 0.0, %v6824
  %v6826 = vpop.f32.mrf.mxu0
  %6827 = vmatprep.mubr.bf16.mxu0 %v6726
  %6828 = vmatmul.mubr.bf16.gmra.mxu0 %v6641
  %v6829 = vpop.f32.mrf.mxu0
  %v6830 = vadd.f32 0.0, %v6829
  %v6831 = vpop.f32.mrf.mxu0
  %v6832 = vpop.f32.mrf.mxu0
  %v6833 = vadd.f32 0.0, %v6832
  %v6834 = vpop.f32.mrf.mxu0
  %6835 = vmatprep.mubr.bf16.mxu0 %v6729
  %6836 = vmatmul.mubr.bf16.gmra.mxu0 %v6643
  %v6837 = vpop.f32.mrf.mxu0
  %v6838 = vadd.f32 0.0, %v6837
  %v6839 = vpop.f32.mrf.mxu0
  %v6840 = vpop.f32.mrf.mxu0
  %v6841 = vadd.f32 0.0, %v6840
  %v6842 = vpop.f32.mrf.mxu0
  %6843 = vmatprep.mubr.bf16.mxu0 %v6732
  %6844 = vmatmul.mubr.bf16.gmra.mxu0 %v6645
  %v6845 = vpop.f32.mrf.mxu0
  %v6846 = vadd.f32 0.0, %v6845
  %v6847 = vpop.f32.mrf.mxu0
  %v6848 = vpop.f32.mrf.mxu0
  %v6849 = vadd.f32 0.0, %v6848
  %v6850 = vpop.f32.mrf.mxu0
  %6851 = vmatprep.mubr.bf16.mxu0 %v6735
  %6852 = vmatmul.mubr.bf16.gmra.mxu0 %v6647
  %v6853 = vpop.f32.mrf.mxu0
  %v6854 = vadd.f32 0.0, %v6853
  %v6855 = vpop.f32.mrf.mxu0
  %v6856 = vpop.f32.mrf.mxu0
  %v6857 = vadd.f32 0.0, %v6856
  %v6858 = vpop.f32.mrf.mxu0
  %6859 = vmatprep.mubr.bf16.mxu0 %v6738
  %6860 = vmatmul.mubr.bf16.gmra.mxu0 %v6649
  %v6861 = vpop.f32.mrf.mxu0
  %v6862 = vadd.f32 0.0, %v6861
  %v6863 = vpop.f32.mrf.mxu0
  %v6864 = vpop.f32.mrf.mxu0
  %v6865 = vadd.f32 0.0, %v6864
  %v6866 = vpop.f32.mrf.mxu0
  %6867 = vmatprep.mubr.bf16.mxu0 %v6741
  %6868 = vmatmul.mubr.bf16.gmra.mxu0 %v6651
  %v6869 = vpop.f32.mrf.mxu0
  %v6870 = vadd.f32 0.0, %v6869
  %v6871 = vpop.f32.mrf.mxu0
  %v6872 = vpop.f32.mrf.mxu0
  %v6873 = vadd.f32 0.0, %v6872
  %v6874 = vpop.f32.mrf.mxu0
  %6875 = vmatprep.mubr.bf16.mxu0 %v6744
  %6876 = vmatmul.mubr.bf16.gmra.mxu0 %v6653
  %v6877 = vpop.f32.mrf.mxu0
  %v6878 = vadd.f32 0.0, %v6877
  %v6879 = vpop.f32.mrf.mxu0
  %v6880 = vpop.f32.mrf.mxu0
  %v6881 = vadd.f32 0.0, %v6880
  %v6882 = vpop.f32.mrf.mxu0
  %6883 = vmatprep.mubr.bf16.mxu0 %v6747
  %6884 = vmatmul.mubr.bf16.gmra.mxu0 %v6655
  %v6885 = vpop.f32.mrf.mxu0
  %v6886 = vadd.f32 0.0, %v6885
  %v6887 = vpop.f32.mrf.mxu0
  %v6888 = vpop.f32.mrf.mxu0
  %v6889 = vpop.f32.mrf.mxu0
  %6890 = vdwg.mxu0
  %v6916 = vunpack.c.l.b16 %v6505
  %v6917 = vunpack.c.h.b16 %v6505
  %v6918 = vunpack.c.l.b16 %v6506
  %v6919 = vunpack.c.h.b16 %v6506
  %v6920 = vunpack.c.l.b16 %v6507
  %v6921 = vunpack.c.h.b16 %v6507
  %v6922 = vunpack.c.l.b16 %v6508
  %v6923 = vunpack.c.h.b16 %v6508
  %v6924 = vunpack.c.l.b16 %v6509
  %v6925 = vunpack.c.h.b16 %v6509
  %v6926 = vunpack.c.l.b16 %v6510
  %v6927 = vunpack.c.h.b16 %v6510
  %v6928 = vunpack.c.l.b16 %v6511
  %v6929 = vunpack.c.h.b16 %v6511
  %v6930 = vunpack.c.l.b16 %v6512
  %v6931 = vunpack.c.h.b16 %v6512
  %v6932 = vunpack.c.l.b16 %v6513
  %v6933 = vunpack.c.h.b16 %v6513
  %v6934 = vunpack.c.l.b16 %v6514
  %v6935 = vunpack.c.h.b16 %v6514
  %v6936 = vunpack.c.l.b16 %v6515
  %v6937 = vunpack.c.h.b16 %v6515
  %v6938 = vunpack.c.l.b16 %v6516
  %v6939 = vunpack.c.h.b16 %v6516
  %v6940 = vunpack.c.l.b16 %v6517
  %v6941 = vunpack.c.h.b16 %v6517
  %v6942 = vunpack.c.l.b16 %v6518
  %v6943 = vunpack.c.h.b16 %v6518
  %v6944 = vunpack.c.l.b16 %v6519
  %v6945 = vunpack.c.h.b16 %v6519
  %v6946 = vunpack.c.l.b16 %v6520
  %v6947 = vunpack.c.h.b16 %v6520
  %v6948 = vunpack.c.l.b16 %v6521
  %v6949 = vunpack.c.h.b16 %v6521
  %v6950 = vunpack.c.l.b16 %v6522
  %v6951 = vunpack.c.h.b16 %v6522
  %v6952 = vunpack.c.l.b16 %v6523
  %v6953 = vunpack.c.h.b16 %v6523
  %v6954 = vunpack.c.l.b16 %v6524
  %v6955 = vunpack.c.h.b16 %v6524
  %v6956 = vunpack.c.l.b16 %v6525
  %v6957 = vunpack.c.h.b16 %v6525
  %v6958 = vunpack.c.l.b16 %v6526
  %v6959 = vunpack.c.h.b16 %v6526
  %v6960 = vunpack.c.l.b16 %v6527
  %v6961 = vunpack.c.h.b16 %v6527
  %v6962 = vunpack.c.l.b16 %v6528
  %v6963 = vunpack.c.h.b16 %v6528
  %v6964 = vunpack.c.l.b16 %v6529
  %v6965 = vunpack.c.h.b16 %v6529
  %v6966 = vpack.c.b16 %v6918, %v6916
  %v6967 = vpack.c.b16 %v6919, %v6917
  %v6968 = vpack.c.b16 %v6922, %v6920
  %v6969 = vpack.c.b16 %v6923, %v6921
  %v6970 = vpack.c.b16 %v6926, %v6924
  %v6971 = vpack.c.b16 %v6927, %v6925
  %v6972 = vpack.c.b16 %v6930, %v6928
  %v6973 = vpack.c.b16 %v6931, %v6929
  %v6974 = vpack.c.b16 %v6934, %v6932
  %v6975 = vpack.c.b16 %v6935, %v6933
  %v6976 = vpack.c.b16 %v6938, %v6936
  %v6977 = vpack.c.b16 %v6939, %v6937
  %v6978 = vpack.c.b16 %v6942, %v6940
  %v6979 = vpack.c.b16 %v6943, %v6941
  %v6980 = vpack.c.b16 %v6946, %v6944
  %v6981 = vpack.c.b16 %v6947, %v6945
  %v6982 = vpack.c.b16 %v6950, %v6948
  %v6983 = vpack.c.b16 %v6951, %v6949
  %v6984 = vpack.c.b16 %v6954, %v6952
  %v6985 = vpack.c.b16 %v6955, %v6953
  %v6986 = vpack.c.b16 %v6958, %v6956
  %v6987 = vpack.c.b16 %v6959, %v6957
  %v6988 = vpack.c.b16 %v6962, %v6960
  %v6989 = vpack.c.b16 %v6963, %v6961
  %v6990 = vpack.c.b16 %v6964, %v6964
  %v6991 = vpack.c.b16 %v6965, %v6965
  %v7006 = vsel %vm6709, %v6967, 0
  %v7009 = vsel %vm6709, %v6969, 0
  %v7012 = vsel %vm6709, %v6971, 0
  %v7015 = vsel %vm6709, %v6973, 0
  %v7018 = vsel %vm6709, %v6975, 0
  %v7021 = vsel %vm6709, %v6977, 0
  %v7024 = vsel %vm6709, %v6979, 0
  %v7027 = vsel %vm6709, %v6981, 0
  %v7030 = vsel %vm6709, %v6983, 0
  %v7033 = vsel %vm6709, %v6985, 0
  %v7036 = vsel %vm6709, %v6987, 0
  %v7039 = vsel %vm6709, %v6989, 0
  %v7042 = vsel %vm6709, %v6991, 0
  %v7045 = vand.u32 %v6504, %v6751
  %7047 = vmatprep.subr.bf16.mxu0 0
  %7048 = vmatpush1.bf16.msra.mxu0 %v6502
  %7049 = vmatprep.subr.bf16.mxu0 0
  %7050 = vmatpush1.bf16.msra.mxu0 %v6501
  %7051 = vmatprep.subr.bf16.mxu0 0
  %7052 = vmatpush1.bf16.msra.mxu0 %v6500
  %7053 = vmatprep.subr.bf16.mxu0 0
  %7054 = vmatpush1.bf16.msra.mxu0 %v6499
  %7055 = vmatprep.subr.bf16.mxu0 0
  %7056 = vmatpush1.bf16.msra.mxu0 %v6498
  %7057 = vmatprep.subr.bf16.mxu0 0
  %7058 = vmatpush1.bf16.msra.mxu0 %v6497
  %7059 = vmatprep.subr.bf16.mxu0 0
  %7060 = vmatpush1.bf16.msra.mxu0 %v6496
  %7061 = vmatprep.subr.bf16.mxu0 0
  %7062 = vmatpush1.bf16.msra.mxu0 %v6495
  %7063 = vmatprep.subr.bf16.mxu0 0
  %7064 = vmatpush2.bf16.msra.mxu0 0
  %7065 = vmatprep.subr.bf16.mxu0 0
  %7066 = vmatpush2.bf16.msra.mxu0 0
  %7067 = vmatprep.subr.bf16.mxu0 0
  %7068 = vmatpush2.bf16.msra.mxu0 0
  %7069 = vmatprep.subr.bf16.mxu0 0
  %7070 = vmatpush2.bf16.msra.mxu0 0
  %7071 = vmatprep.subr.bf16.mxu0 0
  %7072 = vmatpush2.bf16.msra.mxu0 0
  %7073 = vmatprep.subr.bf16.mxu0 0
  %7074 = vmatpush2.bf16.msra.mxu0 0
  %7075 = vmatprep.subr.bf16.mxu0 0
  %7076 = vmatpush2.bf16.msra.mxu0 %v7045
  %7077 = vmatprep.subr.bf16.mxu0 0
  %7078 = vmatpush2.bf16.msra.mxu0 %v6503
  %7079 = vmatprep.mubr.bf16.mxu0 %v7006
  %7080 = vmatmul.mubr.bf16.gmra.mxu0 %v6966
  %v7081 = vpop.f32.mrf.mxu0
  %v7082 = vadd.f32 %v6790, %v7081
  %v7083 = vpop.f32.mrf.mxu0
  %v7084 = vpop.f32.mrf.mxu0
  %v7085 = vadd.f32 %v6793, %v7084
  %v7086 = vpop.f32.mrf.mxu0
  %7087 = vmatprep.mubr.bf16.mxu0 %v7009
  %7088 = vmatmul.mubr.bf16.gmra.mxu0 %v6968
  %v7089 = vpop.f32.mrf.mxu0
  %v7090 = vadd.f32 %v6798, %v7089
  %v7091 = vpop.f32.mrf.mxu0
  %v7092 = vpop.f32.mrf.mxu0
  %v7093 = vadd.f32 %v6801, %v7092
  %v7094 = vpop.f32.mrf.mxu0
  %7095 = vmatprep.mubr.bf16.mxu0 %v7012
  %7096 = vmatmul.mubr.bf16.gmra.mxu0 %v6970
  %v7097 = vpop.f32.mrf.mxu0
  %v7098 = vadd.f32 %v6806, %v7097
  %v7099 = vpop.f32.mrf.mxu0
  %v7100 = vpop.f32.mrf.mxu0
  %v7101 = vadd.f32 %v6809, %v7100
  %v7102 = vpop.f32.mrf.mxu0
  %7103 = vmatprep.mubr.bf16.mxu0 %v7015
  %7104 = vmatmul.mubr.bf16.gmra.mxu0 %v6972
  %v7105 = vpop.f32.mrf.mxu0
  %v7106 = vadd.f32 %v6814, %v7105
  %v7107 = vpop.f32.mrf.mxu0
  %v7108 = vpop.f32.mrf.mxu0
  %v7109 = vadd.f32 %v6817, %v7108
  %v7110 = vpop.f32.mrf.mxu0
  %7111 = vmatprep.mubr.bf16.mxu0 %v7018
  %7112 = vmatmul.mubr.bf16.gmra.mxu0 %v6974
  %v7113 = vpop.f32.mrf.mxu0
  %v7114 = vadd.f32 %v6822, %v7113
  %v7115 = vpop.f32.mrf.mxu0
  %v7116 = vpop.f32.mrf.mxu0
  %v7117 = vadd.f32 %v6825, %v7116
  %v7118 = vpop.f32.mrf.mxu0
  %7119 = vmatprep.mubr.bf16.mxu0 %v7021
  %7120 = vmatmul.mubr.bf16.gmra.mxu0 %v6976
  %v7121 = vpop.f32.mrf.mxu0
  %v7122 = vadd.f32 %v6830, %v7121
  %v7123 = vpop.f32.mrf.mxu0
  %v7124 = vpop.f32.mrf.mxu0
  %v7125 = vadd.f32 %v6833, %v7124
  %v7126 = vpop.f32.mrf.mxu0
  %7127 = vmatprep.mubr.bf16.mxu0 %v7024
  %7128 = vmatmul.mubr.bf16.gmra.mxu0 %v6978
  %v7129 = vpop.f32.mrf.mxu0
  %v7130 = vadd.f32 %v6838, %v7129
  %v7131 = vpop.f32.mrf.mxu0
  %v7132 = vpop.f32.mrf.mxu0
  %v7133 = vadd.f32 %v6841, %v7132
  %v7134 = vpop.f32.mrf.mxu0
  %7135 = vmatprep.mubr.bf16.mxu0 %v7027
  %7136 = vmatmul.mubr.bf16.gmra.mxu0 %v6980
  %v7137 = vpop.f32.mrf.mxu0
  %v7138 = vadd.f32 %v6846, %v7137
  %v7139 = vpop.f32.mrf.mxu0
  %v7140 = vpop.f32.mrf.mxu0
  %v7141 = vadd.f32 %v6849, %v7140
  %v7142 = vpop.f32.mrf.mxu0
  %7143 = vmatprep.mubr.bf16.mxu0 %v7030
  %7144 = vmatmul.mubr.bf16.gmra.mxu0 %v6982
  %v7145 = vpop.f32.mrf.mxu0
  %v7146 = vadd.f32 %v6854, %v7145
  %v7147 = vpop.f32.mrf.mxu0
  %v7148 = vpop.f32.mrf.mxu0
  %v7149 = vadd.f32 %v6857, %v7148
  %v7150 = vpop.f32.mrf.mxu0
  %7151 = vmatprep.mubr.bf16.mxu0 %v7033
  %7152 = vmatmul.mubr.bf16.gmra.mxu0 %v6984
  %v7153 = vpop.f32.mrf.mxu0
  %v7154 = vadd.f32 %v6862, %v7153
  %v7155 = vpop.f32.mrf.mxu0
  %v7156 = vpop.f32.mrf.mxu0
  %v7157 = vadd.f32 %v6865, %v7156
  %v7158 = vpop.f32.mrf.mxu0
  %7159 = vmatprep.mubr.bf16.mxu0 %v7036
  %7160 = vmatmul.mubr.bf16.gmra.mxu0 %v6986
  %v7161 = vpop.f32.mrf.mxu0
  %v7162 = vadd.f32 %v6870, %v7161
  %v7163 = vpop.f32.mrf.mxu0
  %v7164 = vpop.f32.mrf.mxu0
  %v7165 = vadd.f32 %v6873, %v7164
  %v7166 = vpop.f32.mrf.mxu0
  %7167 = vmatprep.mubr.bf16.mxu0 %v7039
  %7168 = vmatmul.mubr.bf16.gmra.mxu0 %v6988
  %v7169 = vpop.f32.mrf.mxu0
  %v7170 = vadd.f32 %v6878, %v7169
  %v7171 = vpop.f32.mrf.mxu0
  %v7172 = vpop.f32.mrf.mxu0
  %v7173 = vadd.f32 %v6881, %v7172
  %v7174 = vpop.f32.mrf.mxu0
  %7175 = vmatprep.mubr.bf16.mxu0 %v7042
  %7176 = vmatmul.mubr.bf16.gmra.mxu0 %v6990
  %v7177 = vpop.f32.mrf.mxu0
  %v7178 = vadd.f32 %v6886, %v7177
  %v7179 = vpop.f32.mrf.mxu0
  %v7180 = vpop.f32.mrf.mxu0
  %v7181 = vpop.f32.mrf.mxu0
  %7182 = vdwg.mxu0
  %s7183 = scalar_lea.vmem %s5, 400
  %v7184 = vld [vmem:[%s7183] sm:$0xff]
  %v7185 = vld [vmem:[%s7183 + $0x8] sm:$0xff]
  %v7186 = vld [vmem:[%s7183 + $0x10] sm:$0xff]
  %v7187 = vld [vmem:[%s7183 + $0x18] sm:$0xff]
  %v7188 = vld [vmem:[%s7183 + $0x20] sm:$0xff]
  %v7189 = vld [vmem:[%s7183 + $0x28] sm:$0xff]
  %v7190 = vld [vmem:[%s7183 + $0x30] sm:$0xff]
  %v7191 = vld [vmem:[%s7183 + $0x38] sm:$0xff]
  %v7192 = vld [vmem:[%s7183 + $0x40] sm:$0xff]
  %v7193 = vld [vmem:[%s7183 + $0x48] sm:$0xff]
  %v7194 = vld [vmem:[%s7183 + $0x50] sm:$0xff]
  %v7195 = vld [vmem:[%s7183 + $0x58] sm:$0xff]
  %v7196 = vld [vmem:[%s7183 + $0x60] sm:$0xff]
  %v7197 = vld [vmem:[%s7183 + $0x68] sm:$0xff]
  %v7198 = vld [vmem:[%s7183 + $0x70] sm:$0xff]
  %v7199 = vld [vmem:[%s7183 + $0x78] sm:$0xff]
  %v7200 = vld [vmem:[%s7183 + $0x80] sm:$0xff]
  %v7201 = vld [vmem:[%s7183 + $0x88] sm:$0xff]
  %v7202 = vld [vmem:[%s7183 + $0x90] sm:$0xff]
  %v7203 = vld [vmem:[%s7183 + $0x98] sm:$0xff]
  %v7204 = vld [vmem:[%s7183 + $0xa0] sm:$0xff]
  %v7205 = vld [vmem:[%s7183 + $0xa8] sm:$0xff]
  %v7206 = vld [vmem:[%s7183 + $0xb0] sm:$0xff]
  %v7207 = vld [vmem:[%s7183 + $0xb8] sm:$0xff]
  %v7208 = vld [vmem:[%s7183 + $0xc0] sm:$0xff]
  %v7234 = vunpack.c.l.b16 %v7184
  %v7235 = vunpack.c.h.b16 %v7184
  %v7236 = vunpack.c.l.b16 %v7185
  %v7237 = vunpack.c.h.b16 %v7185
  %v7238 = vunpack.c.l.b16 %v7186
  %v7239 = vunpack.c.h.b16 %v7186
  %v7240 = vunpack.c.l.b16 %v7187
  %v7241 = vunpack.c.h.b16 %v7187
  %v7242 = vunpack.c.l.b16 %v7188
  %v7243 = vunpack.c.h.b16 %v7188
  %v7244 = vunpack.c.l.b16 %v7189
  %v7245 = vunpack.c.h.b16 %v7189
  %v7246 = vunpack.c.l.b16 %v7190
  %v7247 = vunpack.c.h.b16 %v7190
  %v7248 = vunpack.c.l.b16 %v7191
  %v7249 = vunpack.c.h.b16 %v7191
  %v7250 = vunpack.c.l.b16 %v7192
  %v7251 = vunpack.c.h.b16 %v7192
  %v7252 = vunpack.c.l.b16 %v7193
  %v7253 = vunpack.c.h.b16 %v7193
  %v7254 = vunpack.c.l.b16 %v7194
  %v7255 = vunpack.c.h.b16 %v7194
  %v7256 = vunpack.c.l.b16 %v7195
  %v7257 = vunpack.c.h.b16 %v7195
  %v7258 = vunpack.c.l.b16 %v7196
  %v7259 = vunpack.c.h.b16 %v7196
  %v7260 = vunpack.c.l.b16 %v7197
  %v7261 = vunpack.c.h.b16 %v7197
  %v7262 = vunpack.c.l.b16 %v7198
  %v7263 = vunpack.c.h.b16 %v7198
  %v7264 = vunpack.c.l.b16 %v7199
  %v7265 = vunpack.c.h.b16 %v7199
  %v7266 = vunpack.c.l.b16 %v7200
  %v7267 = vunpack.c.h.b16 %v7200
  %v7268 = vunpack.c.l.b16 %v7201
  %v7269 = vunpack.c.h.b16 %v7201
  %v7270 = vunpack.c.l.b16 %v7202
  %v7271 = vunpack.c.h.b16 %v7202
  %v7272 = vunpack.c.l.b16 %v7203
  %v7273 = vunpack.c.h.b16 %v7203
  %v7274 = vunpack.c.l.b16 %v7204
  %v7275 = vunpack.c.h.b16 %v7204
  %v7276 = vunpack.c.l.b16 %v7205
  %v7277 = vunpack.c.h.b16 %v7205
  %v7278 = vunpack.c.l.b16 %v7206
  %v7279 = vunpack.c.h.b16 %v7206
  %v7280 = vunpack.c.l.b16 %v7207
  %v7281 = vunpack.c.h.b16 %v7207
  %v7282 = vunpack.c.l.b16 %v7208
  %v7283 = vunpack.c.h.b16 %v7208
  %v7284 = vpack.c.b16 %v7236, %v7234
  %v7285 = vpack.c.b16 %v7237, %v7235
  %v7286 = vpack.c.b16 %v7240, %v7238
  %v7287 = vpack.c.b16 %v7241, %v7239
  %v7288 = vpack.c.b16 %v7244, %v7242
  %v7289 = vpack.c.b16 %v7245, %v7243
  %v7290 = vpack.c.b16 %v7248, %v7246
  %v7291 = vpack.c.b16 %v7249, %v7247
  %v7292 = vpack.c.b16 %v7252, %v7250
  %v7293 = vpack.c.b16 %v7253, %v7251
  %v7294 = vpack.c.b16 %v7256, %v7254
  %v7295 = vpack.c.b16 %v7257, %v7255
  %v7296 = vpack.c.b16 %v7260, %v7258
  %v7297 = vpack.c.b16 %v7261, %v7259
  %v7298 = vpack.c.b16 %v7264, %v7262
  %v7299 = vpack.c.b16 %v7265, %v7263
  %v7300 = vpack.c.b16 %v7268, %v7266
  %v7301 = vpack.c.b16 %v7269, %v7267
  %v7302 = vpack.c.b16 %v7272, %v7270
  %v7303 = vpack.c.b16 %v7273, %v7271
  %v7304 = vpack.c.b16 %v7276, %v7274
  %v7305 = vpack.c.b16 %v7277, %v7275
  %v7306 = vpack.c.b16 %v7280, %v7278
  %v7307 = vpack.c.b16 %v7281, %v7279
  %v7308 = vpack.c.b16 %v7282, %v7282
  %v7309 = vpack.c.b16 %v7283, %v7283
  %7323 = vrot.lane.b32.xlu0 %v6495, 64
  %v7324 = vpop.permute.xlu0 %7323
  %7325 = vrot.lane.b32.xlu0 %v6496, 64
  %v7326 = vpop.permute.xlu0 %7325
  %7327 = vrot.lane.b32.xlu0 %v6497, 64
  %v7328 = vpop.permute.xlu0 %7327
  %7329 = vrot.lane.b32.xlu0 %v6498, 64
  %v7330 = vpop.permute.xlu0 %7329
  %7331 = vrot.lane.b32.xlu0 %v6499, 64
  %v7332 = vpop.permute.xlu0 %7331
  %7333 = vrot.lane.b32.xlu0 %v6500, 64
  %v7334 = vpop.permute.xlu0 %7333
  %7335 = vrot.lane.b32.xlu0 %v6501, 64
  %v7336 = vpop.permute.xlu0 %7335
  %7337 = vrot.lane.b32.xlu0 %v6502, 64
  %v7338 = vpop.permute.xlu0 %7337
  %7339 = vrot.lane.b32.xlu0 %v6503, 64
  %v7340 = vpop.permute.xlu0 %7339
  %7341 = vrot.lane.b32.xlu0 %v6504, 64
  %v7342 = vpop.permute.xlu0 %7341
  %v7353 = vsel %vm6709, %v7285, 0
  %v7356 = vsel %vm6709, %v7287, 0
  %v7359 = vsel %vm6709, %v7289, 0
  %v7362 = vsel %vm6709, %v7291, 0
  %v7365 = vsel %vm6709, %v7293, 0
  %v7368 = vsel %vm6709, %v7295, 0
  %v7371 = vsel %vm6709, %v7297, 0
  %v7374 = vsel %vm6709, %v7299, 0
  %v7377 = vsel %vm6709, %v7301, 0
  %v7380 = vsel %vm6709, %v7303, 0
  %v7383 = vsel %vm6709, %v7305, 0
  %v7386 = vsel %vm6709, %v7307, 0
  %v7389 = vsel %vm6709, %v7309, 0
  %v7392 = vand.u32 %v7342, %v6751
  %7394 = vmatprep.subr.bf16.mxu0 0
  %7395 = vmatpush1.bf16.msra.mxu0 %v7338
  %7396 = vmatprep.subr.bf16.mxu0 0
  %7397 = vmatpush1.bf16.msra.mxu0 %v7336
  %7398 = vmatprep.subr.bf16.mxu0 0
  %7399 = vmatpush1.bf16.msra.mxu0 %v7334
  %7400 = vmatprep.subr.bf16.mxu0 0
  %7401 = vmatpush1.bf16.msra.mxu0 %v7332
  %7402 = vmatprep.subr.bf16.mxu0 0
  %7403 = vmatpush1.bf16.msra.mxu0 %v7330
  %7404 = vmatprep.subr.bf16.mxu0 0
  %7405 = vmatpush1.bf16.msra.mxu0 %v7328
  %7406 = vmatprep.subr.bf16.mxu0 0
  %7407 = vmatpush1.bf16.msra.mxu0 %v7326
  %7408 = vmatprep.subr.bf16.mxu0 0
  %7409 = vmatpush1.bf16.msra.mxu0 %v7324
  %7410 = vmatprep.subr.bf16.mxu0 0
  %7411 = vmatpush2.bf16.msra.mxu0 0
  %7412 = vmatprep.subr.bf16.mxu0 0
  %7413 = vmatpush2.bf16.msra.mxu0 0
  %7414 = vmatprep.subr.bf16.mxu0 0
  %7415 = vmatpush2.bf16.msra.mxu0 0
  %7416 = vmatprep.subr.bf16.mxu0 0
  %7417 = vmatpush2.bf16.msra.mxu0 0
  %7418 = vmatprep.subr.bf16.mxu0 0
  %7419 = vmatpush2.bf16.msra.mxu0 0
  %7420 = vmatprep.subr.bf16.mxu0 0
  %7421 = vmatpush2.bf16.msra.mxu0 0
  %7422 = vmatprep.subr.bf16.mxu0 0
  %7423 = vmatpush2.bf16.msra.mxu0 %v7392
  %7424 = vmatprep.subr.bf16.mxu0 0
  %7425 = vmatpush2.bf16.msra.mxu0 %v7340
  %7426 = vmatprep.mubr.bf16.mxu0 %v7353
  %7427 = vmatmul.mubr.bf16.gmra.mxu0 %v7284
  %v7428 = vpop.f32.mrf.mxu0
  %v7429 = vadd.f32 0.0, %v7428
  %v7430 = vpop.f32.mrf.mxu0
  %v7431 = vpop.f32.mrf.mxu0
  %v7432 = vadd.f32 0.0, %v7431
  %v7433 = vpop.f32.mrf.mxu0
  %7434 = vmatprep.mubr.bf16.mxu0 %v7356
  %7435 = vmatmul.mubr.bf16.gmra.mxu0 %v7286
  %v7436 = vpop.f32.mrf.mxu0
  %v7437 = vadd.f32 0.0, %v7436
  %v7438 = vpop.f32.mrf.mxu0
  %v7439 = vpop.f32.mrf.mxu0
  %v7440 = vadd.f32 0.0, %v7439
  %v7441 = vpop.f32.mrf.mxu0
  %7442 = vmatprep.mubr.bf16.mxu0 %v7359
  %7443 = vmatmul.mubr.bf16.gmra.mxu0 %v7288
  %v7444 = vpop.f32.mrf.mxu0
  %v7445 = vadd.f32 0.0, %v7444
  %v7446 = vpop.f32.mrf.mxu0
  %v7447 = vpop.f32.mrf.mxu0
  %v7448 = vadd.f32 0.0, %v7447
  %v7449 = vpop.f32.mrf.mxu0
  %7450 = vmatprep.mubr.bf16.mxu0 %v7362
  %7451 = vmatmul.mubr.bf16.gmra.mxu0 %v7290
  %v7452 = vpop.f32.mrf.mxu0
  %v7453 = vadd.f32 0.0, %v7452
  %v7454 = vpop.f32.mrf.mxu0
  %v7455 = vpop.f32.mrf.mxu0
  %v7456 = vadd.f32 0.0, %v7455
  %v7457 = vpop.f32.mrf.mxu0
  %7458 = vmatprep.mubr.bf16.mxu0 %v7365
  %7459 = vmatmul.mubr.bf16.gmra.mxu0 %v7292
  %v7460 = vpop.f32.mrf.mxu0
  %v7461 = vadd.f32 0.0, %v7460
  %v7462 = vpop.f32.mrf.mxu0
  %v7463 = vpop.f32.mrf.mxu0
  %v7464 = vadd.f32 0.0, %v7463
  %v7465 = vpop.f32.mrf.mxu0
  %7466 = vmatprep.mubr.bf16.mxu0 %v7368
  %7467 = vmatmul.mubr.bf16.gmra.mxu0 %v7294
  %v7468 = vpop.f32.mrf.mxu0
  %v7469 = vadd.f32 0.0, %v7468
  %v7470 = vpop.f32.mrf.mxu0
  %v7471 = vpop.f32.mrf.mxu0
  %v7472 = vadd.f32 0.0, %v7471
  %v7473 = vpop.f32.mrf.mxu0
  %7474 = vmatprep.mubr.bf16.mxu0 %v7371
  %7475 = vmatmul.mubr.bf16.gmra.mxu0 %v7296
  %v7476 = vpop.f32.mrf.mxu0
  %v7477 = vadd.f32 0.0, %v7476
  %v7478 = vpop.f32.mrf.mxu0
  %v7479 = vpop.f32.mrf.mxu0
  %v7480 = vadd.f32 0.0, %v7479
  %v7481 = vpop.f32.mrf.mxu0
  %7482 = vmatprep.mubr.bf16.mxu0 %v7374
  %7483 = vmatmul.mubr.bf16.gmra.mxu0 %v7298
  %v7484 = vpop.f32.mrf.mxu0
  %v7485 = vadd.f32 0.0, %v7484
  %v7486 = vpop.f32.mrf.mxu0
  %v7487 = vpop.f32.mrf.mxu0
  %v7488 = vadd.f32 0.0, %v7487
  %v7489 = vpop.f32.mrf.mxu0
  %7490 = vmatprep.mubr.bf16.mxu0 %v7377
  %7491 = vmatmul.mubr.bf16.gmra.mxu0 %v7300
  %v7492 = vpop.f32.mrf.mxu0
  %v7493 = vadd.f32 0.0, %v7492
  %v7494 = vpop.f32.mrf.mxu0
  %v7495 = vpop.f32.mrf.mxu0
  %v7496 = vadd.f32 0.0, %v7495
  %v7497 = vpop.f32.mrf.mxu0
  %7498 = vmatprep.mubr.bf16.mxu0 %v7380
  %7499 = vmatmul.mubr.bf16.gmra.mxu0 %v7302
  %v7500 = vpop.f32.mrf.mxu0
  %v7501 = vadd.f32 0.0, %v7500
  %v7502 = vpop.f32.mrf.mxu0
  %v7503 = vpop.f32.mrf.mxu0
  %v7504 = vadd.f32 0.0, %v7503
  %v7505 = vpop.f32.mrf.mxu0
  %7506 = vmatprep.mubr.bf16.mxu0 %v7383
  %7507 = vmatmul.mubr.bf16.gmra.mxu0 %v7304
  %v7508 = vpop.f32.mrf.mxu0
  %v7509 = vadd.f32 0.0, %v7508
  %v7510 = vpop.f32.mrf.mxu0
  %v7511 = vpop.f32.mrf.mxu0
  %v7512 = vadd.f32 0.0, %v7511
  %v7513 = vpop.f32.mrf.mxu0
  %7514 = vmatprep.mubr.bf16.mxu0 %v7386
  %7515 = vmatmul.mubr.bf16.gmra.mxu0 %v7306
  %v7516 = vpop.f32.mrf.mxu0
  %v7517 = vadd.f32 0.0, %v7516
  %v7518 = vpop.f32.mrf.mxu0
  %v7519 = vpop.f32.mrf.mxu0
  %v7520 = vadd.f32 0.0, %v7519
  %v7521 = vpop.f32.mrf.mxu0
  %7522 = vmatprep.mubr.bf16.mxu0 %v7389
  %7523 = vmatmul.mubr.bf16.gmra.mxu0 %v7308
  %v7524 = vpop.f32.mrf.mxu0
  %v7525 = vadd.f32 0.0, %v7524
  %v7526 = vpop.f32.mrf.mxu0
  %v7527 = vpop.f32.mrf.mxu0
  %v7528 = vpop.f32.mrf.mxu0
  %7529 = vdwg.mxu0
  %v7530 = vadd.f32 %v7082, %v7429
  %v7531 = vadd.f32 %v7085, %v7432
  %v7532 = vadd.f32 %v7090, %v7437
  %v7533 = vadd.f32 %v7093, %v7440
  %v7534 = vadd.f32 %v7098, %v7445
  %v7535 = vadd.f32 %v7101, %v7448
  %v7536 = vadd.f32 %v7106, %v7453
  %v7537 = vadd.f32 %v7109, %v7456
  %v7538 = vadd.f32 %v7114, %v7461
  %v7539 = vadd.f32 %v7117, %v7464
  %v7540 = vadd.f32 %v7122, %v7469
  %v7541 = vadd.f32 %v7125, %v7472
  %v7542 = vadd.f32 %v7130, %v7477
  %v7543 = vadd.f32 %v7133, %v7480
  %v7544 = vadd.f32 %v7138, %v7485
  %v7545 = vadd.f32 %v7141, %v7488
  %v7546 = vadd.f32 %v7146, %v7493
  %v7547 = vadd.f32 %v7149, %v7496
  %v7548 = vadd.f32 %v7154, %v7501
  %v7549 = vadd.f32 %v7157, %v7504
  %v7550 = vadd.f32 %v7162, %v7509
  %v7551 = vadd.f32 %v7165, %v7512
  %v7552 = vadd.f32 %v7170, %v7517
  %v7553 = vadd.f32 %v7173, %v7520
  %v7554 = vadd.f32 %v7178, %v7525
  %s7555 = scalar_lea.vmem %s5, 600
  %v7556 = vld [vmem:[%s7555] sm:$0xff]
  %v7557 = vld [vmem:[%s7555 + $0x8] sm:$0xff]
  %v7558 = vld [vmem:[%s7555 + $0x10] sm:$0xff]
  %v7559 = vld [vmem:[%s7555 + $0x18] sm:$0xff]
  %v7560 = vld [vmem:[%s7555 + $0x20] sm:$0xff]
  %v7561 = vld [vmem:[%s7555 + $0x28] sm:$0xff]
  %v7562 = vld [vmem:[%s7555 + $0x30] sm:$0xff]
  %v7563 = vld [vmem:[%s7555 + $0x38] sm:$0xff]
  %v7564 = vld [vmem:[%s7555 + $0x40] sm:$0xff]
  %v7565 = vld [vmem:[%s7555 + $0x48] sm:$0xff]
  %v7566 = vld [vmem:[%s7555 + $0x50] sm:$0xff]
  %v7567 = vld [vmem:[%s7555 + $0x58] sm:$0xff]
  %v7568 = vld [vmem:[%s7555 + $0x60] sm:$0xff]
  %v7569 = vld [vmem:[%s7555 + $0x68] sm:$0xff]
  %v7570 = vld [vmem:[%s7555 + $0x70] sm:$0xff]
  %v7571 = vld [vmem:[%s7555 + $0x78] sm:$0xff]
  %v7572 = vld [vmem:[%s7555 + $0x80] sm:$0xff]
  %v7573 = vld [vmem:[%s7555 + $0x88] sm:$0xff]
  %v7574 = vld [vmem:[%s7555 + $0x90] sm:$0xff]
  %v7575 = vld [vmem:[%s7555 + $0x98] sm:$0xff]
  %v7576 = vld [vmem:[%s7555 + $0xa0] sm:$0xff]
  %v7577 = vld [vmem:[%s7555 + $0xa8] sm:$0xff]
  %v7578 = vld [vmem:[%s7555 + $0xb0] sm:$0xff]
  %v7579 = vld [vmem:[%s7555 + $0xb8] sm:$0xff]
  %v7580 = vld [vmem:[%s7555 + $0xc0] sm:$0xff]
  %v7606 = vunpack.c.l.b16 %v7556
  %v7607 = vunpack.c.h.b16 %v7556
  %v7608 = vunpack.c.l.b16 %v7557
  %v7609 = vunpack.c.h.b16 %v7557
  %v7610 = vunpack.c.l.b16 %v7558
  %v7611 = vunpack.c.h.b16 %v7558
  %v7612 = vunpack.c.l.b16 %v7559
  %v7613 = vunpack.c.h.b16 %v7559
  %v7614 = vunpack.c.l.b16 %v7560
  %v7615 = vunpack.c.h.b16 %v7560
  %v7616 = vunpack.c.l.b16 %v7561
  %v7617 = vunpack.c.h.b16 %v7561
  %v7618 = vunpack.c.l.b16 %v7562
  %v7619 = vunpack.c.h.b16 %v7562
  %v7620 = vunpack.c.l.b16 %v7563
  %v7621 = vunpack.c.h.b16 %v7563
  %v7622 = vunpack.c.l.b16 %v7564
  %v7623 = vunpack.c.h.b16 %v7564
  %v7624 = vunpack.c.l.b16 %v7565
  %v7625 = vunpack.c.h.b16 %v7565
  %v7626 = vunpack.c.l.b16 %v7566
  %v7627 = vunpack.c.h.b16 %v7566
  %v7628 = vunpack.c.l.b16 %v7567
  %v7629 = vunpack.c.h.b16 %v7567
  %v7630 = vunpack.c.l.b16 %v7568
  %v7631 = vunpack.c.h.b16 %v7568
  %v7632 = vunpack.c.l.b16 %v7569
  %v7633 = vunpack.c.h.b16 %v7569
  %v7634 = vunpack.c.l.b16 %v7570
  %v7635 = vunpack.c.h.b16 %v7570
  %v7636 = vunpack.c.l.b16 %v7571
  %v7637 = vunpack.c.h.b16 %v7571
  %v7638 = vunpack.c.l.b16 %v7572
  %v7639 = vunpack.c.h.b16 %v7572
  %v7640 = vunpack.c.l.b16 %v7573
  %v7641 = vunpack.c.h.b16 %v7573
  %v7642 = vunpack.c.l.b16 %v7574
  %v7643 = vunpack.c.h.b16 %v7574
  %v7644 = vunpack.c.l.b16 %v7575
  %v7645 = vunpack.c.h.b16 %v7575
  %v7646 = vunpack.c.l.b16 %v7576
  %v7647 = vunpack.c.h.b16 %v7576
  %v7648 = vunpack.c.l.b16 %v7577
  %v7649 = vunpack.c.h.b16 %v7577
  %v7650 = vunpack.c.l.b16 %v7578
  %v7651 = vunpack.c.h.b16 %v7578
  %v7652 = vunpack.c.l.b16 %v7579
  %v7653 = vunpack.c.h.b16 %v7579
  %v7654 = vunpack.c.l.b16 %v7580
  %v7655 = vunpack.c.h.b16 %v7580
  %v7656 = vpack.c.b16 %v7608, %v7606
  %v7657 = vpack.c.b16 %v7609, %v7607
  %v7658 = vpack.c.b16 %v7612, %v7610
  %v7659 = vpack.c.b16 %v7613, %v7611
  %v7660 = vpack.c.b16 %v7616, %v7614
  %v7661 = vpack.c.b16 %v7617, %v7615
  %v7662 = vpack.c.b16 %v7620, %v7618
  %v7663 = vpack.c.b16 %v7621, %v7619
  %v7664 = vpack.c.b16 %v7624, %v7622
  %v7665 = vpack.c.b16 %v7625, %v7623
  %v7666 = vpack.c.b16 %v7628, %v7626
  %v7667 = vpack.c.b16 %v7629, %v7627
  %v7668 = vpack.c.b16 %v7632, %v7630
  %v7669 = vpack.c.b16 %v7633, %v7631
  %v7670 = vpack.c.b16 %v7636, %v7634
  %v7671 = vpack.c.b16 %v7637, %v7635
  %v7672 = vpack.c.b16 %v7640, %v7638
  %v7673 = vpack.c.b16 %v7641, %v7639
  %v7674 = vpack.c.b16 %v7644, %v7642
  %v7675 = vpack.c.b16 %v7645, %v7643
  %v7676 = vpack.c.b16 %v7648, %v7646
  %v7677 = vpack.c.b16 %v7649, %v7647
  %v7678 = vpack.c.b16 %v7652, %v7650
  %v7679 = vpack.c.b16 %v7653, %v7651
  %v7680 = vpack.c.b16 %v7654, %v7654
  %v7681 = vpack.c.b16 %v7655, %v7655
  %7695 = vrot.lane.b32.xlu0 %v6495, 32
  %v7696 = vpop.permute.xlu0 %7695
  %7697 = vrot.lane.b32.xlu0 %v6496, 32
  %v7698 = vpop.permute.xlu0 %7697
  %7699 = vrot.lane.b32.xlu0 %v6497, 32
  %v7700 = vpop.permute.xlu0 %7699
  %7701 = vrot.lane.b32.xlu0 %v6498, 32
  %v7702 = vpop.permute.xlu0 %7701
  %7703 = vrot.lane.b32.xlu0 %v6499, 32
  %v7704 = vpop.permute.xlu0 %7703
  %7705 = vrot.lane.b32.xlu0 %v6500, 32
  %v7706 = vpop.permute.xlu0 %7705
  %7707 = vrot.lane.b32.xlu0 %v6501, 32
  %v7708 = vpop.permute.xlu0 %7707
  %7709 = vrot.lane.b32.xlu0 %v6502, 32
  %v7710 = vpop.permute.xlu0 %7709
  %7711 = vrot.lane.b32.xlu0 %v6503, 32
  %v7712 = vpop.permute.xlu0 %7711
  %7713 = vrot.lane.b32.xlu0 %v6504, 32
  %v7714 = vpop.permute.xlu0 %7713
  %v7725 = vsel %vm6709, %v7657, 0
  %v7728 = vsel %vm6709, %v7659, 0
  %v7731 = vsel %vm6709, %v7661, 0
  %v7734 = vsel %vm6709, %v7663, 0
  %v7737 = vsel %vm6709, %v7665, 0
  %v7740 = vsel %vm6709, %v7667, 0
  %v7743 = vsel %vm6709, %v7669, 0
  %v7746 = vsel %vm6709, %v7671, 0
  %v7749 = vsel %vm6709, %v7673, 0
  %v7752 = vsel %vm6709, %v7675, 0
  %v7755 = vsel %vm6709, %v7677, 0
  %v7758 = vsel %vm6709, %v7679, 0
  %v7761 = vsel %vm6709, %v7681, 0
  %v7764 = vand.u32 %v7714, %v6751
  %7766 = vmatprep.subr.bf16.mxu0 0
  %7767 = vmatpush1.bf16.msra.mxu0 %v7710
  %7768 = vmatprep.subr.bf16.mxu0 0
  %7769 = vmatpush1.bf16.msra.mxu0 %v7708
  %7770 = vmatprep.subr.bf16.mxu0 0
  %7771 = vmatpush1.bf16.msra.mxu0 %v7706
  %7772 = vmatprep.subr.bf16.mxu0 0
  %7773 = vmatpush1.bf16.msra.mxu0 %v7704
  %7774 = vmatprep.subr.bf16.mxu0 0
  %7775 = vmatpush1.bf16.msra.mxu0 %v7702
  %7776 = vmatprep.subr.bf16.mxu0 0
  %7777 = vmatpush1.bf16.msra.mxu0 %v7700
  %7778 = vmatprep.subr.bf16.mxu0 0
  %7779 = vmatpush1.bf16.msra.mxu0 %v7698
  %7780 = vmatprep.subr.bf16.mxu0 0
  %7781 = vmatpush1.bf16.msra.mxu0 %v7696
  %7782 = vmatprep.subr.bf16.mxu0 0
  %7783 = vmatpush2.bf16.msra.mxu0 0
  %7784 = vmatprep.subr.bf16.mxu0 0
  %7785 = vmatpush2.bf16.msra.mxu0 0
  %7786 = vmatprep.subr.bf16.mxu0 0
  %7787 = vmatpush2.bf16.msra.mxu0 0
  %7788 = vmatprep.subr.bf16.mxu0 0
  %7789 = vmatpush2.bf16.msra.mxu0 0
  %7790 = vmatprep.subr.bf16.mxu0 0
  %7791 = vmatpush2.bf16.msra.mxu0 0
  %7792 = vmatprep.subr.bf16.mxu0 0
  %7793 = vmatpush2.bf16.msra.mxu0 0
  %7794 = vmatprep.subr.bf16.mxu0 0
  %7795 = vmatpush2.bf16.msra.mxu0 %v7764
  %7796 = vmatprep.subr.bf16.mxu0 0
  %7797 = vmatpush2.bf16.msra.mxu0 %v7712
  %7798 = vmatprep.mubr.bf16.mxu0 %v7725
  %7799 = vmatmul.mubr.bf16.gmra.mxu0 %v7656
  %v7800 = vpop.f32.mrf.mxu0
  %v7801 = vadd.f32 0.0, %v7800
  %v7802 = vpop.f32.mrf.mxu0
  %v7803 = vpop.f32.mrf.mxu0
  %v7804 = vadd.f32 0.0, %v7803
  %v7805 = vpop.f32.mrf.mxu0
  %7806 = vmatprep.mubr.bf16.mxu0 %v7728
  %7807 = vmatmul.mubr.bf16.gmra.mxu0 %v7658
  %v7808 = vpop.f32.mrf.mxu0
  %v7809 = vadd.f32 0.0, %v7808
  %v7810 = vpop.f32.mrf.mxu0
  %v7811 = vpop.f32.mrf.mxu0
  %v7812 = vadd.f32 0.0, %v7811
  %v7813 = vpop.f32.mrf.mxu0
  %7814 = vmatprep.mubr.bf16.mxu0 %v7731
  %7815 = vmatmul.mubr.bf16.gmra.mxu0 %v7660
  %v7816 = vpop.f32.mrf.mxu0
  %v7817 = vadd.f32 0.0, %v7816
  %v7818 = vpop.f32.mrf.mxu0
  %v7819 = vpop.f32.mrf.mxu0
  %v7820 = vadd.f32 0.0, %v7819
  %v7821 = vpop.f32.mrf.mxu0
  %7822 = vmatprep.mubr.bf16.mxu0 %v7734
  %7823 = vmatmul.mubr.bf16.gmra.mxu0 %v7662
  %v7824 = vpop.f32.mrf.mxu0
  %v7825 = vadd.f32 0.0, %v7824
  %v7826 = vpop.f32.mrf.mxu0
  %v7827 = vpop.f32.mrf.mxu0
  %v7828 = vadd.f32 0.0, %v7827
  %v7829 = vpop.f32.mrf.mxu0
  %7830 = vmatprep.mubr.bf16.mxu0 %v7737
  %7831 = vmatmul.mubr.bf16.gmra.mxu0 %v7664
  %v7832 = vpop.f32.mrf.mxu0
  %v7833 = vadd.f32 0.0, %v7832
  %v7834 = vpop.f32.mrf.mxu0
  %v7835 = vpop.f32.mrf.mxu0
  %v7836 = vadd.f32 0.0, %v7835
  %v7837 = vpop.f32.mrf.mxu0
  %7838 = vmatprep.mubr.bf16.mxu0 %v7740
  %7839 = vmatmul.mubr.bf16.gmra.mxu0 %v7666
  %v7840 = vpop.f32.mrf.mxu0
  %v7841 = vadd.f32 0.0, %v7840
  %v7842 = vpop.f32.mrf.mxu0
  %v7843 = vpop.f32.mrf.mxu0
  %v7844 = vadd.f32 0.0, %v7843
  %v7845 = vpop.f32.mrf.mxu0
  %7846 = vmatprep.mubr.bf16.mxu0 %v7743
  %7847 = vmatmul.mubr.bf16.gmra.mxu0 %v7668
  %v7848 = vpop.f32.mrf.mxu0
  %v7849 = vadd.f32 0.0, %v7848
  %v7850 = vpop.f32.mrf.mxu0
  %v7851 = vpop.f32.mrf.mxu0
  %v7852 = vadd.f32 0.0, %v7851
  %v7853 = vpop.f32.mrf.mxu0
  %7854 = vmatprep.mubr.bf16.mxu0 %v7746
  %7855 = vmatmul.mubr.bf16.gmra.mxu0 %v7670
  %v7856 = vpop.f32.mrf.mxu0
  %v7857 = vadd.f32 0.0, %v7856
  %v7858 = vpop.f32.mrf.mxu0
  %v7859 = vpop.f32.mrf.mxu0
  %v7860 = vadd.f32 0.0, %v7859
  %v7861 = vpop.f32.mrf.mxu0
  %7862 = vmatprep.mubr.bf16.mxu0 %v7749
  %7863 = vmatmul.mubr.bf16.gmra.mxu0 %v7672
  %v7864 = vpop.f32.mrf.mxu0
  %v7865 = vadd.f32 0.0, %v7864
  %v7866 = vpop.f32.mrf.mxu0
  %v7867 = vpop.f32.mrf.mxu0
  %v7868 = vadd.f32 0.0, %v7867
  %v7869 = vpop.f32.mrf.mxu0
  %7870 = vmatprep.mubr.bf16.mxu0 %v7752
  %7871 = vmatmul.mubr.bf16.gmra.mxu0 %v7674
  %v7872 = vpop.f32.mrf.mxu0
  %v7873 = vadd.f32 0.0, %v7872
  %v7874 = vpop.f32.mrf.mxu0
  %v7875 = vpop.f32.mrf.mxu0
  %v7876 = vadd.f32 0.0, %v7875
  %v7877 = vpop.f32.mrf.mxu0
  %7878 = vmatprep.mubr.bf16.mxu0 %v7755
  %7879 = vmatmul.mubr.bf16.gmra.mxu0 %v7676
  %v7880 = vpop.f32.mrf.mxu0
  %v7881 = vadd.f32 0.0, %v7880
  %v7882 = vpop.f32.mrf.mxu0
  %v7883 = vpop.f32.mrf.mxu0
  %v7884 = vadd.f32 0.0, %v7883
  %v7885 = vpop.f32.mrf.mxu0
  %7886 = vmatprep.mubr.bf16.mxu0 %v7758
  %7887 = vmatmul.mubr.bf16.gmra.mxu0 %v7678
  %v7888 = vpop.f32.mrf.mxu0
  %v7889 = vadd.f32 0.0, %v7888
  %v7890 = vpop.f32.mrf.mxu0
  %v7891 = vpop.f32.mrf.mxu0
  %v7892 = vadd.f32 0.0, %v7891
  %v7893 = vpop.f32.mrf.mxu0
  %7894 = vmatprep.mubr.bf16.mxu0 %v7761
  %7895 = vmatmul.mubr.bf16.gmra.mxu0 %v7680
  %v7896 = vpop.f32.mrf.mxu0
  %v7897 = vadd.f32 0.0, %v7896
  %v7898 = vpop.f32.mrf.mxu0
  %v7899 = vpop.f32.mrf.mxu0
  %v7900 = vpop.f32.mrf.mxu0
  %7901 = vdwg.mxu0
  %v7902 = vadd.f32 %v7530, %v7801
  %v7903 = vadd.f32 %v7531, %v7804
  %v7904 = vadd.f32 %v7532, %v7809
  %v7905 = vadd.f32 %v7533, %v7812
  %v7906 = vadd.f32 %v7534, %v7817
  %v7907 = vadd.f32 %v7535, %v7820
  %v7908 = vadd.f32 %v7536, %v7825
  %v7909 = vadd.f32 %v7537, %v7828
  %v7910 = vadd.f32 %v7538, %v7833
  %v7911 = vadd.f32 %v7539, %v7836
  %v7912 = vadd.f32 %v7540, %v7841
  %v7913 = vadd.f32 %v7541, %v7844
  %v7914 = vadd.f32 %v7542, %v7849
  %v7915 = vadd.f32 %v7543, %v7852
  %v7916 = vadd.f32 %v7544, %v7857
  %v7917 = vadd.f32 %v7545, %v7860
  %v7918 = vadd.f32 %v7546, %v7865
  %v7919 = vadd.f32 %v7547, %v7868
  %v7920 = vadd.f32 %v7548, %v7873
  %v7921 = vadd.f32 %v7549, %v7876
  %v7922 = vadd.f32 %v7550, %v7881
  %v7923 = vadd.f32 %v7551, %v7884
  %v7924 = vadd.f32 %v7552, %v7889
  %v7925 = vadd.f32 %v7553, %v7892
  %v7926 = vadd.f32 %v7554, %v7897
  %v7927 = vld [vmem:[#allocation5 + $0x8] sm:$0xff]
  %v7928 = vld [vmem:[#allocation5 + $0x18] sm:$0xff]
  %v7929 = vld [vmem:[#allocation5 + $0x28] sm:$0xff]
  %v7930 = vld [vmem:[#allocation5 + $0x38] sm:$0xff]
  %v7931 = vld [vmem:[#allocation5 + $0x48] sm:$0xff]
  %v7932 = vld [vmem:[#allocation5 + $0x58] sm:$0xff]
  %v7933 = vld [vmem:[#allocation5 + $0x68] sm:$0xff]
  %v7934 = vld [vmem:[#allocation5 + $0x78] sm:$0xff]
  %v7935 = vld [vmem:[#allocation5 + $0x88] sm:$0xff]
  %v7936 = vld [vmem:[#allocation5 + $0x98] sm:$0xff]
  %v7937 = vld [vmem:[#allocation5 + $0xa8] sm:$0xff]
  %v7938 = vld [vmem:[#allocation5 + $0xb8] sm:$0xff]
  %v7939 = vld [vmem:[#allocation5 + $0xc8] sm:$0xff]
  %v7940 = vld [vmem:[#allocation5 + $0xd8] sm:$0xff]
  %v7941 = vld [vmem:[#allocation5 + $0xe8] sm:$0xff]
  %v7942 = vld [vmem:[#allocation5 + $0xf8] sm:$0xff]
  %v7943 = vld [vmem:[#allocation5 + $0x108] sm:$0xff]
  %v7944 = vld [vmem:[#allocation5 + $0x118] sm:$0xff]
  %v7945 = vld [vmem:[#allocation5 + $0x128] sm:$0xff]
  %v7946 = vld [vmem:[#allocation5 + $0x138] sm:$0x7f]
  %v7947 = vpack.c.bf16 %v7928, %v7927
  %v7948 = vpack.c.bf16 %v7930, %v7929
  %v7949 = vpack.c.bf16 %v7932, %v7931
  %v7950 = vpack.c.bf16 %v7934, %v7933
  %v7951 = vpack.c.bf16 %v7936, %v7935
  %v7952 = vpack.c.bf16 %v7938, %v7937
  %v7953 = vpack.c.bf16 %v7940, %v7939
  %v7954 = vpack.c.bf16 %v7942, %v7941
  %v7955 = vpack.c.bf16 %v7944, %v7943
  %v7956 = vpack.c.bf16 %v7946, %v7945
  %s7957 = scalar_lea.vmem %s5, 800
  %v7958 = vld [vmem:[%s7957] sm:$0xff]
  %v7959 = vld [vmem:[%s7957 + $0x8] sm:$0xff]
  %v7960 = vld [vmem:[%s7957 + $0x10] sm:$0xff]
  %v7961 = vld [vmem:[%s7957 + $0x18] sm:$0xff]
  %v7962 = vld [vmem:[%s7957 + $0x20] sm:$0xff]
  %v7963 = vld [vmem:[%s7957 + $0x28] sm:$0xff]
  %v7964 = vld [vmem:[%s7957 + $0x30] sm:$0xff]
  %v7965 = vld [vmem:[%s7957 + $0x38] sm:$0xff]
  %v7966 = vld [vmem:[%s7957 + $0x40] sm:$0xff]
  %v7967 = vld [vmem:[%s7957 + $0x48] sm:$0xff]
  %v7968 = vld [vmem:[%s7957 + $0x50] sm:$0xff]
  %v7969 = vld [vmem:[%s7957 + $0x58] sm:$0xff]
  %v7970 = vld [vmem:[%s7957 + $0x60] sm:$0xff]
  %v7971 = vld [vmem:[%s7957 + $0x68] sm:$0xff]
  %v7972 = vld [vmem:[%s7957 + $0x70] sm:$0xff]
  %v7973 = vld [vmem:[%s7957 + $0x78] sm:$0xff]
  %v7974 = vld [vmem:[%s7957 + $0x80] sm:$0xff]
  %v7975 = vld [vmem:[%s7957 + $0x88] sm:$0xff]
  %v7976 = vld [vmem:[%s7957 + $0x90] sm:$0xff]
  %v7977 = vld [vmem:[%s7957 + $0x98] sm:$0xff]
  %v7978 = vld [vmem:[%s7957 + $0xa0] sm:$0xff]
  %v7979 = vld [vmem:[%s7957 + $0xa8] sm:$0xff]
  %v7980 = vld [vmem:[%s7957 + $0xb0] sm:$0xff]
  %v7981 = vld [vmem:[%s7957 + $0xb8] sm:$0xff]
  %v7982 = vld [vmem:[%s7957 + $0xc0] sm:$0xff]
  %v8008 = vunpack.c.l.b16 %v7958
  %v8009 = vunpack.c.h.b16 %v7958
  %v8010 = vunpack.c.l.b16 %v7959
  %v8011 = vunpack.c.h.b16 %v7959
  %v8012 = vunpack.c.l.b16 %v7960
  %v8013 = vunpack.c.h.b16 %v7960
  %v8014 = vunpack.c.l.b16 %v7961
  %v8015 = vunpack.c.h.b16 %v7961
  %v8016 = vunpack.c.l.b16 %v7962
  %v8017 = vunpack.c.h.b16 %v7962
  %v8018 = vunpack.c.l.b16 %v7963
  %v8019 = vunpack.c.h.b16 %v7963
  %v8020 = vunpack.c.l.b16 %v7964
  %v8021 = vunpack.c.h.b16 %v7964
  %v8022 = vunpack.c.l.b16 %v7965
  %v8023 = vunpack.c.h.b16 %v7965
  %v8024 = vunpack.c.l.b16 %v7966
  %v8025 = vunpack.c.h.b16 %v7966
  %v8026 = vunpack.c.l.b16 %v7967
  %v8027 = vunpack.c.h.b16 %v7967
  %v8028 = vunpack.c.l.b16 %v7968
  %v8029 = vunpack.c.h.b16 %v7968
  %v8030 = vunpack.c.l.b16 %v7969
  %v8031 = vunpack.c.h.b16 %v7969
  %v8032 = vunpack.c.l.b16 %v7970
  %v8033 = vunpack.c.h.b16 %v7970
  %v8034 = vunpack.c.l.b16 %v7971
  %v8035 = vunpack.c.h.b16 %v7971
  %v8036 = vunpack.c.l.b16 %v7972
  %v8037 = vunpack.c.h.b16 %v7972
  %v8038 = vunpack.c.l.b16 %v7973
  %v8039 = vunpack.c.h.b16 %v7973
  %v8040 = vunpack.c.l.b16 %v7974
  %v8041 = vunpack.c.h.b16 %v7974
  %v8042 = vunpack.c.l.b16 %v7975
  %v8043 = vunpack.c.h.b16 %v7975
  %v8044 = vunpack.c.l.b16 %v7976
  %v8045 = vunpack.c.h.b16 %v7976
  %v8046 = vunpack.c.l.b16 %v7977
  %v8047 = vunpack.c.h.b16 %v7977
  %v8048 = vunpack.c.l.b16 %v7978
  %v8049 = vunpack.c.h.b16 %v7978
  %v8050 = vunpack.c.l.b16 %v7979
  %v8051 = vunpack.c.h.b16 %v7979
  %v8052 = vunpack.c.l.b16 %v7980
  %v8053 = vunpack.c.h.b16 %v7980
  %v8054 = vunpack.c.l.b16 %v7981
  %v8055 = vunpack.c.h.b16 %v7981
  %v8056 = vunpack.c.l.b16 %v7982
  %v8057 = vunpack.c.h.b16 %v7982
  %v8058 = vpack.c.b16 %v8010, %v8008
  %v8059 = vpack.c.b16 %v8011, %v8009
  %v8060 = vpack.c.b16 %v8014, %v8012
  %v8061 = vpack.c.b16 %v8015, %v8013
  %v8062 = vpack.c.b16 %v8018, %v8016
  %v8063 = vpack.c.b16 %v8019, %v8017
  %v8064 = vpack.c.b16 %v8022, %v8020
  %v8065 = vpack.c.b16 %v8023, %v8021
  %v8066 = vpack.c.b16 %v8026, %v8024
  %v8067 = vpack.c.b16 %v8027, %v8025
  %v8068 = vpack.c.b16 %v8030, %v8028
  %v8069 = vpack.c.b16 %v8031, %v8029
  %v8070 = vpack.c.b16 %v8034, %v8032
  %v8071 = vpack.c.b16 %v8035, %v8033
  %v8072 = vpack.c.b16 %v8038, %v8036
  %v8073 = vpack.c.b16 %v8039, %v8037
  %v8074 = vpack.c.b16 %v8042, %v8040
  %v8075 = vpack.c.b16 %v8043, %v8041
  %v8076 = vpack.c.b16 %v8046, %v8044
  %v8077 = vpack.c.b16 %v8047, %v8045
  %v8078 = vpack.c.b16 %v8050, %v8048
  %v8079 = vpack.c.b16 %v8051, %v8049
  %v8080 = vpack.c.b16 %v8054, %v8052
  %v8081 = vpack.c.b16 %v8055, %v8053
  %v8082 = vpack.c.b16 %v8056, %v8056
  %v8083 = vpack.c.b16 %v8057, %v8057
  %v8098 = vsel %vm6709, %v8059, 0
  %v8101 = vsel %vm6709, %v8061, 0
  %v8104 = vsel %vm6709, %v8063, 0
  %v8107 = vsel %vm6709, %v8065, 0
  %v8110 = vsel %vm6709, %v8067, 0
  %v8113 = vsel %vm6709, %v8069, 0
  %v8116 = vsel %vm6709, %v8071, 0
  %v8119 = vsel %vm6709, %v8073, 0
  %v8122 = vsel %vm6709, %v8075, 0
  %v8125 = vsel %vm6709, %v8077, 0
  %v8128 = vsel %vm6709, %v8079, 0
  %v8131 = vsel %vm6709, %v8081, 0
  %v8134 = vsel %vm6709, %v8083, 0
  %v8137 = vand.u32 %v7956, %v6751
  %8139 = vmatprep.subr.bf16.mxu0 0
  %8140 = vmatpush1.bf16.msra.mxu0 %v7954
  %8141 = vmatprep.subr.bf16.mxu0 0
  %8142 = vmatpush1.bf16.msra.mxu0 %v7953
  %8143 = vmatprep.subr.bf16.mxu0 0
  %8144 = vmatpush1.bf16.msra.mxu0 %v7952
  %8145 = vmatprep.subr.bf16.mxu0 0
  %8146 = vmatpush1.bf16.msra.mxu0 %v7951
  %8147 = vmatprep.subr.bf16.mxu0 0
  %8148 = vmatpush1.bf16.msra.mxu0 %v7950
  %8149 = vmatprep.subr.bf16.mxu0 0
  %8150 = vmatpush1.bf16.msra.mxu0 %v7949
  %8151 = vmatprep.subr.bf16.mxu0 0
  %8152 = vmatpush1.bf16.msra.mxu0 %v7948
  %8153 = vmatprep.subr.bf16.mxu0 0
  %8154 = vmatpush1.bf16.msra.mxu0 %v7947
  %8155 = vmatprep.subr.bf16.mxu0 0
  %8156 = vmatpush2.bf16.msra.mxu0 0
  %8157 = vmatprep.subr.bf16.mxu0 0
  %8158 = vmatpush2.bf16.msra.mxu0 0
  %8159 = vmatprep.subr.bf16.mxu0 0
  %8160 = vmatpush2.bf16.msra.mxu0 0
  %8161 = vmatprep.subr.bf16.mxu0 0
  %8162 = vmatpush2.bf16.msra.mxu0 0
  %8163 = vmatprep.subr.bf16.mxu0 0
  %8164 = vmatpush2.bf16.msra.mxu0 0
  %8165 = vmatprep.subr.bf16.mxu0 0
  %8166 = vmatpush2.bf16.msra.mxu0 0
  %8167 = vmatprep.subr.bf16.mxu0 0
  %8168 = vmatpush2.bf16.msra.mxu0 %v8137
  %8169 = vmatprep.subr.bf16.mxu0 0
  %8170 = vmatpush2.bf16.msra.mxu0 %v7955
  %8171 = vmatprep.mubr.bf16.mxu0 %v8098
  %8172 = vmatmul.mubr.bf16.gmra.mxu0 %v8058
  %v8173 = vpop.f32.mrf.mxu0
  %v8174 = vadd.f32 0.0, %v8173
  %v8175 = vpop.f32.mrf.mxu0
  %v8176 = vpop.f32.mrf.mxu0
  %v8177 = vadd.f32 0.0, %v8176
  %v8178 = vpop.f32.mrf.mxu0
  %8179 = vmatprep.mubr.bf16.mxu0 %v8101
  %8180 = vmatmul.mubr.bf16.gmra.mxu0 %v8060
  %v8181 = vpop.f32.mrf.mxu0
  %v8182 = vadd.f32 0.0, %v8181
  %v8183 = vpop.f32.mrf.mxu0
  %v8184 = vpop.f32.mrf.mxu0
  %v8185 = vadd.f32 0.0, %v8184
  %v8186 = vpop.f32.mrf.mxu0
  %8187 = vmatprep.mubr.bf16.mxu0 %v8104
  %8188 = vmatmul.mubr.bf16.gmra.mxu0 %v8062
  %v8189 = vpop.f32.mrf.mxu0
  %v8190 = vadd.f32 0.0, %v8189
  %v8191 = vpop.f32.mrf.mxu0
  %v8192 = vpop.f32.mrf.mxu0
  %v8193 = vadd.f32 0.0, %v8192
  %v8194 = vpop.f32.mrf.mxu0
  %8195 = vmatprep.mubr.bf16.mxu0 %v8107
  %8196 = vmatmul.mubr.bf16.gmra.mxu0 %v8064
  %v8197 = vpop.f32.mrf.mxu0
  %v8198 = vadd.f32 0.0, %v8197
  %v8199 = vpop.f32.mrf.mxu0
  %v8200 = vpop.f32.mrf.mxu0
  %v8201 = vadd.f32 0.0, %v8200
  %v8202 = vpop.f32.mrf.mxu0
  %8203 = vmatprep.mubr.bf16.mxu0 %v8110
  %8204 = vmatmul.mubr.bf16.gmra.mxu0 %v8066
  %v8205 = vpop.f32.mrf.mxu0
  %v8206 = vadd.f32 0.0, %v8205
  %v8207 = vpop.f32.mrf.mxu0
  %v8208 = vpop.f32.mrf.mxu0
  %v8209 = vadd.f32 0.0, %v8208
  %v8210 = vpop.f32.mrf.mxu0
  %8211 = vmatprep.mubr.bf16.mxu0 %v8113
  %8212 = vmatmul.mubr.bf16.gmra.mxu0 %v8068
  %v8213 = vpop.f32.mrf.mxu0
  %v8214 = vadd.f32 0.0, %v8213
  %v8215 = vpop.f32.mrf.mxu0
  %v8216 = vpop.f32.mrf.mxu0
  %v8217 = vadd.f32 0.0, %v8216
  %v8218 = vpop.f32.mrf.mxu0
  %8219 = vmatprep.mubr.bf16.mxu0 %v8116
  %8220 = vmatmul.mubr.bf16.gmra.mxu0 %v8070
  %v8221 = vpop.f32.mrf.mxu0
  %v8222 = vadd.f32 0.0, %v8221
  %v8223 = vpop.f32.mrf.mxu0
  %v8224 = vpop.f32.mrf.mxu0
  %v8225 = vadd.f32 0.0, %v8224
  %v8226 = vpop.f32.mrf.mxu0
  %8227 = vmatprep.mubr.bf16.mxu0 %v8119
  %8228 = vmatmul.mubr.bf16.gmra.mxu0 %v8072
  %v8229 = vpop.f32.mrf.mxu0
  %v8230 = vadd.f32 0.0, %v8229
  %v8231 = vpop.f32.mrf.mxu0
  %v8232 = vpop.f32.mrf.mxu0
  %v8233 = vadd.f32 0.0, %v8232
  %v8234 = vpop.f32.mrf.mxu0
  %8235 = vmatprep.mubr.bf16.mxu0 %v8122
  %8236 = vmatmul.mubr.bf16.gmra.mxu0 %v8074
  %v8237 = vpop.f32.mrf.mxu0
  %v8238 = vadd.f32 0.0, %v8237
  %v8239 = vpop.f32.mrf.mxu0
  %v8240 = vpop.f32.mrf.mxu0
  %v8241 = vadd.f32 0.0, %v8240
  %v8242 = vpop.f32.mrf.mxu0
  %8243 = vmatprep.mubr.bf16.mxu0 %v8125
  %8244 = vmatmul.mubr.bf16.gmra.mxu0 %v8076
  %v8245 = vpop.f32.mrf.mxu0
  %v8246 = vadd.f32 0.0, %v8245
  %v8247 = vpop.f32.mrf.mxu0
  %v8248 = vpop.f32.mrf.mxu0
  %v8249 = vadd.f32 0.0, %v8248
  %v8250 = vpop.f32.mrf.mxu0
  %8251 = vmatprep.mubr.bf16.mxu0 %v8128
  %8252 = vmatmul.mubr.bf16.gmra.mxu0 %v8078
  %v8253 = vpop.f32.mrf.mxu0
  %v8254 = vadd.f32 0.0, %v8253
  %v8255 = vpop.f32.mrf.mxu0
  %v8256 = vpop.f32.mrf.mxu0
  %v8257 = vadd.f32 0.0, %v8256
  %v8258 = vpop.f32.mrf.mxu0
  %8259 = vmatprep.mubr.bf16.mxu0 %v8131
  %8260 = vmatmul.mubr.bf16.gmra.mxu0 %v8080
  %v8261 = vpop.f32.mrf.mxu0
  %v8262 = vadd.f32 0.0, %v8261
  %v8263 = vpop.f32.mrf.mxu0
  %v8264 = vpop.f32.mrf.mxu0
  %v8265 = vadd.f32 0.0, %v8264
  %v8266 = vpop.f32.mrf.mxu0
  %8267 = vmatprep.mubr.bf16.mxu0 %v8134
  %8268 = vmatmul.mubr.bf16.gmra.mxu0 %v8082
  %v8269 = vpop.f32.mrf.mxu0
  %v8270 = vadd.f32 0.0, %v8269
  %v8271 = vpop.f32.mrf.mxu0
  %v8272 = vpop.f32.mrf.mxu0
  %v8273 = vpop.f32.mrf.mxu0
  %8274 = vdwg.mxu0
  %v8275 = vadd.f32 %v7902, %v8174
  %v8276 = vadd.f32 %v7903, %v8177
  %v8277 = vadd.f32 %v7904, %v8182
  %v8278 = vadd.f32 %v7905, %v8185
  %v8279 = vadd.f32 %v7906, %v8190
  %v8280 = vadd.f32 %v7907, %v8193
  %v8281 = vadd.f32 %v7908, %v8198
  %v8282 = vadd.f32 %v7909, %v8201
  %v8283 = vadd.f32 %v7910, %v8206
  %v8284 = vadd.f32 %v7911, %v8209
  %v8285 = vadd.f32 %v7912, %v8214
  %v8286 = vadd.f32 %v7913, %v8217
  %v8287 = vadd.f32 %v7914, %v8222
  %v8288 = vadd.f32 %v7915, %v8225
  %v8289 = vadd.f32 %v7916, %v8230
  %v8290 = vadd.f32 %v7917, %v8233
  %v8291 = vadd.f32 %v7918, %v8238
  %v8292 = vadd.f32 %v7919, %v8241
  %v8293 = vadd.f32 %v7920, %v8246
  %v8294 = vadd.f32 %v7921, %v8249
  %v8295 = vadd.f32 %v7922, %v8254
  %v8296 = vadd.f32 %v7923, %v8257
  %v8297 = vadd.f32 %v7924, %v8262
  %v8298 = vadd.f32 %v7925, %v8265
  %v8299 = vadd.f32 %v7926, %v8270
  %v8300 = vld [vmem:[%s6] sm:$0xff]
  %v8301 = vld [vmem:[%s6 + $0x8] sm:$0xff]
  %v8302 = vld [vmem:[%s6 + $0x10] sm:$0xff]
  %v8303 = vld [vmem:[%s6 + $0x18] sm:$0xff]
  %v8304 = vld [vmem:[%s6 + $0x20] sm:$0xff]
  %v8305 = vld [vmem:[%s6 + $0x28] sm:$0xff]
  %v8306 = vld [vmem:[%s6 + $0x30] sm:$0xff]
  %v8307 = vld [vmem:[%s6 + $0x38] sm:$0xff]
  %v8308 = vld [vmem:[%s6 + $0x40] sm:$0xff]
  %v8309 = vld [vmem:[%s6 + $0x48] sm:$0xff]
  %v8310 = vld [vmem:[%s6 + $0x50] sm:$0xff]
  %v8311 = vld [vmem:[%s6 + $0x58] sm:$0xff]
  %v8312 = vld [vmem:[%s6 + $0x60] sm:$0xff]
  %v8313 = vld [vmem:[%s6 + $0x68] sm:$0xff]
  %v8314 = vld [vmem:[%s6 + $0x70] sm:$0xff]
  %v8315 = vld [vmem:[%s6 + $0x78] sm:$0xff]
  %v8316 = vld [vmem:[%s6 + $0x80] sm:$0xff]
  %v8317 = vld [vmem:[%s6 + $0x88] sm:$0xff]
  %v8318 = vld [vmem:[%s6 + $0x90] sm:$0xff]
  %v8319 = vld [vmem:[%s6 + $0x98] sm:$0xff]
  %v8320 = vld [vmem:[%s6 + $0xa0] sm:$0xff]
  %v8321 = vld [vmem:[%s6 + $0xa8] sm:$0xff]
  %v8322 = vld [vmem:[%s6 + $0xb0] sm:$0xff]
  %v8323 = vld [vmem:[%s6 + $0xb8] sm:$0xff]
  %v8324 = vld [vmem:[%s6 + $0xc0] sm:$0xff]
  %8326 = vset.pattern.permute.xlu0 0
  %8327 = vperm.xlu0 %8326, %v8300
  %v8328 = vpop.permute.xlu0 %8327
  %8331 = vset.pattern.permute.xlu0 0
  %8332 = vperm.xlu0 %8331, %v8301
  %v8333 = vpop.permute.xlu0 %8332
  %8336 = vset.pattern.permute.xlu0 0
  %8337 = vperm.xlu0 %8336, %v8302
  %v8338 = vpop.permute.xlu0 %8337
  %8341 = vset.pattern.permute.xlu0 0
  %8342 = vperm.xlu0 %8341, %v8303
  %v8343 = vpop.permute.xlu0 %8342
  %8346 = vset.pattern.permute.xlu0 0
  %8347 = vperm.xlu0 %8346, %v8304
  %v8348 = vpop.permute.xlu0 %8347
  %8351 = vset.pattern.permute.xlu0 0
  %8352 = vperm.xlu0 %8351, %v8305
  %v8353 = vpop.permute.xlu0 %8352
  %8356 = vset.pattern.permute.xlu0 0
  %8357 = vperm.xlu0 %8356, %v8306
  %v8358 = vpop.permute.xlu0 %8357
  %8361 = vset.pattern.permute.xlu0 0
  %8362 = vperm.xlu0 %8361, %v8307
  %v8363 = vpop.permute.xlu0 %8362
  %8366 = vset.pattern.permute.xlu0 0
  %8367 = vperm.xlu0 %8366, %v8308
  %v8368 = vpop.permute.xlu0 %8367
  %8371 = vset.pattern.permute.xlu0 0
  %8372 = vperm.xlu0 %8371, %v8309
  %v8373 = vpop.permute.xlu0 %8372
  %8376 = vset.pattern.permute.xlu0 0
  %8377 = vperm.xlu0 %8376, %v8310
  %v8378 = vpop.permute.xlu0 %8377
  %8381 = vset.pattern.permute.xlu0 0
  %8382 = vperm.xlu0 %8381, %v8311
  %v8383 = vpop.permute.xlu0 %8382
  %8386 = vset.pattern.permute.xlu0 0
  %8387 = vperm.xlu0 %8386, %v8312
  %v8388 = vpop.permute.xlu0 %8387
  %8391 = vset.pattern.permute.xlu0 0
  %8392 = vperm.xlu0 %8391, %v8313
  %v8393 = vpop.permute.xlu0 %8392
  %8396 = vset.pattern.permute.xlu0 0
  %8397 = vperm.xlu0 %8396, %v8314
  %v8398 = vpop.permute.xlu0 %8397
  %8401 = vset.pattern.permute.xlu0 0
  %8402 = vperm.xlu0 %8401, %v8315
  %v8403 = vpop.permute.xlu0 %8402
  %8406 = vset.pattern.permute.xlu0 0
  %8407 = vperm.xlu0 %8406, %v8316
  %v8408 = vpop.permute.xlu0 %8407
  %8411 = vset.pattern.permute.xlu0 0
  %8412 = vperm.xlu0 %8411, %v8317
  %v8413 = vpop.permute.xlu0 %8412
  %8416 = vset.pattern.permute.xlu0 0
  %8417 = vperm.xlu0 %8416, %v8318
  %v8418 = vpop.permute.xlu0 %8417
  %8421 = vset.pattern.permute.xlu0 0
  %8422 = vperm.xlu0 %8421, %v8319
  %v8423 = vpop.permute.xlu0 %8422
  %8426 = vset.pattern.permute.xlu0 0
  %8427 = vperm.xlu0 %8426, %v8320
  %v8428 = vpop.permute.xlu0 %8427
  %8431 = vset.pattern.permute.xlu0 0
  %8432 = vperm.xlu0 %8431, %v8321
  %v8433 = vpop.permute.xlu0 %8432
  %8436 = vset.pattern.permute.xlu0 0
  %8437 = vperm.xlu0 %8436, %v8322
  %v8438 = vpop.permute.xlu0 %8437
  %8441 = vset.pattern.permute.xlu0 0
  %8442 = vperm.xlu0 %8441, %v8323
  %v8443 = vpop.permute.xlu0 %8442
  %8446 = vset.pattern.permute.xlu0 0
  %8447 = vperm.xlu0 %8446, %v8324
  %v8448 = vpop.permute.xlu0 %8447
  %v8450 = vadd.f32 %v8275, %v8328
  %v8451 = vadd.f32 %v8276, %v8333
  %v8452 = vadd.f32 %v8277, %v8338
  %v8453 = vadd.f32 %v8278, %v8343
  %v8454 = vadd.f32 %v8279, %v8348
  %v8455 = vadd.f32 %v8280, %v8353
  %v8456 = vadd.f32 %v8281, %v8358
  %v8457 = vadd.f32 %v8282, %v8363
  %v8458 = vadd.f32 %v8283, %v8368
  %v8459 = vadd.f32 %v8284, %v8373
  %v8460 = vadd.f32 %v8285, %v8378
  %v8461 = vadd.f32 %v8286, %v8383
  %v8462 = vadd.f32 %v8287, %v8388
  %v8463 = vadd.f32 %v8288, %v8393
  %v8464 = vadd.f32 %v8289, %v8398
  %v8465 = vadd.f32 %v8290, %v8403
  %v8466 = vadd.f32 %v8291, %v8408
  %v8467 = vadd.f32 %v8292, %v8413
  %v8468 = vadd.f32 %v8293, %v8418
  %v8469 = vadd.f32 %v8294, %v8423
  %v8470 = vadd.f32 %v8295, %v8428
  %v8471 = vadd.f32 %v8296, %v8433
  %v8472 = vadd.f32 %v8297, %v8438
  %v8473 = vadd.f32 %v8298, %v8443
  %v8474 = vadd.f32 %v8299, %v8448
  %v8475 = vmax.f32 %v8450, 0.0
  %v8476 = vmax.f32 %v8451, 0.0
  %v8477 = vmax.f32 %v8452, 0.0
  %v8478 = vmax.f32 %v8453, 0.0
  %v8479 = vmax.f32 %v8454, 0.0
  %v8480 = vmax.f32 %v8455, 0.0
  %v8481 = vmax.f32 %v8456, 0.0
  %v8482 = vmax.f32 %v8457, 0.0
  %v8483 = vmax.f32 %v8458, 0.0
  %v8484 = vmax.f32 %v8459, 0.0
  %v8485 = vmax.f32 %v8460, 0.0
  %v8486 = vmax.f32 %v8461, 0.0
  %v8487 = vmax.f32 %v8462, 0.0
  %v8488 = vmax.f32 %v8463, 0.0
  %v8489 = vmax.f32 %v8464, 0.0
  %v8490 = vmax.f32 %v8465, 0.0
  %v8491 = vmax.f32 %v8466, 0.0
  %v8492 = vmax.f32 %v8467, 0.0
  %v8493 = vmax.f32 %v8468, 0.0
  %v8494 = vmax.f32 %v8469, 0.0
  %v8495 = vmax.f32 %v8470, 0.0
  %v8496 = vmax.f32 %v8471, 0.0
  %v8497 = vmax.f32 %v8472, 0.0
  %v8498 = vmax.f32 %v8473, 0.0
  %v8499 = vmax.f32 %v8474, 0.0
  %v8500 = vld [vmem:[%s7] sm:$0xff]
  %v8501 = vld [vmem:[%s7 + $0x8] sm:$0xff]
  %v8502 = vld [vmem:[%s7 + $0x10] sm:$0xff]
  %v8503 = vld [vmem:[%s7 + $0x18] sm:$0xff]
  %v8504 = vld [vmem:[%s7 + $0x20] sm:$0xff]
  %v8505 = vld [vmem:[%s7 + $0x28] sm:$0xff]
  %v8506 = vld [vmem:[%s7 + $0x30] sm:$0xff]
  %v8507 = vld [vmem:[%s7 + $0x38] sm:$0xff]
  %v8508 = vld [vmem:[%s7 + $0x40] sm:$0xff]
  %v8509 = vld [vmem:[%s7 + $0x48] sm:$0xff]
  %v8510 = vld [vmem:[%s7 + $0x50] sm:$0xff]
  %v8511 = vld [vmem:[%s7 + $0x58] sm:$0xff]
  %v8512 = vld [vmem:[%s7 + $0x60] sm:$0xff]
  %v8513 = vld [vmem:[%s7 + $0x68] sm:$0xff]
  %v8514 = vld [vmem:[%s7 + $0x70] sm:$0xff]
  %v8515 = vld [vmem:[%s7 + $0x78] sm:$0xff]
  %v8516 = vld [vmem:[%s7 + $0x80] sm:$0xff]
  %v8517 = vld [vmem:[%s7 + $0x88] sm:$0xff]
  %v8518 = vld [vmem:[%s7 + $0x90] sm:$0xff]
  %v8519 = vld [vmem:[%s7 + $0x98] sm:$0xff]
  %v8520 = vld [vmem:[%s7 + $0xa0] sm:$0xff]
  %v8521 = vld [vmem:[%s7 + $0xa8] sm:$0xff]
  %v8522 = vld [vmem:[%s7 + $0xb0] sm:$0xff]
  %v8523 = vld [vmem:[%s7 + $0xb8] sm:$0xff]
  %v8524 = vld [vmem:[%s7 + $0xc0] sm:$0xff]
  %v8525 = vpack.c.bf16 %v8476, %v8475
  %v8526 = vpack.c.bf16 %v8478, %v8477
  %v8527 = vpack.c.bf16 %v8480, %v8479
  %v8528 = vpack.c.bf16 %v8482, %v8481
  %v8529 = vpack.c.bf16 %v8484, %v8483
  %v8530 = vpack.c.bf16 %v8486, %v8485
  %v8531 = vpack.c.bf16 %v8488, %v8487
  %v8532 = vpack.c.bf16 %v8490, %v8489
  %v8533 = vpack.c.bf16 %v8492, %v8491
  %v8534 = vpack.c.bf16 %v8494, %v8493
  %v8535 = vpack.c.bf16 %v8496, %v8495
  %v8536 = vpack.c.bf16 %v8498, %v8497
  %v8537 = vpack.c.bf16 %v8499, %v8499
  %v8538 = vld [vmem:[%s8] sm:$0xff]
  %v8539 = vld [vmem:[%s8 + $0x8] sm:$0xff]
  %v8540 = vld [vmem:[%s8 + $0x10] sm:$0xff]
  %v8541 = vld [vmem:[%s8 + $0x18] sm:$0xff]
  %v8542 = vld [vmem:[%s8 + $0x20] sm:$0xff]
  %v8543 = vld [vmem:[%s8 + $0x28] sm:$0xff]
  %v8544 = vld [vmem:[%s8 + $0x30] sm:$0xff]
  %v8545 = vld [vmem:[%s8 + $0x38] sm:$0xff]
  %v8546 = vld [vmem:[%s8 + $0x40] sm:$0xff]
  %v8547 = vld [vmem:[%s8 + $0x48] sm:$0xff]
  %v8548 = vld [vmem:[%s8 + $0x50] sm:$0xff]
  %v8549 = vld [vmem:[%s8 + $0x58] sm:$0xff]
  %v8550 = vld [vmem:[%s8 + $0x60] sm:$0xff]
  %v8551 = vld [vmem:[%s8 + $0x68] sm:$0xff]
  %v8552 = vld [vmem:[%s8 + $0x70] sm:$0xff]
  %v8553 = vld [vmem:[%s8 + $0x78] sm:$0xff]
  %v8554 = vld [vmem:[%s8 + $0x80] sm:$0xff]
  %v8555 = vld [vmem:[%s8 + $0x88] sm:$0xff]
  %v8556 = vld [vmem:[%s8 + $0x90] sm:$0xff]
  %v8557 = vld [vmem:[%s8 + $0x98] sm:$0xff]
  %v8558 = vld [vmem:[%s8 + $0xa0] sm:$0xff]
  %v8559 = vld [vmem:[%s8 + $0xa8] sm:$0xff]
  %v8560 = vld [vmem:[%s8 + $0xb0] sm:$0xff]
  %v8561 = vld [vmem:[%s8 + $0xb8] sm:$0xff]
  %v8562 = vld [vmem:[%s8 + $0xc0] sm:$0xff]
  %8564 = vset.pattern.permute.xlu0 0
  %8565 = vperm.xlu0 %8564, %v8538
  %v8566 = vpop.permute.xlu0 %8565
  %8569 = vset.pattern.permute.xlu0 0
  %8570 = vperm.xlu0 %8569, %v8539
  %v8571 = vpop.permute.xlu0 %8570
  %8574 = vset.pattern.permute.xlu0 0
  %8575 = vperm.xlu0 %8574, %v8540
  %v8576 = vpop.permute.xlu0 %8575
  %8579 = vset.pattern.permute.xlu0 0
  %8580 = vperm.xlu0 %8579, %v8541
  %v8581 = vpop.permute.xlu0 %8580
  %8584 = vset.pattern.permute.xlu0 0
  %8585 = vperm.xlu0 %8584, %v8542
  %v8586 = vpop.permute.xlu0 %8585
  %8589 = vset.pattern.permute.xlu0 0
  %8590 = vperm.xlu0 %8589, %v8543
  %v8591 = vpop.permute.xlu0 %8590
  %8594 = vset.pattern.permute.xlu0 0
  %8595 = vperm.xlu0 %8594, %v8544
  %v8596 = vpop.permute.xlu0 %8595
  %8599 = vset.pattern.permute.xlu0 0
  %8600 = vperm.xlu0 %8599, %v8545
  %v8601 = vpop.permute.xlu0 %8600
  %8604 = vset.pattern.permute.xlu0 0
  %8605 = vperm.xlu0 %8604, %v8546
  %v8606 = vpop.permute.xlu0 %8605
  %8609 = vset.pattern.permute.xlu0 0
  %8610 = vperm.xlu0 %8609, %v8547
  %v8611 = vpop.permute.xlu0 %8610
  %8614 = vset.pattern.permute.xlu0 0
  %8615 = vperm.xlu0 %8614, %v8548
  %v8616 = vpop.permute.xlu0 %8615
  %8619 = vset.pattern.permute.xlu0 0
  %8620 = vperm.xlu0 %8619, %v8549
  %v8621 = vpop.permute.xlu0 %8620
  %8624 = vset.pattern.permute.xlu0 0
  %8625 = vperm.xlu0 %8624, %v8550
  %v8626 = vpop.permute.xlu0 %8625
  %8629 = vset.pattern.permute.xlu0 0
  %8630 = vperm.xlu0 %8629, %v8551
  %v8631 = vpop.permute.xlu0 %8630
  %8634 = vset.pattern.permute.xlu0 0
  %8635 = vperm.xlu0 %8634, %v8552
  %v8636 = vpop.permute.xlu0 %8635
  %8639 = vset.pattern.permute.xlu0 0
  %8640 = vperm.xlu0 %8639, %v8553
  %v8641 = vpop.permute.xlu0 %8640
  %8644 = vset.pattern.permute.xlu0 0
  %8645 = vperm.xlu0 %8644, %v8554
  %v8646 = vpop.permute.xlu0 %8645
  %8649 = vset.pattern.permute.xlu0 0
  %8650 = vperm.xlu0 %8649, %v8555
  %v8651 = vpop.permute.xlu0 %8650
  %8654 = vset.pattern.permute.xlu0 0
  %8655 = vperm.xlu0 %8654, %v8556
  %v8656 = vpop.permute.xlu0 %8655
  %8659 = vset.pattern.permute.xlu0 0
  %8660 = vperm.xlu0 %8659, %v8557
  %v8661 = vpop.permute.xlu0 %8660
  %8664 = vset.pattern.permute.xlu0 0
  %8665 = vperm.xlu0 %8664, %v8558
  %v8666 = vpop.permute.xlu0 %8665
  %8669 = vset.pattern.permute.xlu0 0
  %8670 = vperm.xlu0 %8669, %v8559
  %v8671 = vpop.permute.xlu0 %8670
  %8674 = vset.pattern.permute.xlu0 0
  %8675 = vperm.xlu0 %8674, %v8560
  %v8676 = vpop.permute.xlu0 %8675
  %8679 = vset.pattern.permute.xlu0 0
  %8680 = vperm.xlu0 %8679, %v8561
  %v8681 = vpop.permute.xlu0 %8680
  %8684 = vset.pattern.permute.xlu0 0
  %8685 = vperm.xlu0 %8684, %v8562
  %v8686 = vpop.permute.xlu0 %8685
  %v8713 = vunpack.c.l.b16 %v8500
  %v8714 = vunpack.c.h.b16 %v8500
  %v8715 = vunpack.c.l.b16 %v8501
  %v8716 = vunpack.c.h.b16 %v8501
  %v8717 = vunpack.c.l.b16 %v8502
  %v8718 = vunpack.c.h.b16 %v8502
  %v8719 = vunpack.c.l.b16 %v8503
  %v8720 = vunpack.c.h.b16 %v8503
  %v8721 = vunpack.c.l.b16 %v8504
  %v8722 = vunpack.c.h.b16 %v8504
  %v8723 = vunpack.c.l.b16 %v8505
  %v8724 = vunpack.c.h.b16 %v8505
  %v8725 = vunpack.c.l.b16 %v8506
  %v8726 = vunpack.c.h.b16 %v8506
  %v8727 = vunpack.c.l.b16 %v8507
  %v8728 = vunpack.c.h.b16 %v8507
  %v8729 = vunpack.c.l.b16 %v8508
  %v8730 = vunpack.c.h.b16 %v8508
  %v8731 = vunpack.c.l.b16 %v8509
  %v8732 = vunpack.c.h.b16 %v8509
  %v8733 = vunpack.c.l.b16 %v8510
  %v8734 = vunpack.c.h.b16 %v8510
  %v8735 = vunpack.c.l.b16 %v8511
  %v8736 = vunpack.c.h.b16 %v8511
  %v8737 = vunpack.c.l.b16 %v8512
  %v8738 = vunpack.c.h.b16 %v8512
  %v8739 = vunpack.c.l.b16 %v8513
  %v8740 = vunpack.c.h.b16 %v8513
  %v8741 = vunpack.c.l.b16 %v8514
  %v8742 = vunpack.c.h.b16 %v8514
  %v8743 = vunpack.c.l.b16 %v8515
  %v8744 = vunpack.c.h.b16 %v8515
  %v8745 = vunpack.c.l.b16 %v8516
  %v8746 = vunpack.c.h.b16 %v8516
  %v8747 = vunpack.c.l.b16 %v8517
  %v8748 = vunpack.c.h.b16 %v8517
  %v8749 = vunpack.c.l.b16 %v8518
  %v8750 = vunpack.c.h.b16 %v8518
  %v8751 = vunpack.c.l.b16 %v8519
  %v8752 = vunpack.c.h.b16 %v8519
  %v8753 = vunpack.c.l.b16 %v8520
  %v8754 = vunpack.c.h.b16 %v8520
  %v8755 = vunpack.c.l.b16 %v8521
  %v8756 = vunpack.c.h.b16 %v8521
  %v8757 = vunpack.c.l.b16 %v8522
  %v8758 = vunpack.c.h.b16 %v8522
  %v8759 = vunpack.c.l.b16 %v8523
  %v8760 = vunpack.c.h.b16 %v8523
  %v8761 = vunpack.c.l.b16 %v8524
  %v8762 = vunpack.c.h.b16 %v8524
  %v8763 = vpack.c.b16 %v8715, %v8713
  %v8764 = vpack.c.b16 %v8716, %v8714
  %v8765 = vpack.c.b16 %v8719, %v8717
  %v8766 = vpack.c.b16 %v8720, %v8718
  %v8767 = vpack.c.b16 %v8723, %v8721
  %v8768 = vpack.c.b16 %v8724, %v8722
  %v8769 = vpack.c.b16 %v8727, %v8725
  %v8770 = vpack.c.b16 %v8728, %v8726
  %v8771 = vpack.c.b16 %v8731, %v8729
  %v8772 = vpack.c.b16 %v8732, %v8730
  %v8773 = vpack.c.b16 %v8735, %v8733
  %v8774 = vpack.c.b16 %v8736, %v8734
  %v8775 = vpack.c.b16 %v8739, %v8737
  %v8776 = vpack.c.b16 %v8740, %v8738
  %v8777 = vpack.c.b16 %v8743, %v8741
  %v8778 = vpack.c.b16 %v8744, %v8742
  %v8779 = vpack.c.b16 %v8747, %v8745
  %v8780 = vpack.c.b16 %v8748, %v8746
  %v8781 = vpack.c.b16 %v8751, %v8749
  %v8782 = vpack.c.b16 %v8752, %v8750
  %v8783 = vpack.c.b16 %v8755, %v8753
  %v8784 = vpack.c.b16 %v8756, %v8754
  %v8785 = vpack.c.b16 %v8759, %v8757
  %v8786 = vpack.c.b16 %v8760, %v8758
  %v8787 = vpack.c.b16 %v8761, %v8761
  %v8788 = vpack.c.b16 %v8762, %v8762
  %vm8802 = vcmask 588800
  %v8804 = vsel %vm8802, %v8764, 0
  %v8807 = vsel %vm8802, %v8766, 0
  %v8810 = vsel %vm8802, %v8768, 0
  %v8813 = vsel %vm8802, %v8770, 0
  %v8816 = vsel %vm8802, %v8772, 0
  %v8819 = vsel %vm8802, %v8774, 0
  %v8822 = vsel %vm8802, %v8776, 0
  %v8825 = vsel %vm8802, %v8778, 0
  %v8828 = vsel %vm8802, %v8780, 0
  %v8831 = vsel %vm8802, %v8782, 0
  %v8834 = vsel %vm8802, %v8784, 0
  %v8837 = vsel %vm8802, %v8786, 0
  %v8840 = vsel %vm8802, %v8788, 0
  %v8843 = vsel %vm3261, %v8537, 0
  %8845 = vmatprep.subr.bf16.mxu0 0
  %8846 = vmatpush1.bf16.msra.mxu0 %v8532
  %8847 = vmatprep.subr.bf16.mxu0 0
  %8848 = vmatpush1.bf16.msra.mxu0 %v8531
  %8849 = vmatprep.subr.bf16.mxu0 0
  %8850 = vmatpush1.bf16.msra.mxu0 %v8530
  %8851 = vmatprep.subr.bf16.mxu0 0
  %8852 = vmatpush1.bf16.msra.mxu0 %v8529
  %8853 = vmatprep.subr.bf16.mxu0 0
  %8854 = vmatpush1.bf16.msra.mxu0 %v8528
  %8855 = vmatprep.subr.bf16.mxu0 0
  %8856 = vmatpush1.bf16.msra.mxu0 %v8527
  %8857 = vmatprep.subr.bf16.mxu0 0
  %8858 = vmatpush1.bf16.msra.mxu0 %v8526
  %8859 = vmatprep.subr.bf16.mxu0 0
  %8860 = vmatpush1.bf16.msra.mxu0 %v8525
  %8861 = vmatprep.subr.bf16.mxu0 0
  %8862 = vmatpush2.bf16.msra.mxu0 0
  %8863 = vmatprep.subr.bf16.mxu0 0
  %8864 = vmatpush2.bf16.msra.mxu0 0
  %8865 = vmatprep.subr.bf16.mxu0 0
  %8866 = vmatpush2.bf16.msra.mxu0 0
  %8867 = vmatprep.subr.bf16.mxu0 0
  %8868 = vmatpush2.bf16.msra.mxu0 %v8843
  %8869 = vmatprep.subr.bf16.mxu0 0
  %8870 = vmatpush2.bf16.msra.mxu0 %v8536
  %8871 = vmatprep.subr.bf16.mxu0 0
  %8872 = vmatpush2.bf16.msra.mxu0 %v8535
  %8873 = vmatprep.subr.bf16.mxu0 0
  %8874 = vmatpush2.bf16.msra.mxu0 %v8534
  %8875 = vmatprep.subr.bf16.mxu0 0
  %8876 = vmatpush2.bf16.msra.mxu0 %v8533
  %8877 = vmatprep.mubr.bf16.mxu0 %v8804
  %8878 = vmatmul.mubr.bf16.gmra.mxu0 %v8763
  %v8879 = vpop.f32.mrf.mxu0
  %v8880 = vadd.f32 %v8566, %v8879
  %v8881 = vpop.f32.mrf.mxu0
  %v8882 = vpop.f32.mrf.mxu0
  %v8883 = vadd.f32 %v8571, %v8882
  %v8884 = vpop.f32.mrf.mxu0
  %8885 = vmatprep.mubr.bf16.mxu0 %v8807
  %8886 = vmatmul.mubr.bf16.gmra.mxu0 %v8765
  %v8887 = vpop.f32.mrf.mxu0
  %v8888 = vadd.f32 %v8576, %v8887
  %v8889 = vpop.f32.mrf.mxu0
  %v8890 = vpop.f32.mrf.mxu0
  %v8891 = vadd.f32 %v8581, %v8890
  %v8892 = vpop.f32.mrf.mxu0
  %8893 = vmatprep.mubr.bf16.mxu0 %v8810
  %8894 = vmatmul.mubr.bf16.gmra.mxu0 %v8767
  %v8895 = vpop.f32.mrf.mxu0
  %v8896 = vadd.f32 %v8586, %v8895
  %v8897 = vpop.f32.mrf.mxu0
  %v8898 = vpop.f32.mrf.mxu0
  %v8899 = vadd.f32 %v8591, %v8898
  %v8900 = vpop.f32.mrf.mxu0
  %8901 = vmatprep.mubr.bf16.mxu0 %v8813
  %8902 = vmatmul.mubr.bf16.gmra.mxu0 %v8769
  %v8903 = vpop.f32.mrf.mxu0
  %v8904 = vadd.f32 %v8596, %v8903
  %v8905 = vpop.f32.mrf.mxu0
  %v8906 = vpop.f32.mrf.mxu0
  %v8907 = vadd.f32 %v8601, %v8906
  %v8908 = vpop.f32.mrf.mxu0
  %8909 = vmatprep.mubr.bf16.mxu0 %v8816
  %8910 = vmatmul.mubr.bf16.gmra.mxu0 %v8771
  %v8911 = vpop.f32.mrf.mxu0
  %v8912 = vadd.f32 %v8606, %v8911
  %v8913 = vpop.f32.mrf.mxu0
  %v8914 = vpop.f32.mrf.mxu0
  %v8915 = vadd.f32 %v8611, %v8914
  %v8916 = vpop.f32.mrf.mxu0
  %8917 = vmatprep.mubr.bf16.mxu0 %v8819
  %8918 = vmatmul.mubr.bf16.gmra.mxu0 %v8773
  %v8919 = vpop.f32.mrf.mxu0
  %v8920 = vadd.f32 %v8616, %v8919
  %v8921 = vpop.f32.mrf.mxu0
  %v8922 = vpop.f32.mrf.mxu0
  %v8923 = vadd.f32 %v8621, %v8922
  %v8924 = vpop.f32.mrf.mxu0
  %8925 = vmatprep.mubr.bf16.mxu0 %v8822
  %8926 = vmatmul.mubr.bf16.gmra.mxu0 %v8775
  %v8927 = vpop.f32.mrf.mxu0
  %v8928 = vadd.f32 %v8626, %v8927
  %v8929 = vpop.f32.mrf.mxu0
  %v8930 = vpop.f32.mrf.mxu0
  %v8931 = vadd.f32 %v8631, %v8930
  %v8932 = vpop.f32.mrf.mxu0
  %8933 = vmatprep.mubr.bf16.mxu0 %v8825
  %8934 = vmatmul.mubr.bf16.gmra.mxu0 %v8777
  %v8935 = vpop.f32.mrf.mxu0
  %v8936 = vadd.f32 %v8636, %v8935
  %v8937 = vpop.f32.mrf.mxu0
  %v8938 = vpop.f32.mrf.mxu0
  %v8939 = vadd.f32 %v8641, %v8938
  %v8940 = vpop.f32.mrf.mxu0
  %8941 = vmatprep.mubr.bf16.mxu0 %v8828
  %8942 = vmatmul.mubr.bf16.gmra.mxu0 %v8779
  %v8943 = vpop.f32.mrf.mxu0
  %v8944 = vadd.f32 %v8646, %v8943
  %v8945 = vpop.f32.mrf.mxu0
  %v8946 = vpop.f32.mrf.mxu0
  %v8947 = vadd.f32 %v8651, %v8946
  %v8948 = vpop.f32.mrf.mxu0
  %8949 = vmatprep.mubr.bf16.mxu0 %v8831
  %8950 = vmatmul.mubr.bf16.gmra.mxu0 %v8781
  %v8951 = vpop.f32.mrf.mxu0
  %v8952 = vadd.f32 %v8656, %v8951
  %v8953 = vpop.f32.mrf.mxu0
  %v8954 = vpop.f32.mrf.mxu0
  %v8955 = vadd.f32 %v8661, %v8954
  %v8956 = vpop.f32.mrf.mxu0
  %8957 = vmatprep.mubr.bf16.mxu0 %v8834
  %8958 = vmatmul.mubr.bf16.gmra.mxu0 %v8783
  %v8959 = vpop.f32.mrf.mxu0
  %v8960 = vadd.f32 %v8666, %v8959
  %v8961 = vpop.f32.mrf.mxu0
  %v8962 = vpop.f32.mrf.mxu0
  %v8963 = vadd.f32 %v8671, %v8962
  %v8964 = vpop.f32.mrf.mxu0
  %8965 = vmatprep.mubr.bf16.mxu0 %v8837
  %8966 = vmatmul.mubr.bf16.gmra.mxu0 %v8785
  %v8967 = vpop.f32.mrf.mxu0
  %v8968 = vadd.f32 %v8676, %v8967
  %v8969 = vpop.f32.mrf.mxu0
  %v8970 = vpop.f32.mrf.mxu0
  %v8971 = vadd.f32 %v8681, %v8970
  %v8972 = vpop.f32.mrf.mxu0
  %8973 = vmatprep.mubr.bf16.mxu0 %v8840
  %8974 = vmatmul.mubr.bf16.gmra.mxu0 %v8787
  %v8975 = vpop.f32.mrf.mxu0
  %v8976 = vadd.f32 %v8686, %v8975
  %v8977 = vpop.f32.mrf.mxu0
  %v8978 = vpop.f32.mrf.mxu0
  %v8979 = vpop.f32.mrf.mxu0
  %8980 = vdwg.mxu0
  %v8981 = vmax.f32 %v8880, 0.0
  %v8982 = vmax.f32 %v8883, 0.0
  %v8983 = vmax.f32 %v8888, 0.0
  %v8984 = vmax.f32 %v8891, 0.0
  %v8985 = vmax.f32 %v8896, 0.0
  %v8986 = vmax.f32 %v8899, 0.0
  %v8987 = vmax.f32 %v8904, 0.0
  %v8988 = vmax.f32 %v8907, 0.0
  %v8989 = vmax.f32 %v8912, 0.0
  %v8990 = vmax.f32 %v8915, 0.0
  %v8991 = vmax.f32 %v8920, 0.0
  %v8992 = vmax.f32 %v8923, 0.0
  %v8993 = vmax.f32 %v8928, 0.0
  %v8994 = vmax.f32 %v8931, 0.0
  %v8995 = vmax.f32 %v8936, 0.0
  %v8996 = vmax.f32 %v8939, 0.0
  %v8997 = vmax.f32 %v8944, 0.0
  %v8998 = vmax.f32 %v8947, 0.0
  %v8999 = vmax.f32 %v8952, 0.0
  %v9000 = vmax.f32 %v8955, 0.0
  %v9001 = vmax.f32 %v8960, 0.0
  %v9002 = vmax.f32 %v8963, 0.0
  %v9003 = vmax.f32 %v8968, 0.0
  %v9004 = vmax.f32 %v8971, 0.0
  %v9005 = vmax.f32 %v8976, 0.0
  %v9006 = vld [vmem:[%s9] sm:$0x77]
  %v9007 = vpack.c.bf16 %v8982, %v8981
  %v9008 = vpack.c.bf16 %v8984, %v8983
  %v9009 = vpack.c.bf16 %v8986, %v8985
  %v9010 = vpack.c.bf16 %v8988, %v8987
  %v9011 = vpack.c.bf16 %v8990, %v8989
  %v9012 = vpack.c.bf16 %v8992, %v8991
  %v9013 = vpack.c.bf16 %v8994, %v8993
  %v9014 = vpack.c.bf16 %v8996, %v8995
  %v9015 = vpack.c.bf16 %v8998, %v8997
  %v9016 = vpack.c.bf16 %v9000, %v8999
  %v9017 = vpack.c.bf16 %v9002, %v9001
  %v9018 = vpack.c.bf16 %v9004, %v9003
  %v9019 = vpack.c.bf16 %v9005, %v9005
  %v9020 = vld [vmem:[%s10] sm:$0x1f]
  %9022 = vset.pattern.permute.xlu0 0
  %9023 = vperm.xlu0 %9022, %v9020
  %v9024 = vpop.permute.xlu0 %9023
  %v9027 = vunpack.c.l.b16 %v9006
  %v9028 = vunpack.c.h.b16 %v9006
  %v9029 = vpack.c.b16 %v9027, %v9027
  %v9030 = vpack.c.b16 %v9028, %v9028
  %v9033 = vsel %vm8802, %v9030, 0
  %v9036 = vsel %vm3261, %v9019, 0
  %9038 = vmatprep.subr.bf16.mxu0 0
  %9039 = vmatpush1.bf16.msra.mxu0 %v9014
  %9040 = vmatprep.subr.bf16.mxu0 0
  %9041 = vmatpush1.bf16.msra.mxu0 %v9013
  %9042 = vmatprep.subr.bf16.mxu0 0
  %9043 = vmatpush1.bf16.msra.mxu0 %v9012
  %9044 = vmatprep.subr.bf16.mxu0 0
  %9045 = vmatpush1.bf16.msra.mxu0 %v9011
  %9046 = vmatprep.subr.bf16.mxu0 0
  %9047 = vmatpush1.bf16.msra.mxu0 %v9010
  %9048 = vmatprep.subr.bf16.mxu0 0
  %9049 = vmatpush1.bf16.msra.mxu0 %v9009
  %9050 = vmatprep.subr.bf16.mxu0 0
  %9051 = vmatpush1.bf16.msra.mxu0 %v9008
  %9052 = vmatprep.subr.bf16.mxu0 0
  %9053 = vmatpush1.bf16.msra.mxu0 %v9007
  %9054 = vmatprep.subr.bf16.mxu0 0
  %9055 = vmatpush2.bf16.msra.mxu0 0
  %9056 = vmatprep.subr.bf16.mxu0 0
  %9057 = vmatpush2.bf16.msra.mxu0 0
  %9058 = vmatprep.subr.bf16.mxu0 0
  %9059 = vmatpush2.bf16.msra.mxu0 0
  %9060 = vmatprep.subr.bf16.mxu0 0
  %9061 = vmatpush2.bf16.msra.mxu0 %v9036
  %9062 = vmatprep.subr.bf16.mxu0 0
  %9063 = vmatpush2.bf16.msra.mxu0 %v9018
  %9064 = vmatprep.subr.bf16.mxu0 0
  %9065 = vmatpush2.bf16.msra.mxu0 %v9017
  %9066 = vmatprep.subr.bf16.mxu0 0
  %9067 = vmatpush2.bf16.msra.mxu0 %v9016
  %9068 = vmatprep.subr.bf16.mxu0 0
  %9069 = vmatpush2.bf16.msra.mxu0 %v9015
  %9070 = vmatprep.mubr.bf16.mxu0 %v9033
  %9071 = vmatmul.mubr.bf16.gmra.mxu0 %v9029
  %v9072 = vpop.f32.mrf.mxu0
  %v9073 = vadd.f32 %v9024, %v9072
  %v9074 = vpop.f32.mrf.mxu0
  %v9075 = vpop.f32.mrf.mxu0
  %v9076 = vpop.f32.mrf.mxu0
  %9077 = vdwg.mxu0
  %vm9078 = vcmask 61440
  %9079 = vst.msk [vmem:[%s11] sm:$0x1f] %vm9078, %v9073
  // Predicated region
  $region46: #{single_head_forward.1} parent=0 // pred_check
    _
  $region47: #{single_head_forward.1} parent=0 // pred_check_branch
    %9081 = sbr.rel (0) target = $region49
  $region48: #{single_head_forward.1} parent=0 // pred_region
    _
  $region49: #{single_head_forward.1} parent=0 // pred_fallthru
    _
  // Predicated region
  $region50: #{single_head_forward.1} parent=0 // pred_check
    _
  $region51: #{single_head_forward.1} parent=0 // pred_check_branch
    %9083 = sbr.rel (0) target = $region53
  $region52: #{single_head_forward.1} parent=0 // pred_region
    _
  $region53: #{single_head_forward.1} parent=0 // pred_fallthru
    _

</llo_original>
